<compile_context>
chip_gen: v7x
topology: tpu7x:2x2x1
jax: 0.10.0
libtpu: 0.0.40
codegen_flags: <defaults>
</compile_context>

<pallas_src>
import functools

import jax
import jax.numpy as jnp
from jax.experimental import pallas as pl
from jax.experimental.pallas import tpu as pltpu

HEAD_PAD = 128  # lane-dense padded output width for the tiny prediction heads


def _round_up(x, m):
    return ((x + m - 1) // m) * m


# -----------------------------------------------------------------------------
# Pallas kernels
# -----------------------------------------------------------------------------

def _backbone_conv_kernel(x_ref, w_ref, b_ref, o_ref, *, wp):
    """Fused (pixel-normalize o 3x3 conv o ReLU) for one image.

    x_ref : (ROWS_PAD, Cin) f32   flattened, spatially *mean*-padded raw image
    w_ref : (9, Cin, Cout)  bf16  conv weights with 1/std folded in
    b_ref : (1, Cout)       f32   bias with -sum(mean/std * w) folded in
    o_ref : (ANCHORS, Cout) f32   row p = y*Wp + x  (columns x >= W are garbage)
    """
    m = o_ref.shape[0]
    cout = o_ref.shape[1]
    acc = jnp.zeros((m, cout), jnp.float32)
    t = 0
    for dy in range(3):
        for dx in range(3):
            off = dy * wp + dx                              # static offset
            lhs = x_ref[pl.ds(off, m), :].astype(jnp.bfloat16)
            acc = acc + jnp.dot(lhs, w_ref[t], preferred_element_type=jnp.float32)
            t += 1
    o_ref[...] = jnp.maximum(acc + b_ref[...], 0.0).astype(o_ref.dtype)


def _rpn_fused_kernel(x_ref, wc_ref, bc_ref, wh_ref, bh_ref, o_ref, *, wp):
    """Fused RPN for one image: 3x3 conv + ReLU, then 1x1 [objectness | deltas] heads.

    x_ref : (ROWS_PAD, F) f32   flattened, zero-padded backbone feature map
    wc_ref: (9, F, R)     bf16  ; bc_ref: (1, R)   f32
    wh_ref: (R, 128)      bf16  ; bh_ref: (1, 128) f32   ([obj | dlt | zero-pad])
    o_ref : (ANCHORS, 128) f32  lane-dense output slab
    """
    m = o_ref.shape[0]
    r = wc_ref.shape[2]
    acc = jnp.zeros((m, r), jnp.float32)
    t = 0
    for dy in range(3):
        for dx in range(3):
            off = dy * wp + dx
            lhs = x_ref[pl.ds(off, m), :].astype(jnp.bfloat16)
            acc = acc + jnp.dot(lhs, wc_ref[t], preferred_element_type=jnp.float32)
            t += 1
    rpn = jnp.maximum(acc + bc_ref[...], 0.0).astype(jnp.bfloat16)   # stays in VMEM
    heads = jnp.dot(rpn, wh_ref[...], preferred_element_type=jnp.float32) + bh_ref[...]
    o_ref[...] = heads.astype(o_ref.dtype)


def _roi_fused_kernel(x_ref, w1_ref, b1_ref, wh_ref, bh_ref, o_ref):
    """Fused ROI head: fc1 + ReLU, then [cls | box] heads, all proposals at once.

    x_ref : (NK, F) bf16 ; w1_ref: (F, H) bf16 ; b1_ref: (1, H) f32
    wh_ref: (H, 128) bf16 ; bh_ref: (1, 128) f32 ; o_ref: (NK, 128) f32
    """
    h = jnp.dot(x_ref[...], w1_ref[...], preferred_element_type=jnp.float32) + b1_ref[...]
    h = jnp.maximum(h, 0.0).astype(jnp.bfloat16)
    out = jnp.dot(h, wh_ref[...], preferred_element_type=jnp.float32) + bh_ref[...]
    o_ref[...] = out.astype(o_ref.dtype)


# -----------------------------------------------------------------------------
# GeneralizedRCNN (inference path)
# -----------------------------------------------------------------------------

class GeneralizedRCNNPallas:
    # Detectron2-style defaults (BGR means, unit std)
    PIXEL_MEAN = (103.53, 116.28, 123.675)
    PIXEL_STD = (1.0, 1.0, 1.0)

    def __init__(self, key, in_ch=3, feat_ch=32, rpn_ch=32, num_anchors=3,
                 num_classes=5, hidden=64, topk=8):
        self.in_ch = in_ch
        self.feat_ch = feat_ch
        self.rpn_ch = rpn_ch
        self.num_anchors = num_anchors
        self.num_classes = num_classes
        self.hidden = hidden
        self.topk = topk
        self.anchor_sizes = jnp.array([4.0, 8.0, 16.0], dtype=jnp.float32)

        ks = jax.random.split(key, 8)
        s = 0.01
        w_bb = s * jax.random.normal(ks[0], (9, in_ch, feat_ch), jnp.float32)
        b_bb = jnp.zeros((feat_ch,), jnp.float32)
        w_rpn = s * jax.random.normal(ks[1], (9, feat_ch, rpn_ch), jnp.float32)
        b_rpn = jnp.zeros((rpn_ch,), jnp.float32)
        w_obj = s * jax.random.normal(ks[2], (rpn_ch, num_anchors), jnp.float32)
        b_obj = jnp.zeros((num_anchors,), jnp.float32)
        w_dlt = s * jax.random.normal(ks[3], (rpn_ch, 4 * num_anchors), jnp.float32)
        b_dlt = jnp.zeros((4 * num_anchors,), jnp.float32)
        w_fc1 = s * jax.random.normal(ks[4], (feat_ch, hidden), jnp.float32)
        b_fc1 = jnp.zeros((hidden,), jnp.float32)
        w_cls = s * jax.random.normal(ks[5], (hidden, num_classes + 1), jnp.float32)
        b_cls = jnp.zeros((num_classes + 1,), jnp.float32)
        w_box = s * jax.random.normal(ks[6], (hidden, 4 * num_classes), jnp.float32)
        b_box = jnp.zeros((4 * num_classes,), jnp.float32)

        self.pixel_mean = jnp.array(self.PIXEL_MEAN, jnp.float32)
        self.pixel_std = jnp.array(self.PIXEL_STD, jnp.float32)
        inv_std = 1.0 / self.pixel_std

        # ---- fold (x - mean) / std into the first conv (exact: input is mean-padded) ----
        self.w_bb_k = (w_bb * inv_std[None, :, None]).astype(jnp.bfloat16)
        self.b_bb_k = (b_bb - jnp.einsum("tcf,c->f", w_bb, self.pixel_mean * inv_std)
                       ).reshape(1, feat_ch).astype(jnp.float32)

        # ---- fused RPN weights; heads concatenated + zero-padded to 128 lanes ----
        self.w_rpn_k = w_rpn.astype(jnp.bfloat16)
        self.b_rpn_k = b_rpn.reshape(1, rpn_ch)
        wh = jnp.concatenate([w_obj, w_dlt], axis=1)                       # (R, A + 4A)
        self.w_rpnhead_k = jnp.pad(wh, ((0, 0), (0, HEAD_PAD - wh.shape[1]))).astype(jnp.bfloat16)
        bh = jnp.concatenate([b_obj, b_dlt])
        self.b_rpnhead_k = jnp.pad(bh, (0, HEAD_PAD - bh.shape[0])).reshape(1, HEAD_PAD)

        # ---- fused ROI-head weights; cls/box concatenated + zero-padded to 128 lanes ----
        self.w_fc1_k = w_fc1.astype(jnp.bfloat16)
        self.b_fc1_k = b_fc1.reshape(1, hidden)
        wr = jnp.concatenate([w_cls, w_box], axis=1)                       # (H, (C+1) + 4C)
        self.w_roihead_k = jnp.pad(wr, ((0, 0), (0, HEAD_PAD - wr.shape[1]))).astype(jnp.bfloat16)
        br = jnp.concatenate([b_cls, b_box])
        self.b_roihead_k = jnp.pad(br, (0, HEAD_PAD - br.shape[0])).reshape(1, HEAD_PAD)

    # ---- helpers ---------------------------------------------------------------
    @staticmethod
    def _flatten_padded(xpad):
        """(n, Hp, Wp, C) -> flat (n, ROWS_PAD, C); pad rows so every tap slice is in-bounds."""
        n, hp, wp, c = xpad.shape
        rows = hp * wp
        rows_pad = _round_up(rows + 2, 8)      # max tap offset = 2*Wp + 2; anchors = H*Wp
        flat = xpad.reshape(n, rows, c)
        return jnp.pad(flat, ((0, 0), (0, rows_pad - rows), (0, 0))), rows_pad

    # ---- backbone (normalize folded in) -----------------------------------------
    def backbone(self, images_nchw):
        n, c, h, w = images_nchw.shape
        hp, wp = h + 2, w + 2
        x = jnp.transpose(images_nchw, (0, 2, 3, 1)).astype(jnp.float32)   # NCHW -> NHWC
        # TODO(synk): ImageList.from_tensors size-divisibility padding is skipped (fixed sizes).
        # Pad the *raw* image border with pixel_mean so the folded normalization is exact.
        xpad = jnp.broadcast_to(self.pixel_mean, (n, hp, wp, c)).astype(jnp.float32)
        xpad = xpad.at[:, 1:h + 1, 1:w + 1, :].set(x)
        xflat, rows_pad = self._flatten_padded(xpad)
        anchors = h * wp                                                    # output rows / image

        feats_flat = pl.pallas_call(
            functools.partial(_backbone_conv_kernel, wp=wp),
            out_shape=jax.ShapeDtypeStruct((n, anchors, self.feat_ch), jnp.float32),
            grid=(n,),
            in_specs=[
                pl.BlockSpec((None, rows_pad, c), lambda b: (b, 0, 0)),
                pl.BlockSpec((9, c, self.feat_ch), lambda b: (0, 0, 0)),
                pl.BlockSpec((1, self.feat_ch), lambda b: (0, 0)),
            ],
            out_specs=pl.BlockSpec((None, anchors, self.feat_ch), lambda b: (b, 0, 0)),
            compiler_params=pltpu.CompilerParams(dimension_semantics=("parallel",)),
        )(xflat, self.w_bb_k, self.b_bb_k)

        # drop the garbage columns (anchor rows with x >= W)
        feats = feats_flat.reshape(n, h, wp, self.feat_ch)[:, :, :w, :]
        return feats                                                        # (n, H, W, F) f32

    # ---- proposal generator (fused RPN) ------------------------------------------
    def _anchors(self, h, w):
        ys, xs = jnp.meshgrid(jnp.arange(h, dtype=jnp.float32),
                              jnp.arange(w, dtype=jnp.float32), indexing="ij")
        cx = (xs + 0.5)[..., None] * jnp.ones((self.num_anchors,))
        cy = (ys + 0.5)[..., None] * jnp.ones((self.num_anchors,))
        aw = jnp.broadcast_to(self.anchor_sizes, (h, w, self.num_anchors))
        ah = aw
        return jnp.stack([cx, cy, aw, ah], axis=-1).reshape(h * w * self.num_anchors, 4)

    def proposal_generator(self, feats):
        n, h, w, f = feats.shape
        hp, wp = h + 2, w + 2
        fpad = jnp.zeros((n, hp, wp, f), jnp.float32).at[:, 1:h + 1, 1:w + 1, :].set(feats)
        fflat, rows_pad = self._flatten_padded(fpad)
        anchor_rows = h * wp

        heads = pl.pallas_call(
            functools.partial(_rpn_fused_kernel, wp=wp),
            out_shape=jax.ShapeDtypeStruct((n, anchor_rows, HEAD_PAD), jnp.float32),
            grid=(n,),
            in_specs=[
                pl.BlockSpec((None, rows_pad, f), lambda b: (b, 0, 0)),
                pl.BlockSpec((9, f, self.rpn_ch), lambda b: (0, 0, 0)),
                pl.BlockSpec((1, self.rpn_ch), lambda b: (0, 0)),
                pl.BlockSpec((self.rpn_ch, HEAD_PAD), lambda b: (0, 0)),
                pl.BlockSpec((1, HEAD_PAD), lambda b: (0, 0)),
            ],
            out_specs=pl.BlockSpec((None, anchor_rows, HEAD_PAD), lambda b: (b, 0, 0)),
            compiler_params=pltpu.CompilerParams(dimension_semantics=("parallel",)),
        )(fflat, self.w_rpn_k, self.b_rpn_k, self.w_rpnhead_k, self.b_rpnhead_k)

        heads = heads.reshape(n, h, wp, HEAD_PAD)[:, :, :w, :]              # (n, H, W, 128)
        a = self.num_anchors
        obj = heads[..., :a].reshape(n, h * w * a)                          # (n, HWA)
        dlt = heads[..., a:a + 4 * a].reshape(n, h * w, a, 4).reshape(n, h * w * a, 4)
        anchors = self._anchors(h, w)                                       # (HWA, 4) cxcywh

        # decode deltas (dx, dy, dw, dh) -> boxes x1y1x2y2
        cx = anchors[None, :, 0] + dlt[..., 0] * anchors[None, :, 2]
        cy = anchors[None, :, 1] + dlt[..., 1] * anchors[None, :, 3]
        bw = anchors[None, :, 2] * jnp.exp(jnp.clip(dlt[..., 2], -4.0, 4.0))
        bh = anchors[None, :, 3] * jnp.exp(jnp.clip(dlt[..., 3], -4.0, 4.0))
        boxes = jnp.stack([cx - bw / 2, cy - bh / 2, cx + bw / 2, cy + bh / 2], axis=-1)
        boxes = jnp.clip(boxes, 0.0, jnp.array([w, h, w, h], jnp.float32))

        # per-image top-K proposals by objectness
        # TODO(synk): real RPN applies NMS between top-k selection and the ROI heads.
        scores, idx = jax.lax.top_k(obj, self.topk)                         # (n, K)
        prop_boxes = jnp.take_along_axis(boxes, idx[..., None], axis=1)     # (n, K, 4)
        return prop_boxes, scores

    # ---- roi_heads (fused) --------------------------------------------------------
    def roi_heads(self, feats, prop_boxes):
        n, h, w, f = feats.shape
        k = prop_boxes.shape[1]
        # ROI feature = feature vector at the proposal-box center cell
        # TODO(synk): full ROIAlign bilinear pooling is replaced by center-cell sampling.
        ctr_x = jnp.clip(((prop_boxes[..., 0] + prop_boxes[..., 2]) / 2).astype(jnp.int32), 0, w - 1)
        ctr_y = jnp.clip(((prop_boxes[..., 1] + prop_boxes[..., 3]) / 2).astype(jnp.int32), 0, h - 1)
        flat = feats.reshape(n, h * w, f)
        cell = ctr_y * w + ctr_x                                            # (n, K)
        roi_feat = jnp.take_along_axis(flat, cell[..., None], axis=1)       # (n, K, F)
        roi_feat = roi_feat.reshape(n * k, f).astype(jnp.bfloat16)
        m = n * k                                                           # no padding to 128 rows

        out = pl.pallas_call(
            _roi_fused_kernel,
            out_shape=jax.ShapeDtypeStruct((m, HEAD_PAD), jnp.float32),
            grid=(1,),
            in_specs=[
                pl.BlockSpec((m, f), lambda i: (0, 0)),
                pl.BlockSpec((f, self.hidden), lambda i: (0, 0)),
                pl.BlockSpec((1, self.hidden), lambda i: (0, 0)),
                pl.BlockSpec((self.hidden, HEAD_PAD), lambda i: (0, 0)),
                pl.BlockSpec((1, HEAD_PAD), lambda i: (0, 0)),
            ],
            out_specs=pl.BlockSpec((m, HEAD_PAD), lambda i: (0, 0)),
            compiler_params=pltpu.CompilerParams(dimension_semantics=("arbitrary",)),
        )(roi_feat, self.w_fc1_k, self.b_fc1_k, self.w_roihead_k, self.b_roihead_k)

        nc = self.num_classes
        cls_logits = out[:, :nc + 1]                                        # (NK, C+1)
        box_deltas = out[:, nc + 1:nc + 1 + 4 * nc]                         # (NK, 4C)

        probs = jax.nn.softmax(cls_logits, axis=-1)
        pred_cls = jnp.argmax(probs[:, :nc], axis=-1)                       # (NK,)
        scores = jnp.take_along_axis(probs, pred_cls[:, None], axis=1)[:, 0]

        # apply class-specific deltas to the proposal boxes
        box_deltas = box_deltas.reshape(m, nc, 4)
        sel = jnp.take_along_axis(box_deltas, pred_cls[:, None, None], axis=1)[:, 0]
        pb = prop_boxes.reshape(m, 4)
        pw = pb[:, 2] - pb[:, 0]
        ph = pb[:, 3] - pb[:, 1]
        pcx = pb[:, 0] + 0.5 * pw
        pcy = pb[:, 1] + 0.5 * ph
        ncx = pcx + sel[:, 0] * pw
        ncy = pcy + sel[:, 1] * ph
        nw = pw * jnp.exp(jnp.clip(sel[:, 2], -4.0, 4.0))
        nh = ph * jnp.exp(jnp.clip(sel[:, 3], -4.0, 4.0))
        pred_boxes = jnp.stack([ncx - nw / 2, ncy - nh / 2, ncx + nw / 2, ncy + nh / 2], axis=-1)
        pred_boxes = jnp.clip(pred_boxes, 0.0, jnp.array([w, h, w, h], jnp.float32))
        return (pred_boxes.reshape(n, k, 4),
                scores.reshape(n, k),
                pred_cls.reshape(n, k))

    # ---- _postprocess ------------------------------------------------------------
    @staticmethod
    def _postprocess(pred_boxes, image_h, image_w, out_h, out_w):
        sx = out_w / image_w
        sy = out_h / image_h
        scale = jnp.array([sx, sy, sx, sy], jnp.float32)
        return pred_boxes * scale

    # ---- inference (forward, eval mode) --------------------------------------------
    def inference(self, images_nchw, out_h=None, out_w=None):
        n, c, h, w = images_nchw.shape
        out_h = h if out_h is None else out_h
        out_w = w if out_w is None else out_w
        # preprocess_image (normalization) is folded into the backbone conv weights.
        feats = self.backbone(images_nchw)
        prop_boxes, _ = self.proposal_generator(feats)
        pred_boxes, scores, pred_classes = self.roi_heads(feats, prop_boxes)
        pred_boxes = self._postprocess(pred_boxes, h, w, out_h, out_w)
        return {"pred_boxes": pred_boxes, "scores": scores, "pred_classes": pred_classes}


# -----------------------------------------------------------------------------
# main
# -----------------------------------------------------------------------------

if __name__ == "__main__":
    key = jax.random.PRNGKey(0)
    k_model, k_img = jax.random.split(key)

    # batched_inputs: 2 images, 3 channels (matches pixel_mean/std length), 16x16 — NCHW.
    images = jax.random.uniform(k_img, (2, 3, 16, 16), jnp.float32, 0.0, 255.0)

    model = GeneralizedRCNNPallas(k_model)
    inference = jax.jit(model.inference)          # whole-graph compile; glue ops fuse in XLA
    results = inference(images)
    jax.block_until_ready(results)

    assert results["pred_boxes"].shape == (2, 8, 4)
    assert results["scores"].shape == (2, 8)
    assert results["pred_classes"].shape == (2, 8)
    assert bool(jnp.all(jnp.isfinite(results["pred_boxes"])))
    assert bool(jnp.all(jnp.isfinite(results["scores"])))
    print("KERNEL_OK")
</pallas_src>

<mosaic_0001>
module attributes {stable_mosaic.version = 11 : i64} {
  func.func @_backbone_conv_kernel(%arg0: i32, %arg1: memref<1x328x3xf32, #tpu.memory_space<vmem>>, %arg2: memref<9x3x32xbf16, #tpu.memory_space<vmem>>, %arg3: memref<1x32xf32, #tpu.memory_space<vmem>>, %arg4: memref<1x288x32xf32, #tpu.memory_space<vmem>>) attributes {dimension_semantics = [#tpu.dimension_semantics<parallel>], iteration_bounds = array<i64: 2>, scalar_prefetch = 0 : i64, scratch_operands = 0 : i64, tpu.core_type = #tpu.core_type<tc>, window_params = [{transform_indices = @transform_0, window_bounds = array<i64: 1, 328, 3>}, {pipeline_mode = #tpu.pipeline_mode<synchronous>, transform_indices = @transform_1, window_bounds = array<i64: 9, 3, 32>}, {pipeline_mode = #tpu.pipeline_mode<synchronous>, transform_indices = @transform_2, window_bounds = array<i64: 1, 32>}, {transform_indices = @transform_3, window_bounds = array<i64: 1, 288, 32>}]} {
    %cst = arith.constant 0.000000e+00 : f32
    %0 = vector.broadcast %cst : f32 to vector<288x32xf32>
    %c0 = arith.constant 0 : index
    %c0_0 = arith.constant 0 : index
    %c0_1 = arith.constant 0 : index
    %1 = vector.load %arg1[%c0, %c0_0, %c0_1] : memref<1x328x3xf32, #tpu.memory_space<vmem>>, vector<1x288x3xf32>
    %2 = vector.shape_cast %1 : vector<1x288x3xf32> to vector<288x3xf32>
    %3 = arith.truncf %2 : vector<288x3xf32> to vector<288x3xbf16>
    %c0_2 = arith.constant 0 : index
    %c0_3 = arith.constant 0 : index
    %c0_4 = arith.constant 0 : index
    %4 = vector.load %arg2[%c0_2, %c0_3, %c0_4] : memref<9x3x32xbf16, #tpu.memory_space<vmem>>, vector<1x3x32xbf16>
    %5 = vector.shape_cast %4 : vector<1x3x32xbf16> to vector<3x32xbf16>
    %cst_5 = arith.constant dense<0.000000e+00> : vector<288x32xf32>
    %6 = tpu.matmul %3, %5, %cst_5 {dimension_numbers = #tpu.dot_dimension_numbers<[1], [0], [0], [1], [0, 0, 1, 1], [], []>} : vector<288x3xbf16>, vector<3x32xbf16>, vector<288x32xf32> -> vector<288x32xf32>
    %7 = arith.addf %0, %6 : vector<288x32xf32>
    %c0_6 = arith.constant 0 : index
    %c1 = arith.constant 1 : index
    %c0_7 = arith.constant 0 : index
    %8 = vector.load %arg1[%c0_6, %c1, %c0_7] : memref<1x328x3xf32, #tpu.memory_space<vmem>>, vector<1x288x3xf32>
    %9 = vector.shape_cast %8 : vector<1x288x3xf32> to vector<288x3xf32>
    %10 = arith.truncf %9 : vector<288x3xf32> to vector<288x3xbf16>
    %c1_8 = arith.constant 1 : index
    %c0_9 = arith.constant 0 : index
    %c0_10 = arith.constant 0 : index
    %11 = vector.load %arg2[%c1_8, %c0_9, %c0_10] : memref<9x3x32xbf16, #tpu.memory_space<vmem>>, vector<1x3x32xbf16>
    %12 = vector.shape_cast %11 : vector<1x3x32xbf16> to vector<3x32xbf16>
    %cst_11 = arith.constant dense<0.000000e+00> : vector<288x32xf32>
    %13 = tpu.matmul %10, %12, %cst_11 {dimension_numbers = #tpu.dot_dimension_numbers<[1], [0], [0], [1], [0, 0, 1, 1], [], []>} : vector<288x3xbf16>, vector<3x32xbf16>, vector<288x32xf32> -> vector<288x32xf32>
    %14 = arith.addf %7, %13 : vector<288x32xf32>
    %c0_12 = arith.constant 0 : index
    %c2 = arith.constant 2 : index
    %c0_13 = arith.constant 0 : index
    %15 = vector.load %arg1[%c0_12, %c2, %c0_13] : memref<1x328x3xf32, #tpu.memory_space<vmem>>, vector<1x288x3xf32>
    %16 = vector.shape_cast %15 : vector<1x288x3xf32> to vector<288x3xf32>
    %17 = arith.truncf %16 : vector<288x3xf32> to vector<288x3xbf16>
    %c2_14 = arith.constant 2 : index
    %c0_15 = arith.constant 0 : index
    %c0_16 = arith.constant 0 : index
    %18 = vector.load %arg2[%c2_14, %c0_15, %c0_16] : memref<9x3x32xbf16, #tpu.memory_space<vmem>>, vector<1x3x32xbf16>
    %19 = vector.shape_cast %18 : vector<1x3x32xbf16> to vector<3x32xbf16>
    %cst_17 = arith.constant dense<0.000000e+00> : vector<288x32xf32>
    %20 = tpu.matmul %17, %19, %cst_17 {dimension_numbers = #tpu.dot_dimension_numbers<[1], [0], [0], [1], [0, 0, 1, 1], [], []>} : vector<288x3xbf16>, vector<3x32xbf16>, vector<288x32xf32> -> vector<288x32xf32>
    %21 = arith.addf %14, %20 : vector<288x32xf32>
    %c0_18 = arith.constant 0 : index
    %c18 = arith.constant 18 : index
    %c0_19 = arith.constant 0 : index
    %22 = vector.load %arg1[%c0_18, %c18, %c0_19] : memref<1x328x3xf32, #tpu.memory_space<vmem>>, vector<1x288x3xf32>
    %23 = vector.shape_cast %22 : vector<1x288x3xf32> to vector<288x3xf32>
    %24 = arith.truncf %23 : vector<288x3xf32> to vector<288x3xbf16>
    %c3 = arith.constant 3 : index
    %c0_20 = arith.constant 0 : index
    %c0_21 = arith.constant 0 : index
    %25 = vector.load %arg2[%c3, %c0_20, %c0_21] : memref<9x3x32xbf16, #tpu.memory_space<vmem>>, vector<1x3x32xbf16>
    %26 = vector.shape_cast %25 : vector<1x3x32xbf16> to vector<3x32xbf16>
    %cst_22 = arith.constant dense<0.000000e+00> : vector<288x32xf32>
    %27 = tpu.matmul %24, %26, %cst_22 {dimension_numbers = #tpu.dot_dimension_numbers<[1], [0], [0], [1], [0, 0, 1, 1], [], []>} : vector<288x3xbf16>, vector<3x32xbf16>, vector<288x32xf32> -> vector<288x32xf32>
    %28 = arith.addf %21, %27 : vector<288x32xf32>
    %c0_23 = arith.constant 0 : index
    %c19 = arith.constant 19 : index
    %c0_24 = arith.constant 0 : index
    %29 = vector.load %arg1[%c0_23, %c19, %c0_24] : memref<1x328x3xf32, #tpu.memory_space<vmem>>, vector<1x288x3xf32>
    %30 = vector.shape_cast %29 : vector<1x288x3xf32> to vector<288x3xf32>
    %31 = arith.truncf %30 : vector<288x3xf32> to vector<288x3xbf16>
    %c4 = arith.constant 4 : index
    %c0_25 = arith.constant 0 : index
    %c0_26 = arith.constant 0 : index
    %32 = vector.load %arg2[%c4, %c0_25, %c0_26] : memref<9x3x32xbf16, #tpu.memory_space<vmem>>, vector<1x3x32xbf16>
    %33 = vector.shape_cast %32 : vector<1x3x32xbf16> to vector<3x32xbf16>
    %cst_27 = arith.constant dense<0.000000e+00> : vector<288x32xf32>
    %34 = tpu.matmul %31, %33, %cst_27 {dimension_numbers = #tpu.dot_dimension_numbers<[1], [0], [0], [1], [0, 0, 1, 1], [], []>} : vector<288x3xbf16>, vector<3x32xbf16>, vector<288x32xf32> -> vector<288x32xf32>
    %35 = arith.addf %28, %34 : vector<288x32xf32>
    %c0_28 = arith.constant 0 : index
    %c20 = arith.constant 20 : index
    %c0_29 = arith.constant 0 : index
    %36 = vector.load %arg1[%c0_28, %c20, %c0_29] : memref<1x328x3xf32, #tpu.memory_space<vmem>>, vector<1x288x3xf32>
    %37 = vector.shape_cast %36 : vector<1x288x3xf32> to vector<288x3xf32>
    %38 = arith.truncf %37 : vector<288x3xf32> to vector<288x3xbf16>
    %c5 = arith.constant 5 : index
    %c0_30 = arith.constant 0 : index
    %c0_31 = arith.constant 0 : index
    %39 = vector.load %arg2[%c5, %c0_30, %c0_31] : memref<9x3x32xbf16, #tpu.memory_space<vmem>>, vector<1x3x32xbf16>
    %40 = vector.shape_cast %39 : vector<1x3x32xbf16> to vector<3x32xbf16>
    %cst_32 = arith.constant dense<0.000000e+00> : vector<288x32xf32>
    %41 = tpu.matmul %38, %40, %cst_32 {dimension_numbers = #tpu.dot_dimension_numbers<[1], [0], [0], [1], [0, 0, 1, 1], [], []>} : vector<288x3xbf16>, vector<3x32xbf16>, vector<288x32xf32> -> vector<288x32xf32>
    %42 = arith.addf %35, %41 : vector<288x32xf32>
    %c0_33 = arith.constant 0 : index
    %c36 = arith.constant 36 : index
    %c0_34 = arith.constant 0 : index
    %43 = vector.load %arg1[%c0_33, %c36, %c0_34] : memref<1x328x3xf32, #tpu.memory_space<vmem>>, vector<1x288x3xf32>
    %44 = vector.shape_cast %43 : vector<1x288x3xf32> to vector<288x3xf32>
    %45 = arith.truncf %44 : vector<288x3xf32> to vector<288x3xbf16>
    %c6 = arith.constant 6 : index
    %c0_35 = arith.constant 0 : index
    %c0_36 = arith.constant 0 : index
    %46 = vector.load %arg2[%c6, %c0_35, %c0_36] : memref<9x3x32xbf16, #tpu.memory_space<vmem>>, vector<1x3x32xbf16>
    %47 = vector.shape_cast %46 : vector<1x3x32xbf16> to vector<3x32xbf16>
    %cst_37 = arith.constant dense<0.000000e+00> : vector<288x32xf32>
    %48 = tpu.matmul %45, %47, %cst_37 {dimension_numbers = #tpu.dot_dimension_numbers<[1], [0], [0], [1], [0, 0, 1, 1], [], []>} : vector<288x3xbf16>, vector<3x32xbf16>, vector<288x32xf32> -> vector<288x32xf32>
    %49 = arith.addf %42, %48 : vector<288x32xf32>
    %c0_38 = arith.constant 0 : index
    %c37 = arith.constant 37 : index
    %c0_39 = arith.constant 0 : index
    %50 = vector.load %arg1[%c0_38, %c37, %c0_39] : memref<1x328x3xf32, #tpu.memory_space<vmem>>, vector<1x288x3xf32>
    %51 = vector.shape_cast %50 : vector<1x288x3xf32> to vector<288x3xf32>
    %52 = arith.truncf %51 : vector<288x3xf32> to vector<288x3xbf16>
    %c7 = arith.constant 7 : index
    %c0_40 = arith.constant 0 : index
    %c0_41 = arith.constant 0 : index
    %53 = vector.load %arg2[%c7, %c0_40, %c0_41] : memref<9x3x32xbf16, #tpu.memory_space<vmem>>, vector<1x3x32xbf16>
    %54 = vector.shape_cast %53 : vector<1x3x32xbf16> to vector<3x32xbf16>
    %cst_42 = arith.constant dense<0.000000e+00> : vector<288x32xf32>
    %55 = tpu.matmul %52, %54, %cst_42 {dimension_numbers = #tpu.dot_dimension_numbers<[1], [0], [0], [1], [0, 0, 1, 1], [], []>} : vector<288x3xbf16>, vector<3x32xbf16>, vector<288x32xf32> -> vector<288x32xf32>
    %56 = arith.addf %49, %55 : vector<288x32xf32>
    %c0_43 = arith.constant 0 : index
    %c38 = arith.constant 38 : index
    %c0_44 = arith.constant 0 : index
    %57 = vector.load %arg1[%c0_43, %c38, %c0_44] : memref<1x328x3xf32, #tpu.memory_space<vmem>>, vector<1x288x3xf32>
    %58 = vector.shape_cast %57 : vector<1x288x3xf32> to vector<288x3xf32>
    %59 = arith.truncf %58 : vector<288x3xf32> to vector<288x3xbf16>
    %c8 = arith.constant 8 : index
    %c0_45 = arith.constant 0 : index
    %c0_46 = arith.constant 0 : index
    %60 = vector.load %arg2[%c8, %c0_45, %c0_46] : memref<9x3x32xbf16, #tpu.memory_space<vmem>>, vector<1x3x32xbf16>
    %61 = vector.shape_cast %60 : vector<1x3x32xbf16> to vector<3x32xbf16>
    %cst_47 = arith.constant dense<0.000000e+00> : vector<288x32xf32>
    %62 = tpu.matmul %59, %61, %cst_47 {dimension_numbers = #tpu.dot_dimension_numbers<[1], [0], [0], [1], [0, 0, 1, 1], [], []>} : vector<288x3xbf16>, vector<3x32xbf16>, vector<288x32xf32> -> vector<288x32xf32>
    %63 = arith.addf %56, %62 : vector<288x32xf32>
    %c0_48 = arith.constant 0 : index
    %c0_49 = arith.constant 0 : index
    %64 = vector.load %arg3[%c0_48, %c0_49] : memref<1x32xf32, #tpu.memory_space<vmem>>, vector<1x32xf32>
    %65 = vector.broadcast %64 : vector<1x32xf32> to vector<288x32xf32>
    %66 = arith.addf %63, %65 : vector<288x32xf32>
    %cst_50 = arith.constant 0.000000e+00 : f32
    %67 = vector.broadcast %cst_50 : f32 to vector<288x32xf32>
    %68 = arith.maximumf %66, %67 : vector<288x32xf32>
    %c0_51 = arith.constant 0 : index
    %c0_52 = arith.constant 0 : index
    %c0_53 = arith.constant 0 : index
    %69 = vector.load %arg4[%c0_51, %c0_52, %c0_53] : memref<1x288x32xf32, #tpu.memory_space<vmem>>, vector<1x288x32xf32>
    %70 = vector.shape_cast %69 : vector<1x288x32xf32> to vector<288x32xf32>
    %71 = vector.shape_cast %68 : vector<288x32xf32> to vector<1x288x32xf32>
    tpu.vector_store %arg4[%c0_51, %c0_52, %c0_53], %71 {strides = array<i32>} : memref<1x288x32xf32, #tpu.memory_space<vmem>>, vector<1x288x32xf32>,
    return
  }
  func.func @transform_0(%arg0: i32) -> (i32, i32, i32) {
    %c0_i32 = arith.constant 0 : i32
    %c0_i32_0 = arith.constant 0 : i32
    %c0_i32_1 = arith.constant 0 : i32
    return %arg0, %c0_i32, %c0_i32_0 : i32, i32, i32
  }
  func.func @transform_1(%arg0: i32) -> (i32, i32, i32) {
    %c0_i32 = arith.constant 0 : i32
    %c0_i32_0 = arith.constant 0 : i32
    %c0_i32_1 = arith.constant 0 : i32
    %c0_i32_2 = arith.constant 0 : i32
    return %c0_i32, %c0_i32_0, %c0_i32_1 : i32, i32, i32
  }
  func.func @transform_2(%arg0: i32) -> (i32, i32) {
    %c0_i32 = arith.constant 0 : i32
    %c0_i32_0 = arith.constant 0 : i32
    %c0_i32_1 = arith.constant 0 : i32
    return %c0_i32, %c0_i32_0 : i32, i32
  }
  func.func @transform_3(%arg0: i32) -> (i32, i32, i32) {
    %c0_i32 = arith.constant 0 : i32
    %c0_i32_0 = arith.constant 0 : i32
    %c0_i32_1 = arith.constant 0 : i32
    return %arg0, %c0_i32, %c0_i32_0 : i32, i32, i32
  }
}

module attributes {stable_mosaic.version = 11 : i64} {
  func.func @_rpn_fused_kernel(%arg0: i32, %arg1: memref<1x328x32xf32, #tpu.memory_space<vmem>>, %arg2: memref<9x32x32xbf16, #tpu.memory_space<vmem>>, %arg3: memref<1x32xf32, #tpu.memory_space<vmem>>, %arg4: memref<32x128xbf16, #tpu.memory_space<vmem>>, %arg5: memref<1x128xf32, #tpu.memory_space<vmem>>, %arg6: memref<1x288x128xf32, #tpu.memory_space<vmem>>) attributes {dimension_semantics = [#tpu.dimension_semantics<parallel>], iteration_bounds = array<i64: 2>, scalar_prefetch = 0 : i64, scratch_operands = 0 : i64, tpu.core_type = #tpu.core_type<tc>, window_params = [{transform_indices = @transform_0, window_bounds = array<i64: 1, 328, 32>}, {pipeline_mode = #tpu.pipeline_mode<synchronous>, transform_indices = @transform_1, window_bounds = array<i64: 9, 32, 32>}, {pipeline_mode = #tpu.pipeline_mode<synchronous>, transform_indices = @transform_2, window_bounds = array<i64: 1, 32>}, {pipeline_mode = #tpu.pipeline_mode<synchronous>, transform_indices = @transform_3, window_bounds = array<i64: 32, 128>}, {pipeline_mode = #tpu.pipeline_mode<synchronous>, transform_indices = @transform_4, window_bounds = array<i64: 1, 128>}, {transform_indices = @transform_5, window_bounds = array<i64: 1, 288, 128>}]} {
    %cst = arith.constant 0.000000e+00 : f32
    %0 = vector.broadcast %cst : f32 to vector<288x32xf32>
    %c0 = arith.constant 0 : index
    %c0_0 = arith.constant 0 : index
    %c0_1 = arith.constant 0 : index
    %1 = vector.load %arg1[%c0, %c0_0, %c0_1] : memref<1x328x32xf32, #tpu.memory_space<vmem>>, vector<1x288x32xf32>
    %2 = vector.shape_cast %1 : vector<1x288x32xf32> to vector<288x32xf32>
    %3 = arith.truncf %2 : vector<288x32xf32> to vector<288x32xbf16>
    %c0_2 = arith.constant 0 : index
    %c0_3 = arith.constant 0 : index
    %c0_4 = arith.constant 0 : index
    %4 = vector.load %arg2[%c0_2, %c0_3, %c0_4] : memref<9x32x32xbf16, #tpu.memory_space<vmem>>, vector<1x32x32xbf16>
    %5 = vector.shape_cast %4 : vector<1x32x32xbf16> to vector<32x32xbf16>
    %cst_5 = arith.constant dense<0.000000e+00> : vector<288x32xf32>
    %6 = tpu.matmul %3, %5, %cst_5 {dimension_numbers = #tpu.dot_dimension_numbers<[1], [0], [0], [1], [0, 0, 1, 1], [], []>} : vector<288x32xbf16>, vector<32x32xbf16>, vector<288x32xf32> -> vector<288x32xf32>
    %7 = arith.addf %0, %6 : vector<288x32xf32>
    %c0_6 = arith.constant 0 : index
    %c1 = arith.constant 1 : index
    %c0_7 = arith.constant 0 : index
    %8 = vector.load %arg1[%c0_6, %c1, %c0_7] : memref<1x328x32xf32, #tpu.memory_space<vmem>>, vector<1x288x32xf32>
    %9 = vector.shape_cast %8 : vector<1x288x32xf32> to vector<288x32xf32>
    %10 = arith.truncf %9 : vector<288x32xf32> to vector<288x32xbf16>
    %c1_8 = arith.constant 1 : index
    %c0_9 = arith.constant 0 : index
    %c0_10 = arith.constant 0 : index
    %11 = vector.load %arg2[%c1_8, %c0_9, %c0_10] : memref<9x32x32xbf16, #tpu.memory_space<vmem>>, vector<1x32x32xbf16>
    %12 = vector.shape_cast %11 : vector<1x32x32xbf16> to vector<32x32xbf16>
    %cst_11 = arith.constant dense<0.000000e+00> : vector<288x32xf32>
    %13 = tpu.matmul %10, %12, %cst_11 {dimension_numbers = #tpu.dot_dimension_numbers<[1], [0], [0], [1], [0, 0, 1, 1], [], []>} : vector<288x32xbf16>, vector<32x32xbf16>, vector<288x32xf32> -> vector<288x32xf32>
    %14 = arith.addf %7, %13 : vector<288x32xf32>
    %c0_12 = arith.constant 0 : index
    %c2 = arith.constant 2 : index
    %c0_13 = arith.constant 0 : index
    %15 = vector.load %arg1[%c0_12, %c2, %c0_13] : memref<1x328x32xf32, #tpu.memory_space<vmem>>, vector<1x288x32xf32>
    %16 = vector.shape_cast %15 : vector<1x288x32xf32> to vector<288x32xf32>
    %17 = arith.truncf %16 : vector<288x32xf32> to vector<288x32xbf16>
    %c2_14 = arith.constant 2 : index
    %c0_15 = arith.constant 0 : index
    %c0_16 = arith.constant 0 : index
    %18 = vector.load %arg2[%c2_14, %c0_15, %c0_16] : memref<9x32x32xbf16, #tpu.memory_space<vmem>>, vector<1x32x32xbf16>
    %19 = vector.shape_cast %18 : vector<1x32x32xbf16> to vector<32x32xbf16>
    %cst_17 = arith.constant dense<0.000000e+00> : vector<288x32xf32>
    %20 = tpu.matmul %17, %19, %cst_17 {dimension_numbers = #tpu.dot_dimension_numbers<[1], [0], [0], [1], [0, 0, 1, 1], [], []>} : vector<288x32xbf16>, vector<32x32xbf16>, vector<288x32xf32> -> vector<288x32xf32>
    %21 = arith.addf %14, %20 : vector<288x32xf32>
    %c0_18 = arith.constant 0 : index
    %c18 = arith.constant 18 : index
    %c0_19 = arith.constant 0 : index
    %22 = vector.load %arg1[%c0_18, %c18, %c0_19] : memref<1x328x32xf32, #tpu.memory_space<vmem>>, vector<1x288x32xf32>
    %23 = vector.shape_cast %22 : vector<1x288x32xf32> to vector<288x32xf32>
    %24 = arith.truncf %23 : vector<288x32xf32> to vector<288x32xbf16>
    %c3 = arith.constant 3 : index
    %c0_20 = arith.constant 0 : index
    %c0_21 = arith.constant 0 : index
    %25 = vector.load %arg2[%c3, %c0_20, %c0_21] : memref<9x32x32xbf16, #tpu.memory_space<vmem>>, vector<1x32x32xbf16>
    %26 = vector.shape_cast %25 : vector<1x32x32xbf16> to vector<32x32xbf16>
    %cst_22 = arith.constant dense<0.000000e+00> : vector<288x32xf32>
    %27 = tpu.matmul %24, %26, %cst_22 {dimension_numbers = #tpu.dot_dimension_numbers<[1], [0], [0], [1], [0, 0, 1, 1], [], []>} : vector<288x32xbf16>, vector<32x32xbf16>, vector<288x32xf32> -> vector<288x32xf32>
    %28 = arith.addf %21, %27 : vector<288x32xf32>
    %c0_23 = arith.constant 0 : index
    %c19 = arith.constant 19 : index
    %c0_24 = arith.constant 0 : index
    %29 = vector.load %arg1[%c0_23, %c19, %c0_24] : memref<1x328x32xf32, #tpu.memory_space<vmem>>, vector<1x288x32xf32>
    %30 = vector.shape_cast %29 : vector<1x288x32xf32> to vector<288x32xf32>
    %31 = arith.truncf %30 : vector<288x32xf32> to vector<288x32xbf16>
    %c4 = arith.constant 4 : index
    %c0_25 = arith.constant 0 : index
    %c0_26 = arith.constant 0 : index
    %32 = vector.load %arg2[%c4, %c0_25, %c0_26] : memref<9x32x32xbf16, #tpu.memory_space<vmem>>, vector<1x32x32xbf16>
    %33 = vector.shape_cast %32 : vector<1x32x32xbf16> to vector<32x32xbf16>
    %cst_27 = arith.constant dense<0.000000e+00> : vector<288x32xf32>
    %34 = tpu.matmul %31, %33, %cst_27 {dimension_numbers = #tpu.dot_dimension_numbers<[1], [0], [0], [1], [0, 0, 1, 1], [], []>} : vector<288x32xbf16>, vector<32x32xbf16>, vector<288x32xf32> -> vector<288x32xf32>
    %35 = arith.addf %28, %34 : vector<288x32xf32>
    %c0_28 = arith.constant 0 : index
    %c20 = arith.constant 20 : index
    %c0_29 = arith.constant 0 : index
    %36 = vector.load %arg1[%c0_28, %c20, %c0_29] : memref<1x328x32xf32, #tpu.memory_space<vmem>>, vector<1x288x32xf32>
    %37 = vector.shape_cast %36 : vector<1x288x32xf32> to vector<288x32xf32>
    %38 = arith.truncf %37 : vector<288x32xf32> to vector<288x32xbf16>
    %c5 = arith.constant 5 : index
    %c0_30 = arith.constant 0 : index
    %c0_31 = arith.constant 0 : index
    %39 = vector.load %arg2[%c5, %c0_30, %c0_31] : memref<9x32x32xbf16, #tpu.memory_space<vmem>>, vector<1x32x32xbf16>
    %40 = vector.shape_cast %39 : vector<1x32x32xbf16> to vector<32x32xbf16>
    %cst_32 = arith.constant dense<0.000000e+00> : vector<288x32xf32>
    %41 = tpu.matmul %38, %40, %cst_32 {dimension_numbers = #tpu.dot_dimension_numbers<[1], [0], [0], [1], [0, 0, 1, 1], [], []>} : vector<288x32xbf16>, vector<32x32xbf16>, vector<288x32xf32> -> vector<288x32xf32>
    %42 = arith.addf %35, %41 : vector<288x32xf32>
    %c0_33 = arith.constant 0 : index
    %c36 = arith.constant 36 : index
    %c0_34 = arith.constant 0 : index
    %43 = vector.load %arg1[%c0_33, %c36, %c0_34] : memref<1x328x32xf32, #tpu.memory_space<vmem>>, vector<1x288x32xf32>
    %44 = vector.shape_cast %43 : vector<1x288x32xf32> to vector<288x32xf32>
    %45 = arith.truncf %44 : vector<288x32xf32> to vector<288x32xbf16>
    %c6 = arith.constant 6 : index
    %c0_35 = arith.constant 0 : index
    %c0_36 = arith.constant 0 : index
    %46 = vector.load %arg2[%c6, %c0_35, %c0_36] : memref<9x32x32xbf16, #tpu.memory_space<vmem>>, vector<1x32x32xbf16>
    %47 = vector.shape_cast %46 : vector<1x32x32xbf16> to vector<32x32xbf16>
    %cst_37 = arith.constant dense<0.000000e+00> : vector<288x32xf32>
    %48 = tpu.matmul %45, %47, %cst_37 {dimension_numbers = #tpu.dot_dimension_numbers<[1], [0], [0], [1], [0, 0, 1, 1], [], []>} : vector<288x32xbf16>, vector<32x32xbf16>, vector<288x32xf32> -> vector<288x32xf32>
    %49 = arith.addf %42, %48 : vector<288x32xf32>
    %c0_38 = arith.constant 0 : index
    %c37 = arith.constant 37 : index
    %c0_39 = arith.constant 0 : index
    %50 = vector.load %arg1[%c0_38, %c37, %c0_39] : memref<1x328x32xf32, #tpu.memory_space<vmem>>, vector<1x288x32xf32>
    %51 = vector.shape_cast %50 : vector<1x288x32xf32> to vector<288x32xf32>
    %52 = arith.truncf %51 : vector<288x32xf32> to vector<288x32xbf16>
    %c7 = arith.constant 7 : index
    %c0_40 = arith.constant 0 : index
    %c0_41 = arith.constant 0 : index
    %53 = vector.load %arg2[%c7, %c0_40, %c0_41] : memref<9x32x32xbf16, #tpu.memory_space<vmem>>, vector<1x32x32xbf16>
    %54 = vector.shape_cast %53 : vector<1x32x32xbf16> to vector<32x32xbf16>
    %cst_42 = arith.constant dense<0.000000e+00> : vector<288x32xf32>
    %55 = tpu.matmul %52, %54, %cst_42 {dimension_numbers = #tpu.dot_dimension_numbers<[1], [0], [0], [1], [0, 0, 1, 1], [], []>} : vector<288x32xbf16>, vector<32x32xbf16>, vector<288x32xf32> -> vector<288x32xf32>
    %56 = arith.addf %49, %55 : vector<288x32xf32>
    %c0_43 = arith.constant 0 : index
    %c38 = arith.constant 38 : index
    %c0_44 = arith.constant 0 : index
    %57 = vector.load %arg1[%c0_43, %c38, %c0_44] : memref<1x328x32xf32, #tpu.memory_space<vmem>>, vector<1x288x32xf32>
    %58 = vector.shape_cast %57 : vector<1x288x32xf32> to vector<288x32xf32>
    %59 = arith.truncf %58 : vector<288x32xf32> to vector<288x32xbf16>
    %c8 = arith.constant 8 : index
    %c0_45 = arith.constant 0 : index
    %c0_46 = arith.constant 0 : index
    %60 = vector.load %arg2[%c8, %c0_45, %c0_46] : memref<9x32x32xbf16, #tpu.memory_space<vmem>>, vector<1x32x32xbf16>
    %61 = vector.shape_cast %60 : vector<1x32x32xbf16> to vector<32x32xbf16>
    %cst_47 = arith.constant dense<0.000000e+00> : vector<288x32xf32>
    %62 = tpu.matmul %59, %61, %cst_47 {dimension_numbers = #tpu.dot_dimension_numbers<[1], [0], [0], [1], [0, 0, 1, 1], [], []>} : vector<288x32xbf16>, vector<32x32xbf16>, vector<288x32xf32> -> vector<288x32xf32>
    %63 = arith.addf %56, %62 : vector<288x32xf32>
    %c0_48 = arith.constant 0 : index
    %c0_49 = arith.constant 0 : index
    %64 = vector.load %arg3[%c0_48, %c0_49] : memref<1x32xf32, #tpu.memory_space<vmem>>, vector<1x32xf32>
    %65 = vector.broadcast %64 : vector<1x32xf32> to vector<288x32xf32>
    %66 = arith.addf %63, %65 : vector<288x32xf32>
    %cst_50 = arith.constant 0.000000e+00 : f32
    %67 = vector.broadcast %cst_50 : f32 to vector<288x32xf32>
    %68 = arith.maximumf %66, %67 : vector<288x32xf32>
    %69 = arith.truncf %68 : vector<288x32xf32> to vector<288x32xbf16>
    %c0_51 = arith.constant 0 : index
    %c0_52 = arith.constant 0 : index
    %70 = vector.load %arg4[%c0_51, %c0_52] : memref<32x128xbf16, #tpu.memory_space<vmem>>, vector<32x128xbf16>
    %cst_53 = arith.constant dense<0.000000e+00> : vector<288x128xf32>
    %71 = tpu.matmul %69, %70, %cst_53 {dimension_numbers = #tpu.dot_dimension_numbers<[1], [0], [0], [1], [0, 0, 1, 1], [], []>} : vector<288x32xbf16>, vector<32x128xbf16>, vector<288x128xf32> -> vector<288x128xf32>
    %c0_54 = arith.constant 0 : index
    %c0_55 = arith.constant 0 : index
    %72 = vector.load %arg5[%c0_54, %c0_55] : memref<1x128xf32, #tpu.memory_space<vmem>>, vector<1x128xf32>
    %73 = vector.broadcast %72 : vector<1x128xf32> to vector<288x128xf32>
    %74 = arith.addf %71, %73 : vector<288x128xf32>
    %c0_56 = arith.constant 0 : index
    %c0_57 = arith.constant 0 : index
    %c0_58 = arith.constant 0 : index
    %75 = vector.load %arg6[%c0_56, %c0_57, %c0_58] : memref<1x288x128xf32, #tpu.memory_space<vmem>>, vector<1x288x128xf32>
    %76 = vector.shape_cast %75 : vector<1x288x128xf32> to vector<288x128xf32>
    %77 = vector.shape_cast %74 : vector<288x128xf32> to vector<1x288x128xf32>
    tpu.vector_store %arg6[%c0_56, %c0_57, %c0_58], %77 {strides = array<i32>} : memref<1x288x128xf32, #tpu.memory_space<vmem>>, vector<1x288x128xf32>,
    return
  }
  func.func @transform_0(%arg0: i32) -> (i32, i32, i32) {
    %c0_i32 = arith.constant 0 : i32
    %c0_i32_0 = arith.constant 0 : i32
    %c0_i32_1 = arith.constant 0 : i32
    return %arg0, %c0_i32, %c0_i32_0 : i32, i32, i32
  }
  func.func @transform_1(%arg0: i32) -> (i32, i32, i32) {
    %c0_i32 = arith.constant 0 : i32
    %c0_i32_0 = arith.constant 0 : i32
    %c0_i32_1 = arith.constant 0 : i32
    %c0_i32_2 = arith.constant 0 : i32
    return %c0_i32, %c0_i32_0, %c0_i32_1 : i32, i32, i32
  }
  func.func @transform_2(%arg0: i32) -> (i32, i32) {
    %c0_i32 = arith.constant 0 : i32
    %c0_i32_0 = arith.constant 0 : i32
    %c0_i32_1 = arith.constant 0 : i32
    return %c0_i32, %c0_i32_0 : i32, i32
  }
  func.func @transform_3(%arg0: i32) -> (i32, i32) {
    %c0_i32 = arith.constant 0 : i32
    %c0_i32_0 = arith.constant 0 : i32
    %c0_i32_1 = arith.constant 0 : i32
    return %c0_i32, %c0_i32_0 : i32, i32
  }
  func.func @transform_4(%arg0: i32) -> (i32, i32) {
    %c0_i32 = arith.constant 0 : i32
    %c0_i32_0 = arith.constant 0 : i32
    %c0_i32_1 = arith.constant 0 : i32
    return %c0_i32, %c0_i32_0 : i32, i32
  }
  func.func @transform_5(%arg0: i32) -> (i32, i32, i32) {
    %c0_i32 = arith.constant 0 : i32
    %c0_i32_0 = arith.constant 0 : i32
    %c0_i32_1 = arith.constant 0 : i32
    return %arg0, %c0_i32, %c0_i32_0 : i32, i32, i32
  }
}

module attributes {stable_mosaic.version = 11 : i64} {
  func.func @_roi_fused_kernel(%arg0: i32, %arg1: memref<16x32xbf16, #tpu.memory_space<vmem>>, %arg2: memref<32x64xbf16, #tpu.memory_space<vmem>>, %arg3: memref<1x64xf32, #tpu.memory_space<vmem>>, %arg4: memref<64x128xbf16, #tpu.memory_space<vmem>>, %arg5: memref<1x128xf32, #tpu.memory_space<vmem>>, %arg6: memref<16x128xf32, #tpu.memory_space<vmem>>) attributes {dimension_semantics = [#tpu.dimension_semantics<arbitrary>], iteration_bounds = array<i64: 1>, scalar_prefetch = 0 : i64, scratch_operands = 0 : i64, tpu.core_type = #tpu.core_type<tc>, window_params = [{pipeline_mode = #tpu.pipeline_mode<synchronous>, transform_indices = @transform_0, window_bounds = array<i64: 16, 32>}, {pipeline_mode = #tpu.pipeline_mode<synchronous>, transform_indices = @transform_1, window_bounds = array<i64: 32, 64>}, {pipeline_mode = #tpu.pipeline_mode<synchronous>, transform_indices = @transform_2, window_bounds = array<i64: 1, 64>}, {pipeline_mode = #tpu.pipeline_mode<synchronous>, transform_indices = @transform_3, window_bounds = array<i64: 64, 128>}, {pipeline_mode = #tpu.pipeline_mode<synchronous>, transform_indices = @transform_4, window_bounds = array<i64: 1, 128>}, {pipeline_mode = #tpu.pipeline_mode<synchronous>, transform_indices = @transform_5, window_bounds = array<i64: 16, 128>}]} {
    %c0 = arith.constant 0 : index
    %c0_0 = arith.constant 0 : index
    %0 = vector.load %arg1[%c0, %c0_0] : memref<16x32xbf16, #tpu.memory_space<vmem>>, vector<16x32xbf16>
    %c0_1 = arith.constant 0 : index
    %c0_2 = arith.constant 0 : index
    %1 = vector.load %arg2[%c0_1, %c0_2] : memref<32x64xbf16, #tpu.memory_space<vmem>>, vector<32x64xbf16>
    %cst = arith.constant dense<0.000000e+00> : vector<16x64xf32>
    %2 = tpu.matmul %0, %1, %cst {dimension_numbers = #tpu.dot_dimension_numbers<[1], [0], [0], [1], [0, 0, 1, 1], [], []>} : vector<16x32xbf16>, vector<32x64xbf16>, vector<16x64xf32> -> vector<16x64xf32>
    %c0_3 = arith.constant 0 : index
    %c0_4 = arith.constant 0 : index
    %3 = vector.load %arg3[%c0_3, %c0_4] : memref<1x64xf32, #tpu.memory_space<vmem>>, vector<1x64xf32>
    %4 = vector.broadcast %3 : vector<1x64xf32> to vector<16x64xf32>
    %5 = arith.addf %2, %4 : vector<16x64xf32>
    %cst_5 = arith.constant 0.000000e+00 : f32
    %6 = vector.broadcast %cst_5 : f32 to vector<16x64xf32>
    %7 = arith.maximumf %5, %6 : vector<16x64xf32>
    %8 = arith.truncf %7 : vector<16x64xf32> to vector<16x64xbf16>
    %c0_6 = arith.constant 0 : index
    %c0_7 = arith.constant 0 : index
    %9 = vector.load %arg4[%c0_6, %c0_7] : memref<64x128xbf16, #tpu.memory_space<vmem>>, vector<64x128xbf16>
    %cst_8 = arith.constant dense<0.000000e+00> : vector<16x128xf32>
    %10 = tpu.matmul %8, %9, %cst_8 {dimension_numbers = #tpu.dot_dimension_numbers<[1], [0], [0], [1], [0, 0, 1, 1], [], []>} : vector<16x64xbf16>, vector<64x128xbf16>, vector<16x128xf32> -> vector<16x128xf32>
    %c0_9 = arith.constant 0 : index
    %c0_10 = arith.constant 0 : index
    %11 = vector.load %arg5[%c0_9, %c0_10] : memref<1x128xf32, #tpu.memory_space<vmem>>, vector<1x128xf32>
    %12 = vector.broadcast %11 : vector<1x128xf32> to vector<16x128xf32>
    %13 = arith.addf %10, %12 : vector<16x128xf32>
    %c0_11 = arith.constant 0 : index
    %c0_12 = arith.constant 0 : index
    %14 = vector.load %arg6[%c0_11, %c0_12] : memref<16x128xf32, #tpu.memory_space<vmem>>, vector<16x128xf32>
    tpu.vector_store %arg6[%c0_11, %c0_12], %13 {strides = array<i32>} : memref<16x128xf32, #tpu.memory_space<vmem>>, vector<16x128xf32>,
    return
  }
  func.func @transform_0(%arg0: i32) -> (i32, i32) {
    %c0_i32 = arith.constant 0 : i32
    %c0_i32_0 = arith.constant 0 : i32
    %c0_i32_1 = arith.constant 0 : i32
    return %c0_i32, %c0_i32_0 : i32, i32
  }
  func.func @transform_1(%arg0: i32) -> (i32, i32) {
    %c0_i32 = arith.constant 0 : i32
    %c0_i32_0 = arith.constant 0 : i32
    %c0_i32_1 = arith.constant 0 : i32
    return %c0_i32, %c0_i32_0 : i32, i32
  }
  func.func @transform_2(%arg0: i32) -> (i32, i32) {
    %c0_i32 = arith.constant 0 : i32
    %c0_i32_0 = arith.constant 0 : i32
    %c0_i32_1 = arith.constant 0 : i32
    return %c0_i32, %c0_i32_0 : i32, i32
  }
  func.func @transform_3(%arg0: i32) -> (i32, i32) {
    %c0_i32 = arith.constant 0 : i32
    %c0_i32_0 = arith.constant 0 : i32
    %c0_i32_1 = arith.constant 0 : i32
    return %c0_i32, %c0_i32_0 : i32, i32
  }
  func.func @transform_4(%arg0: i32) -> (i32, i32) {
    %c0_i32 = arith.constant 0 : i32
    %c0_i32_0 = arith.constant 0 : i32
    %c0_i32_1 = arith.constant 0 : i32
    return %c0_i32, %c0_i32_0 : i32, i32
  }
  func.func @transform_5(%arg0: i32) -> (i32, i32) {
    %c0_i32 = arith.constant 0 : i32
    %c0_i32_0 = arith.constant 0 : i32
    %c0_i32_1 = arith.constant 0 : i32
    return %c0_i32, %c0_i32_0 : i32, i32
  }
}

</mosaic_0001>

<llo_original>
// kernel: inference.3
$region0: #{inference.3}
  #allocation0 [shape = 'u32[]', space=smem, size = 0x4, offset = 0x4, fixed_abs, tag = 'smem constant byte address 0x4 - core index']
  #allocation1 [shape = 'u32[144,128]{1,0:T(1,128)}', space=vmem, size = 0x12000, scoped, tag = 'internal scratch']
  %s0 = inlined_call_operand.vmem [shape: f32[2,328,3], index: 0, kind: input, shape index: {}]
  %s1 = inlined_call_operand.vmem [shape: bf16[9,3,32], index: 1, kind: input, shape index: {}]
  %s2 = inlined_call_operand.vmem [shape: f32[1,32], index: 2, kind: input, shape index: {}]
  %s3 = inlined_call_operand.vmem [shape: f32[2,288,32], index: 3, kind: output, shape index: {}]
  %s4 = sld [smem:[#allocation0]]
  $region45: #{inference.3} parent=0
    _
  %s6 = ssub.s32 1, %s4
  %s7 = scalar_select 0, %s6, %s4
  loop: start=0, step=1, limit=4
  $region2: #{inference.3} parent=0 // loop_pre_header
    _
  $region3: #{inference.3} parent=0 // loop_header
    %s9 = sphi 0, %s13
    %p10 = scmp.ge.s32.totalorder %s9, 4
    %s19 = sphi 0, %s21
    %s22 = sphi 0, %s19
    %s23 = sphi 0, %s22
    %s39 = sphi 0, %s23
    %s43 = sphi 0, %s43
    %s45 = sphi 0, %s43
    %s46 = sphi 0, %s45
    %s60 = sphi 0, %s46
    %s64 = sphi 0, %s64
    %s66 = sphi 0, %s64
    %s67 = sphi 0, %s66
    %s81 = sphi 0, %s67
    %s87 = sphi 0, %s89
    %s90 = sphi 0, %s87
    %s91 = sphi 0, %s90
    %s107 = sphi 0, %s91
  $region4: #{inference.3} parent=0 // loop_header_branch
    %12 = sbr.rel (%p10) target = $region8
  $region5: #{inference.3} parent=0 // loop_body
    %s14 = ssub.s32 %s9, 1
    %s15 = ssub.s32 %s9, 2
    %s16 = sadd.s32 %s9, 1
    %s17 = ssub.s32 %s9, %s16
    %p18 = scmp.eq.s32.totalorder %s17, 0
    %s20 = sadd.s32 %s19, 1
    %s21 = scalar_select %p18, %s19, %s20
    %p24 = pneg %p18
    %p25 = scmp.eq.s32.totalorder %s9, 1
    %p26 = por %p24, %p25
    %p27 = scmp.ne.s32.totalorder %s19, %s22
    %p28 = scmp.eq.s32.totalorder %s9, 0
    %p29 = por %p27, %p28
    %p30 = scmp.ne.s32.totalorder %s19, %s22
    %p31 = scmp.eq.s32.totalorder %s14, 1
    %p32 = por %p30, %p31
    %p33 = scmp.ne.s32.totalorder %s22, %s23
    %p34 = scmp.eq.s32.totalorder %s14, 0
    %p35 = por %p33, %p34
    %p36 = scmp.ne.s32.totalorder %s22, %s23
    %p37 = scmp.eq.s32.totalorder %s15, 1
    %p38 = por %p36, %p37
    %p40 = scmp.ne.s32.totalorder %s23, %s39
    %p41 = scmp.eq.s32.totalorder %s15, 0
    %p42 = por %p40, %p41
    %s44 = sadd.s32 %s43, 1
    %p47 = scmp.eq.s32.totalorder %s9, 1
    %p48 = scmp.ne.s32.totalorder %s43, %s45
    %p49 = scmp.eq.s32.totalorder %s9, 0
    %p50 = por %p48, %p49
    %p51 = scmp.ne.s32.totalorder %s43, %s45
    %p52 = scmp.eq.s32.totalorder %s14, 1
    %p53 = por %p51, %p52
    %p54 = scmp.ne.s32.totalorder %s45, %s46
    %p55 = scmp.eq.s32.totalorder %s14, 0
    %p56 = por %p54, %p55
    %p57 = scmp.ne.s32.totalorder %s45, %s46
    %p58 = scmp.eq.s32.totalorder %s15, 1
    %p59 = por %p57, %p58
    %p61 = scmp.ne.s32.totalorder %s46, %s60
    %p62 = scmp.eq.s32.totalorder %s15, 0
    %p63 = por %p61, %p62
    %s65 = sadd.s32 %s64, 1
    %p68 = scmp.eq.s32.totalorder %s9, 1
    %p69 = scmp.ne.s32.totalorder %s64, %s66
    %p70 = scmp.eq.s32.totalorder %s9, 0
    %p71 = por %p69, %p70
    %p72 = scmp.ne.s32.totalorder %s64, %s66
    %p73 = scmp.eq.s32.totalorder %s14, 1
    %p74 = por %p72, %p73
    %p75 = scmp.ne.s32.totalorder %s66, %s67
    %p76 = scmp.eq.s32.totalorder %s14, 0
    %p77 = por %p75, %p76
    %p78 = scmp.ne.s32.totalorder %s66, %s67
    %p79 = scmp.eq.s32.totalorder %s15, 1
    %p80 = por %p78, %p79
    %p82 = scmp.ne.s32.totalorder %s67, %s81
    %p83 = scmp.eq.s32.totalorder %s15, 0
    %p84 = por %p82, %p83
    %s85 = ssub.s32 %s9, %s16
    %p86 = scmp.eq.s32.totalorder %s85, 0
    %s88 = sadd.s32 %s87, 1
    %s89 = scalar_select %p86, %s87, %s88
    %p92 = pneg %p86
    %p93 = scmp.eq.s32.totalorder %s9, 1
    %p94 = por %p92, %p93
    %p95 = scmp.ne.s32.totalorder %s87, %s90
    %p96 = scmp.eq.s32.totalorder %s9, 0
    %p97 = por %p95, %p96
    %p98 = scmp.ne.s32.totalorder %s87, %s90
    %p99 = scmp.eq.s32.totalorder %s14, 1
    %p100 = por %p98, %p99
    %p101 = scmp.ne.s32.totalorder %s90, %s91
    %p102 = scmp.eq.s32.totalorder %s14, 0
    %p103 = por %p101, %p102
    %p104 = scmp.ne.s32.totalorder %s90, %s91
    %p105 = scmp.eq.s32.totalorder %s15, 1
    %p106 = por %p104, %p105
    %p108 = scmp.ne.s32.totalorder %s91, %s107
    %p109 = scmp.eq.s32.totalorder %s15, 0
    %p110 = por %p108, %p109
    %p111 = scmp.le.s32.totalorder 1, %s9
    %p112 = scmp.lt.s32.totalorder %s9, 3
    %p113 = pnand %p111, %p112
    %p114 = pneg %p113
    // Predicated region
    $region9: #{inference.3} parent=5 // pred_check
      _
    $region10: #{inference.3} parent=5 // pred_check_branch
      %116 = sbr.rel (%p113) target = $region12
    $region11: #{inference.3} parent=5 // pred_region
      %s117 = ssub.s32 %s9, 1
      // Predicated region
      $region13: #{inference.3} parent=11 // pred_check
        %p118 = pneg %p56
      $region14: #{inference.3} parent=11 // pred_check_branch
        %120 = sbr.rel (%p118) target = $region16
      $region15: #{inference.3} parent=11 // pred_region
        _
      $region16: #{inference.3} parent=11 // pred_fallthru
        _
      // Predicated region
      $region17: #{inference.3} parent=11 // pred_check
        %p121 = pneg %p77
      $region18: #{inference.3} parent=11 // pred_check_branch
        %123 = sbr.rel (%p121) target = $region20
      $region19: #{inference.3} parent=11 // pred_region
        _
      $region20: #{inference.3} parent=11 // pred_fallthru
        _
    $region12: #{inference.3} parent=5 // pred_fallthru
      _
    %p124 = scmp.lt.s32.totalorder %s9, 2
    // Predicated region
    $region21: #{inference.3} parent=5 // pred_check
      %p125 = pneg %p124
    $region22: #{inference.3} parent=5 // pred_check_branch
      %127 = sbr.rel (%p125) target = $region24
    $region23: #{inference.3} parent=5 // pred_region
      // Predicated region
      $region25: #{inference.3} parent=23 // pred_check
        %p128 = pneg %p29
      $region26: #{inference.3} parent=23 // pred_check_branch
        %130 = sbr.rel (%p128) target = $region28
      $region27: #{inference.3} parent=23 // pred_region
        %p131 = scmp.lt.s32.totalorder %s9, 1
        %s132 = scalar_select %p131, %s9, 1
        %s133 = smul.addr %s132, 41
        %s134 = smul.addr %s133, 8
        %s135 = scalar_lea.vmem %s0, %s134
      $region28: #{inference.3} parent=23 // pred_fallthru
        _
    $region24: #{inference.3} parent=5 // pred_fallthru
      _
    %p136 = scmp.le.s32.totalorder 1, %s9
    %p137 = scmp.lt.s32.totalorder %s9, 3
    %p138 = pnand %p136, %p137
    %p139 = pneg %p138
    // Predicated region
    $region29: #{inference.3} parent=5 // pred_check
      _
    $region30: #{inference.3} parent=5 // pred_check_branch
      %141 = sbr.rel (%p138) target = $region32
    $region31: #{inference.3} parent=5 // pred_region
      %s142 = ssub.s32 %s9, 1
      %p143 = scmp.lt.s32.totalorder %s14, 1
      %s144 = scalar_select %p143, %s14, 1
      %s145 = smul.addr %s144, 41
      %s146 = smul.addr %s145, 8
      %s147 = scalar_lea.vmem %s0, %s146
      %p148 = pneg %p35
      %p149 = pneg %p32
      %p150 = pneg %p56
      %p151 = pneg %p53
      %p152 = pneg %p77
      %p153 = pneg %p74
      %p154 = pneg %p103
      %p155 = pneg %p100
      %p156 = scmp.lt.s32.totalorder %s14, 1
      %s157 = scalar_select %p156, %s14, 1
      %s158 = smul.addr %s157, 36
      %s159 = smul.addr %s158, 8
      %s160 = scalar_lea.vmem %s3, %s159
      %p161 = scmp.lt.s32.totalorder %s14, 1
      %s162 = scalar_select %p161, %s14, 1
      %s163 = smul.addr %s162, 41
      %s164 = smul.addr %s163, 8
      %s165 = scalar_lea.vmem %s0, %s164
      %p166 = scmp.lt.s32.totalorder %s14, 1
      %s167 = scalar_select %p166, %s14, 1
      %s168 = smul.addr %s167, 36
      %s169 = smul.addr %s168, 8
      %s170 = scalar_lea.vmem %s3, %s169
      %v172 = vld [vmem:[%s165] sm:$0xff]
      %v173 = vld [vmem:[%s165 + $0x8] sm:$0xff]
      %v174 = vld [vmem:[%s165 + $0x10] sm:$0xff]
      %v175 = vld [vmem:[%s165 + $0x18] sm:$0xff]
      %v176 = vld [vmem:[%s165 + $0x20] sm:$0xff]
      %v177 = vld [vmem:[%s165 + $0x28] sm:$0xff]
      %v178 = vld [vmem:[%s165 + $0x30] sm:$0xff]
      %v179 = vld [vmem:[%s165 + $0x38] sm:$0xff]
      %v180 = vld [vmem:[%s165 + $0x40] sm:$0xff]
      %v181 = vld [vmem:[%s165 + $0x48] sm:$0xff]
      %v182 = vld [vmem:[%s165 + $0x50] sm:$0xff]
      %v183 = vld [vmem:[%s165 + $0x58] sm:$0xff]
      %v184 = vld [vmem:[%s165 + $0x60] sm:$0xff]
      %v185 = vld [vmem:[%s165 + $0x68] sm:$0xff]
      %v186 = vld [vmem:[%s165 + $0x70] sm:$0xff]
      %v187 = vld [vmem:[%s165 + $0x78] sm:$0xff]
      %v188 = vld [vmem:[%s165 + $0x80] sm:$0xff]
      %v189 = vld [vmem:[%s165 + $0x88] sm:$0xff]
      %v190 = vld [vmem:[%s165 + $0x90] sm:$0xff]
      %v191 = vld [vmem:[%s165 + $0x98] sm:$0xff]
      %v192 = vld [vmem:[%s165 + $0xa0] sm:$0xff]
      %v193 = vld [vmem:[%s165 + $0xa8] sm:$0xff]
      %v194 = vld [vmem:[%s165 + $0xb0] sm:$0xff]
      %v195 = vld [vmem:[%s165 + $0xb8] sm:$0xff]
      %v196 = vld [vmem:[%s165 + $0xc0] sm:$0xff]
      %v197 = vld [vmem:[%s165 + $0xc8] sm:$0xff]
      %v198 = vld [vmem:[%s165 + $0xd0] sm:$0xff]
      %v199 = vld [vmem:[%s165 + $0xd8] sm:$0xff]
      %v200 = vld [vmem:[%s165 + $0xe0] sm:$0xff]
      %v201 = vld [vmem:[%s165 + $0xe8] sm:$0xff]
      %v202 = vld [vmem:[%s165 + $0xf0] sm:$0xff]
      %v203 = vld [vmem:[%s165 + $0xf8] sm:$0xff]
      %v204 = vld [vmem:[%s165 + $0x100] sm:$0xff]
      %v205 = vld [vmem:[%s165 + $0x108] sm:$0xff]
      %v206 = vld [vmem:[%s165 + $0x110] sm:$0xff]
      %v207 = vld [vmem:[%s165 + $0x118] sm:$0xff]
      %v208 = vpack.c.bf16 %v173, %v172
      %v209 = vpack.c.bf16 %v175, %v174
      %v210 = vpack.c.bf16 %v177, %v176
      %v211 = vpack.c.bf16 %v179, %v178
      %v212 = vpack.c.bf16 %v181, %v180
      %v213 = vpack.c.bf16 %v183, %v182
      %v214 = vpack.c.bf16 %v185, %v184
      %v215 = vpack.c.bf16 %v187, %v186
      %v216 = vpack.c.bf16 %v189, %v188
      %v217 = vpack.c.bf16 %v191, %v190
      %v218 = vpack.c.bf16 %v193, %v192
      %v219 = vpack.c.bf16 %v195, %v194
      %v220 = vpack.c.bf16 %v197, %v196
      %v221 = vpack.c.bf16 %v199, %v198
      %v222 = vpack.c.bf16 %v201, %v200
      %v223 = vpack.c.bf16 %v203, %v202
      %v224 = vpack.c.bf16 %v205, %v204
      %v225 = vpack.c.bf16 %v207, %v206
      %v226 = vld [vmem:[%s1] sm:$0x3]
      %v227 = vld [vmem:[%s165 + $0x1] sm:$0xff]
      %v228 = vld [vmem:[%s165 + $0x9] sm:$0xff]
      %v229 = vld [vmem:[%s165 + $0x11] sm:$0xff]
      %v230 = vld [vmem:[%s165 + $0x19] sm:$0xff]
      %v231 = vld [vmem:[%s165 + $0x21] sm:$0xff]
      %v232 = vld [vmem:[%s165 + $0x29] sm:$0xff]
      %v233 = vld [vmem:[%s165 + $0x31] sm:$0xff]
      %v234 = vld [vmem:[%s165 + $0x39] sm:$0xff]
      %v235 = vld [vmem:[%s165 + $0x41] sm:$0xff]
      %v236 = vld [vmem:[%s165 + $0x49] sm:$0xff]
      %v237 = vld [vmem:[%s165 + $0x51] sm:$0xff]
      %v238 = vld [vmem:[%s165 + $0x59] sm:$0xff]
      %v239 = vld [vmem:[%s165 + $0x61] sm:$0xff]
      %v240 = vld [vmem:[%s165 + $0x69] sm:$0xff]
      %v241 = vld [vmem:[%s165 + $0x71] sm:$0xff]
      %v242 = vld [vmem:[%s165 + $0x79] sm:$0xff]
      %v243 = vld [vmem:[%s165 + $0x81] sm:$0xff]
      %v244 = vld [vmem:[%s165 + $0x89] sm:$0xff]
      %v245 = vld [vmem:[%s165 + $0x91] sm:$0xff]
      %v246 = vld [vmem:[%s165 + $0x99] sm:$0xff]
      %v247 = vld [vmem:[%s165 + $0xa1] sm:$0xff]
      %v248 = vld [vmem:[%s165 + $0xa9] sm:$0xff]
      %v249 = vld [vmem:[%s165 + $0xb1] sm:$0xff]
      %v250 = vld [vmem:[%s165 + $0xb9] sm:$0xff]
      %v251 = vld [vmem:[%s165 + $0xc1] sm:$0xff]
      %v252 = vld [vmem:[%s165 + $0xc9] sm:$0xff]
      %v253 = vld [vmem:[%s165 + $0xd1] sm:$0xff]
      %v254 = vld [vmem:[%s165 + $0xd9] sm:$0xff]
      %v255 = vld [vmem:[%s165 + $0xe1] sm:$0xff]
      %v256 = vld [vmem:[%s165 + $0xe9] sm:$0xff]
      %v257 = vld [vmem:[%s165 + $0xf1] sm:$0xff]
      %v258 = vld [vmem:[%s165 + $0xf9] sm:$0xff]
      %v259 = vld [vmem:[%s165 + $0x101] sm:$0xff]
      %v260 = vld [vmem:[%s165 + $0x109] sm:$0xff]
      %v261 = vld [vmem:[%s165 + $0x111] sm:$0xff]
      %v262 = vld [vmem:[%s165 + $0x119] sm:$0xff]
      %v263 = vpack.c.bf16 %v228, %v227
      %v264 = vpack.c.bf16 %v230, %v229
      %v265 = vpack.c.bf16 %v232, %v231
      %v266 = vpack.c.bf16 %v234, %v233
      %v267 = vpack.c.bf16 %v236, %v235
      %v268 = vpack.c.bf16 %v238, %v237
      %v269 = vpack.c.bf16 %v240, %v239
      %v270 = vpack.c.bf16 %v242, %v241
      %v271 = vpack.c.bf16 %v244, %v243
      %v272 = vpack.c.bf16 %v246, %v245
      %v273 = vpack.c.bf16 %v248, %v247
      %v274 = vpack.c.bf16 %v250, %v249
      %v275 = vpack.c.bf16 %v252, %v251
      %v276 = vpack.c.bf16 %v254, %v253
      %v277 = vpack.c.bf16 %v256, %v255
      %v278 = vpack.c.bf16 %v258, %v257
      %v279 = vpack.c.bf16 %v260, %v259
      %v280 = vpack.c.bf16 %v262, %v261
      %s281 = scalar_lea.vmem %s1, 2
      %v282 = vld [vmem:[%s281] sm:$0x3]
      %vm283 = vcmask 23552
      %v285 = vsel %vm283, %v263, 0
      %v288 = vsel %vm283, %v264, 0
      %v291 = vsel %vm283, %v265, 0
      %v294 = vsel %vm283, %v266, 0
      %v297 = vsel %vm283, %v267, 0
      %v300 = vsel %vm283, %v268, 0
      %v303 = vsel %vm283, %v269, 0
      %v306 = vsel %vm283, %v270, 0
      %v309 = vsel %vm283, %v271, 0
      %v312 = vsel %vm283, %v272, 0
      %v315 = vsel %vm283, %v273, 0
      %v318 = vsel %vm283, %v274, 0
      %v321 = vsel %vm283, %v275, 0
      %v324 = vsel %vm283, %v276, 0
      %v327 = vsel %vm283, %v277, 0
      %v330 = vsel %vm283, %v278, 0
      %v333 = vsel %vm283, %v279, 0
      %v336 = vsel %vm283, %v280, 0
      %vm338 = vcmask 1040384
      %vm339 = vcmask 1041408
      %v340 = vsel %vm338, 4294967295, 65535
      %v341 = vsel %vm339, %v340, 0
      %v343 = vand.u32 %v282, %v341
      %345 = vmatprep.subr.bf16.mxu0 0
      %346 = vmatpush1.bf16.msra.mxu0 %v343
      %347 = vmatprep.subr.bf16.mxu0 0
      %348 = vmatpush1.bf16.msra.mxu0 0
      %349 = vmatprep.subr.bf16.mxu0 0
      %350 = vmatpush1.bf16.msra.mxu0 0
      %351 = vmatprep.subr.bf16.mxu0 0
      %352 = vmatpush1.bf16.msra.mxu0 0
      %353 = vmatprep.subr.bf16.mxu0 0
      %354 = vmatpush1.bf16.msra.mxu0 0
      %355 = vmatprep.subr.bf16.mxu0 0
      %356 = vmatpush1.bf16.msra.mxu0 0
      %357 = vmatprep.subr.bf16.mxu0 0
      %358 = vmatpush1.bf16.msra.mxu0 0
      %359 = vmatprep.subr.bf16.mxu0 0
      %360 = vmatpush1.bf16.msra.mxu0 0
      %361 = vmatprep.subr.bf16.mxu0 0
      %362 = vmatpush1.bf16.msra.mxu0 0
      %363 = vmatprep.subr.bf16.mxu0 0
      %364 = vmatpush1.bf16.msra.mxu0 0
      %365 = vmatprep.subr.bf16.mxu0 0
      %366 = vmatpush1.bf16.msra.mxu0 0
      %367 = vmatprep.subr.bf16.mxu0 0
      %368 = vmatpush1.bf16.msra.mxu0 0
      %369 = vmatprep.subr.bf16.mxu0 0
      %370 = vmatpush1.bf16.msra.mxu0 0
      %371 = vmatprep.subr.bf16.mxu0 0
      %372 = vmatpush1.bf16.msra.mxu0 0
      %373 = vmatprep.subr.bf16.mxu0 0
      %374 = vmatpush1.bf16.msra.mxu0 0
      %375 = vmatprep.subr.bf16.mxu0 0
      %376 = vmatpush1.bf16.msra.mxu0 0
      %377 = vmatprep.mubr.bf16.mxu0 0
      %378 = vmatmul.mubr.bf16.gmra.mrb[0].mxu0 %v285
      %v379 = vpop.f32.mrb[0].mxu0
      %v380 = vadd.f32 0.0, %v379
      %v381 = vpop.f32.mrb[0].mxu0
      %v382 = vpop.f32.mrb[0].mxu0
      %v383 = vadd.f32 0.0, %v382
      %v384 = vpop.f32.mrb[0].mxu0
      %385 = vmatprep.mubr.bf16.mxu0 0
      %386 = vmatmul.mubr.bf16.gmra.mrb[0].mxu0 %v288
      %v387 = vpop.f32.mrb[0].mxu0
      %v388 = vadd.f32 0.0, %v387
      %v389 = vpop.f32.mrb[0].mxu0
      %v390 = vpop.f32.mrb[0].mxu0
      %v391 = vadd.f32 0.0, %v390
      %v392 = vpop.f32.mrb[0].mxu0
      %393 = vmatprep.mubr.bf16.mxu0 0
      %394 = vmatmul.mubr.bf16.gmra.mrb[0].mxu0 %v291
      %v395 = vpop.f32.mrb[0].mxu0
      %v396 = vadd.f32 0.0, %v395
      %v397 = vpop.f32.mrb[0].mxu0
      %v398 = vpop.f32.mrb[0].mxu0
      %v399 = vadd.f32 0.0, %v398
      %v400 = vpop.f32.mrb[0].mxu0
      %401 = vmatprep.mubr.bf16.mxu0 0
      %402 = vmatmul.mubr.bf16.gmra.mrb[0].mxu0 %v294
      %v403 = vpop.f32.mrb[0].mxu0
      %v404 = vadd.f32 0.0, %v403
      %v405 = vpop.f32.mrb[0].mxu0
      %v406 = vpop.f32.mrb[0].mxu0
      %v407 = vadd.f32 0.0, %v406
      %v408 = vpop.f32.mrb[0].mxu0
      %409 = vmatprep.mubr.bf16.mxu0 0
      %410 = vmatmul.mubr.bf16.gmra.mrb[0].mxu0 %v297
      %v411 = vpop.f32.mrb[0].mxu0
      %v412 = vadd.f32 0.0, %v411
      %v413 = vpop.f32.mrb[0].mxu0
      %v414 = vpop.f32.mrb[0].mxu0
      %v415 = vadd.f32 0.0, %v414
      %v416 = vpop.f32.mrb[0].mxu0
      %417 = vmatprep.mubr.bf16.mxu0 0
      %418 = vmatmul.mubr.bf16.gmra.mrb[0].mxu0 %v300
      %v419 = vpop.f32.mrb[0].mxu0
      %v420 = vadd.f32 0.0, %v419
      %v421 = vpop.f32.mrb[0].mxu0
      %v422 = vpop.f32.mrb[0].mxu0
      %v423 = vadd.f32 0.0, %v422
      %v424 = vpop.f32.mrb[0].mxu0
      %425 = vmatprep.mubr.bf16.mxu0 0
      %426 = vmatmul.mubr.bf16.gmra.mrb[0].mxu0 %v303
      %v427 = vpop.f32.mrb[0].mxu0
      %v428 = vadd.f32 0.0, %v427
      %v429 = vpop.f32.mrb[0].mxu0
      %v430 = vpop.f32.mrb[0].mxu0
      %v431 = vadd.f32 0.0, %v430
      %v432 = vpop.f32.mrb[0].mxu0
      %433 = vmatprep.mubr.bf16.mxu0 0
      %434 = vmatmul.mubr.bf16.gmra.mrb[0].mxu0 %v306
      %v435 = vpop.f32.mrb[0].mxu0
      %v436 = vadd.f32 0.0, %v435
      %v437 = vpop.f32.mrb[0].mxu0
      %v438 = vpop.f32.mrb[0].mxu0
      %v439 = vadd.f32 0.0, %v438
      %v440 = vpop.f32.mrb[0].mxu0
      %441 = vmatprep.mubr.bf16.mxu0 0
      %442 = vmatmul.mubr.bf16.gmra.mrb[0].mxu0 %v309
      %v443 = vpop.f32.mrb[0].mxu0
      %v444 = vadd.f32 0.0, %v443
      %v445 = vpop.f32.mrb[0].mxu0
      %v446 = vpop.f32.mrb[0].mxu0
      %v447 = vadd.f32 0.0, %v446
      %v448 = vpop.f32.mrb[0].mxu0
      %449 = vmatprep.mubr.bf16.mxu0 0
      %450 = vmatmul.mubr.bf16.gmra.mrb[0].mxu0 %v312
      %v451 = vpop.f32.mrb[0].mxu0
      %v452 = vadd.f32 0.0, %v451
      %v453 = vpop.f32.mrb[0].mxu0
      %v454 = vpop.f32.mrb[0].mxu0
      %v455 = vadd.f32 0.0, %v454
      %v456 = vpop.f32.mrb[0].mxu0
      %457 = vmatprep.mubr.bf16.mxu0 0
      %458 = vmatmul.mubr.bf16.gmra.mrb[0].mxu0 %v315
      %v459 = vpop.f32.mrb[0].mxu0
      %v460 = vadd.f32 0.0, %v459
      %v461 = vpop.f32.mrb[0].mxu0
      %v462 = vpop.f32.mrb[0].mxu0
      %v463 = vadd.f32 0.0, %v462
      %v464 = vpop.f32.mrb[0].mxu0
      %465 = vmatprep.mubr.bf16.mxu0 0
      %466 = vmatmul.mubr.bf16.gmra.mrb[0].mxu0 %v318
      %v467 = vpop.f32.mrb[0].mxu0
      %v468 = vadd.f32 0.0, %v467
      %v469 = vpop.f32.mrb[0].mxu0
      %v470 = vpop.f32.mrb[0].mxu0
      %v471 = vadd.f32 0.0, %v470
      %v472 = vpop.f32.mrb[0].mxu0
      %473 = vmatprep.mubr.bf16.mxu0 0
      %474 = vmatmul.mubr.bf16.gmra.mrb[0].mxu0 %v321
      %v475 = vpop.f32.mrb[0].mxu0
      %v476 = vadd.f32 0.0, %v475
      %v477 = vpop.f32.mrb[0].mxu0
      %v478 = vpop.f32.mrb[0].mxu0
      %v479 = vadd.f32 0.0, %v478
      %v480 = vpop.f32.mrb[0].mxu0
      %481 = vmatprep.mubr.bf16.mxu0 0
      %482 = vmatmul.mubr.bf16.gmra.mrb[0].mxu0 %v324
      %v483 = vpop.f32.mrb[0].mxu0
      %v484 = vadd.f32 0.0, %v483
      %v485 = vpop.f32.mrb[0].mxu0
      %v486 = vpop.f32.mrb[0].mxu0
      %v487 = vadd.f32 0.0, %v486
      %v488 = vpop.f32.mrb[0].mxu0
      %489 = vmatprep.mubr.bf16.mxu0 0
      %490 = vmatmul.mubr.bf16.gmra.mrb[0].mxu0 %v327
      %v491 = vpop.f32.mrb[0].mxu0
      %v492 = vadd.f32 0.0, %v491
      %v493 = vpop.f32.mrb[0].mxu0
      %v494 = vpop.f32.mrb[0].mxu0
      %v495 = vadd.f32 0.0, %v494
      %v496 = vpop.f32.mrb[0].mxu0
      %497 = vmatprep.mubr.bf16.mxu0 0
      %498 = vmatmul.mubr.bf16.gmra.mrb[0].mxu0 %v330
      %v499 = vpop.f32.mrb[0].mxu0
      %v500 = vadd.f32 0.0, %v499
      %v501 = vpop.f32.mrb[0].mxu0
      %v502 = vpop.f32.mrb[0].mxu0
      %v503 = vadd.f32 0.0, %v502
      %v504 = vpop.f32.mrb[0].mxu0
      %505 = vmatprep.mubr.bf16.mxu0 0
      %506 = vmatmul.mubr.bf16.gmra.mrb[0].mxu0 %v333
      %v507 = vpop.f32.mrb[0].mxu0
      %v508 = vadd.f32 0.0, %v507
      %v509 = vpop.f32.mrb[0].mxu0
      %v510 = vpop.f32.mrb[0].mxu0
      %v511 = vadd.f32 0.0, %v510
      %v512 = vpop.f32.mrb[0].mxu0
      %513 = vmatprep.mubr.bf16.mxu0 0
      %514 = vmatmul.mubr.bf16.gmra.mrb[0].mxu0 %v336
      %v515 = vpop.f32.mrb[0].mxu0
      %v516 = vadd.f32 0.0, %v515
      %v517 = vpop.f32.mrb[0].mxu0
      %v518 = vpop.f32.mrb[0].mxu0
      %v519 = vadd.f32 0.0, %v518
      %v520 = vpop.f32.mrb[0].mxu0
      %521 = vdwg.mxu0
      %v523 = vsel %vm283, %v208, 0
      %v526 = vsel %vm283, %v209, 0
      %v529 = vsel %vm283, %v210, 0
      %v532 = vsel %vm283, %v211, 0
      %v535 = vsel %vm283, %v212, 0
      %v538 = vsel %vm283, %v213, 0
      %v541 = vsel %vm283, %v214, 0
      %v544 = vsel %vm283, %v215, 0
      %v547 = vsel %vm283, %v216, 0
      %v550 = vsel %vm283, %v217, 0
      %v553 = vsel %vm283, %v218, 0
      %v556 = vsel %vm283, %v219, 0
      %v559 = vsel %vm283, %v220, 0
      %v562 = vsel %vm283, %v221, 0
      %v565 = vsel %vm283, %v222, 0
      %v568 = vsel %vm283, %v223, 0
      %v571 = vsel %vm283, %v224, 0
      %v574 = vsel %vm283, %v225, 0
      %v577 = vand.u32 %v226, %v341
      %579 = vmatprep.subr.bf16.mxu0 0
      %580 = vmatpush1.bf16.msra.mxu0 %v577
      %581 = vmatprep.subr.bf16.mxu0 0
      %582 = vmatpush1.bf16.msra.mxu0 0
      %583 = vmatprep.subr.bf16.mxu0 0
      %584 = vmatpush1.bf16.msra.mxu0 0
      %585 = vmatprep.subr.bf16.mxu0 0
      %586 = vmatpush1.bf16.msra.mxu0 0
      %587 = vmatprep.subr.bf16.mxu0 0
      %588 = vmatpush1.bf16.msra.mxu0 0
      %589 = vmatprep.subr.bf16.mxu0 0
      %590 = vmatpush1.bf16.msra.mxu0 0
      %591 = vmatprep.subr.bf16.mxu0 0
      %592 = vmatpush1.bf16.msra.mxu0 0
      %593 = vmatprep.subr.bf16.mxu0 0
      %594 = vmatpush1.bf16.msra.mxu0 0
      %595 = vmatprep.subr.bf16.mxu0 0
      %596 = vmatpush1.bf16.msra.mxu0 0
      %597 = vmatprep.subr.bf16.mxu0 0
      %598 = vmatpush1.bf16.msra.mxu0 0
      %599 = vmatprep.subr.bf16.mxu0 0
      %600 = vmatpush1.bf16.msra.mxu0 0
      %601 = vmatprep.subr.bf16.mxu0 0
      %602 = vmatpush1.bf16.msra.mxu0 0
      %603 = vmatprep.subr.bf16.mxu0 0
      %604 = vmatpush1.bf16.msra.mxu0 0
      %605 = vmatprep.subr.bf16.mxu0 0
      %606 = vmatpush1.bf16.msra.mxu0 0
      %607 = vmatprep.subr.bf16.mxu0 0
      %608 = vmatpush1.bf16.msra.mxu0 0
      %609 = vmatprep.subr.bf16.mxu0 0
      %610 = vmatpush1.bf16.msra.mxu0 0
      %611 = vmatprep.mubr.bf16.mxu0 0
      %612 = vmatmul.mubr.bf16.gmra.mrb[0].mxu0 %v523
      %v613 = vpop.f32.mrb[0].mxu0
      %v614 = vadd.f32 %v380, %v613
      %v615 = vpop.f32.mrb[0].mxu0
      %v616 = vpop.f32.mrb[0].mxu0
      %v617 = vadd.f32 %v383, %v616
      %v618 = vpop.f32.mrb[0].mxu0
      %619 = vmatprep.mubr.bf16.mxu0 0
      %620 = vmatmul.mubr.bf16.gmra.mrb[0].mxu0 %v526
      %v621 = vpop.f32.mrb[0].mxu0
      %v622 = vadd.f32 %v388, %v621
      %v623 = vpop.f32.mrb[0].mxu0
      %v624 = vpop.f32.mrb[0].mxu0
      %v625 = vadd.f32 %v391, %v624
      %v626 = vpop.f32.mrb[0].mxu0
      %627 = vmatprep.mubr.bf16.mxu0 0
      %628 = vmatmul.mubr.bf16.gmra.mrb[0].mxu0 %v529
      %v629 = vpop.f32.mrb[0].mxu0
      %v630 = vadd.f32 %v396, %v629
      %v631 = vpop.f32.mrb[0].mxu0
      %v632 = vpop.f32.mrb[0].mxu0
      %v633 = vadd.f32 %v399, %v632
      %v634 = vpop.f32.mrb[0].mxu0
      %635 = vmatprep.mubr.bf16.mxu0 0
      %636 = vmatmul.mubr.bf16.gmra.mrb[0].mxu0 %v532
      %v637 = vpop.f32.mrb[0].mxu0
      %v638 = vadd.f32 %v404, %v637
      %v639 = vpop.f32.mrb[0].mxu0
      %v640 = vpop.f32.mrb[0].mxu0
      %v641 = vadd.f32 %v407, %v640
      %v642 = vpop.f32.mrb[0].mxu0
      %643 = vmatprep.mubr.bf16.mxu0 0
      %644 = vmatmul.mubr.bf16.gmra.mrb[0].mxu0 %v535
      %v645 = vpop.f32.mrb[0].mxu0
      %v646 = vadd.f32 %v412, %v645
      %v647 = vpop.f32.mrb[0].mxu0
      %v648 = vpop.f32.mrb[0].mxu0
      %v649 = vadd.f32 %v415, %v648
      %v650 = vpop.f32.mrb[0].mxu0
      %651 = vmatprep.mubr.bf16.mxu0 0
      %652 = vmatmul.mubr.bf16.gmra.mrb[0].mxu0 %v538
      %v653 = vpop.f32.mrb[0].mxu0
      %v654 = vadd.f32 %v420, %v653
      %v655 = vpop.f32.mrb[0].mxu0
      %v656 = vpop.f32.mrb[0].mxu0
      %v657 = vadd.f32 %v423, %v656
      %v658 = vpop.f32.mrb[0].mxu0
      %659 = vmatprep.mubr.bf16.mxu0 0
      %660 = vmatmul.mubr.bf16.gmra.mrb[0].mxu0 %v541
      %v661 = vpop.f32.mrb[0].mxu0
      %v662 = vadd.f32 %v428, %v661
      %v663 = vpop.f32.mrb[0].mxu0
      %v664 = vpop.f32.mrb[0].mxu0
      %v665 = vadd.f32 %v431, %v664
      %v666 = vpop.f32.mrb[0].mxu0
      %667 = vmatprep.mubr.bf16.mxu0 0
      %668 = vmatmul.mubr.bf16.gmra.mrb[0].mxu0 %v544
      %v669 = vpop.f32.mrb[0].mxu0
      %v670 = vadd.f32 %v436, %v669
      %v671 = vpop.f32.mrb[0].mxu0
      %v672 = vpop.f32.mrb[0].mxu0
      %v673 = vadd.f32 %v439, %v672
      %v674 = vpop.f32.mrb[0].mxu0
      %675 = vmatprep.mubr.bf16.mxu0 0
      %676 = vmatmul.mubr.bf16.gmra.mrb[0].mxu0 %v547
      %v677 = vpop.f32.mrb[0].mxu0
      %v678 = vadd.f32 %v444, %v677
      %v679 = vpop.f32.mrb[0].mxu0
      %v680 = vpop.f32.mrb[0].mxu0
      %v681 = vadd.f32 %v447, %v680
      %v682 = vpop.f32.mrb[0].mxu0
      %683 = vmatprep.mubr.bf16.mxu0 0
      %684 = vmatmul.mubr.bf16.gmra.mrb[0].mxu0 %v550
      %v685 = vpop.f32.mrb[0].mxu0
      %v686 = vadd.f32 %v452, %v685
      %v687 = vpop.f32.mrb[0].mxu0
      %v688 = vpop.f32.mrb[0].mxu0
      %v689 = vadd.f32 %v455, %v688
      %v690 = vpop.f32.mrb[0].mxu0
      %691 = vmatprep.mubr.bf16.mxu0 0
      %692 = vmatmul.mubr.bf16.gmra.mrb[0].mxu0 %v553
      %v693 = vpop.f32.mrb[0].mxu0
      %v694 = vadd.f32 %v460, %v693
      %v695 = vpop.f32.mrb[0].mxu0
      %v696 = vpop.f32.mrb[0].mxu0
      %v697 = vadd.f32 %v463, %v696
      %v698 = vpop.f32.mrb[0].mxu0
      %699 = vmatprep.mubr.bf16.mxu0 0
      %700 = vmatmul.mubr.bf16.gmra.mrb[0].mxu0 %v556
      %v701 = vpop.f32.mrb[0].mxu0
      %v702 = vadd.f32 %v468, %v701
      %v703 = vpop.f32.mrb[0].mxu0
      %v704 = vpop.f32.mrb[0].mxu0
      %v705 = vadd.f32 %v471, %v704
      %v706 = vpop.f32.mrb[0].mxu0
      %707 = vmatprep.mubr.bf16.mxu0 0
      %708 = vmatmul.mubr.bf16.gmra.mrb[0].mxu0 %v559
      %v709 = vpop.f32.mrb[0].mxu0
      %v710 = vadd.f32 %v476, %v709
      %v711 = vpop.f32.mrb[0].mxu0
      %v712 = vpop.f32.mrb[0].mxu0
      %v713 = vadd.f32 %v479, %v712
      %v714 = vpop.f32.mrb[0].mxu0
      %715 = vmatprep.mubr.bf16.mxu0 0
      %716 = vmatmul.mubr.bf16.gmra.mrb[0].mxu0 %v562
      %v717 = vpop.f32.mrb[0].mxu0
      %v718 = vadd.f32 %v484, %v717
      %v719 = vpop.f32.mrb[0].mxu0
      %v720 = vpop.f32.mrb[0].mxu0
      %v721 = vadd.f32 %v487, %v720
      %v722 = vpop.f32.mrb[0].mxu0
      %723 = vmatprep.mubr.bf16.mxu0 0
      %724 = vmatmul.mubr.bf16.gmra.mrb[0].mxu0 %v565
      %v725 = vpop.f32.mrb[0].mxu0
      %v726 = vadd.f32 %v492, %v725
      %v727 = vpop.f32.mrb[0].mxu0
      %v728 = vpop.f32.mrb[0].mxu0
      %v729 = vadd.f32 %v495, %v728
      %v730 = vpop.f32.mrb[0].mxu0
      %731 = vmatprep.mubr.bf16.mxu0 0
      %732 = vmatmul.mubr.bf16.gmra.mrb[0].mxu0 %v568
      %v733 = vpop.f32.mrb[0].mxu0
      %v734 = vadd.f32 %v500, %v733
      %v735 = vpop.f32.mrb[0].mxu0
      %v736 = vpop.f32.mrb[0].mxu0
      %v737 = vadd.f32 %v503, %v736
      %v738 = vpop.f32.mrb[0].mxu0
      %739 = vmatprep.mubr.bf16.mxu0 0
      %740 = vmatmul.mubr.bf16.gmra.mrb[0].mxu0 %v571
      %v741 = vpop.f32.mrb[0].mxu0
      %v742 = vadd.f32 %v508, %v741
      %v743 = vpop.f32.mrb[0].mxu0
      %v744 = vpop.f32.mrb[0].mxu0
      %v745 = vadd.f32 %v511, %v744
      %v746 = vpop.f32.mrb[0].mxu0
      %747 = vmatprep.mubr.bf16.mxu0 0
      %748 = vmatmul.mubr.bf16.gmra.mrb[0].mxu0 %v574
      %v749 = vpop.f32.mrb[0].mxu0
      %v750 = vadd.f32 %v516, %v749
      %v751 = vpop.f32.mrb[0].mxu0
      %v752 = vpop.f32.mrb[0].mxu0
      %v753 = vadd.f32 %v519, %v752
      %v754 = vpop.f32.mrb[0].mxu0
      %755 = vdwg.mxu0
      %v756 = vld [vmem:[%s165 + $0x2] sm:$0xff]
      %v757 = vld [vmem:[%s165 + $0xa] sm:$0xff]
      %v758 = vld [vmem:[%s165 + $0x12] sm:$0xff]
      %v759 = vld [vmem:[%s165 + $0x1a] sm:$0xff]
      %v760 = vld [vmem:[%s165 + $0x22] sm:$0xff]
      %v761 = vld [vmem:[%s165 + $0x2a] sm:$0xff]
      %v762 = vld [vmem:[%s165 + $0x32] sm:$0xff]
      %v763 = vld [vmem:[%s165 + $0x3a] sm:$0xff]
      %v764 = vld [vmem:[%s165 + $0x42] sm:$0xff]
      %v765 = vld [vmem:[%s165 + $0x4a] sm:$0xff]
      %v766 = vld [vmem:[%s165 + $0x52] sm:$0xff]
      %v767 = vld [vmem:[%s165 + $0x5a] sm:$0xff]
      %v768 = vld [vmem:[%s165 + $0x62] sm:$0xff]
      %v769 = vld [vmem:[%s165 + $0x6a] sm:$0xff]
      %v770 = vld [vmem:[%s165 + $0x72] sm:$0xff]
      %v771 = vld [vmem:[%s165 + $0x7a] sm:$0xff]
      %v772 = vld [vmem:[%s165 + $0x82] sm:$0xff]
      %v773 = vld [vmem:[%s165 + $0x8a] sm:$0xff]
      %v774 = vld [vmem:[%s165 + $0x92] sm:$0xff]
      %v775 = vld [vmem:[%s165 + $0x9a] sm:$0xff]
      %v776 = vld [vmem:[%s165 + $0xa2] sm:$0xff]
      %v777 = vld [vmem:[%s165 + $0xaa] sm:$0xff]
      %v778 = vld [vmem:[%s165 + $0xb2] sm:$0xff]
      %v779 = vld [vmem:[%s165 + $0xba] sm:$0xff]
      %v780 = vld [vmem:[%s165 + $0xc2] sm:$0xff]
      %v781 = vld [vmem:[%s165 + $0xca] sm:$0xff]
      %v782 = vld [vmem:[%s165 + $0xd2] sm:$0xff]
      %v783 = vld [vmem:[%s165 + $0xda] sm:$0xff]
      %v784 = vld [vmem:[%s165 + $0xe2] sm:$0xff]
      %v785 = vld [vmem:[%s165 + $0xea] sm:$0xff]
      %v786 = vld [vmem:[%s165 + $0xf2] sm:$0xff]
      %v787 = vld [vmem:[%s165 + $0xfa] sm:$0xff]
      %v788 = vld [vmem:[%s165 + $0x102] sm:$0xff]
      %v789 = vld [vmem:[%s165 + $0x10a] sm:$0xff]
      %v790 = vld [vmem:[%s165 + $0x112] sm:$0xff]
      %v791 = vld [vmem:[%s165 + $0x11a] sm:$0xff]
      %v792 = vpack.c.bf16 %v757, %v756
      %v793 = vpack.c.bf16 %v759, %v758
      %v794 = vpack.c.bf16 %v761, %v760
      %v795 = vpack.c.bf16 %v763, %v762
      %v796 = vpack.c.bf16 %v765, %v764
      %v797 = vpack.c.bf16 %v767, %v766
      %v798 = vpack.c.bf16 %v769, %v768
      %v799 = vpack.c.bf16 %v771, %v770
      %v800 = vpack.c.bf16 %v773, %v772
      %v801 = vpack.c.bf16 %v775, %v774
      %v802 = vpack.c.bf16 %v777, %v776
      %v803 = vpack.c.bf16 %v779, %v778
      %v804 = vpack.c.bf16 %v781, %v780
      %v805 = vpack.c.bf16 %v783, %v782
      %v806 = vpack.c.bf16 %v785, %v784
      %v807 = vpack.c.bf16 %v787, %v786
      %v808 = vpack.c.bf16 %v789, %v788
      %v809 = vpack.c.bf16 %v791, %v790
      %s810 = scalar_lea.vmem %s1, 4
      %v811 = vld [vmem:[%s810] sm:$0x3]
      %v813 = vsel %vm283, %v792, 0
      %v816 = vsel %vm283, %v793, 0
      %v819 = vsel %vm283, %v794, 0
      %v822 = vsel %vm283, %v795, 0
      %v825 = vsel %vm283, %v796, 0
      %v828 = vsel %vm283, %v797, 0
      %v831 = vsel %vm283, %v798, 0
      %v834 = vsel %vm283, %v799, 0
      %v837 = vsel %vm283, %v800, 0
      %v840 = vsel %vm283, %v801, 0
      %v843 = vsel %vm283, %v802, 0
      %v846 = vsel %vm283, %v803, 0
      %v849 = vsel %vm283, %v804, 0
      %v852 = vsel %vm283, %v805, 0
      %v855 = vsel %vm283, %v806, 0
      %v858 = vsel %vm283, %v807, 0
      %v861 = vsel %vm283, %v808, 0
      %v864 = vsel %vm283, %v809, 0
      %v867 = vand.u32 %v811, %v341
      %869 = vmatprep.subr.bf16.mxu0 0
      %870 = vmatpush1.bf16.msra.mxu0 %v867
      %871 = vmatprep.subr.bf16.mxu0 0
      %872 = vmatpush1.bf16.msra.mxu0 0
      %873 = vmatprep.subr.bf16.mxu0 0
      %874 = vmatpush1.bf16.msra.mxu0 0
      %875 = vmatprep.subr.bf16.mxu0 0
      %876 = vmatpush1.bf16.msra.mxu0 0
      %877 = vmatprep.subr.bf16.mxu0 0
      %878 = vmatpush1.bf16.msra.mxu0 0
      %879 = vmatprep.subr.bf16.mxu0 0
      %880 = vmatpush1.bf16.msra.mxu0 0
      %881 = vmatprep.subr.bf16.mxu0 0
      %882 = vmatpush1.bf16.msra.mxu0 0
      %883 = vmatprep.subr.bf16.mxu0 0
      %884 = vmatpush1.bf16.msra.mxu0 0
      %885 = vmatprep.subr.bf16.mxu0 0
      %886 = vmatpush1.bf16.msra.mxu0 0
      %887 = vmatprep.subr.bf16.mxu0 0
      %888 = vmatpush1.bf16.msra.mxu0 0
      %889 = vmatprep.subr.bf16.mxu0 0
      %890 = vmatpush1.bf16.msra.mxu0 0
      %891 = vmatprep.subr.bf16.mxu0 0
      %892 = vmatpush1.bf16.msra.mxu0 0
      %893 = vmatprep.subr.bf16.mxu0 0
      %894 = vmatpush1.bf16.msra.mxu0 0
      %895 = vmatprep.subr.bf16.mxu0 0
      %896 = vmatpush1.bf16.msra.mxu0 0
      %897 = vmatprep.subr.bf16.mxu0 0
      %898 = vmatpush1.bf16.msra.mxu0 0
      %899 = vmatprep.subr.bf16.mxu0 0
      %900 = vmatpush1.bf16.msra.mxu0 0
      %901 = vmatprep.mubr.bf16.mxu0 0
      %902 = vmatmul.mubr.bf16.gmra.mrb[0].mxu0 %v813
      %v903 = vpop.f32.mrb[0].mxu0
      %v904 = vadd.f32 0.0, %v903
      %v905 = vpop.f32.mrb[0].mxu0
      %v906 = vpop.f32.mrb[0].mxu0
      %v907 = vadd.f32 0.0, %v906
      %v908 = vpop.f32.mrb[0].mxu0
      %909 = vmatprep.mubr.bf16.mxu0 0
      %910 = vmatmul.mubr.bf16.gmra.mrb[0].mxu0 %v816
      %v911 = vpop.f32.mrb[0].mxu0
      %v912 = vadd.f32 0.0, %v911
      %v913 = vpop.f32.mrb[0].mxu0
      %v914 = vpop.f32.mrb[0].mxu0
      %v915 = vadd.f32 0.0, %v914
      %v916 = vpop.f32.mrb[0].mxu0
      %917 = vmatprep.mubr.bf16.mxu0 0
      %918 = vmatmul.mubr.bf16.gmra.mrb[0].mxu0 %v819
      %v919 = vpop.f32.mrb[0].mxu0
      %v920 = vadd.f32 0.0, %v919
      %v921 = vpop.f32.mrb[0].mxu0
      %v922 = vpop.f32.mrb[0].mxu0
      %v923 = vadd.f32 0.0, %v922
      %v924 = vpop.f32.mrb[0].mxu0
      %925 = vmatprep.mubr.bf16.mxu0 0
      %926 = vmatmul.mubr.bf16.gmra.mrb[0].mxu0 %v822
      %v927 = vpop.f32.mrb[0].mxu0
      %v928 = vadd.f32 0.0, %v927
      %v929 = vpop.f32.mrb[0].mxu0
      %v930 = vpop.f32.mrb[0].mxu0
      %v931 = vadd.f32 0.0, %v930
      %v932 = vpop.f32.mrb[0].mxu0
      %933 = vmatprep.mubr.bf16.mxu0 0
      %934 = vmatmul.mubr.bf16.gmra.mrb[0].mxu0 %v825
      %v935 = vpop.f32.mrb[0].mxu0
      %v936 = vadd.f32 0.0, %v935
      %v937 = vpop.f32.mrb[0].mxu0
      %v938 = vpop.f32.mrb[0].mxu0
      %v939 = vadd.f32 0.0, %v938
      %v940 = vpop.f32.mrb[0].mxu0
      %941 = vmatprep.mubr.bf16.mxu0 0
      %942 = vmatmul.mubr.bf16.gmra.mrb[0].mxu0 %v828
      %v943 = vpop.f32.mrb[0].mxu0
      %v944 = vadd.f32 0.0, %v943
      %v945 = vpop.f32.mrb[0].mxu0
      %v946 = vpop.f32.mrb[0].mxu0
      %v947 = vadd.f32 0.0, %v946
      %v948 = vpop.f32.mrb[0].mxu0
      %949 = vmatprep.mubr.bf16.mxu0 0
      %950 = vmatmul.mubr.bf16.gmra.mrb[0].mxu0 %v831
      %v951 = vpop.f32.mrb[0].mxu0
      %v952 = vadd.f32 0.0, %v951
      %v953 = vpop.f32.mrb[0].mxu0
      %v954 = vpop.f32.mrb[0].mxu0
      %v955 = vadd.f32 0.0, %v954
      %v956 = vpop.f32.mrb[0].mxu0
      %957 = vmatprep.mubr.bf16.mxu0 0
      %958 = vmatmul.mubr.bf16.gmra.mrb[0].mxu0 %v834
      %v959 = vpop.f32.mrb[0].mxu0
      %v960 = vadd.f32 0.0, %v959
      %v961 = vpop.f32.mrb[0].mxu0
      %v962 = vpop.f32.mrb[0].mxu0
      %v963 = vadd.f32 0.0, %v962
      %v964 = vpop.f32.mrb[0].mxu0
      %965 = vmatprep.mubr.bf16.mxu0 0
      %966 = vmatmul.mubr.bf16.gmra.mrb[0].mxu0 %v837
      %v967 = vpop.f32.mrb[0].mxu0
      %v968 = vadd.f32 0.0, %v967
      %v969 = vpop.f32.mrb[0].mxu0
      %v970 = vpop.f32.mrb[0].mxu0
      %v971 = vadd.f32 0.0, %v970
      %v972 = vpop.f32.mrb[0].mxu0
      %973 = vmatprep.mubr.bf16.mxu0 0
      %974 = vmatmul.mubr.bf16.gmra.mrb[0].mxu0 %v840
      %v975 = vpop.f32.mrb[0].mxu0
      %v976 = vadd.f32 0.0, %v975
      %v977 = vpop.f32.mrb[0].mxu0
      %v978 = vpop.f32.mrb[0].mxu0
      %v979 = vadd.f32 0.0, %v978
      %v980 = vpop.f32.mrb[0].mxu0
      %981 = vmatprep.mubr.bf16.mxu0 0
      %982 = vmatmul.mubr.bf16.gmra.mrb[0].mxu0 %v843
      %v983 = vpop.f32.mrb[0].mxu0
      %v984 = vadd.f32 0.0, %v983
      %v985 = vpop.f32.mrb[0].mxu0
      %v986 = vpop.f32.mrb[0].mxu0
      %v987 = vadd.f32 0.0, %v986
      %v988 = vpop.f32.mrb[0].mxu0
      %989 = vmatprep.mubr.bf16.mxu0 0
      %990 = vmatmul.mubr.bf16.gmra.mrb[0].mxu0 %v846
      %v991 = vpop.f32.mrb[0].mxu0
      %v992 = vadd.f32 0.0, %v991
      %v993 = vpop.f32.mrb[0].mxu0
      %v994 = vpop.f32.mrb[0].mxu0
      %v995 = vadd.f32 0.0, %v994
      %v996 = vpop.f32.mrb[0].mxu0
      %997 = vmatprep.mubr.bf16.mxu0 0
      %998 = vmatmul.mubr.bf16.gmra.mrb[0].mxu0 %v849
      %v999 = vpop.f32.mrb[0].mxu0
      %v1000 = vadd.f32 0.0, %v999
      %v1001 = vpop.f32.mrb[0].mxu0
      %v1002 = vpop.f32.mrb[0].mxu0
      %v1003 = vadd.f32 0.0, %v1002
      %v1004 = vpop.f32.mrb[0].mxu0
      %1005 = vmatprep.mubr.bf16.mxu0 0
      %1006 = vmatmul.mubr.bf16.gmra.mrb[0].mxu0 %v852
      %v1007 = vpop.f32.mrb[0].mxu0
      %v1008 = vadd.f32 0.0, %v1007
      %v1009 = vpop.f32.mrb[0].mxu0
      %v1010 = vpop.f32.mrb[0].mxu0
      %v1011 = vadd.f32 0.0, %v1010
      %v1012 = vpop.f32.mrb[0].mxu0
      %1013 = vmatprep.mubr.bf16.mxu0 0
      %1014 = vmatmul.mubr.bf16.gmra.mrb[0].mxu0 %v855
      %v1015 = vpop.f32.mrb[0].mxu0
      %v1016 = vadd.f32 0.0, %v1015
      %v1017 = vpop.f32.mrb[0].mxu0
      %v1018 = vpop.f32.mrb[0].mxu0
      %v1019 = vadd.f32 0.0, %v1018
      %v1020 = vpop.f32.mrb[0].mxu0
      %1021 = vmatprep.mubr.bf16.mxu0 0
      %1022 = vmatmul.mubr.bf16.gmra.mrb[0].mxu0 %v858
      %v1023 = vpop.f32.mrb[0].mxu0
      %v1024 = vadd.f32 0.0, %v1023
      %v1025 = vpop.f32.mrb[0].mxu0
      %v1026 = vpop.f32.mrb[0].mxu0
      %v1027 = vadd.f32 0.0, %v1026
      %v1028 = vpop.f32.mrb[0].mxu0
      %1029 = vmatprep.mubr.bf16.mxu0 0
      %1030 = vmatmul.mubr.bf16.gmra.mrb[0].mxu0 %v861
      %v1031 = vpop.f32.mrb[0].mxu0
      %v1032 = vadd.f32 0.0, %v1031
      %v1033 = vpop.f32.mrb[0].mxu0
      %v1034 = vpop.f32.mrb[0].mxu0
      %v1035 = vadd.f32 0.0, %v1034
      %v1036 = vpop.f32.mrb[0].mxu0
      %1037 = vmatprep.mubr.bf16.mxu0 0
      %1038 = vmatmul.mubr.bf16.gmra.mrb[0].mxu0 %v864
      %v1039 = vpop.f32.mrb[0].mxu0
      %v1040 = vadd.f32 0.0, %v1039
      %v1041 = vpop.f32.mrb[0].mxu0
      %v1042 = vpop.f32.mrb[0].mxu0
      %v1043 = vadd.f32 0.0, %v1042
      %v1044 = vpop.f32.mrb[0].mxu0
      %1045 = vdwg.mxu0
      %v1046 = vadd.f32 %v614, %v904
      %v1047 = vadd.f32 %v617, %v907
      %v1048 = vadd.f32 %v622, %v912
      %v1049 = vadd.f32 %v625, %v915
      %v1050 = vadd.f32 %v630, %v920
      %v1051 = vadd.f32 %v633, %v923
      %v1052 = vadd.f32 %v638, %v928
      %v1053 = vadd.f32 %v641, %v931
      %v1054 = vadd.f32 %v646, %v936
      %v1055 = vadd.f32 %v649, %v939
      %v1056 = vadd.f32 %v654, %v944
      %v1057 = vadd.f32 %v657, %v947
      %v1058 = vadd.f32 %v662, %v952
      %v1059 = vadd.f32 %v665, %v955
      %v1060 = vadd.f32 %v670, %v960
      %v1061 = vadd.f32 %v673, %v963
      %v1062 = vadd.f32 %v678, %v968
      %v1063 = vadd.f32 %v681, %v971
      %v1064 = vadd.f32 %v686, %v976
      %v1065 = vadd.f32 %v689, %v979
      %v1066 = vadd.f32 %v694, %v984
      %v1067 = vadd.f32 %v697, %v987
      %v1068 = vadd.f32 %v702, %v992
      %v1069 = vadd.f32 %v705, %v995
      %v1070 = vadd.f32 %v710, %v1000
      %v1071 = vadd.f32 %v713, %v1003
      %v1072 = vadd.f32 %v718, %v1008
      %v1073 = vadd.f32 %v721, %v1011
      %v1074 = vadd.f32 %v726, %v1016
      %v1075 = vadd.f32 %v729, %v1019
      %v1076 = vadd.f32 %v734, %v1024
      %v1077 = vadd.f32 %v737, %v1027
      %v1078 = vadd.f32 %v742, %v1032
      %v1079 = vadd.f32 %v745, %v1035
      %v1080 = vadd.f32 %v750, %v1040
      %v1081 = vadd.f32 %v753, %v1043
      %v1082 = vld [vmem:[%s165 + $0x12] sm:$0xff]
      %v1083 = vld [vmem:[%s165 + $0x1a] sm:$0xff]
      %v1084 = vld [vmem:[%s165 + $0x22] sm:$0xff]
      %v1085 = vld [vmem:[%s165 + $0x2a] sm:$0xff]
      %v1086 = vld [vmem:[%s165 + $0x32] sm:$0xff]
      %v1087 = vld [vmem:[%s165 + $0x3a] sm:$0xff]
      %v1088 = vld [vmem:[%s165 + $0x42] sm:$0xff]
      %v1089 = vld [vmem:[%s165 + $0x4a] sm:$0xff]
      %v1090 = vld [vmem:[%s165 + $0x52] sm:$0xff]
      %v1091 = vld [vmem:[%s165 + $0x5a] sm:$0xff]
      %v1092 = vld [vmem:[%s165 + $0x62] sm:$0xff]
      %v1093 = vld [vmem:[%s165 + $0x6a] sm:$0xff]
      %v1094 = vld [vmem:[%s165 + $0x72] sm:$0xff]
      %v1095 = vld [vmem:[%s165 + $0x7a] sm:$0xff]
      %v1096 = vld [vmem:[%s165 + $0x82] sm:$0xff]
      %v1097 = vld [vmem:[%s165 + $0x8a] sm:$0xff]
      %v1098 = vld [vmem:[%s165 + $0x92] sm:$0xff]
      %v1099 = vld [vmem:[%s165 + $0x9a] sm:$0xff]
      %v1100 = vld [vmem:[%s165 + $0xa2] sm:$0xff]
      %v1101 = vld [vmem:[%s165 + $0xaa] sm:$0xff]
      %v1102 = vld [vmem:[%s165 + $0xb2] sm:$0xff]
      %v1103 = vld [vmem:[%s165 + $0xba] sm:$0xff]
      %v1104 = vld [vmem:[%s165 + $0xc2] sm:$0xff]
      %v1105 = vld [vmem:[%s165 + $0xca] sm:$0xff]
      %v1106 = vld [vmem:[%s165 + $0xd2] sm:$0xff]
      %v1107 = vld [vmem:[%s165 + $0xda] sm:$0xff]
      %v1108 = vld [vmem:[%s165 + $0xe2] sm:$0xff]
      %v1109 = vld [vmem:[%s165 + $0xea] sm:$0xff]
      %v1110 = vld [vmem:[%s165 + $0xf2] sm:$0xff]
      %v1111 = vld [vmem:[%s165 + $0xfa] sm:$0xff]
      %v1112 = vld [vmem:[%s165 + $0x102] sm:$0xff]
      %v1113 = vld [vmem:[%s165 + $0x10a] sm:$0xff]
      %v1114 = vld [vmem:[%s165 + $0x112] sm:$0xff]
      %v1115 = vld [vmem:[%s165 + $0x11a] sm:$0xff]
      %v1116 = vld [vmem:[%s165 + $0x122] sm:$0xff]
      %v1117 = vld [vmem:[%s165 + $0x12a] sm:$0xff]
      %v1118 = vpack.c.bf16 %v1083, %v1082
      %v1119 = vpack.c.bf16 %v1085, %v1084
      %v1120 = vpack.c.bf16 %v1087, %v1086
      %v1121 = vpack.c.bf16 %v1089, %v1088
      %v1122 = vpack.c.bf16 %v1091, %v1090
      %v1123 = vpack.c.bf16 %v1093, %v1092
      %v1124 = vpack.c.bf16 %v1095, %v1094
      %v1125 = vpack.c.bf16 %v1097, %v1096
      %v1126 = vpack.c.bf16 %v1099, %v1098
      %v1127 = vpack.c.bf16 %v1101, %v1100
      %v1128 = vpack.c.bf16 %v1103, %v1102
      %v1129 = vpack.c.bf16 %v1105, %v1104
      %v1130 = vpack.c.bf16 %v1107, %v1106
      %v1131 = vpack.c.bf16 %v1109, %v1108
      %v1132 = vpack.c.bf16 %v1111, %v1110
      %v1133 = vpack.c.bf16 %v1113, %v1112
      %v1134 = vpack.c.bf16 %v1115, %v1114
      %v1135 = vpack.c.bf16 %v1117, %v1116
      %s1136 = scalar_lea.vmem %s1, 6
      %v1137 = vld [vmem:[%s1136] sm:$0x3]
      %v1139 = vsel %vm283, %v1118, 0
      %v1142 = vsel %vm283, %v1119, 0
      %v1145 = vsel %vm283, %v1120, 0
      %v1148 = vsel %vm283, %v1121, 0
      %v1151 = vsel %vm283, %v1122, 0
      %v1154 = vsel %vm283, %v1123, 0
      %v1157 = vsel %vm283, %v1124, 0
      %v1160 = vsel %vm283, %v1125, 0
      %v1163 = vsel %vm283, %v1126, 0
      %v1166 = vsel %vm283, %v1127, 0
      %v1169 = vsel %vm283, %v1128, 0
      %v1172 = vsel %vm283, %v1129, 0
      %v1175 = vsel %vm283, %v1130, 0
      %v1178 = vsel %vm283, %v1131, 0
      %v1181 = vsel %vm283, %v1132, 0
      %v1184 = vsel %vm283, %v1133, 0
      %v1187 = vsel %vm283, %v1134, 0
      %v1190 = vsel %vm283, %v1135, 0
      %v1193 = vand.u32 %v1137, %v341
      %1195 = vmatprep.subr.bf16.mxu0 0
      %1196 = vmatpush1.bf16.msra.mxu0 %v1193
      %1197 = vmatprep.subr.bf16.mxu0 0
      %1198 = vmatpush1.bf16.msra.mxu0 0
      %1199 = vmatprep.subr.bf16.mxu0 0
      %1200 = vmatpush1.bf16.msra.mxu0 0
      %1201 = vmatprep.subr.bf16.mxu0 0
      %1202 = vmatpush1.bf16.msra.mxu0 0
      %1203 = vmatprep.subr.bf16.mxu0 0
      %1204 = vmatpush1.bf16.msra.mxu0 0
      %1205 = vmatprep.subr.bf16.mxu0 0
      %1206 = vmatpush1.bf16.msra.mxu0 0
      %1207 = vmatprep.subr.bf16.mxu0 0
      %1208 = vmatpush1.bf16.msra.mxu0 0
      %1209 = vmatprep.subr.bf16.mxu0 0
      %1210 = vmatpush1.bf16.msra.mxu0 0
      %1211 = vmatprep.subr.bf16.mxu0 0
      %1212 = vmatpush1.bf16.msra.mxu0 0
      %1213 = vmatprep.subr.bf16.mxu0 0
      %1214 = vmatpush1.bf16.msra.mxu0 0
      %1215 = vmatprep.subr.bf16.mxu0 0
      %1216 = vmatpush1.bf16.msra.mxu0 0
      %1217 = vmatprep.subr.bf16.mxu0 0
      %1218 = vmatpush1.bf16.msra.mxu0 0
      %1219 = vmatprep.subr.bf16.mxu0 0
      %1220 = vmatpush1.bf16.msra.mxu0 0
      %1221 = vmatprep.subr.bf16.mxu0 0
      %1222 = vmatpush1.bf16.msra.mxu0 0
      %1223 = vmatprep.subr.bf16.mxu0 0
      %1224 = vmatpush1.bf16.msra.mxu0 0
      %1225 = vmatprep.subr.bf16.mxu0 0
      %1226 = vmatpush1.bf16.msra.mxu0 0
      %1227 = vmatprep.mubr.bf16.mxu0 0
      %1228 = vmatmul.mubr.bf16.gmra.mrb[0].mxu0 %v1139
      %v1229 = vpop.f32.mrb[0].mxu0
      %v1230 = vadd.f32 0.0, %v1229
      %v1231 = vpop.f32.mrb[0].mxu0
      %v1232 = vpop.f32.mrb[0].mxu0
      %v1233 = vadd.f32 0.0, %v1232
      %v1234 = vpop.f32.mrb[0].mxu0
      %1235 = vmatprep.mubr.bf16.mxu0 0
      %1236 = vmatmul.mubr.bf16.gmra.mrb[0].mxu0 %v1142
      %v1237 = vpop.f32.mrb[0].mxu0
      %v1238 = vadd.f32 0.0, %v1237
      %v1239 = vpop.f32.mrb[0].mxu0
      %v1240 = vpop.f32.mrb[0].mxu0
      %v1241 = vadd.f32 0.0, %v1240
      %v1242 = vpop.f32.mrb[0].mxu0
      %1243 = vmatprep.mubr.bf16.mxu0 0
      %1244 = vmatmul.mubr.bf16.gmra.mrb[0].mxu0 %v1145
      %v1245 = vpop.f32.mrb[0].mxu0
      %v1246 = vadd.f32 0.0, %v1245
      %v1247 = vpop.f32.mrb[0].mxu0
      %v1248 = vpop.f32.mrb[0].mxu0
      %v1249 = vadd.f32 0.0, %v1248
      %v1250 = vpop.f32.mrb[0].mxu0
      %1251 = vmatprep.mubr.bf16.mxu0 0
      %1252 = vmatmul.mubr.bf16.gmra.mrb[0].mxu0 %v1148
      %v1253 = vpop.f32.mrb[0].mxu0
      %v1254 = vadd.f32 0.0, %v1253
      %v1255 = vpop.f32.mrb[0].mxu0
      %v1256 = vpop.f32.mrb[0].mxu0
      %v1257 = vadd.f32 0.0, %v1256
      %v1258 = vpop.f32.mrb[0].mxu0
      %1259 = vmatprep.mubr.bf16.mxu0 0
      %1260 = vmatmul.mubr.bf16.gmra.mrb[0].mxu0 %v1151
      %v1261 = vpop.f32.mrb[0].mxu0
      %v1262 = vadd.f32 0.0, %v1261
      %v1263 = vpop.f32.mrb[0].mxu0
      %v1264 = vpop.f32.mrb[0].mxu0
      %v1265 = vadd.f32 0.0, %v1264
      %v1266 = vpop.f32.mrb[0].mxu0
      %1267 = vmatprep.mubr.bf16.mxu0 0
      %1268 = vmatmul.mubr.bf16.gmra.mrb[0].mxu0 %v1154
      %v1269 = vpop.f32.mrb[0].mxu0
      %v1270 = vadd.f32 0.0, %v1269
      %v1271 = vpop.f32.mrb[0].mxu0
      %v1272 = vpop.f32.mrb[0].mxu0
      %v1273 = vadd.f32 0.0, %v1272
      %v1274 = vpop.f32.mrb[0].mxu0
      %1275 = vmatprep.mubr.bf16.mxu0 0
      %1276 = vmatmul.mubr.bf16.gmra.mrb[0].mxu0 %v1157
      %v1277 = vpop.f32.mrb[0].mxu0
      %v1278 = vadd.f32 0.0, %v1277
      %v1279 = vpop.f32.mrb[0].mxu0
      %v1280 = vpop.f32.mrb[0].mxu0
      %v1281 = vadd.f32 0.0, %v1280
      %v1282 = vpop.f32.mrb[0].mxu0
      %1283 = vmatprep.mubr.bf16.mxu0 0
      %1284 = vmatmul.mubr.bf16.gmra.mrb[0].mxu0 %v1160
      %v1285 = vpop.f32.mrb[0].mxu0
      %v1286 = vadd.f32 0.0, %v1285
      %v1287 = vpop.f32.mrb[0].mxu0
      %v1288 = vpop.f32.mrb[0].mxu0
      %v1289 = vadd.f32 0.0, %v1288
      %v1290 = vpop.f32.mrb[0].mxu0
      %1291 = vmatprep.mubr.bf16.mxu0 0
      %1292 = vmatmul.mubr.bf16.gmra.mrb[0].mxu0 %v1163
      %v1293 = vpop.f32.mrb[0].mxu0
      %v1294 = vadd.f32 0.0, %v1293
      %v1295 = vpop.f32.mrb[0].mxu0
      %v1296 = vpop.f32.mrb[0].mxu0
      %v1297 = vadd.f32 0.0, %v1296
      %v1298 = vpop.f32.mrb[0].mxu0
      %1299 = vmatprep.mubr.bf16.mxu0 0
      %1300 = vmatmul.mubr.bf16.gmra.mrb[0].mxu0 %v1166
      %v1301 = vpop.f32.mrb[0].mxu0
      %v1302 = vadd.f32 0.0, %v1301
      %v1303 = vpop.f32.mrb[0].mxu0
      %v1304 = vpop.f32.mrb[0].mxu0
      %v1305 = vadd.f32 0.0, %v1304
      %v1306 = vpop.f32.mrb[0].mxu0
      %1307 = vmatprep.mubr.bf16.mxu0 0
      %1308 = vmatmul.mubr.bf16.gmra.mrb[0].mxu0 %v1169
      %v1309 = vpop.f32.mrb[0].mxu0
      %v1310 = vadd.f32 0.0, %v1309
      %v1311 = vpop.f32.mrb[0].mxu0
      %v1312 = vpop.f32.mrb[0].mxu0
      %v1313 = vadd.f32 0.0, %v1312
      %v1314 = vpop.f32.mrb[0].mxu0
      %1315 = vmatprep.mubr.bf16.mxu0 0
      %1316 = vmatmul.mubr.bf16.gmra.mrb[0].mxu0 %v1172
      %v1317 = vpop.f32.mrb[0].mxu0
      %v1318 = vadd.f32 0.0, %v1317
      %v1319 = vpop.f32.mrb[0].mxu0
      %v1320 = vpop.f32.mrb[0].mxu0
      %v1321 = vadd.f32 0.0, %v1320
      %v1322 = vpop.f32.mrb[0].mxu0
      %1323 = vmatprep.mubr.bf16.mxu0 0
      %1324 = vmatmul.mubr.bf16.gmra.mrb[0].mxu0 %v1175
      %v1325 = vpop.f32.mrb[0].mxu0
      %v1326 = vadd.f32 0.0, %v1325
      %v1327 = vpop.f32.mrb[0].mxu0
      %v1328 = vpop.f32.mrb[0].mxu0
      %v1329 = vadd.f32 0.0, %v1328
      %v1330 = vpop.f32.mrb[0].mxu0
      %1331 = vmatprep.mubr.bf16.mxu0 0
      %1332 = vmatmul.mubr.bf16.gmra.mrb[0].mxu0 %v1178
      %v1333 = vpop.f32.mrb[0].mxu0
      %v1334 = vadd.f32 0.0, %v1333
      %v1335 = vpop.f32.mrb[0].mxu0
      %v1336 = vpop.f32.mrb[0].mxu0
      %v1337 = vadd.f32 0.0, %v1336
      %v1338 = vpop.f32.mrb[0].mxu0
      %1339 = vmatprep.mubr.bf16.mxu0 0
      %1340 = vmatmul.mubr.bf16.gmra.mrb[0].mxu0 %v1181
      %v1341 = vpop.f32.mrb[0].mxu0
      %v1342 = vadd.f32 0.0, %v1341
      %v1343 = vpop.f32.mrb[0].mxu0
      %v1344 = vpop.f32.mrb[0].mxu0
      %v1345 = vadd.f32 0.0, %v1344
      %v1346 = vpop.f32.mrb[0].mxu0
      %1347 = vmatprep.mubr.bf16.mxu0 0
      %1348 = vmatmul.mubr.bf16.gmra.mrb[0].mxu0 %v1184
      %v1349 = vpop.f32.mrb[0].mxu0
      %v1350 = vadd.f32 0.0, %v1349
      %v1351 = vpop.f32.mrb[0].mxu0
      %v1352 = vpop.f32.mrb[0].mxu0
      %v1353 = vadd.f32 0.0, %v1352
      %v1354 = vpop.f32.mrb[0].mxu0
      %1355 = vmatprep.mubr.bf16.mxu0 0
      %1356 = vmatmul.mubr.bf16.gmra.mrb[0].mxu0 %v1187
      %v1357 = vpop.f32.mrb[0].mxu0
      %v1358 = vadd.f32 0.0, %v1357
      %v1359 = vpop.f32.mrb[0].mxu0
      %v1360 = vpop.f32.mrb[0].mxu0
      %v1361 = vadd.f32 0.0, %v1360
      %v1362 = vpop.f32.mrb[0].mxu0
      %1363 = vmatprep.mubr.bf16.mxu0 0
      %1364 = vmatmul.mubr.bf16.gmra.mrb[0].mxu0 %v1190
      %v1365 = vpop.f32.mrb[0].mxu0
      %v1366 = vadd.f32 0.0, %v1365
      %v1367 = vpop.f32.mrb[0].mxu0
      %v1368 = vpop.f32.mrb[0].mxu0
      %v1369 = vadd.f32 0.0, %v1368
      %v1370 = vpop.f32.mrb[0].mxu0
      %1371 = vdwg.mxu0
      %v1372 = vadd.f32 %v1046, %v1230
      %v1373 = vadd.f32 %v1047, %v1233
      %v1374 = vadd.f32 %v1048, %v1238
      %v1375 = vadd.f32 %v1049, %v1241
      %v1376 = vadd.f32 %v1050, %v1246
      %v1377 = vadd.f32 %v1051, %v1249
      %v1378 = vadd.f32 %v1052, %v1254
      %v1379 = vadd.f32 %v1053, %v1257
      %v1380 = vadd.f32 %v1054, %v1262
      %v1381 = vadd.f32 %v1055, %v1265
      %v1382 = vadd.f32 %v1056, %v1270
      %v1383 = vadd.f32 %v1057, %v1273
      %v1384 = vadd.f32 %v1058, %v1278
      %v1385 = vadd.f32 %v1059, %v1281
      %v1386 = vadd.f32 %v1060, %v1286
      %v1387 = vadd.f32 %v1061, %v1289
      %v1388 = vadd.f32 %v1062, %v1294
      %v1389 = vadd.f32 %v1063, %v1297
      %v1390 = vadd.f32 %v1064, %v1302
      %v1391 = vadd.f32 %v1065, %v1305
      %v1392 = vadd.f32 %v1066, %v1310
      %v1393 = vadd.f32 %v1067, %v1313
      %v1394 = vadd.f32 %v1068, %v1318
      %v1395 = vadd.f32 %v1069, %v1321
      %v1396 = vadd.f32 %v1070, %v1326
      %v1397 = vadd.f32 %v1071, %v1329
      %v1398 = vadd.f32 %v1072, %v1334
      %v1399 = vadd.f32 %v1073, %v1337
      %v1400 = vadd.f32 %v1074, %v1342
      %v1401 = vadd.f32 %v1075, %v1345
      %v1402 = vadd.f32 %v1076, %v1350
      %v1403 = vadd.f32 %v1077, %v1353
      %v1404 = vadd.f32 %v1078, %v1358
      %v1405 = vadd.f32 %v1079, %v1361
      %v1406 = vadd.f32 %v1080, %v1366
      %v1407 = vadd.f32 %v1081, %v1369
      %v1408 = vld [vmem:[%s165 + $0x13] sm:$0xff]
      %v1409 = vld [vmem:[%s165 + $0x1b] sm:$0xff]
      %v1410 = vld [vmem:[%s165 + $0x23] sm:$0xff]
      %v1411 = vld [vmem:[%s165 + $0x2b] sm:$0xff]
      %v1412 = vld [vmem:[%s165 + $0x33] sm:$0xff]
      %v1413 = vld [vmem:[%s165 + $0x3b] sm:$0xff]
      %v1414 = vld [vmem:[%s165 + $0x43] sm:$0xff]
      %v1415 = vld [vmem:[%s165 + $0x4b] sm:$0xff]
      %v1416 = vld [vmem:[%s165 + $0x53] sm:$0xff]
      %v1417 = vld [vmem:[%s165 + $0x5b] sm:$0xff]
      %v1418 = vld [vmem:[%s165 + $0x63] sm:$0xff]
      %v1419 = vld [vmem:[%s165 + $0x6b] sm:$0xff]
      %v1420 = vld [vmem:[%s165 + $0x73] sm:$0xff]
      %v1421 = vld [vmem:[%s165 + $0x7b] sm:$0xff]
      %v1422 = vld [vmem:[%s165 + $0x83] sm:$0xff]
      %v1423 = vld [vmem:[%s165 + $0x8b] sm:$0xff]
      %v1424 = vld [vmem:[%s165 + $0x93] sm:$0xff]
      %v1425 = vld [vmem:[%s165 + $0x9b] sm:$0xff]
      %v1426 = vld [vmem:[%s165 + $0xa3] sm:$0xff]
      %v1427 = vld [vmem:[%s165 + $0xab] sm:$0xff]
      %v1428 = vld [vmem:[%s165 + $0xb3] sm:$0xff]
      %v1429 = vld [vmem:[%s165 + $0xbb] sm:$0xff]
      %v1430 = vld [vmem:[%s165 + $0xc3] sm:$0xff]
      %v1431 = vld [vmem:[%s165 + $0xcb] sm:$0xff]
      %v1432 = vld [vmem:[%s165 + $0xd3] sm:$0xff]
      %v1433 = vld [vmem:[%s165 + $0xdb] sm:$0xff]
      %v1434 = vld [vmem:[%s165 + $0xe3] sm:$0xff]
      %v1435 = vld [vmem:[%s165 + $0xeb] sm:$0xff]
      %v1436 = vld [vmem:[%s165 + $0xf3] sm:$0xff]
      %v1437 = vld [vmem:[%s165 + $0xfb] sm:$0xff]
      %v1438 = vld [vmem:[%s165 + $0x103] sm:$0xff]
      %v1439 = vld [vmem:[%s165 + $0x10b] sm:$0xff]
      %v1440 = vld [vmem:[%s165 + $0x113] sm:$0xff]
      %v1441 = vld [vmem:[%s165 + $0x11b] sm:$0xff]
      %v1442 = vld [vmem:[%s165 + $0x123] sm:$0xff]
      %v1443 = vld [vmem:[%s165 + $0x12b] sm:$0xff]
      %v1444 = vpack.c.bf16 %v1409, %v1408
      %v1445 = vpack.c.bf16 %v1411, %v1410
      %v1446 = vpack.c.bf16 %v1413, %v1412
      %v1447 = vpack.c.bf16 %v1415, %v1414
      %v1448 = vpack.c.bf16 %v1417, %v1416
      %v1449 = vpack.c.bf16 %v1419, %v1418
      %v1450 = vpack.c.bf16 %v1421, %v1420
      %v1451 = vpack.c.bf16 %v1423, %v1422
      %v1452 = vpack.c.bf16 %v1425, %v1424
      %v1453 = vpack.c.bf16 %v1427, %v1426
      %v1454 = vpack.c.bf16 %v1429, %v1428
      %v1455 = vpack.c.bf16 %v1431, %v1430
      %v1456 = vpack.c.bf16 %v1433, %v1432
      %v1457 = vpack.c.bf16 %v1435, %v1434
      %v1458 = vpack.c.bf16 %v1437, %v1436
      %v1459 = vpack.c.bf16 %v1439, %v1438
      %v1460 = vpack.c.bf16 %v1441, %v1440
      %v1461 = vpack.c.bf16 %v1443, %v1442
      %s1462 = scalar_lea.vmem %s1, 8
      %v1463 = vld [vmem:[%s1462] sm:$0x3]
      %v1465 = vsel %vm283, %v1444, 0
      %v1468 = vsel %vm283, %v1445, 0
      %v1471 = vsel %vm283, %v1446, 0
      %v1474 = vsel %vm283, %v1447, 0
      %v1477 = vsel %vm283, %v1448, 0
      %v1480 = vsel %vm283, %v1449, 0
      %v1483 = vsel %vm283, %v1450, 0
      %v1486 = vsel %vm283, %v1451, 0
      %v1489 = vsel %vm283, %v1452, 0
      %v1492 = vsel %vm283, %v1453, 0
      %v1495 = vsel %vm283, %v1454, 0
      %v1498 = vsel %vm283, %v1455, 0
      %v1501 = vsel %vm283, %v1456, 0
      %v1504 = vsel %vm283, %v1457, 0
      %v1507 = vsel %vm283, %v1458, 0
      %v1510 = vsel %vm283, %v1459, 0
      %v1513 = vsel %vm283, %v1460, 0
      %v1516 = vsel %vm283, %v1461, 0
      %v1519 = vand.u32 %v1463, %v341
      %1521 = vmatprep.subr.bf16.mxu0 0
      %1522 = vmatpush1.bf16.msra.mxu0 %v1519
      %1523 = vmatprep.subr.bf16.mxu0 0
      %1524 = vmatpush1.bf16.msra.mxu0 0
      %1525 = vmatprep.subr.bf16.mxu0 0
      %1526 = vmatpush1.bf16.msra.mxu0 0
      %1527 = vmatprep.subr.bf16.mxu0 0
      %1528 = vmatpush1.bf16.msra.mxu0 0
      %1529 = vmatprep.subr.bf16.mxu0 0
      %1530 = vmatpush1.bf16.msra.mxu0 0
      %1531 = vmatprep.subr.bf16.mxu0 0
      %1532 = vmatpush1.bf16.msra.mxu0 0
      %1533 = vmatprep.subr.bf16.mxu0 0
      %1534 = vmatpush1.bf16.msra.mxu0 0
      %1535 = vmatprep.subr.bf16.mxu0 0
      %1536 = vmatpush1.bf16.msra.mxu0 0
      %1537 = vmatprep.subr.bf16.mxu0 0
      %1538 = vmatpush1.bf16.msra.mxu0 0
      %1539 = vmatprep.subr.bf16.mxu0 0
      %1540 = vmatpush1.bf16.msra.mxu0 0
      %1541 = vmatprep.subr.bf16.mxu0 0
      %1542 = vmatpush1.bf16.msra.mxu0 0
      %1543 = vmatprep.subr.bf16.mxu0 0
      %1544 = vmatpush1.bf16.msra.mxu0 0
      %1545 = vmatprep.subr.bf16.mxu0 0
      %1546 = vmatpush1.bf16.msra.mxu0 0
      %1547 = vmatprep.subr.bf16.mxu0 0
      %1548 = vmatpush1.bf16.msra.mxu0 0
      %1549 = vmatprep.subr.bf16.mxu0 0
      %1550 = vmatpush1.bf16.msra.mxu0 0
      %1551 = vmatprep.subr.bf16.mxu0 0
      %1552 = vmatpush1.bf16.msra.mxu0 0
      %1553 = vmatprep.mubr.bf16.mxu0 0
      %1554 = vmatmul.mubr.bf16.gmra.mrb[0].mxu0 %v1465
      %v1555 = vpop.f32.mrb[0].mxu0
      %v1556 = vadd.f32 0.0, %v1555
      %v1557 = vpop.f32.mrb[0].mxu0
      %v1558 = vpop.f32.mrb[0].mxu0
      %v1559 = vadd.f32 0.0, %v1558
      %v1560 = vpop.f32.mrb[0].mxu0
      %1561 = vmatprep.mubr.bf16.mxu0 0
      %1562 = vmatmul.mubr.bf16.gmra.mrb[0].mxu0 %v1468
      %v1563 = vpop.f32.mrb[0].mxu0
      %v1564 = vadd.f32 0.0, %v1563
      %v1565 = vpop.f32.mrb[0].mxu0
      %v1566 = vpop.f32.mrb[0].mxu0
      %v1567 = vadd.f32 0.0, %v1566
      %v1568 = vpop.f32.mrb[0].mxu0
      %1569 = vmatprep.mubr.bf16.mxu0 0
      %1570 = vmatmul.mubr.bf16.gmra.mrb[0].mxu0 %v1471
      %v1571 = vpop.f32.mrb[0].mxu0
      %v1572 = vadd.f32 0.0, %v1571
      %v1573 = vpop.f32.mrb[0].mxu0
      %v1574 = vpop.f32.mrb[0].mxu0
      %v1575 = vadd.f32 0.0, %v1574
      %v1576 = vpop.f32.mrb[0].mxu0
      %1577 = vmatprep.mubr.bf16.mxu0 0
      %1578 = vmatmul.mubr.bf16.gmra.mrb[0].mxu0 %v1474
      %v1579 = vpop.f32.mrb[0].mxu0
      %v1580 = vadd.f32 0.0, %v1579
      %v1581 = vpop.f32.mrb[0].mxu0
      %v1582 = vpop.f32.mrb[0].mxu0
      %v1583 = vadd.f32 0.0, %v1582
      %v1584 = vpop.f32.mrb[0].mxu0
      %1585 = vmatprep.mubr.bf16.mxu0 0
      %1586 = vmatmul.mubr.bf16.gmra.mrb[0].mxu0 %v1477
      %v1587 = vpop.f32.mrb[0].mxu0
      %v1588 = vadd.f32 0.0, %v1587
      %v1589 = vpop.f32.mrb[0].mxu0
      %v1590 = vpop.f32.mrb[0].mxu0
      %v1591 = vadd.f32 0.0, %v1590
      %v1592 = vpop.f32.mrb[0].mxu0
      %1593 = vmatprep.mubr.bf16.mxu0 0
      %1594 = vmatmul.mubr.bf16.gmra.mrb[0].mxu0 %v1480
      %v1595 = vpop.f32.mrb[0].mxu0
      %v1596 = vadd.f32 0.0, %v1595
      %v1597 = vpop.f32.mrb[0].mxu0
      %v1598 = vpop.f32.mrb[0].mxu0
      %v1599 = vadd.f32 0.0, %v1598
      %v1600 = vpop.f32.mrb[0].mxu0
      %1601 = vmatprep.mubr.bf16.mxu0 0
      %1602 = vmatmul.mubr.bf16.gmra.mrb[0].mxu0 %v1483
      %v1603 = vpop.f32.mrb[0].mxu0
      %v1604 = vadd.f32 0.0, %v1603
      %v1605 = vpop.f32.mrb[0].mxu0
      %v1606 = vpop.f32.mrb[0].mxu0
      %v1607 = vadd.f32 0.0, %v1606
      %v1608 = vpop.f32.mrb[0].mxu0
      %1609 = vmatprep.mubr.bf16.mxu0 0
      %1610 = vmatmul.mubr.bf16.gmra.mrb[0].mxu0 %v1486
      %v1611 = vpop.f32.mrb[0].mxu0
      %v1612 = vadd.f32 0.0, %v1611
      %v1613 = vpop.f32.mrb[0].mxu0
      %v1614 = vpop.f32.mrb[0].mxu0
      %v1615 = vadd.f32 0.0, %v1614
      %v1616 = vpop.f32.mrb[0].mxu0
      %1617 = vmatprep.mubr.bf16.mxu0 0
      %1618 = vmatmul.mubr.bf16.gmra.mrb[0].mxu0 %v1489
      %v1619 = vpop.f32.mrb[0].mxu0
      %v1620 = vadd.f32 0.0, %v1619
      %v1621 = vpop.f32.mrb[0].mxu0
      %v1622 = vpop.f32.mrb[0].mxu0
      %v1623 = vadd.f32 0.0, %v1622
      %v1624 = vpop.f32.mrb[0].mxu0
      %1625 = vmatprep.mubr.bf16.mxu0 0
      %1626 = vmatmul.mubr.bf16.gmra.mrb[0].mxu0 %v1492
      %v1627 = vpop.f32.mrb[0].mxu0
      %v1628 = vadd.f32 0.0, %v1627
      %v1629 = vpop.f32.mrb[0].mxu0
      %v1630 = vpop.f32.mrb[0].mxu0
      %v1631 = vadd.f32 0.0, %v1630
      %v1632 = vpop.f32.mrb[0].mxu0
      %1633 = vmatprep.mubr.bf16.mxu0 0
      %1634 = vmatmul.mubr.bf16.gmra.mrb[0].mxu0 %v1495
      %v1635 = vpop.f32.mrb[0].mxu0
      %v1636 = vadd.f32 0.0, %v1635
      %v1637 = vpop.f32.mrb[0].mxu0
      %v1638 = vpop.f32.mrb[0].mxu0
      %v1639 = vadd.f32 0.0, %v1638
      %v1640 = vpop.f32.mrb[0].mxu0
      %1641 = vmatprep.mubr.bf16.mxu0 0
      %1642 = vmatmul.mubr.bf16.gmra.mrb[0].mxu0 %v1498
      %v1643 = vpop.f32.mrb[0].mxu0
      %v1644 = vadd.f32 0.0, %v1643
      %v1645 = vpop.f32.mrb[0].mxu0
      %v1646 = vpop.f32.mrb[0].mxu0
      %v1647 = vadd.f32 0.0, %v1646
      %v1648 = vpop.f32.mrb[0].mxu0
      %1649 = vmatprep.mubr.bf16.mxu0 0
      %1650 = vmatmul.mubr.bf16.gmra.mrb[0].mxu0 %v1501
      %v1651 = vpop.f32.mrb[0].mxu0
      %v1652 = vadd.f32 0.0, %v1651
      %v1653 = vpop.f32.mrb[0].mxu0
      %v1654 = vpop.f32.mrb[0].mxu0
      %v1655 = vadd.f32 0.0, %v1654
      %v1656 = vpop.f32.mrb[0].mxu0
      %1657 = vmatprep.mubr.bf16.mxu0 0
      %1658 = vmatmul.mubr.bf16.gmra.mrb[0].mxu0 %v1504
      %v1659 = vpop.f32.mrb[0].mxu0
      %v1660 = vadd.f32 0.0, %v1659
      %v1661 = vpop.f32.mrb[0].mxu0
      %v1662 = vpop.f32.mrb[0].mxu0
      %v1663 = vadd.f32 0.0, %v1662
      %v1664 = vpop.f32.mrb[0].mxu0
      %1665 = vmatprep.mubr.bf16.mxu0 0
      %1666 = vmatmul.mubr.bf16.gmra.mrb[0].mxu0 %v1507
      %v1667 = vpop.f32.mrb[0].mxu0
      %v1668 = vadd.f32 0.0, %v1667
      %v1669 = vpop.f32.mrb[0].mxu0
      %v1670 = vpop.f32.mrb[0].mxu0
      %v1671 = vadd.f32 0.0, %v1670
      %v1672 = vpop.f32.mrb[0].mxu0
      %1673 = vmatprep.mubr.bf16.mxu0 0
      %1674 = vmatmul.mubr.bf16.gmra.mrb[0].mxu0 %v1510
      %v1675 = vpop.f32.mrb[0].mxu0
      %v1676 = vadd.f32 0.0, %v1675
      %v1677 = vpop.f32.mrb[0].mxu0
      %v1678 = vpop.f32.mrb[0].mxu0
      %v1679 = vadd.f32 0.0, %v1678
      %v1680 = vpop.f32.mrb[0].mxu0
      %1681 = vmatprep.mubr.bf16.mxu0 0
      %1682 = vmatmul.mubr.bf16.gmra.mrb[0].mxu0 %v1513
      %v1683 = vpop.f32.mrb[0].mxu0
      %v1684 = vadd.f32 0.0, %v1683
      %v1685 = vpop.f32.mrb[0].mxu0
      %v1686 = vpop.f32.mrb[0].mxu0
      %v1687 = vadd.f32 0.0, %v1686
      %v1688 = vpop.f32.mrb[0].mxu0
      %1689 = vmatprep.mubr.bf16.mxu0 0
      %1690 = vmatmul.mubr.bf16.gmra.mrb[0].mxu0 %v1516
      %v1691 = vpop.f32.mrb[0].mxu0
      %v1692 = vadd.f32 0.0, %v1691
      %v1693 = vpop.f32.mrb[0].mxu0
      %v1694 = vpop.f32.mrb[0].mxu0
      %v1695 = vadd.f32 0.0, %v1694
      %v1696 = vpop.f32.mrb[0].mxu0
      %1697 = vdwg.mxu0
      %v1698 = vadd.f32 %v1372, %v1556
      %v1699 = vadd.f32 %v1373, %v1559
      %v1700 = vadd.f32 %v1374, %v1564
      %v1701 = vadd.f32 %v1375, %v1567
      %v1702 = vadd.f32 %v1376, %v1572
      %v1703 = vadd.f32 %v1377, %v1575
      %v1704 = vadd.f32 %v1378, %v1580
      %v1705 = vadd.f32 %v1379, %v1583
      %v1706 = vadd.f32 %v1380, %v1588
      %v1707 = vadd.f32 %v1381, %v1591
      %v1708 = vadd.f32 %v1382, %v1596
      %v1709 = vadd.f32 %v1383, %v1599
      %v1710 = vadd.f32 %v1384, %v1604
      %v1711 = vadd.f32 %v1385, %v1607
      %v1712 = vadd.f32 %v1386, %v1612
      %v1713 = vadd.f32 %v1387, %v1615
      %v1714 = vadd.f32 %v1388, %v1620
      %v1715 = vadd.f32 %v1389, %v1623
      %v1716 = vadd.f32 %v1390, %v1628
      %v1717 = vadd.f32 %v1391, %v1631
      %v1718 = vadd.f32 %v1392, %v1636
      %v1719 = vadd.f32 %v1393, %v1639
      %v1720 = vadd.f32 %v1394, %v1644
      %v1721 = vadd.f32 %v1395, %v1647
      %v1722 = vadd.f32 %v1396, %v1652
      %v1723 = vadd.f32 %v1397, %v1655
      %v1724 = vadd.f32 %v1398, %v1660
      %v1725 = vadd.f32 %v1399, %v1663
      %v1726 = vadd.f32 %v1400, %v1668
      %v1727 = vadd.f32 %v1401, %v1671
      %v1728 = vadd.f32 %v1402, %v1676
      %v1729 = vadd.f32 %v1403, %v1679
      %v1730 = vadd.f32 %v1404, %v1684
      %v1731 = vadd.f32 %v1405, %v1687
      %v1732 = vadd.f32 %v1406, %v1692
      %v1733 = vadd.f32 %v1407, %v1695
      %v1734 = vld [vmem:[%s165 + $0x14] sm:$0xff]
      %v1735 = vld [vmem:[%s165 + $0x1c] sm:$0xff]
      %v1736 = vld [vmem:[%s165 + $0x24] sm:$0xff]
      %v1737 = vld [vmem:[%s165 + $0x2c] sm:$0xff]
      %v1738 = vld [vmem:[%s165 + $0x34] sm:$0xff]
      %v1739 = vld [vmem:[%s165 + $0x3c] sm:$0xff]
      %v1740 = vld [vmem:[%s165 + $0x44] sm:$0xff]
      %v1741 = vld [vmem:[%s165 + $0x4c] sm:$0xff]
      %v1742 = vld [vmem:[%s165 + $0x54] sm:$0xff]
      %v1743 = vld [vmem:[%s165 + $0x5c] sm:$0xff]
      %v1744 = vld [vmem:[%s165 + $0x64] sm:$0xff]
      %v1745 = vld [vmem:[%s165 + $0x6c] sm:$0xff]
      %v1746 = vld [vmem:[%s165 + $0x74] sm:$0xff]
      %v1747 = vld [vmem:[%s165 + $0x7c] sm:$0xff]
      %v1748 = vld [vmem:[%s165 + $0x84] sm:$0xff]
      %v1749 = vld [vmem:[%s165 + $0x8c] sm:$0xff]
      %v1750 = vld [vmem:[%s165 + $0x94] sm:$0xff]
      %v1751 = vld [vmem:[%s165 + $0x9c] sm:$0xff]
      %v1752 = vld [vmem:[%s165 + $0xa4] sm:$0xff]
      %v1753 = vld [vmem:[%s165 + $0xac] sm:$0xff]
      %v1754 = vld [vmem:[%s165 + $0xb4] sm:$0xff]
      %v1755 = vld [vmem:[%s165 + $0xbc] sm:$0xff]
      %v1756 = vld [vmem:[%s165 + $0xc4] sm:$0xff]
      %v1757 = vld [vmem:[%s165 + $0xcc] sm:$0xff]
      %v1758 = vld [vmem:[%s165 + $0xd4] sm:$0xff]
      %v1759 = vld [vmem:[%s165 + $0xdc] sm:$0xff]
      %v1760 = vld [vmem:[%s165 + $0xe4] sm:$0xff]
      %v1761 = vld [vmem:[%s165 + $0xec] sm:$0xff]
      %v1762 = vld [vmem:[%s165 + $0xf4] sm:$0xff]
      %v1763 = vld [vmem:[%s165 + $0xfc] sm:$0xff]
      %v1764 = vld [vmem:[%s165 + $0x104] sm:$0xff]
      %v1765 = vld [vmem:[%s165 + $0x10c] sm:$0xff]
      %v1766 = vld [vmem:[%s165 + $0x114] sm:$0xff]
      %v1767 = vld [vmem:[%s165 + $0x11c] sm:$0xff]
      %v1768 = vld [vmem:[%s165 + $0x124] sm:$0xff]
      %v1769 = vld [vmem:[%s165 + $0x12c] sm:$0xff]
      %v1770 = vpack.c.bf16 %v1735, %v1734
      %v1771 = vpack.c.bf16 %v1737, %v1736
      %v1772 = vpack.c.bf16 %v1739, %v1738
      %v1773 = vpack.c.bf16 %v1741, %v1740
      %v1774 = vpack.c.bf16 %v1743, %v1742
      %v1775 = vpack.c.bf16 %v1745, %v1744
      %v1776 = vpack.c.bf16 %v1747, %v1746
      %v1777 = vpack.c.bf16 %v1749, %v1748
      %v1778 = vpack.c.bf16 %v1751, %v1750
      %v1779 = vpack.c.bf16 %v1753, %v1752
      %v1780 = vpack.c.bf16 %v1755, %v1754
      %v1781 = vpack.c.bf16 %v1757, %v1756
      %v1782 = vpack.c.bf16 %v1759, %v1758
      %v1783 = vpack.c.bf16 %v1761, %v1760
      %v1784 = vpack.c.bf16 %v1763, %v1762
      %v1785 = vpack.c.bf16 %v1765, %v1764
      %v1786 = vpack.c.bf16 %v1767, %v1766
      %v1787 = vpack.c.bf16 %v1769, %v1768
      %s1788 = scalar_lea.vmem %s1, 10
      %v1789 = vld [vmem:[%s1788] sm:$0x3]
      %v1791 = vsel %vm283, %v1770, 0
      %v1794 = vsel %vm283, %v1771, 0
      %v1797 = vsel %vm283, %v1772, 0
      %v1800 = vsel %vm283, %v1773, 0
      %v1803 = vsel %vm283, %v1774, 0
      %v1806 = vsel %vm283, %v1775, 0
      %v1809 = vsel %vm283, %v1776, 0
      %v1812 = vsel %vm283, %v1777, 0
      %v1815 = vsel %vm283, %v1778, 0
      %v1818 = vsel %vm283, %v1779, 0
      %v1821 = vsel %vm283, %v1780, 0
      %v1824 = vsel %vm283, %v1781, 0
      %v1827 = vsel %vm283, %v1782, 0
      %v1830 = vsel %vm283, %v1783, 0
      %v1833 = vsel %vm283, %v1784, 0
      %v1836 = vsel %vm283, %v1785, 0
      %v1839 = vsel %vm283, %v1786, 0
      %v1842 = vsel %vm283, %v1787, 0
      %v1845 = vand.u32 %v1789, %v341
      %1847 = vmatprep.subr.bf16.mxu0 0
      %1848 = vmatpush1.bf16.msra.mxu0 %v1845
      %1849 = vmatprep.subr.bf16.mxu0 0
      %1850 = vmatpush1.bf16.msra.mxu0 0
      %1851 = vmatprep.subr.bf16.mxu0 0
      %1852 = vmatpush1.bf16.msra.mxu0 0
      %1853 = vmatprep.subr.bf16.mxu0 0
      %1854 = vmatpush1.bf16.msra.mxu0 0
      %1855 = vmatprep.subr.bf16.mxu0 0
      %1856 = vmatpush1.bf16.msra.mxu0 0
      %1857 = vmatprep.subr.bf16.mxu0 0
      %1858 = vmatpush1.bf16.msra.mxu0 0
      %1859 = vmatprep.subr.bf16.mxu0 0
      %1860 = vmatpush1.bf16.msra.mxu0 0
      %1861 = vmatprep.subr.bf16.mxu0 0
      %1862 = vmatpush1.bf16.msra.mxu0 0
      %1863 = vmatprep.subr.bf16.mxu0 0
      %1864 = vmatpush1.bf16.msra.mxu0 0
      %1865 = vmatprep.subr.bf16.mxu0 0
      %1866 = vmatpush1.bf16.msra.mxu0 0
      %1867 = vmatprep.subr.bf16.mxu0 0
      %1868 = vmatpush1.bf16.msra.mxu0 0
      %1869 = vmatprep.subr.bf16.mxu0 0
      %1870 = vmatpush1.bf16.msra.mxu0 0
      %1871 = vmatprep.subr.bf16.mxu0 0
      %1872 = vmatpush1.bf16.msra.mxu0 0
      %1873 = vmatprep.subr.bf16.mxu0 0
      %1874 = vmatpush1.bf16.msra.mxu0 0
      %1875 = vmatprep.subr.bf16.mxu0 0
      %1876 = vmatpush1.bf16.msra.mxu0 0
      %1877 = vmatprep.subr.bf16.mxu0 0
      %1878 = vmatpush1.bf16.msra.mxu0 0
      %1879 = vmatprep.mubr.bf16.mxu0 0
      %1880 = vmatmul.mubr.bf16.gmra.mrb[0].mxu0 %v1791
      %v1881 = vpop.f32.mrb[0].mxu0
      %v1882 = vadd.f32 0.0, %v1881
      %v1883 = vpop.f32.mrb[0].mxu0
      %v1884 = vpop.f32.mrb[0].mxu0
      %v1885 = vadd.f32 0.0, %v1884
      %v1886 = vpop.f32.mrb[0].mxu0
      %1887 = vmatprep.mubr.bf16.mxu0 0
      %1888 = vmatmul.mubr.bf16.gmra.mrb[0].mxu0 %v1794
      %v1889 = vpop.f32.mrb[0].mxu0
      %v1890 = vadd.f32 0.0, %v1889
      %v1891 = vpop.f32.mrb[0].mxu0
      %v1892 = vpop.f32.mrb[0].mxu0
      %v1893 = vadd.f32 0.0, %v1892
      %v1894 = vpop.f32.mrb[0].mxu0
      %1895 = vmatprep.mubr.bf16.mxu0 0
      %1896 = vmatmul.mubr.bf16.gmra.mrb[0].mxu0 %v1797
      %v1897 = vpop.f32.mrb[0].mxu0
      %v1898 = vadd.f32 0.0, %v1897
      %v1899 = vpop.f32.mrb[0].mxu0
      %v1900 = vpop.f32.mrb[0].mxu0
      %v1901 = vadd.f32 0.0, %v1900
      %v1902 = vpop.f32.mrb[0].mxu0
      %1903 = vmatprep.mubr.bf16.mxu0 0
      %1904 = vmatmul.mubr.bf16.gmra.mrb[0].mxu0 %v1800
      %v1905 = vpop.f32.mrb[0].mxu0
      %v1906 = vadd.f32 0.0, %v1905
      %v1907 = vpop.f32.mrb[0].mxu0
      %v1908 = vpop.f32.mrb[0].mxu0
      %v1909 = vadd.f32 0.0, %v1908
      %v1910 = vpop.f32.mrb[0].mxu0
      %1911 = vmatprep.mubr.bf16.mxu0 0
      %1912 = vmatmul.mubr.bf16.gmra.mrb[0].mxu0 %v1803
      %v1913 = vpop.f32.mrb[0].mxu0
      %v1914 = vadd.f32 0.0, %v1913
      %v1915 = vpop.f32.mrb[0].mxu0
      %v1916 = vpop.f32.mrb[0].mxu0
      %v1917 = vadd.f32 0.0, %v1916
      %v1918 = vpop.f32.mrb[0].mxu0
      %1919 = vmatprep.mubr.bf16.mxu0 0
      %1920 = vmatmul.mubr.bf16.gmra.mrb[0].mxu0 %v1806
      %v1921 = vpop.f32.mrb[0].mxu0
      %v1922 = vadd.f32 0.0, %v1921
      %v1923 = vpop.f32.mrb[0].mxu0
      %v1924 = vpop.f32.mrb[0].mxu0
      %v1925 = vadd.f32 0.0, %v1924
      %v1926 = vpop.f32.mrb[0].mxu0
      %1927 = vmatprep.mubr.bf16.mxu0 0
      %1928 = vmatmul.mubr.bf16.gmra.mrb[0].mxu0 %v1809
      %v1929 = vpop.f32.mrb[0].mxu0
      %v1930 = vadd.f32 0.0, %v1929
      %v1931 = vpop.f32.mrb[0].mxu0
      %v1932 = vpop.f32.mrb[0].mxu0
      %v1933 = vadd.f32 0.0, %v1932
      %v1934 = vpop.f32.mrb[0].mxu0
      %1935 = vmatprep.mubr.bf16.mxu0 0
      %1936 = vmatmul.mubr.bf16.gmra.mrb[0].mxu0 %v1812
      %v1937 = vpop.f32.mrb[0].mxu0
      %v1938 = vadd.f32 0.0, %v1937
      %v1939 = vpop.f32.mrb[0].mxu0
      %v1940 = vpop.f32.mrb[0].mxu0
      %v1941 = vadd.f32 0.0, %v1940
      %v1942 = vpop.f32.mrb[0].mxu0
      %1943 = vmatprep.mubr.bf16.mxu0 0
      %1944 = vmatmul.mubr.bf16.gmra.mrb[0].mxu0 %v1815
      %v1945 = vpop.f32.mrb[0].mxu0
      %v1946 = vadd.f32 0.0, %v1945
      %v1947 = vpop.f32.mrb[0].mxu0
      %v1948 = vpop.f32.mrb[0].mxu0
      %v1949 = vadd.f32 0.0, %v1948
      %v1950 = vpop.f32.mrb[0].mxu0
      %1951 = vmatprep.mubr.bf16.mxu0 0
      %1952 = vmatmul.mubr.bf16.gmra.mrb[0].mxu0 %v1818
      %v1953 = vpop.f32.mrb[0].mxu0
      %v1954 = vadd.f32 0.0, %v1953
      %v1955 = vpop.f32.mrb[0].mxu0
      %v1956 = vpop.f32.mrb[0].mxu0
      %v1957 = vadd.f32 0.0, %v1956
      %v1958 = vpop.f32.mrb[0].mxu0
      %1959 = vmatprep.mubr.bf16.mxu0 0
      %1960 = vmatmul.mubr.bf16.gmra.mrb[0].mxu0 %v1821
      %v1961 = vpop.f32.mrb[0].mxu0
      %v1962 = vadd.f32 0.0, %v1961
      %v1963 = vpop.f32.mrb[0].mxu0
      %v1964 = vpop.f32.mrb[0].mxu0
      %v1965 = vadd.f32 0.0, %v1964
      %v1966 = vpop.f32.mrb[0].mxu0
      %1967 = vmatprep.mubr.bf16.mxu0 0
      %1968 = vmatmul.mubr.bf16.gmra.mrb[0].mxu0 %v1824
      %v1969 = vpop.f32.mrb[0].mxu0
      %v1970 = vadd.f32 0.0, %v1969
      %v1971 = vpop.f32.mrb[0].mxu0
      %v1972 = vpop.f32.mrb[0].mxu0
      %v1973 = vadd.f32 0.0, %v1972
      %v1974 = vpop.f32.mrb[0].mxu0
      %1975 = vmatprep.mubr.bf16.mxu0 0
      %1976 = vmatmul.mubr.bf16.gmra.mrb[0].mxu0 %v1827
      %v1977 = vpop.f32.mrb[0].mxu0
      %v1978 = vadd.f32 0.0, %v1977
      %v1979 = vpop.f32.mrb[0].mxu0
      %v1980 = vpop.f32.mrb[0].mxu0
      %v1981 = vadd.f32 0.0, %v1980
      %v1982 = vpop.f32.mrb[0].mxu0
      %1983 = vmatprep.mubr.bf16.mxu0 0
      %1984 = vmatmul.mubr.bf16.gmra.mrb[0].mxu0 %v1830
      %v1985 = vpop.f32.mrb[0].mxu0
      %v1986 = vadd.f32 0.0, %v1985
      %v1987 = vpop.f32.mrb[0].mxu0
      %v1988 = vpop.f32.mrb[0].mxu0
      %v1989 = vadd.f32 0.0, %v1988
      %v1990 = vpop.f32.mrb[0].mxu0
      %1991 = vmatprep.mubr.bf16.mxu0 0
      %1992 = vmatmul.mubr.bf16.gmra.mrb[0].mxu0 %v1833
      %v1993 = vpop.f32.mrb[0].mxu0
      %v1994 = vadd.f32 0.0, %v1993
      %v1995 = vpop.f32.mrb[0].mxu0
      %v1996 = vpop.f32.mrb[0].mxu0
      %v1997 = vadd.f32 0.0, %v1996
      %v1998 = vpop.f32.mrb[0].mxu0
      %1999 = vmatprep.mubr.bf16.mxu0 0
      %2000 = vmatmul.mubr.bf16.gmra.mrb[0].mxu0 %v1836
      %v2001 = vpop.f32.mrb[0].mxu0
      %v2002 = vadd.f32 0.0, %v2001
      %v2003 = vpop.f32.mrb[0].mxu0
      %v2004 = vpop.f32.mrb[0].mxu0
      %v2005 = vadd.f32 0.0, %v2004
      %v2006 = vpop.f32.mrb[0].mxu0
      %2007 = vmatprep.mubr.bf16.mxu0 0
      %2008 = vmatmul.mubr.bf16.gmra.mrb[0].mxu0 %v1839
      %v2009 = vpop.f32.mrb[0].mxu0
      %v2010 = vadd.f32 0.0, %v2009
      %v2011 = vpop.f32.mrb[0].mxu0
      %v2012 = vpop.f32.mrb[0].mxu0
      %v2013 = vadd.f32 0.0, %v2012
      %v2014 = vpop.f32.mrb[0].mxu0
      %2015 = vmatprep.mubr.bf16.mxu0 0
      %2016 = vmatmul.mubr.bf16.gmra.mrb[0].mxu0 %v1842
      %v2017 = vpop.f32.mrb[0].mxu0
      %v2018 = vadd.f32 0.0, %v2017
      %v2019 = vpop.f32.mrb[0].mxu0
      %v2020 = vpop.f32.mrb[0].mxu0
      %v2021 = vadd.f32 0.0, %v2020
      %v2022 = vpop.f32.mrb[0].mxu0
      %2023 = vdwg.mxu0
      %v2024 = vadd.f32 %v1698, %v1882
      %v2025 = vadd.f32 %v1699, %v1885
      %v2026 = vadd.f32 %v1700, %v1890
      %v2027 = vadd.f32 %v1701, %v1893
      %v2028 = vadd.f32 %v1702, %v1898
      %v2029 = vadd.f32 %v1703, %v1901
      %v2030 = vadd.f32 %v1704, %v1906
      %v2031 = vadd.f32 %v1705, %v1909
      %v2032 = vadd.f32 %v1706, %v1914
      %v2033 = vadd.f32 %v1707, %v1917
      %v2034 = vadd.f32 %v1708, %v1922
      %v2035 = vadd.f32 %v1709, %v1925
      %v2036 = vadd.f32 %v1710, %v1930
      %v2037 = vadd.f32 %v1711, %v1933
      %v2038 = vadd.f32 %v1712, %v1938
      %v2039 = vadd.f32 %v1713, %v1941
      %v2040 = vadd.f32 %v1714, %v1946
      %v2041 = vadd.f32 %v1715, %v1949
      %v2042 = vadd.f32 %v1716, %v1954
      %v2043 = vadd.f32 %v1717, %v1957
      %v2044 = vadd.f32 %v1718, %v1962
      %v2045 = vadd.f32 %v1719, %v1965
      %v2046 = vadd.f32 %v1720, %v1970
      %v2047 = vadd.f32 %v1721, %v1973
      %v2048 = vadd.f32 %v1722, %v1978
      %v2049 = vadd.f32 %v1723, %v1981
      %v2050 = vadd.f32 %v1724, %v1986
      %v2051 = vadd.f32 %v1725, %v1989
      %v2052 = vadd.f32 %v1726, %v1994
      %v2053 = vadd.f32 %v1727, %v1997
      %v2054 = vadd.f32 %v1728, %v2002
      %v2055 = vadd.f32 %v1729, %v2005
      %v2056 = vadd.f32 %v1730, %v2010
      %v2057 = vadd.f32 %v1731, %v2013
      %v2058 = vadd.f32 %v1732, %v2018
      %v2059 = vadd.f32 %v1733, %v2021
      %v2060 = vld [vmem:[%s165 + $0x24] sm:$0xff]
      %v2061 = vld [vmem:[%s165 + $0x2c] sm:$0xff]
      %v2062 = vld [vmem:[%s165 + $0x34] sm:$0xff]
      %v2063 = vld [vmem:[%s165 + $0x3c] sm:$0xff]
      %v2064 = vld [vmem:[%s165 + $0x44] sm:$0xff]
      %v2065 = vld [vmem:[%s165 + $0x4c] sm:$0xff]
      %v2066 = vld [vmem:[%s165 + $0x54] sm:$0xff]
      %v2067 = vld [vmem:[%s165 + $0x5c] sm:$0xff]
      %v2068 = vld [vmem:[%s165 + $0x64] sm:$0xff]
      %v2069 = vld [vmem:[%s165 + $0x6c] sm:$0xff]
      %v2070 = vld [vmem:[%s165 + $0x74] sm:$0xff]
      %v2071 = vld [vmem:[%s165 + $0x7c] sm:$0xff]
      %v2072 = vld [vmem:[%s165 + $0x84] sm:$0xff]
      %v2073 = vld [vmem:[%s165 + $0x8c] sm:$0xff]
      %v2074 = vld [vmem:[%s165 + $0x94] sm:$0xff]
      %v2075 = vld [vmem:[%s165 + $0x9c] sm:$0xff]
      %v2076 = vld [vmem:[%s165 + $0xa4] sm:$0xff]
      %v2077 = vld [vmem:[%s165 + $0xac] sm:$0xff]
      %v2078 = vld [vmem:[%s165 + $0xb4] sm:$0xff]
      %v2079 = vld [vmem:[%s165 + $0xbc] sm:$0xff]
      %v2080 = vld [vmem:[%s165 + $0xc4] sm:$0xff]
      %v2081 = vld [vmem:[%s165 + $0xcc] sm:$0xff]
      %v2082 = vld [vmem:[%s165 + $0xd4] sm:$0xff]
      %v2083 = vld [vmem:[%s165 + $0xdc] sm:$0xff]
      %v2084 = vld [vmem:[%s165 + $0xe4] sm:$0xff]
      %v2085 = vld [vmem:[%s165 + $0xec] sm:$0xff]
      %v2086 = vld [vmem:[%s165 + $0xf4] sm:$0xff]
      %v2087 = vld [vmem:[%s165 + $0xfc] sm:$0xff]
      %v2088 = vld [vmem:[%s165 + $0x104] sm:$0xff]
      %v2089 = vld [vmem:[%s165 + $0x10c] sm:$0xff]
      %v2090 = vld [vmem:[%s165 + $0x114] sm:$0xff]
      %v2091 = vld [vmem:[%s165 + $0x11c] sm:$0xff]
      %v2092 = vld [vmem:[%s165 + $0x124] sm:$0xff]
      %v2093 = vld [vmem:[%s165 + $0x12c] sm:$0xff]
      %v2094 = vld [vmem:[%s165 + $0x134] sm:$0xff]
      %v2095 = vld [vmem:[%s165 + $0x13c] sm:$0xff]
      %v2096 = vpack.c.bf16 %v2061, %v2060
      %v2097 = vpack.c.bf16 %v2063, %v2062
      %v2098 = vpack.c.bf16 %v2065, %v2064
      %v2099 = vpack.c.bf16 %v2067, %v2066
      %v2100 = vpack.c.bf16 %v2069, %v2068
      %v2101 = vpack.c.bf16 %v2071, %v2070
      %v2102 = vpack.c.bf16 %v2073, %v2072
      %v2103 = vpack.c.bf16 %v2075, %v2074
      %v2104 = vpack.c.bf16 %v2077, %v2076
      %v2105 = vpack.c.bf16 %v2079, %v2078
      %v2106 = vpack.c.bf16 %v2081, %v2080
      %v2107 = vpack.c.bf16 %v2083, %v2082
      %v2108 = vpack.c.bf16 %v2085, %v2084
      %v2109 = vpack.c.bf16 %v2087, %v2086
      %v2110 = vpack.c.bf16 %v2089, %v2088
      %v2111 = vpack.c.bf16 %v2091, %v2090
      %v2112 = vpack.c.bf16 %v2093, %v2092
      %v2113 = vpack.c.bf16 %v2095, %v2094
      %s2114 = scalar_lea.vmem %s1, 12
      %v2115 = vld [vmem:[%s2114] sm:$0x3]
      %v2117 = vsel %vm283, %v2096, 0
      %v2120 = vsel %vm283, %v2097, 0
      %v2123 = vsel %vm283, %v2098, 0
      %v2126 = vsel %vm283, %v2099, 0
      %v2129 = vsel %vm283, %v2100, 0
      %v2132 = vsel %vm283, %v2101, 0
      %v2135 = vsel %vm283, %v2102, 0
      %v2138 = vsel %vm283, %v2103, 0
      %v2141 = vsel %vm283, %v2104, 0
      %v2144 = vsel %vm283, %v2105, 0
      %v2147 = vsel %vm283, %v2106, 0
      %v2150 = vsel %vm283, %v2107, 0
      %v2153 = vsel %vm283, %v2108, 0
      %v2156 = vsel %vm283, %v2109, 0
      %v2159 = vsel %vm283, %v2110, 0
      %v2162 = vsel %vm283, %v2111, 0
      %v2165 = vsel %vm283, %v2112, 0
      %v2168 = vsel %vm283, %v2113, 0
      %v2171 = vand.u32 %v2115, %v341
      %2173 = vmatprep.subr.bf16.mxu0 0
      %2174 = vmatpush1.bf16.msra.mxu0 %v2171
      %2175 = vmatprep.subr.bf16.mxu0 0
      %2176 = vmatpush1.bf16.msra.mxu0 0
      %2177 = vmatprep.subr.bf16.mxu0 0
      %2178 = vmatpush1.bf16.msra.mxu0 0
      %2179 = vmatprep.subr.bf16.mxu0 0
      %2180 = vmatpush1.bf16.msra.mxu0 0
      %2181 = vmatprep.subr.bf16.mxu0 0
      %2182 = vmatpush1.bf16.msra.mxu0 0
      %2183 = vmatprep.subr.bf16.mxu0 0
      %2184 = vmatpush1.bf16.msra.mxu0 0
      %2185 = vmatprep.subr.bf16.mxu0 0
      %2186 = vmatpush1.bf16.msra.mxu0 0
      %2187 = vmatprep.subr.bf16.mxu0 0
      %2188 = vmatpush1.bf16.msra.mxu0 0
      %2189 = vmatprep.subr.bf16.mxu0 0
      %2190 = vmatpush1.bf16.msra.mxu0 0
      %2191 = vmatprep.subr.bf16.mxu0 0
      %2192 = vmatpush1.bf16.msra.mxu0 0
      %2193 = vmatprep.subr.bf16.mxu0 0
      %2194 = vmatpush1.bf16.msra.mxu0 0
      %2195 = vmatprep.subr.bf16.mxu0 0
      %2196 = vmatpush1.bf16.msra.mxu0 0
      %2197 = vmatprep.subr.bf16.mxu0 0
      %2198 = vmatpush1.bf16.msra.mxu0 0
      %2199 = vmatprep.subr.bf16.mxu0 0
      %2200 = vmatpush1.bf16.msra.mxu0 0
      %2201 = vmatprep.subr.bf16.mxu0 0
      %2202 = vmatpush1.bf16.msra.mxu0 0
      %2203 = vmatprep.subr.bf16.mxu0 0
      %2204 = vmatpush1.bf16.msra.mxu0 0
      %2205 = vmatprep.mubr.bf16.mxu0 0
      %2206 = vmatmul.mubr.bf16.gmra.mrb[0].mxu0 %v2117
      %v2207 = vpop.f32.mrb[0].mxu0
      %v2208 = vadd.f32 0.0, %v2207
      %v2209 = vpop.f32.mrb[0].mxu0
      %v2210 = vpop.f32.mrb[0].mxu0
      %v2211 = vadd.f32 0.0, %v2210
      %v2212 = vpop.f32.mrb[0].mxu0
      %2213 = vmatprep.mubr.bf16.mxu0 0
      %2214 = vmatmul.mubr.bf16.gmra.mrb[0].mxu0 %v2120
      %v2215 = vpop.f32.mrb[0].mxu0
      %v2216 = vadd.f32 0.0, %v2215
      %v2217 = vpop.f32.mrb[0].mxu0
      %v2218 = vpop.f32.mrb[0].mxu0
      %v2219 = vadd.f32 0.0, %v2218
      %v2220 = vpop.f32.mrb[0].mxu0
      %2221 = vmatprep.mubr.bf16.mxu0 0
      %2222 = vmatmul.mubr.bf16.gmra.mrb[0].mxu0 %v2123
      %v2223 = vpop.f32.mrb[0].mxu0
      %v2224 = vadd.f32 0.0, %v2223
      %v2225 = vpop.f32.mrb[0].mxu0
      %v2226 = vpop.f32.mrb[0].mxu0
      %v2227 = vadd.f32 0.0, %v2226
      %v2228 = vpop.f32.mrb[0].mxu0
      %2229 = vmatprep.mubr.bf16.mxu0 0
      %2230 = vmatmul.mubr.bf16.gmra.mrb[0].mxu0 %v2126
      %v2231 = vpop.f32.mrb[0].mxu0
      %v2232 = vadd.f32 0.0, %v2231
      %v2233 = vpop.f32.mrb[0].mxu0
      %v2234 = vpop.f32.mrb[0].mxu0
      %v2235 = vadd.f32 0.0, %v2234
      %v2236 = vpop.f32.mrb[0].mxu0
      %2237 = vmatprep.mubr.bf16.mxu0 0
      %2238 = vmatmul.mubr.bf16.gmra.mrb[0].mxu0 %v2129
      %v2239 = vpop.f32.mrb[0].mxu0
      %v2240 = vadd.f32 0.0, %v2239
      %v2241 = vpop.f32.mrb[0].mxu0
      %v2242 = vpop.f32.mrb[0].mxu0
      %v2243 = vadd.f32 0.0, %v2242
      %v2244 = vpop.f32.mrb[0].mxu0
      %2245 = vmatprep.mubr.bf16.mxu0 0
      %2246 = vmatmul.mubr.bf16.gmra.mrb[0].mxu0 %v2132
      %v2247 = vpop.f32.mrb[0].mxu0
      %v2248 = vadd.f32 0.0, %v2247
      %v2249 = vpop.f32.mrb[0].mxu0
      %v2250 = vpop.f32.mrb[0].mxu0
      %v2251 = vadd.f32 0.0, %v2250
      %v2252 = vpop.f32.mrb[0].mxu0
      %2253 = vmatprep.mubr.bf16.mxu0 0
      %2254 = vmatmul.mubr.bf16.gmra.mrb[0].mxu0 %v2135
      %v2255 = vpop.f32.mrb[0].mxu0
      %v2256 = vadd.f32 0.0, %v2255
      %v2257 = vpop.f32.mrb[0].mxu0
      %v2258 = vpop.f32.mrb[0].mxu0
      %v2259 = vadd.f32 0.0, %v2258
      %v2260 = vpop.f32.mrb[0].mxu0
      %2261 = vmatprep.mubr.bf16.mxu0 0
      %2262 = vmatmul.mubr.bf16.gmra.mrb[0].mxu0 %v2138
      %v2263 = vpop.f32.mrb[0].mxu0
      %v2264 = vadd.f32 0.0, %v2263
      %v2265 = vpop.f32.mrb[0].mxu0
      %v2266 = vpop.f32.mrb[0].mxu0
      %v2267 = vadd.f32 0.0, %v2266
      %v2268 = vpop.f32.mrb[0].mxu0
      %2269 = vmatprep.mubr.bf16.mxu0 0
      %2270 = vmatmul.mubr.bf16.gmra.mrb[0].mxu0 %v2141
      %v2271 = vpop.f32.mrb[0].mxu0
      %v2272 = vadd.f32 0.0, %v2271
      %v2273 = vpop.f32.mrb[0].mxu0
      %v2274 = vpop.f32.mrb[0].mxu0
      %v2275 = vadd.f32 0.0, %v2274
      %v2276 = vpop.f32.mrb[0].mxu0
      %2277 = vmatprep.mubr.bf16.mxu0 0
      %2278 = vmatmul.mubr.bf16.gmra.mrb[0].mxu0 %v2144
      %v2279 = vpop.f32.mrb[0].mxu0
      %v2280 = vadd.f32 0.0, %v2279
      %v2281 = vpop.f32.mrb[0].mxu0
      %v2282 = vpop.f32.mrb[0].mxu0
      %v2283 = vadd.f32 0.0, %v2282
      %v2284 = vpop.f32.mrb[0].mxu0
      %2285 = vmatprep.mubr.bf16.mxu0 0
      %2286 = vmatmul.mubr.bf16.gmra.mrb[0].mxu0 %v2147
      %v2287 = vpop.f32.mrb[0].mxu0
      %v2288 = vadd.f32 0.0, %v2287
      %v2289 = vpop.f32.mrb[0].mxu0
      %v2290 = vpop.f32.mrb[0].mxu0
      %v2291 = vadd.f32 0.0, %v2290
      %v2292 = vpop.f32.mrb[0].mxu0
      %2293 = vmatprep.mubr.bf16.mxu0 0
      %2294 = vmatmul.mubr.bf16.gmra.mrb[0].mxu0 %v2150
      %v2295 = vpop.f32.mrb[0].mxu0
      %v2296 = vadd.f32 0.0, %v2295
      %v2297 = vpop.f32.mrb[0].mxu0
      %v2298 = vpop.f32.mrb[0].mxu0
      %v2299 = vadd.f32 0.0, %v2298
      %v2300 = vpop.f32.mrb[0].mxu0
      %2301 = vmatprep.mubr.bf16.mxu0 0
      %2302 = vmatmul.mubr.bf16.gmra.mrb[0].mxu0 %v2153
      %v2303 = vpop.f32.mrb[0].mxu0
      %v2304 = vadd.f32 0.0, %v2303
      %v2305 = vpop.f32.mrb[0].mxu0
      %v2306 = vpop.f32.mrb[0].mxu0
      %v2307 = vadd.f32 0.0, %v2306
      %v2308 = vpop.f32.mrb[0].mxu0
      %2309 = vmatprep.mubr.bf16.mxu0 0
      %2310 = vmatmul.mubr.bf16.gmra.mrb[0].mxu0 %v2156
      %v2311 = vpop.f32.mrb[0].mxu0
      %v2312 = vadd.f32 0.0, %v2311
      %v2313 = vpop.f32.mrb[0].mxu0
      %v2314 = vpop.f32.mrb[0].mxu0
      %v2315 = vadd.f32 0.0, %v2314
      %v2316 = vpop.f32.mrb[0].mxu0
      %2317 = vmatprep.mubr.bf16.mxu0 0
      %2318 = vmatmul.mubr.bf16.gmra.mrb[0].mxu0 %v2159
      %v2319 = vpop.f32.mrb[0].mxu0
      %v2320 = vadd.f32 0.0, %v2319
      %v2321 = vpop.f32.mrb[0].mxu0
      %v2322 = vpop.f32.mrb[0].mxu0
      %v2323 = vadd.f32 0.0, %v2322
      %v2324 = vpop.f32.mrb[0].mxu0
      %2325 = vmatprep.mubr.bf16.mxu0 0
      %2326 = vmatmul.mubr.bf16.gmra.mrb[0].mxu0 %v2162
      %v2327 = vpop.f32.mrb[0].mxu0
      %v2328 = vadd.f32 0.0, %v2327
      %v2329 = vpop.f32.mrb[0].mxu0
      %v2330 = vpop.f32.mrb[0].mxu0
      %v2331 = vadd.f32 0.0, %v2330
      %v2332 = vpop.f32.mrb[0].mxu0
      %2333 = vmatprep.mubr.bf16.mxu0 0
      %2334 = vmatmul.mubr.bf16.gmra.mrb[0].mxu0 %v2165
      %v2335 = vpop.f32.mrb[0].mxu0
      %v2336 = vadd.f32 0.0, %v2335
      %v2337 = vpop.f32.mrb[0].mxu0
      %v2338 = vpop.f32.mrb[0].mxu0
      %v2339 = vadd.f32 0.0, %v2338
      %v2340 = vpop.f32.mrb[0].mxu0
      %2341 = vmatprep.mubr.bf16.mxu0 0
      %2342 = vmatmul.mubr.bf16.gmra.mrb[0].mxu0 %v2168
      %v2343 = vpop.f32.mrb[0].mxu0
      %v2344 = vadd.f32 0.0, %v2343
      %v2345 = vpop.f32.mrb[0].mxu0
      %v2346 = vpop.f32.mrb[0].mxu0
      %v2347 = vadd.f32 0.0, %v2346
      %v2348 = vpop.f32.mrb[0].mxu0
      %2349 = vdwg.mxu0
      %v2350 = vadd.f32 %v2024, %v2208
      %v2351 = vadd.f32 %v2025, %v2211
      %v2352 = vadd.f32 %v2026, %v2216
      %v2353 = vadd.f32 %v2027, %v2219
      %v2354 = vadd.f32 %v2028, %v2224
      %v2355 = vadd.f32 %v2029, %v2227
      %v2356 = vadd.f32 %v2030, %v2232
      %v2357 = vadd.f32 %v2031, %v2235
      %v2358 = vadd.f32 %v2032, %v2240
      %v2359 = vadd.f32 %v2033, %v2243
      %v2360 = vadd.f32 %v2034, %v2248
      %v2361 = vadd.f32 %v2035, %v2251
      %v2362 = vadd.f32 %v2036, %v2256
      %v2363 = vadd.f32 %v2037, %v2259
      %v2364 = vadd.f32 %v2038, %v2264
      %v2365 = vadd.f32 %v2039, %v2267
      %v2366 = vadd.f32 %v2040, %v2272
      %v2367 = vadd.f32 %v2041, %v2275
      %v2368 = vadd.f32 %v2042, %v2280
      %v2369 = vadd.f32 %v2043, %v2283
      %v2370 = vadd.f32 %v2044, %v2288
      %v2371 = vadd.f32 %v2045, %v2291
      %v2372 = vadd.f32 %v2046, %v2296
      %v2373 = vadd.f32 %v2047, %v2299
      %v2374 = vadd.f32 %v2048, %v2304
      %v2375 = vadd.f32 %v2049, %v2307
      %v2376 = vadd.f32 %v2050, %v2312
      %v2377 = vadd.f32 %v2051, %v2315
      %v2378 = vadd.f32 %v2052, %v2320
      %v2379 = vadd.f32 %v2053, %v2323
      %v2380 = vadd.f32 %v2054, %v2328
      %v2381 = vadd.f32 %v2055, %v2331
      %v2382 = vadd.f32 %v2056, %v2336
      %v2383 = vadd.f32 %v2057, %v2339
      %v2384 = vadd.f32 %v2058, %v2344
      %v2385 = vadd.f32 %v2059, %v2347
      %v2386 = vld [vmem:[%s165 + $0x25] sm:$0xff]
      %v2387 = vld [vmem:[%s165 + $0x2d] sm:$0xff]
      %v2388 = vld [vmem:[%s165 + $0x35] sm:$0xff]
      %v2389 = vld [vmem:[%s165 + $0x3d] sm:$0xff]
      %v2390 = vld [vmem:[%s165 + $0x45] sm:$0xff]
      %v2391 = vld [vmem:[%s165 + $0x4d] sm:$0xff]
      %v2392 = vld [vmem:[%s165 + $0x55] sm:$0xff]
      %v2393 = vld [vmem:[%s165 + $0x5d] sm:$0xff]
      %v2394 = vld [vmem:[%s165 + $0x65] sm:$0xff]
      %v2395 = vld [vmem:[%s165 + $0x6d] sm:$0xff]
      %v2396 = vld [vmem:[%s165 + $0x75] sm:$0xff]
      %v2397 = vld [vmem:[%s165 + $0x7d] sm:$0xff]
      %v2398 = vld [vmem:[%s165 + $0x85] sm:$0xff]
      %v2399 = vld [vmem:[%s165 + $0x8d] sm:$0xff]
      %v2400 = vld [vmem:[%s165 + $0x95] sm:$0xff]
      %v2401 = vld [vmem:[%s165 + $0x9d] sm:$0xff]
      %v2402 = vld [vmem:[%s165 + $0xa5] sm:$0xff]
      %v2403 = vld [vmem:[%s165 + $0xad] sm:$0xff]
      %v2404 = vld [vmem:[%s165 + $0xb5] sm:$0xff]
      %v2405 = vld [vmem:[%s165 + $0xbd] sm:$0xff]
      %v2406 = vld [vmem:[%s165 + $0xc5] sm:$0xff]
      %v2407 = vld [vmem:[%s165 + $0xcd] sm:$0xff]
      %v2408 = vld [vmem:[%s165 + $0xd5] sm:$0xff]
      %v2409 = vld [vmem:[%s165 + $0xdd] sm:$0xff]
      %v2410 = vld [vmem:[%s165 + $0xe5] sm:$0xff]
      %v2411 = vld [vmem:[%s165 + $0xed] sm:$0xff]
      %v2412 = vld [vmem:[%s165 + $0xf5] sm:$0xff]
      %v2413 = vld [vmem:[%s165 + $0xfd] sm:$0xff]
      %v2414 = vld [vmem:[%s165 + $0x105] sm:$0xff]
      %v2415 = vld [vmem:[%s165 + $0x10d] sm:$0xff]
      %v2416 = vld [vmem:[%s165 + $0x115] sm:$0xff]
      %v2417 = vld [vmem:[%s165 + $0x11d] sm:$0xff]
      %v2418 = vld [vmem:[%s165 + $0x125] sm:$0xff]
      %v2419 = vld [vmem:[%s165 + $0x12d] sm:$0xff]
      %v2420 = vld [vmem:[%s165 + $0x135] sm:$0xff]
      %v2421 = vld [vmem:[%s165 + $0x13d] sm:$0xff]
      %v2422 = vpack.c.bf16 %v2387, %v2386
      %v2423 = vpack.c.bf16 %v2389, %v2388
      %v2424 = vpack.c.bf16 %v2391, %v2390
      %v2425 = vpack.c.bf16 %v2393, %v2392
      %v2426 = vpack.c.bf16 %v2395, %v2394
      %v2427 = vpack.c.bf16 %v2397, %v2396
      %v2428 = vpack.c.bf16 %v2399, %v2398
      %v2429 = vpack.c.bf16 %v2401, %v2400
      %v2430 = vpack.c.bf16 %v2403, %v2402
      %v2431 = vpack.c.bf16 %v2405, %v2404
      %v2432 = vpack.c.bf16 %v2407, %v2406
      %v2433 = vpack.c.bf16 %v2409, %v2408
      %v2434 = vpack.c.bf16 %v2411, %v2410
      %v2435 = vpack.c.bf16 %v2413, %v2412
      %v2436 = vpack.c.bf16 %v2415, %v2414
      %v2437 = vpack.c.bf16 %v2417, %v2416
      %v2438 = vpack.c.bf16 %v2419, %v2418
      %v2439 = vpack.c.bf16 %v2421, %v2420
      %s2440 = scalar_lea.vmem %s1, 14
      %v2441 = vld [vmem:[%s2440] sm:$0x3]
      %v2443 = vsel %vm283, %v2422, 0
      %v2446 = vsel %vm283, %v2423, 0
      %v2449 = vsel %vm283, %v2424, 0
      %v2452 = vsel %vm283, %v2425, 0
      %v2455 = vsel %vm283, %v2426, 0
      %v2458 = vsel %vm283, %v2427, 0
      %v2461 = vsel %vm283, %v2428, 0
      %v2464 = vsel %vm283, %v2429, 0
      %v2467 = vsel %vm283, %v2430, 0
      %v2470 = vsel %vm283, %v2431, 0
      %v2473 = vsel %vm283, %v2432, 0
      %v2476 = vsel %vm283, %v2433, 0
      %v2479 = vsel %vm283, %v2434, 0
      %v2482 = vsel %vm283, %v2435, 0
      %v2485 = vsel %vm283, %v2436, 0
      %v2488 = vsel %vm283, %v2437, 0
      %v2491 = vsel %vm283, %v2438, 0
      %v2494 = vsel %vm283, %v2439, 0
      %v2497 = vand.u32 %v2441, %v341
      %2499 = vmatprep.subr.bf16.mxu0 0
      %2500 = vmatpush1.bf16.msra.mxu0 %v2497
      %2501 = vmatprep.subr.bf16.mxu0 0
      %2502 = vmatpush1.bf16.msra.mxu0 0
      %2503 = vmatprep.subr.bf16.mxu0 0
      %2504 = vmatpush1.bf16.msra.mxu0 0
      %2505 = vmatprep.subr.bf16.mxu0 0
      %2506 = vmatpush1.bf16.msra.mxu0 0
      %2507 = vmatprep.subr.bf16.mxu0 0
      %2508 = vmatpush1.bf16.msra.mxu0 0
      %2509 = vmatprep.subr.bf16.mxu0 0
      %2510 = vmatpush1.bf16.msra.mxu0 0
      %2511 = vmatprep.subr.bf16.mxu0 0
      %2512 = vmatpush1.bf16.msra.mxu0 0
      %2513 = vmatprep.subr.bf16.mxu0 0
      %2514 = vmatpush1.bf16.msra.mxu0 0
      %2515 = vmatprep.subr.bf16.mxu0 0
      %2516 = vmatpush1.bf16.msra.mxu0 0
      %2517 = vmatprep.subr.bf16.mxu0 0
      %2518 = vmatpush1.bf16.msra.mxu0 0
      %2519 = vmatprep.subr.bf16.mxu0 0
      %2520 = vmatpush1.bf16.msra.mxu0 0
      %2521 = vmatprep.subr.bf16.mxu0 0
      %2522 = vmatpush1.bf16.msra.mxu0 0
      %2523 = vmatprep.subr.bf16.mxu0 0
      %2524 = vmatpush1.bf16.msra.mxu0 0
      %2525 = vmatprep.subr.bf16.mxu0 0
      %2526 = vmatpush1.bf16.msra.mxu0 0
      %2527 = vmatprep.subr.bf16.mxu0 0
      %2528 = vmatpush1.bf16.msra.mxu0 0
      %2529 = vmatprep.subr.bf16.mxu0 0
      %2530 = vmatpush1.bf16.msra.mxu0 0
      %2531 = vmatprep.mubr.bf16.mxu0 0
      %2532 = vmatmul.mubr.bf16.gmra.mrb[0].mxu0 %v2443
      %v2533 = vpop.f32.mrb[0].mxu0
      %v2534 = vadd.f32 0.0, %v2533
      %v2535 = vpop.f32.mrb[0].mxu0
      %v2536 = vpop.f32.mrb[0].mxu0
      %v2537 = vadd.f32 0.0, %v2536
      %v2538 = vpop.f32.mrb[0].mxu0
      %2539 = vmatprep.mubr.bf16.mxu0 0
      %2540 = vmatmul.mubr.bf16.gmra.mrb[0].mxu0 %v2446
      %v2541 = vpop.f32.mrb[0].mxu0
      %v2542 = vadd.f32 0.0, %v2541
      %v2543 = vpop.f32.mrb[0].mxu0
      %v2544 = vpop.f32.mrb[0].mxu0
      %v2545 = vadd.f32 0.0, %v2544
      %v2546 = vpop.f32.mrb[0].mxu0
      %2547 = vmatprep.mubr.bf16.mxu0 0
      %2548 = vmatmul.mubr.bf16.gmra.mrb[0].mxu0 %v2449
      %v2549 = vpop.f32.mrb[0].mxu0
      %v2550 = vadd.f32 0.0, %v2549
      %v2551 = vpop.f32.mrb[0].mxu0
      %v2552 = vpop.f32.mrb[0].mxu0
      %v2553 = vadd.f32 0.0, %v2552
      %v2554 = vpop.f32.mrb[0].mxu0
      %2555 = vmatprep.mubr.bf16.mxu0 0
      %2556 = vmatmul.mubr.bf16.gmra.mrb[0].mxu0 %v2452
      %v2557 = vpop.f32.mrb[0].mxu0
      %v2558 = vadd.f32 0.0, %v2557
      %v2559 = vpop.f32.mrb[0].mxu0
      %v2560 = vpop.f32.mrb[0].mxu0
      %v2561 = vadd.f32 0.0, %v2560
      %v2562 = vpop.f32.mrb[0].mxu0
      %2563 = vmatprep.mubr.bf16.mxu0 0
      %2564 = vmatmul.mubr.bf16.gmra.mrb[0].mxu0 %v2455
      %v2565 = vpop.f32.mrb[0].mxu0
      %v2566 = vadd.f32 0.0, %v2565
      %v2567 = vpop.f32.mrb[0].mxu0
      %v2568 = vpop.f32.mrb[0].mxu0
      %v2569 = vadd.f32 0.0, %v2568
      %v2570 = vpop.f32.mrb[0].mxu0
      %2571 = vmatprep.mubr.bf16.mxu0 0
      %2572 = vmatmul.mubr.bf16.gmra.mrb[0].mxu0 %v2458
      %v2573 = vpop.f32.mrb[0].mxu0
      %v2574 = vadd.f32 0.0, %v2573
      %v2575 = vpop.f32.mrb[0].mxu0
      %v2576 = vpop.f32.mrb[0].mxu0
      %v2577 = vadd.f32 0.0, %v2576
      %v2578 = vpop.f32.mrb[0].mxu0
      %2579 = vmatprep.mubr.bf16.mxu0 0
      %2580 = vmatmul.mubr.bf16.gmra.mrb[0].mxu0 %v2461
      %v2581 = vpop.f32.mrb[0].mxu0
      %v2582 = vadd.f32 0.0, %v2581
      %v2583 = vpop.f32.mrb[0].mxu0
      %v2584 = vpop.f32.mrb[0].mxu0
      %v2585 = vadd.f32 0.0, %v2584
      %v2586 = vpop.f32.mrb[0].mxu0
      %2587 = vmatprep.mubr.bf16.mxu0 0
      %2588 = vmatmul.mubr.bf16.gmra.mrb[0].mxu0 %v2464
      %v2589 = vpop.f32.mrb[0].mxu0
      %v2590 = vadd.f32 0.0, %v2589
      %v2591 = vpop.f32.mrb[0].mxu0
      %v2592 = vpop.f32.mrb[0].mxu0
      %v2593 = vadd.f32 0.0, %v2592
      %v2594 = vpop.f32.mrb[0].mxu0
      %2595 = vmatprep.mubr.bf16.mxu0 0
      %2596 = vmatmul.mubr.bf16.gmra.mrb[0].mxu0 %v2467
      %v2597 = vpop.f32.mrb[0].mxu0
      %v2598 = vadd.f32 0.0, %v2597
      %v2599 = vpop.f32.mrb[0].mxu0
      %v2600 = vpop.f32.mrb[0].mxu0
      %v2601 = vadd.f32 0.0, %v2600
      %v2602 = vpop.f32.mrb[0].mxu0
      %2603 = vmatprep.mubr.bf16.mxu0 0
      %2604 = vmatmul.mubr.bf16.gmra.mrb[0].mxu0 %v2470
      %v2605 = vpop.f32.mrb[0].mxu0
      %v2606 = vadd.f32 0.0, %v2605
      %v2607 = vpop.f32.mrb[0].mxu0
      %v2608 = vpop.f32.mrb[0].mxu0
      %v2609 = vadd.f32 0.0, %v2608
      %v2610 = vpop.f32.mrb[0].mxu0
      %2611 = vmatprep.mubr.bf16.mxu0 0
      %2612 = vmatmul.mubr.bf16.gmra.mrb[0].mxu0 %v2473
      %v2613 = vpop.f32.mrb[0].mxu0
      %v2614 = vadd.f32 0.0, %v2613
      %v2615 = vpop.f32.mrb[0].mxu0
      %v2616 = vpop.f32.mrb[0].mxu0
      %v2617 = vadd.f32 0.0, %v2616
      %v2618 = vpop.f32.mrb[0].mxu0
      %2619 = vmatprep.mubr.bf16.mxu0 0
      %2620 = vmatmul.mubr.bf16.gmra.mrb[0].mxu0 %v2476
      %v2621 = vpop.f32.mrb[0].mxu0
      %v2622 = vadd.f32 0.0, %v2621
      %v2623 = vpop.f32.mrb[0].mxu0
      %v2624 = vpop.f32.mrb[0].mxu0
      %v2625 = vadd.f32 0.0, %v2624
      %v2626 = vpop.f32.mrb[0].mxu0
      %2627 = vmatprep.mubr.bf16.mxu0 0
      %2628 = vmatmul.mubr.bf16.gmra.mrb[0].mxu0 %v2479
      %v2629 = vpop.f32.mrb[0].mxu0
      %v2630 = vadd.f32 0.0, %v2629
      %v2631 = vpop.f32.mrb[0].mxu0
      %v2632 = vpop.f32.mrb[0].mxu0
      %v2633 = vadd.f32 0.0, %v2632
      %v2634 = vpop.f32.mrb[0].mxu0
      %2635 = vmatprep.mubr.bf16.mxu0 0
      %2636 = vmatmul.mubr.bf16.gmra.mrb[0].mxu0 %v2482
      %v2637 = vpop.f32.mrb[0].mxu0
      %v2638 = vadd.f32 0.0, %v2637
      %v2639 = vpop.f32.mrb[0].mxu0
      %v2640 = vpop.f32.mrb[0].mxu0
      %v2641 = vadd.f32 0.0, %v2640
      %v2642 = vpop.f32.mrb[0].mxu0
      %2643 = vmatprep.mubr.bf16.mxu0 0
      %2644 = vmatmul.mubr.bf16.gmra.mrb[0].mxu0 %v2485
      %v2645 = vpop.f32.mrb[0].mxu0
      %v2646 = vadd.f32 0.0, %v2645
      %v2647 = vpop.f32.mrb[0].mxu0
      %v2648 = vpop.f32.mrb[0].mxu0
      %v2649 = vadd.f32 0.0, %v2648
      %v2650 = vpop.f32.mrb[0].mxu0
      %2651 = vmatprep.mubr.bf16.mxu0 0
      %2652 = vmatmul.mubr.bf16.gmra.mrb[0].mxu0 %v2488
      %v2653 = vpop.f32.mrb[0].mxu0
      %v2654 = vadd.f32 0.0, %v2653
      %v2655 = vpop.f32.mrb[0].mxu0
      %v2656 = vpop.f32.mrb[0].mxu0
      %v2657 = vadd.f32 0.0, %v2656
      %v2658 = vpop.f32.mrb[0].mxu0
      %2659 = vmatprep.mubr.bf16.mxu0 0
      %2660 = vmatmul.mubr.bf16.gmra.mrb[0].mxu0 %v2491
      %v2661 = vpop.f32.mrb[0].mxu0
      %v2662 = vadd.f32 0.0, %v2661
      %v2663 = vpop.f32.mrb[0].mxu0
      %v2664 = vpop.f32.mrb[0].mxu0
      %v2665 = vadd.f32 0.0, %v2664
      %v2666 = vpop.f32.mrb[0].mxu0
      %2667 = vmatprep.mubr.bf16.mxu0 0
      %2668 = vmatmul.mubr.bf16.gmra.mrb[0].mxu0 %v2494
      %v2669 = vpop.f32.mrb[0].mxu0
      %v2670 = vadd.f32 0.0, %v2669
      %v2671 = vpop.f32.mrb[0].mxu0
      %v2672 = vpop.f32.mrb[0].mxu0
      %v2673 = vadd.f32 0.0, %v2672
      %v2674 = vpop.f32.mrb[0].mxu0
      %2675 = vdwg.mxu0
      %v2676 = vadd.f32 %v2350, %v2534
      %v2677 = vadd.f32 %v2351, %v2537
      %v2678 = vadd.f32 %v2352, %v2542
      %v2679 = vadd.f32 %v2353, %v2545
      %v2680 = vadd.f32 %v2354, %v2550
      %v2681 = vadd.f32 %v2355, %v2553
      %v2682 = vadd.f32 %v2356, %v2558
      %v2683 = vadd.f32 %v2357, %v2561
      %v2684 = vadd.f32 %v2358, %v2566
      %v2685 = vadd.f32 %v2359, %v2569
      %v2686 = vadd.f32 %v2360, %v2574
      %v2687 = vadd.f32 %v2361, %v2577
      %v2688 = vadd.f32 %v2362, %v2582
      %v2689 = vadd.f32 %v2363, %v2585
      %v2690 = vadd.f32 %v2364, %v2590
      %v2691 = vadd.f32 %v2365, %v2593
      %v2692 = vadd.f32 %v2366, %v2598
      %v2693 = vadd.f32 %v2367, %v2601
      %v2694 = vadd.f32 %v2368, %v2606
      %v2695 = vadd.f32 %v2369, %v2609
      %v2696 = vadd.f32 %v2370, %v2614
      %v2697 = vadd.f32 %v2371, %v2617
      %v2698 = vadd.f32 %v2372, %v2622
      %v2699 = vadd.f32 %v2373, %v2625
      %v2700 = vadd.f32 %v2374, %v2630
      %v2701 = vadd.f32 %v2375, %v2633
      %v2702 = vadd.f32 %v2376, %v2638
      %v2703 = vadd.f32 %v2377, %v2641
      %v2704 = vadd.f32 %v2378, %v2646
      %v2705 = vadd.f32 %v2379, %v2649
      %v2706 = vadd.f32 %v2380, %v2654
      %v2707 = vadd.f32 %v2381, %v2657
      %v2708 = vadd.f32 %v2382, %v2662
      %v2709 = vadd.f32 %v2383, %v2665
      %v2710 = vadd.f32 %v2384, %v2670
      %v2711 = vadd.f32 %v2385, %v2673
      %v2712 = vld [vmem:[%s165 + $0x26] sm:$0xff]
      %v2713 = vld [vmem:[%s165 + $0x2e] sm:$0xff]
      %v2714 = vld [vmem:[%s165 + $0x36] sm:$0xff]
      %v2715 = vld [vmem:[%s165 + $0x3e] sm:$0xff]
      %v2716 = vld [vmem:[%s165 + $0x46] sm:$0xff]
      %v2717 = vld [vmem:[%s165 + $0x4e] sm:$0xff]
      %v2718 = vld [vmem:[%s165 + $0x56] sm:$0xff]
      %v2719 = vld [vmem:[%s165 + $0x5e] sm:$0xff]
      %v2720 = vld [vmem:[%s165 + $0x66] sm:$0xff]
      %v2721 = vld [vmem:[%s165 + $0x6e] sm:$0xff]
      %v2722 = vld [vmem:[%s165 + $0x76] sm:$0xff]
      %v2723 = vld [vmem:[%s165 + $0x7e] sm:$0xff]
      %v2724 = vld [vmem:[%s165 + $0x86] sm:$0xff]
      %v2725 = vld [vmem:[%s165 + $0x8e] sm:$0xff]
      %v2726 = vld [vmem:[%s165 + $0x96] sm:$0xff]
      %v2727 = vld [vmem:[%s165 + $0x9e] sm:$0xff]
      %v2728 = vld [vmem:[%s165 + $0xa6] sm:$0xff]
      %v2729 = vld [vmem:[%s165 + $0xae] sm:$0xff]
      %v2730 = vld [vmem:[%s165 + $0xb6] sm:$0xff]
      %v2731 = vld [vmem:[%s165 + $0xbe] sm:$0xff]
      %v2732 = vld [vmem:[%s165 + $0xc6] sm:$0xff]
      %v2733 = vld [vmem:[%s165 + $0xce] sm:$0xff]
      %v2734 = vld [vmem:[%s165 + $0xd6] sm:$0xff]
      %v2735 = vld [vmem:[%s165 + $0xde] sm:$0xff]
      %v2736 = vld [vmem:[%s165 + $0xe6] sm:$0xff]
      %v2737 = vld [vmem:[%s165 + $0xee] sm:$0xff]
      %v2738 = vld [vmem:[%s165 + $0xf6] sm:$0xff]
      %v2739 = vld [vmem:[%s165 + $0xfe] sm:$0xff]
      %v2740 = vld [vmem:[%s165 + $0x106] sm:$0xff]
      %v2741 = vld [vmem:[%s165 + $0x10e] sm:$0xff]
      %v2742 = vld [vmem:[%s165 + $0x116] sm:$0xff]
      %v2743 = vld [vmem:[%s165 + $0x11e] sm:$0xff]
      %v2744 = vld [vmem:[%s165 + $0x126] sm:$0xff]
      %v2745 = vld [vmem:[%s165 + $0x12e] sm:$0xff]
      %v2746 = vld [vmem:[%s165 + $0x136] sm:$0xff]
      %v2747 = vld [vmem:[%s165 + $0x13e] sm:$0xff]
      %v2748 = vpack.c.bf16 %v2713, %v2712
      %v2749 = vpack.c.bf16 %v2715, %v2714
      %v2750 = vpack.c.bf16 %v2717, %v2716
      %v2751 = vpack.c.bf16 %v2719, %v2718
      %v2752 = vpack.c.bf16 %v2721, %v2720
      %v2753 = vpack.c.bf16 %v2723, %v2722
      %v2754 = vpack.c.bf16 %v2725, %v2724
      %v2755 = vpack.c.bf16 %v2727, %v2726
      %v2756 = vpack.c.bf16 %v2729, %v2728
      %v2757 = vpack.c.bf16 %v2731, %v2730
      %v2758 = vpack.c.bf16 %v2733, %v2732
      %v2759 = vpack.c.bf16 %v2735, %v2734
      %v2760 = vpack.c.bf16 %v2737, %v2736
      %v2761 = vpack.c.bf16 %v2739, %v2738
      %v2762 = vpack.c.bf16 %v2741, %v2740
      %v2763 = vpack.c.bf16 %v2743, %v2742
      %v2764 = vpack.c.bf16 %v2745, %v2744
      %v2765 = vpack.c.bf16 %v2747, %v2746
      %s2766 = scalar_lea.vmem %s1, 16
      %v2767 = vld [vmem:[%s2766] sm:$0x3]
      %v2769 = vsel %vm283, %v2748, 0
      %v2772 = vsel %vm283, %v2749, 0
      %v2775 = vsel %vm283, %v2750, 0
      %v2778 = vsel %vm283, %v2751, 0
      %v2781 = vsel %vm283, %v2752, 0
      %v2784 = vsel %vm283, %v2753, 0
      %v2787 = vsel %vm283, %v2754, 0
      %v2790 = vsel %vm283, %v2755, 0
      %v2793 = vsel %vm283, %v2756, 0
      %v2796 = vsel %vm283, %v2757, 0
      %v2799 = vsel %vm283, %v2758, 0
      %v2802 = vsel %vm283, %v2759, 0
      %v2805 = vsel %vm283, %v2760, 0
      %v2808 = vsel %vm283, %v2761, 0
      %v2811 = vsel %vm283, %v2762, 0
      %v2814 = vsel %vm283, %v2763, 0
      %v2817 = vsel %vm283, %v2764, 0
      %v2820 = vsel %vm283, %v2765, 0
      %v2823 = vand.u32 %v2767, %v341
      %2825 = vmatprep.subr.bf16.mxu0 0
      %2826 = vmatpush1.bf16.msra.mxu0 %v2823
      %2827 = vmatprep.subr.bf16.mxu0 0
      %2828 = vmatpush1.bf16.msra.mxu0 0
      %2829 = vmatprep.subr.bf16.mxu0 0
      %2830 = vmatpush1.bf16.msra.mxu0 0
      %2831 = vmatprep.subr.bf16.mxu0 0
      %2832 = vmatpush1.bf16.msra.mxu0 0
      %2833 = vmatprep.subr.bf16.mxu0 0
      %2834 = vmatpush1.bf16.msra.mxu0 0
      %2835 = vmatprep.subr.bf16.mxu0 0
      %2836 = vmatpush1.bf16.msra.mxu0 0
      %2837 = vmatprep.subr.bf16.mxu0 0
      %2838 = vmatpush1.bf16.msra.mxu0 0
      %2839 = vmatprep.subr.bf16.mxu0 0
      %2840 = vmatpush1.bf16.msra.mxu0 0
      %2841 = vmatprep.subr.bf16.mxu0 0
      %2842 = vmatpush1.bf16.msra.mxu0 0
      %2843 = vmatprep.subr.bf16.mxu0 0
      %2844 = vmatpush1.bf16.msra.mxu0 0
      %2845 = vmatprep.subr.bf16.mxu0 0
      %2846 = vmatpush1.bf16.msra.mxu0 0
      %2847 = vmatprep.subr.bf16.mxu0 0
      %2848 = vmatpush1.bf16.msra.mxu0 0
      %2849 = vmatprep.subr.bf16.mxu0 0
      %2850 = vmatpush1.bf16.msra.mxu0 0
      %2851 = vmatprep.subr.bf16.mxu0 0
      %2852 = vmatpush1.bf16.msra.mxu0 0
      %2853 = vmatprep.subr.bf16.mxu0 0
      %2854 = vmatpush1.bf16.msra.mxu0 0
      %2855 = vmatprep.subr.bf16.mxu0 0
      %2856 = vmatpush1.bf16.msra.mxu0 0
      %2857 = vmatprep.mubr.bf16.mxu0 0
      %2858 = vmatmul.mubr.bf16.gmra.mrb[0].mxu0 %v2769
      %v2859 = vpop.f32.mrb[0].mxu0
      %v2860 = vadd.f32 0.0, %v2859
      %v2861 = vpop.f32.mrb[0].mxu0
      %v2862 = vpop.f32.mrb[0].mxu0
      %v2863 = vadd.f32 0.0, %v2862
      %v2864 = vpop.f32.mrb[0].mxu0
      %2865 = vmatprep.mubr.bf16.mxu0 0
      %2866 = vmatmul.mubr.bf16.gmra.mrb[0].mxu0 %v2772
      %v2867 = vpop.f32.mrb[0].mxu0
      %v2868 = vadd.f32 0.0, %v2867
      %v2869 = vpop.f32.mrb[0].mxu0
      %v2870 = vpop.f32.mrb[0].mxu0
      %v2871 = vadd.f32 0.0, %v2870
      %v2872 = vpop.f32.mrb[0].mxu0
      %2873 = vmatprep.mubr.bf16.mxu0 0
      %2874 = vmatmul.mubr.bf16.gmra.mrb[0].mxu0 %v2775
      %v2875 = vpop.f32.mrb[0].mxu0
      %v2876 = vadd.f32 0.0, %v2875
      %v2877 = vpop.f32.mrb[0].mxu0
      %v2878 = vpop.f32.mrb[0].mxu0
      %v2879 = vadd.f32 0.0, %v2878
      %v2880 = vpop.f32.mrb[0].mxu0
      %2881 = vmatprep.mubr.bf16.mxu0 0
      %2882 = vmatmul.mubr.bf16.gmra.mrb[0].mxu0 %v2778
      %v2883 = vpop.f32.mrb[0].mxu0
      %v2884 = vadd.f32 0.0, %v2883
      %v2885 = vpop.f32.mrb[0].mxu0
      %v2886 = vpop.f32.mrb[0].mxu0
      %v2887 = vadd.f32 0.0, %v2886
      %v2888 = vpop.f32.mrb[0].mxu0
      %2889 = vmatprep.mubr.bf16.mxu0 0
      %2890 = vmatmul.mubr.bf16.gmra.mrb[0].mxu0 %v2781
      %v2891 = vpop.f32.mrb[0].mxu0
      %v2892 = vadd.f32 0.0, %v2891
      %v2893 = vpop.f32.mrb[0].mxu0
      %v2894 = vpop.f32.mrb[0].mxu0
      %v2895 = vadd.f32 0.0, %v2894
      %v2896 = vpop.f32.mrb[0].mxu0
      %2897 = vmatprep.mubr.bf16.mxu0 0
      %2898 = vmatmul.mubr.bf16.gmra.mrb[0].mxu0 %v2784
      %v2899 = vpop.f32.mrb[0].mxu0
      %v2900 = vadd.f32 0.0, %v2899
      %v2901 = vpop.f32.mrb[0].mxu0
      %v2902 = vpop.f32.mrb[0].mxu0
      %v2903 = vadd.f32 0.0, %v2902
      %v2904 = vpop.f32.mrb[0].mxu0
      %2905 = vmatprep.mubr.bf16.mxu0 0
      %2906 = vmatmul.mubr.bf16.gmra.mrb[0].mxu0 %v2787
      %v2907 = vpop.f32.mrb[0].mxu0
      %v2908 = vadd.f32 0.0, %v2907
      %v2909 = vpop.f32.mrb[0].mxu0
      %v2910 = vpop.f32.mrb[0].mxu0
      %v2911 = vadd.f32 0.0, %v2910
      %v2912 = vpop.f32.mrb[0].mxu0
      %2913 = vmatprep.mubr.bf16.mxu0 0
      %2914 = vmatmul.mubr.bf16.gmra.mrb[0].mxu0 %v2790
      %v2915 = vpop.f32.mrb[0].mxu0
      %v2916 = vadd.f32 0.0, %v2915
      %v2917 = vpop.f32.mrb[0].mxu0
      %v2918 = vpop.f32.mrb[0].mxu0
      %v2919 = vadd.f32 0.0, %v2918
      %v2920 = vpop.f32.mrb[0].mxu0
      %2921 = vmatprep.mubr.bf16.mxu0 0
      %2922 = vmatmul.mubr.bf16.gmra.mrb[0].mxu0 %v2793
      %v2923 = vpop.f32.mrb[0].mxu0
      %v2924 = vadd.f32 0.0, %v2923
      %v2925 = vpop.f32.mrb[0].mxu0
      %v2926 = vpop.f32.mrb[0].mxu0
      %v2927 = vadd.f32 0.0, %v2926
      %v2928 = vpop.f32.mrb[0].mxu0
      %2929 = vmatprep.mubr.bf16.mxu0 0
      %2930 = vmatmul.mubr.bf16.gmra.mrb[0].mxu0 %v2796
      %v2931 = vpop.f32.mrb[0].mxu0
      %v2932 = vadd.f32 0.0, %v2931
      %v2933 = vpop.f32.mrb[0].mxu0
      %v2934 = vpop.f32.mrb[0].mxu0
      %v2935 = vadd.f32 0.0, %v2934
      %v2936 = vpop.f32.mrb[0].mxu0
      %2937 = vmatprep.mubr.bf16.mxu0 0
      %2938 = vmatmul.mubr.bf16.gmra.mrb[0].mxu0 %v2799
      %v2939 = vpop.f32.mrb[0].mxu0
      %v2940 = vadd.f32 0.0, %v2939
      %v2941 = vpop.f32.mrb[0].mxu0
      %v2942 = vpop.f32.mrb[0].mxu0
      %v2943 = vadd.f32 0.0, %v2942
      %v2944 = vpop.f32.mrb[0].mxu0
      %2945 = vmatprep.mubr.bf16.mxu0 0
      %2946 = vmatmul.mubr.bf16.gmra.mrb[0].mxu0 %v2802
      %v2947 = vpop.f32.mrb[0].mxu0
      %v2948 = vadd.f32 0.0, %v2947
      %v2949 = vpop.f32.mrb[0].mxu0
      %v2950 = vpop.f32.mrb[0].mxu0
      %v2951 = vadd.f32 0.0, %v2950
      %v2952 = vpop.f32.mrb[0].mxu0
      %2953 = vmatprep.mubr.bf16.mxu0 0
      %2954 = vmatmul.mubr.bf16.gmra.mrb[0].mxu0 %v2805
      %v2955 = vpop.f32.mrb[0].mxu0
      %v2956 = vadd.f32 0.0, %v2955
      %v2957 = vpop.f32.mrb[0].mxu0
      %v2958 = vpop.f32.mrb[0].mxu0
      %v2959 = vadd.f32 0.0, %v2958
      %v2960 = vpop.f32.mrb[0].mxu0
      %2961 = vmatprep.mubr.bf16.mxu0 0
      %2962 = vmatmul.mubr.bf16.gmra.mrb[0].mxu0 %v2808
      %v2963 = vpop.f32.mrb[0].mxu0
      %v2964 = vadd.f32 0.0, %v2963
      %v2965 = vpop.f32.mrb[0].mxu0
      %v2966 = vpop.f32.mrb[0].mxu0
      %v2967 = vadd.f32 0.0, %v2966
      %v2968 = vpop.f32.mrb[0].mxu0
      %2969 = vmatprep.mubr.bf16.mxu0 0
      %2970 = vmatmul.mubr.bf16.gmra.mrb[0].mxu0 %v2811
      %v2971 = vpop.f32.mrb[0].mxu0
      %v2972 = vadd.f32 0.0, %v2971
      %v2973 = vpop.f32.mrb[0].mxu0
      %v2974 = vpop.f32.mrb[0].mxu0
      %v2975 = vadd.f32 0.0, %v2974
      %v2976 = vpop.f32.mrb[0].mxu0
      %2977 = vmatprep.mubr.bf16.mxu0 0
      %2978 = vmatmul.mubr.bf16.gmra.mrb[0].mxu0 %v2814
      %v2979 = vpop.f32.mrb[0].mxu0
      %v2980 = vadd.f32 0.0, %v2979
      %v2981 = vpop.f32.mrb[0].mxu0
      %v2982 = vpop.f32.mrb[0].mxu0
      %v2983 = vadd.f32 0.0, %v2982
      %v2984 = vpop.f32.mrb[0].mxu0
      %2985 = vmatprep.mubr.bf16.mxu0 0
      %2986 = vmatmul.mubr.bf16.gmra.mrb[0].mxu0 %v2817
      %v2987 = vpop.f32.mrb[0].mxu0
      %v2988 = vadd.f32 0.0, %v2987
      %v2989 = vpop.f32.mrb[0].mxu0
      %v2990 = vpop.f32.mrb[0].mxu0
      %v2991 = vadd.f32 0.0, %v2990
      %v2992 = vpop.f32.mrb[0].mxu0
      %2993 = vmatprep.mubr.bf16.mxu0 0
      %2994 = vmatmul.mubr.bf16.gmra.mrb[0].mxu0 %v2820
      %v2995 = vpop.f32.mrb[0].mxu0
      %v2996 = vadd.f32 0.0, %v2995
      %v2997 = vpop.f32.mrb[0].mxu0
      %v2998 = vpop.f32.mrb[0].mxu0
      %v2999 = vadd.f32 0.0, %v2998
      %v3000 = vpop.f32.mrb[0].mxu0
      %3001 = vdwg.mxu0
      %v3002 = vadd.f32 %v2676, %v2860
      %v3003 = vadd.f32 %v2677, %v2863
      %v3004 = vadd.f32 %v2678, %v2868
      %v3005 = vadd.f32 %v2679, %v2871
      %v3006 = vadd.f32 %v2680, %v2876
      %v3007 = vadd.f32 %v2681, %v2879
      %v3008 = vadd.f32 %v2682, %v2884
      %v3009 = vadd.f32 %v2683, %v2887
      %v3010 = vadd.f32 %v2684, %v2892
      %v3011 = vadd.f32 %v2685, %v2895
      %v3012 = vadd.f32 %v2686, %v2900
      %v3013 = vadd.f32 %v2687, %v2903
      %v3014 = vadd.f32 %v2688, %v2908
      %v3015 = vadd.f32 %v2689, %v2911
      %v3016 = vadd.f32 %v2690, %v2916
      %v3017 = vadd.f32 %v2691, %v2919
      %v3018 = vadd.f32 %v2692, %v2924
      %v3019 = vadd.f32 %v2693, %v2927
      %v3020 = vadd.f32 %v2694, %v2932
      %v3021 = vadd.f32 %v2695, %v2935
      %v3022 = vadd.f32 %v2696, %v2940
      %v3023 = vadd.f32 %v2697, %v2943
      %v3024 = vadd.f32 %v2698, %v2948
      %v3025 = vadd.f32 %v2699, %v2951
      %v3026 = vadd.f32 %v2700, %v2956
      %v3027 = vadd.f32 %v2701, %v2959
      %v3028 = vadd.f32 %v2702, %v2964
      %v3029 = vadd.f32 %v2703, %v2967
      %v3030 = vadd.f32 %v2704, %v2972
      %v3031 = vadd.f32 %v2705, %v2975
      %v3032 = vadd.f32 %v2706, %v2980
      %v3033 = vadd.f32 %v2707, %v2983
      %v3034 = vadd.f32 %v2708, %v2988
      %v3035 = vadd.f32 %v2709, %v2991
      %v3036 = vadd.f32 %v2710, %v2996
      %v3037 = vadd.f32 %v2711, %v2999
      %v3038 = vld [vmem:[%s2] sm:$0x1]
      %v3040 = vlaneseq
      %v3041 = vshrl.u32 %v3040, 7
      %v3042 = vsub.s32 0, %v3041
      %v3043 = vrot.slane %v3038, %v3042
      %v3045 = vadd.f32 %v3002, %v3043
      %v3046 = vadd.f32 %v3003, %v3043
      %v3047 = vadd.f32 %v3004, %v3043
      %v3048 = vadd.f32 %v3005, %v3043
      %v3049 = vadd.f32 %v3006, %v3043
      %v3050 = vadd.f32 %v3007, %v3043
      %v3051 = vadd.f32 %v3008, %v3043
      %v3052 = vadd.f32 %v3009, %v3043
      %v3053 = vadd.f32 %v3010, %v3043
      %v3054 = vadd.f32 %v3011, %v3043
      %v3055 = vadd.f32 %v3012, %v3043
      %v3056 = vadd.f32 %v3013, %v3043
      %v3057 = vadd.f32 %v3014, %v3043
      %v3058 = vadd.f32 %v3015, %v3043
      %v3059 = vadd.f32 %v3016, %v3043
      %v3060 = vadd.f32 %v3017, %v3043
      %v3061 = vadd.f32 %v3018, %v3043
      %v3062 = vadd.f32 %v3019, %v3043
      %v3063 = vadd.f32 %v3020, %v3043
      %v3064 = vadd.f32 %v3021, %v3043
      %v3065 = vadd.f32 %v3022, %v3043
      %v3066 = vadd.f32 %v3023, %v3043
      %v3067 = vadd.f32 %v3024, %v3043
      %v3068 = vadd.f32 %v3025, %v3043
      %v3069 = vadd.f32 %v3026, %v3043
      %v3070 = vadd.f32 %v3027, %v3043
      %v3071 = vadd.f32 %v3028, %v3043
      %v3072 = vadd.f32 %v3029, %v3043
      %v3073 = vadd.f32 %v3030, %v3043
      %v3074 = vadd.f32 %v3031, %v3043
      %v3075 = vadd.f32 %v3032, %v3043
      %v3076 = vadd.f32 %v3033, %v3043
      %v3077 = vadd.f32 %v3034, %v3043
      %v3078 = vadd.f32 %v3035, %v3043
      %v3079 = vadd.f32 %v3036, %v3043
      %v3080 = vadd.f32 %v3037, %v3043
      %v3081 = vmax.f32 %v3045, 0.0
      %v3082 = vmax.f32 %v3046, 0.0
      %v3083 = vmax.f32 %v3047, 0.0
      %v3084 = vmax.f32 %v3048, 0.0
      %v3085 = vmax.f32 %v3049, 0.0
      %v3086 = vmax.f32 %v3050, 0.0
      %v3087 = vmax.f32 %v3051, 0.0
      %v3088 = vmax.f32 %v3052, 0.0
      %v3089 = vmax.f32 %v3053, 0.0
      %v3090 = vmax.f32 %v3054, 0.0
      %v3091 = vmax.f32 %v3055, 0.0
      %v3092 = vmax.f32 %v3056, 0.0
      %v3093 = vmax.f32 %v3057, 0.0
      %v3094 = vmax.f32 %v3058, 0.0
      %v3095 = vmax.f32 %v3059, 0.0
      %v3096 = vmax.f32 %v3060, 0.0
      %v3097 = vmax.f32 %v3061, 0.0
      %v3098 = vmax.f32 %v3062, 0.0
      %v3099 = vmax.f32 %v3063, 0.0
      %v3100 = vmax.f32 %v3064, 0.0
      %v3101 = vmax.f32 %v3065, 0.0
      %v3102 = vmax.f32 %v3066, 0.0
      %v3103 = vmax.f32 %v3067, 0.0
      %v3104 = vmax.f32 %v3068, 0.0
      %v3105 = vmax.f32 %v3069, 0.0
      %v3106 = vmax.f32 %v3070, 0.0
      %v3107 = vmax.f32 %v3071, 0.0
      %v3108 = vmax.f32 %v3072, 0.0
      %v3109 = vmax.f32 %v3073, 0.0
      %v3110 = vmax.f32 %v3074, 0.0
      %v3111 = vmax.f32 %v3075, 0.0
      %v3112 = vmax.f32 %v3076, 0.0
      %v3113 = vmax.f32 %v3077, 0.0
      %v3114 = vmax.f32 %v3078, 0.0
      %v3115 = vmax.f32 %v3079, 0.0
      %v3116 = vmax.f32 %v3080, 0.0
      %vm3117 = vcmask 261120
      %3118 = vst.msk [vmem:[%s170] sm:$0xff] %vm3117, %v3081
      %3119 = vst.msk [vmem:[%s170 + $0x8] sm:$0xff] %vm3117, %v3082
      %3120 = vst.msk [vmem:[%s170 + $0x10] sm:$0xff] %vm3117, %v3083
      %3121 = vst.msk [vmem:[%s170 + $0x18] sm:$0xff] %vm3117, %v3084
      %3122 = vst.msk [vmem:[%s170 + $0x20] sm:$0xff] %vm3117, %v3085
      %3123 = vst.msk [vmem:[%s170 + $0x28] sm:$0xff] %vm3117, %v3086
      %3124 = vst.msk [vmem:[%s170 + $0x30] sm:$0xff] %vm3117, %v3087
      %3125 = vst.msk [vmem:[%s170 + $0x38] sm:$0xff] %vm3117, %v3088
      %3126 = vst.msk [vmem:[%s170 + $0x40] sm:$0xff] %vm3117, %v3089
      %3127 = vst.msk [vmem:[%s170 + $0x48] sm:$0xff] %vm3117, %v3090
      %3128 = vst.msk [vmem:[%s170 + $0x50] sm:$0xff] %vm3117, %v3091
      %3129 = vst.msk [vmem:[%s170 + $0x58] sm:$0xff] %vm3117, %v3092
      %3130 = vst.msk [vmem:[%s170 + $0x60] sm:$0xff] %vm3117, %v3093
      %3131 = vst.msk [vmem:[%s170 + $0x68] sm:$0xff] %vm3117, %v3094
      %3132 = vst.msk [vmem:[%s170 + $0x70] sm:$0xff] %vm3117, %v3095
      %3133 = vst.msk [vmem:[%s170 + $0x78] sm:$0xff] %vm3117, %v3096
      %3134 = vst.msk [vmem:[%s170 + $0x80] sm:$0xff] %vm3117, %v3097
      %3135 = vst.msk [vmem:[%s170 + $0x88] sm:$0xff] %vm3117, %v3098
      %3136 = vst.msk [vmem:[%s170 + $0x90] sm:$0xff] %vm3117, %v3099
      %3137 = vst.msk [vmem:[%s170 + $0x98] sm:$0xff] %vm3117, %v3100
      %3138 = vst.msk [vmem:[%s170 + $0xa0] sm:$0xff] %vm3117, %v3101
      %3139 = vst.msk [vmem:[%s170 + $0xa8] sm:$0xff] %vm3117, %v3102
      %3140 = vst.msk [vmem:[%s170 + $0xb0] sm:$0xff] %vm3117, %v3103
      %3141 = vst.msk [vmem:[%s170 + $0xb8] sm:$0xff] %vm3117, %v3104
      %3142 = vst.msk [vmem:[%s170 + $0xc0] sm:$0xff] %vm3117, %v3105
      %3143 = vst.msk [vmem:[%s170 + $0xc8] sm:$0xff] %vm3117, %v3106
      %3144 = vst.msk [vmem:[%s170 + $0xd0] sm:$0xff] %vm3117, %v3107
      %3145 = vst.msk [vmem:[%s170 + $0xd8] sm:$0xff] %vm3117, %v3108
      %3146 = vst.msk [vmem:[%s170 + $0xe0] sm:$0xff] %vm3117, %v3109
      %3147 = vst.msk [vmem:[%s170 + $0xe8] sm:$0xff] %vm3117, %v3110
      %3148 = vst.msk [vmem:[%s170 + $0xf0] sm:$0xff] %vm3117, %v3111
      %3149 = vst.msk [vmem:[%s170 + $0xf8] sm:$0xff] %vm3117, %v3112
      %3150 = vst.msk [vmem:[%s170 + $0x100] sm:$0xff] %vm3117, %v3113
      %3151 = vst.msk [vmem:[%s170 + $0x108] sm:$0xff] %vm3117, %v3114
      %3152 = vst.msk [vmem:[%s170 + $0x110] sm:$0xff] %vm3117, %v3115
      %3153 = vst.msk [vmem:[%s170 + $0x118] sm:$0xff] %vm3117, %v3116
      %p3154 = scmp.lt.s32.totalorder %s14, 1
      %s3155 = scalar_select %p3154, %s14, 1
      %s3156 = smul.addr %s3155, 36
      %s3157 = smul.addr %s3156, 8
      %s3158 = scalar_lea.vmem %s3, %s3157
      // Predicated region
      $region33: #{inference.3} parent=31 // pred_check
        %p3159 = pneg %p100
      $region34: #{inference.3} parent=31 // pred_check_branch
        %3161 = sbr.rel (%p3159) target = $region36
      $region35: #{inference.3} parent=31 // pred_region
        _
      $region36: #{inference.3} parent=31 // pred_fallthru
        _
    $region32: #{inference.3} parent=5 // pred_fallthru
      _
    %p3162 = scmp.le.s32.totalorder 2, %s9
    // Predicated region
    $region37: #{inference.3} parent=5 // pred_check
      %p3163 = pneg %p3162
    $region38: #{inference.3} parent=5 // pred_check_branch
      %3165 = sbr.rel (%p3163) target = $region40
    $region39: #{inference.3} parent=5 // pred_region
      %s3166 = ssub.s32 %s9, 2
      // Predicated region
      $region41: #{inference.3} parent=39 // pred_check
        %p3167 = pneg %p106
      $region42: #{inference.3} parent=39 // pred_check_branch
        %3169 = sbr.rel (%p3167) target = $region44
      $region43: #{inference.3} parent=39 // pred_region
        %p3170 = scmp.lt.s32.totalorder %s15, 1
        %s3171 = scalar_select %p3170, %s15, 1
        %s3172 = smul.addr %s3171, 36
        %s3173 = smul.addr %s3172, 8
        %s3174 = scalar_lea.vmem %s3, %s3173
      $region44: #{inference.3} parent=39 // pred_fallthru
        _
    $region40: #{inference.3} parent=5 // pred_fallthru
      _
  $region6: #{inference.3} parent=0 // loop_footer
    %s13 = sadd.s32 1, %s9
  $region7: #{inference.3} parent=0 // loop_footer_branch
    %8 = sbr.rel target = $region3
  $region8: #{inference.3} parent=0 // loop_exit
    _

// kernel: custom-call
$region0: #{custom-call}
  #allocation0 [shape = 'u32[8,128]{1,0}', space=vmem, size = 0x1000, scoped, tag = 'scratch']
  #allocation1 [shape = 'u32[8,128]{1,0}', space=vmem, size = 0x1000, scoped, tag = 'scratch']
  #allocation2 [shape = 'u32[8,128]{1,0}', space=vmem, size = 0x1000, scoped, tag = 'scratch']
  #allocation3 [shape = 'u32[8,128]{1,0}', space=vmem, size = 0x1000, scoped, tag = 'scratch']
  #allocation4 [shape = 'u32[8,128]{1,0}', space=vmem, size = 0x1000, scoped, tag = 'scratch']
  #allocation5 [shape = 'u32[8,128]{1,0}', space=vmem, size = 0x1000, scoped, tag = 'scratch']
  #allocation6 [shape = 'u32[8,128]{1,0}', space=vmem, size = 0x1000, scoped, tag = 'scratch']
  %s0 = inlined_call_operand.vmem [shape: f32[2,768], index: 0, kind: input, shape index: {}]
  %s1 = inlined_call_operand.hbm [shape: f32[2,8], index: 1, kind: output, shape index: {0}]
  %s2 = inlined_call_operand.vmem [shape: s32[2,8], index: 2, kind: output, shape index: {1}]
  %3 = xla_tuple %s1, %s2
  %4 = xla_tuple 2147483648, 2147483647
  $region1: #{custom-call} parent=0
    #allocation7 [shape = 'u8[4096]{0}', space=vmem, size = 0x1000, scoped, tag = 'operand span for operand 1']
    #allocation8 [shape = 'u8[1024]{0}', space=vmem, size = 0x400, scoped, tag = 'packed  for operand 1']
    #allocation9 [shape = 's32[1]{0}', space=sflag, size = 0x4, scoped, tag = 'scoped memory for custom-call']
    #allocation10 [shape = 'u8[4096]{0}', space=vmem, size = 0x1000, scoped, tag = 'operand span for operand 2']
    #allocation11 [shape = 'u8[1024]{0}', space=vmem, size = 0x400, scoped, tag = 'packed  for operand 2']
    #allocation12 [shape = 'f32[8,2]{1,0:T(8,128)}', space=vmem, size = 0x1000, scoped, tag = 'scoped memory for custom-call']
    #allocation13 [shape = 'f32[8,2]{1,0:T(8,128)}', space=vmem, size = 0x1000, scoped, tag = 'scoped memory for custom-call']
    #allocation14 [shape = 's32[8,2]{1,0:T(8,128)}', space=vmem, size = 0x1000, scoped, tag = 'scoped memory for custom-call']
    #allocation15 [shape = 's32[8,2]{1,0:T(8,128)}', space=vmem, size = 0x1000, scoped, tag = 'scoped memory for custom-call']
    %5 = vsyncpa [#allocation9], 0
    %6 = xla_tuple [#allocation7], [#allocation10]
    %7 = vst [vmem:[#allocation12] sm:$0xff] 2147483648
    %8 = vst [vmem:[#allocation14] sm:$0xff] 2147483647
    %9 = xla_tuple [#allocation12], [#allocation14]
    %10 = xla_tuple [#allocation13], [#allocation15]
    $region2: #{custom-call} parent=1
      #allocation16 [shape = 'u8[8192]{0}', space=vmem, size = 0x2000, scoped, tag = 'operand span for operand 0']
      #allocation17 [shape = 's32[2048]{0}', space=vmem, size = 0x2000, scoped, tag = 'scoped memory for custom-call']
      // Predicated region
      $region3: #{custom-call} parent=2 // pred_check
        _
      $region4: #{custom-call} parent=2 // pred_check_branch
        %12 = sbr.rel (0) target = $region6
      $region5: #{custom-call} parent=2 // pred_region
        // Predicated region
        $region7: #{custom-call} parent=5 // pred_check
          _
        $region8: #{custom-call} parent=5 // pred_check_branch
          %14 = sbr.rel (0) target = $region10
        $region9: #{custom-call} parent=5 // pred_region
          // Predicated region
          $region11: #{custom-call} parent=9 // pred_check
            _
          $region12: #{custom-call} parent=9 // pred_check_branch
            %16 = sbr.rel (0) target = $region14
          $region13: #{custom-call} parent=9 // pred_region
            %s17 = scalar_lea.vmem %s0, 8
            %s18 = scalar_lea.vmem [#allocation16], 8
            loop: start=0, step=1, limit=1
            $region15: #{custom-call} parent=13 // loop_pre_header
              _
            $region16: #{custom-call} parent=13 // loop_header
              %s20 = sphi 0, %s24
              %p21 = scmp.ge.s32.totalorder %s20, 1
              %s25 = sphi %s0, %s0
              %s26 = sphi [#allocation16], [#allocation16]
            $region17: #{custom-call} parent=13 // loop_header_branch
              %23 = sbr.rel (%p21) target = $region21
            $region18: #{custom-call} parent=13 // loop_body
              %v27 = vld [vmem:[%s25] sm:$0xff]
              %28 = vst [vmem:[%s26] sm:$0xff] %v27
            $region19: #{custom-call} parent=13 // loop_footer
              %s24 = sadd.s32 1, %s20
            $region20: #{custom-call} parent=13 // loop_footer_branch
              %19 = sbr.rel target = $region16
            $region21: #{custom-call} parent=13 // loop_exit
              _
            loop: start=0, step=1, limit=1
            $region22: #{custom-call} parent=13 // loop_pre_header
              _
            $region23: #{custom-call} parent=13 // loop_header
              %s31 = sphi 0, %s35
              %p32 = scmp.ge.s32.totalorder %s31, 1
              %s36 = sphi %s17, %s17
              %s37 = sphi %s18, %s18
            $region24: #{custom-call} parent=13 // loop_header_branch
              %34 = sbr.rel (%p32) target = $region28
            $region25: #{custom-call} parent=13 // loop_body
              %v38 = vld [vmem:[%s36] sm:$0xf]
              %39 = vst [vmem:[%s37] sm:$0xf] %v38
            $region26: #{custom-call} parent=13 // loop_footer
              %s35 = sadd.s32 1, %s31
            $region27: #{custom-call} parent=13 // loop_footer_branch
              %30 = sbr.rel target = $region23
            $region28: #{custom-call} parent=13 // loop_exit
              _
          $region14: #{custom-call} parent=9 // pred_fallthru
            _
        $region10: #{custom-call} parent=5 // pred_fallthru
          _
        %40 = vnop
      $region6: #{custom-call} parent=2 // pred_fallthru
        _
      // Predicated region
      $region29: #{custom-call} parent=2 // pred_check
        _
      $region30: #{custom-call} parent=2 // pred_check_branch
        %42 = sbr.rel (0) target = $region32
      $region31: #{custom-call} parent=2 // pred_region
        _
      $region32: #{custom-call} parent=2 // pred_fallthru
        _
      %v43 = vlaneseq
      %v44 = vand.u32 %v43, 127
      %v45 = vlaneseq
      %v46 = vshrl.u32 %v45, 7
      %v47 = vshrl.u32 %v46, 1
      %v48 = vand.u32 %v46, 1
      %v49 = vmul.u32 %v47, 128
      %v50 = vadd.s32 %v44, %v49
      %v52 = vld [vmem:[#allocation16] sm:$0xff]
      %vm53 = vcmp.lt.s32.totalorder %v52, 0
      %v54 = vsub.s32 2147483647, %v52
      %v55 = vsel %vm53, %v54, %v52
      %vm57 = vcmp.lt.s32.totalorder %v50, 768
      %v58 = vsel %vm57, %v55, 2147483648
      %59 = vst [vmem:[#allocation16] sm:$0xff] %v58
      %s60 = scalar_lea.vmem [#allocation16], 8
      %v61 = vld [vmem:[%s60] sm:$0xff]
      %vm62 = vcmp.lt.s32.totalorder %v61, 0
      %v63 = vsub.s32 2147483647, %v61
      %v64 = vsel %vm62, %v63, %v61
      %v65 = vadd.s32 %v50, 512
      %vm66 = vcmp.lt.s32.totalorder %v65, 768
      %v67 = vsel %vm66, %v64, 2147483648
      %68 = vst [vmem:[%s60] sm:$0xff] %v67
      %v69 = vlaneseq
      %v70 = vand.u32 %v69, 127
      %v71 = vlaneseq
      %v72 = vshrl.u32 %v71, 7
      %v73 = vshrl.u32 %v72, 1
      %v74 = vand.u32 %v72, 1
      %v75 = vmul.u32 %v73, 128
      %v76 = vadd.s32 %v70, %v75
      %79 = vst [vmem:[#allocation17] sm:$0xff] %v76
      %v80 = vadd.s32 %v76, 512
      %s81 = scalar_lea.vmem [#allocation17], 8
      %82 = vst [vmem:[%s81] sm:$0xff] %v80
      %83 = xla_tuple [#allocation16], [#allocation17]
      %84 = vst [vmem:[#allocation13] sm:$0xff] 2147483648
      %85 = vst [vmem:[#allocation15] sm:$0xff] 2147483647
      %86 = xla_tuple [#allocation13], [#allocation15]
      loop: start=0, step=1, limit=8
      $region33: #{custom-call} parent=2 // loop_pre_header
        _
      $region34: #{custom-call} parent=2 // loop_header
        %s88 = sphi 0, %s92
        %p89 = scmp.ge.s32.totalorder %s88, 8
      $region35: #{custom-call} parent=2 // loop_header_branch
        %91 = sbr.rel (%p89) target = $region39
      $region36: #{custom-call} parent=2 // loop_body
        %v93 = vld [vmem:[#allocation16] sm:$0xff]
        %v94 = vld [vmem:[#allocation17] sm:$0xff]
        %95 = xla_tuple %v93, %v94
        %s96 = scalar_lea.vmem [#allocation16], 8
        %v97 = vld [vmem:[%s96] sm:$0xff]
        %s98 = scalar_lea.vmem [#allocation17], 8
        %v99 = vld [vmem:[%s98] sm:$0xff]
        %100 = xla_tuple %v97, %v99
        %vm101 = vcmp.gt.s32.totalorder %v97, %v93
        %vm102 = vcmp.eq.s32.totalorder %v97, %v93
        %vm103 = vcmp.lt.s32.totalorder %v99, %v94
        %vm104 = vmand %vm102, %vm103
        %vm105 = vmor %vm101, %vm104
        %v106 = vsel %vm105, %v97, %v93
        %v107 = vsel %vm105, %v99, %v94
        %108 = xla_tuple %v106, %v107
        %v109 = vrot.slane %v106, 2
        %v110 = vrot.slane %v107, 2
        %111 = xla_tuple %v109, %v110
        %vm112 = vcmp.gt.s32.totalorder %v109, %v106
        %vm113 = vcmp.eq.s32.totalorder %v109, %v106
        %vm114 = vcmp.lt.s32.totalorder %v110, %v107
        %vm115 = vmand %vm113, %vm114
        %vm116 = vmor %vm112, %vm115
        %v117 = vsel %vm116, %v109, %v106
        %v118 = vsel %vm116, %v110, %v107
        %119 = xla_tuple %v117, %v118
        %v120 = vrot.slane %v117, 2
        %v121 = vrot.slane %v118, 2
        %122 = xla_tuple %v120, %v121
        %vm123 = vcmp.gt.s32.totalorder %v120, %v117
        %vm124 = vcmp.eq.s32.totalorder %v120, %v117
        %vm125 = vcmp.lt.s32.totalorder %v121, %v118
        %vm126 = vmand %vm124, %vm125
        %vm127 = vmor %vm123, %vm126
        %v128 = vsel %vm127, %v120, %v117
        %v129 = vsel %vm127, %v121, %v118
        %130 = xla_tuple %v128, %v129
        %v131 = vrot.slane %v128, 2
        %v132 = vrot.slane %v129, 2
        %133 = xla_tuple %v131, %v132
        %vm134 = vcmp.gt.s32.totalorder %v131, %v128
        %vm135 = vcmp.eq.s32.totalorder %v131, %v128
        %vm136 = vcmp.lt.s32.totalorder %v132, %v129
        %vm137 = vmand %vm135, %vm136
        %vm138 = vmor %vm134, %vm137
        %v139 = vsel %vm138, %v131, %v128
        %v140 = vsel %vm138, %v132, %v129
        %141 = xla_tuple %v139, %v140
        %142 = vxpose.xlu0.b32.start [1/16] %v139, 128
        %143 = vxpose.xlu0.b32.cont [2/16] %v139, 128
        %144 = vxpose.xlu0.b32.cont [3/16] %v139, 128
        %145 = vxpose.xlu0.b32.cont [4/16] %v139, 128
        %146 = vxpose.xlu0.b32.cont [5/16] %v139, 128
        %147 = vxpose.xlu0.b32.cont [6/16] %v139, 128
        %148 = vxpose.xlu0.b32.cont [7/16] %v139, 128
        %149 = vxpose.xlu0.b32.cont [8/16] %v139, 128
        %150 = vxpose.xlu0.b32.cont [9/16] %v139, 128
        %151 = vxpose.xlu0.b32.cont [10/16] %v139, 128
        %152 = vxpose.xlu0.b32.cont [11/16] %v139, 128
        %153 = vxpose.xlu0.b32.cont [12/16] %v139, 128
        %154 = vxpose.xlu0.b32.cont [13/16] %v139, 128
        %155 = vxpose.xlu0.b32.cont [14/16] %v139, 128
        %156 = vxpose.xlu0.b32.cont [15/16] %v139, 128
        %157 = vxpose.xlu0.b32.end [16/16] %v139, 128
        %v158 = vpop.trf.xlu0
        %v159 = vpop.trf.xlu0
        %v160 = vpop.trf.xlu0
        %v161 = vpop.trf.xlu0
        %v162 = vpop.trf.xlu0
        %v163 = vpop.trf.xlu0
        %v164 = vpop.trf.xlu0
        %v165 = vpop.trf.xlu0
        %v166 = vpop.trf.xlu0
        %v167 = vpop.trf.xlu0
        %v168 = vpop.trf.xlu0
        %v169 = vpop.trf.xlu0
        %v170 = vpop.trf.xlu0
        %v171 = vpop.trf.xlu0
        %v172 = vpop.trf.xlu0
        %v173 = vpop.trf.xlu0
        %174 = vxpose.xlu0.b32.start [1/16] %v140, 128
        %175 = vxpose.xlu0.b32.cont [2/16] %v140, 128
        %176 = vxpose.xlu0.b32.cont [3/16] %v140, 128
        %177 = vxpose.xlu0.b32.cont [4/16] %v140, 128
        %178 = vxpose.xlu0.b32.cont [5/16] %v140, 128
        %179 = vxpose.xlu0.b32.cont [6/16] %v140, 128
        %180 = vxpose.xlu0.b32.cont [7/16] %v140, 128
        %181 = vxpose.xlu0.b32.cont [8/16] %v140, 128
        %182 = vxpose.xlu0.b32.cont [9/16] %v140, 128
        %183 = vxpose.xlu0.b32.cont [10/16] %v140, 128
        %184 = vxpose.xlu0.b32.cont [11/16] %v140, 128
        %185 = vxpose.xlu0.b32.cont [12/16] %v140, 128
        %186 = vxpose.xlu0.b32.cont [13/16] %v140, 128
        %187 = vxpose.xlu0.b32.cont [14/16] %v140, 128
        %188 = vxpose.xlu0.b32.cont [15/16] %v140, 128
        %189 = vxpose.xlu0.b32.end [16/16] %v140, 128
        %v190 = vpop.trf.xlu0
        %v191 = vpop.trf.xlu0
        %v192 = vpop.trf.xlu0
        %v193 = vpop.trf.xlu0
        %v194 = vpop.trf.xlu0
        %v195 = vpop.trf.xlu0
        %v196 = vpop.trf.xlu0
        %v197 = vpop.trf.xlu0
        %v198 = vpop.trf.xlu0
        %v199 = vpop.trf.xlu0
        %v200 = vpop.trf.xlu0
        %v201 = vpop.trf.xlu0
        %v202 = vpop.trf.xlu0
        %v203 = vpop.trf.xlu0
        %v204 = vpop.trf.xlu0
        %v205 = vpop.trf.xlu0
        %206 = xla_tuple %v158, %v190
        %207 = xla_tuple %v159, %v191
        %vm208 = vcmp.gt.s32.totalorder %v159, %v158
        %vm209 = vcmp.eq.s32.totalorder %v159, %v158
        %vm210 = vcmp.lt.s32.totalorder %v191, %v190
        %vm211 = vmand %vm209, %vm210
        %vm212 = vmor %vm208, %vm211
        %v213 = vsel %vm212, %v159, %v158
        %v214 = vsel %vm212, %v191, %v190
        %215 = xla_tuple %v213, %v214
        %216 = xla_tuple %v160, %v192
        %vm217 = vcmp.gt.s32.totalorder %v160, %v213
        %vm218 = vcmp.eq.s32.totalorder %v160, %v213
        %vm219 = vcmp.lt.s32.totalorder %v192, %v214
        %vm220 = vmand %vm218, %vm219
        %vm221 = vmor %vm217, %vm220
        %v222 = vsel %vm221, %v160, %v213
        %v223 = vsel %vm221, %v192, %v214
        %224 = xla_tuple %v222, %v223
        %225 = xla_tuple %v161, %v193
        %vm226 = vcmp.gt.s32.totalorder %v161, %v222
        %vm227 = vcmp.eq.s32.totalorder %v161, %v222
        %vm228 = vcmp.lt.s32.totalorder %v193, %v223
        %vm229 = vmand %vm227, %vm228
        %vm230 = vmor %vm226, %vm229
        %v231 = vsel %vm230, %v161, %v222
        %v232 = vsel %vm230, %v193, %v223
        %233 = xla_tuple %v231, %v232
        %234 = xla_tuple %v162, %v194
        %vm235 = vcmp.gt.s32.totalorder %v162, %v231
        %vm236 = vcmp.eq.s32.totalorder %v162, %v231
        %vm237 = vcmp.lt.s32.totalorder %v194, %v232
        %vm238 = vmand %vm236, %vm237
        %vm239 = vmor %vm235, %vm238
        %v240 = vsel %vm239, %v162, %v231
        %v241 = vsel %vm239, %v194, %v232
        %242 = xla_tuple %v240, %v241
        %243 = xla_tuple %v163, %v195
        %vm244 = vcmp.gt.s32.totalorder %v163, %v240
        %vm245 = vcmp.eq.s32.totalorder %v163, %v240
        %vm246 = vcmp.lt.s32.totalorder %v195, %v241
        %vm247 = vmand %vm245, %vm246
        %vm248 = vmor %vm244, %vm247
        %v249 = vsel %vm248, %v163, %v240
        %v250 = vsel %vm248, %v195, %v241
        %251 = xla_tuple %v249, %v250
        %252 = xla_tuple %v164, %v196
        %vm253 = vcmp.gt.s32.totalorder %v164, %v249
        %vm254 = vcmp.eq.s32.totalorder %v164, %v249
        %vm255 = vcmp.lt.s32.totalorder %v196, %v250
        %vm256 = vmand %vm254, %vm255
        %vm257 = vmor %vm253, %vm256
        %v258 = vsel %vm257, %v164, %v249
        %v259 = vsel %vm257, %v196, %v250
        %260 = xla_tuple %v258, %v259
        %261 = xla_tuple %v165, %v197
        %vm262 = vcmp.gt.s32.totalorder %v165, %v258
        %vm263 = vcmp.eq.s32.totalorder %v165, %v258
        %vm264 = vcmp.lt.s32.totalorder %v197, %v259
        %vm265 = vmand %vm263, %vm264
        %vm266 = vmor %vm262, %vm265
        %v267 = vsel %vm266, %v165, %v258
        %v268 = vsel %vm266, %v197, %v259
        %269 = xla_tuple %v267, %v268
        %270 = xla_tuple %v166, %v198
        %vm271 = vcmp.gt.s32.totalorder %v166, %v267
        %vm272 = vcmp.eq.s32.totalorder %v166, %v267
        %vm273 = vcmp.lt.s32.totalorder %v198, %v268
        %vm274 = vmand %vm272, %vm273
        %vm275 = vmor %vm271, %vm274
        %v276 = vsel %vm275, %v166, %v267
        %v277 = vsel %vm275, %v198, %v268
        %278 = xla_tuple %v276, %v277
        %279 = xla_tuple %v167, %v199
        %vm280 = vcmp.gt.s32.totalorder %v167, %v276
        %vm281 = vcmp.eq.s32.totalorder %v167, %v276
        %vm282 = vcmp.lt.s32.totalorder %v199, %v277
        %vm283 = vmand %vm281, %vm282
        %vm284 = vmor %vm280, %vm283
        %v285 = vsel %vm284, %v167, %v276
        %v286 = vsel %vm284, %v199, %v277
        %287 = xla_tuple %v285, %v286
        %288 = xla_tuple %v168, %v200
        %vm289 = vcmp.gt.s32.totalorder %v168, %v285
        %vm290 = vcmp.eq.s32.totalorder %v168, %v285
        %vm291 = vcmp.lt.s32.totalorder %v200, %v286
        %vm292 = vmand %vm290, %vm291
        %vm293 = vmor %vm289, %vm292
        %v294 = vsel %vm293, %v168, %v285
        %v295 = vsel %vm293, %v200, %v286
        %296 = xla_tuple %v294, %v295
        %297 = xla_tuple %v169, %v201
        %vm298 = vcmp.gt.s32.totalorder %v169, %v294
        %vm299 = vcmp.eq.s32.totalorder %v169, %v294
        %vm300 = vcmp.lt.s32.totalorder %v201, %v295
        %vm301 = vmand %vm299, %vm300
        %vm302 = vmor %vm298, %vm301
        %v303 = vsel %vm302, %v169, %v294
        %v304 = vsel %vm302, %v201, %v295
        %305 = xla_tuple %v303, %v304
        %306 = xla_tuple %v170, %v202
        %vm307 = vcmp.gt.s32.totalorder %v170, %v303
        %vm308 = vcmp.eq.s32.totalorder %v170, %v303
        %vm309 = vcmp.lt.s32.totalorder %v202, %v304
        %vm310 = vmand %vm308, %vm309
        %vm311 = vmor %vm307, %vm310
        %v312 = vsel %vm311, %v170, %v303
        %v313 = vsel %vm311, %v202, %v304
        %314 = xla_tuple %v312, %v313
        %315 = xla_tuple %v171, %v203
        %vm316 = vcmp.gt.s32.totalorder %v171, %v312
        %vm317 = vcmp.eq.s32.totalorder %v171, %v312
        %vm318 = vcmp.lt.s32.totalorder %v203, %v313
        %vm319 = vmand %vm317, %vm318
        %vm320 = vmor %vm316, %vm319
        %v321 = vsel %vm320, %v171, %v312
        %v322 = vsel %vm320, %v203, %v313
        %323 = xla_tuple %v321, %v322
        %324 = xla_tuple %v172, %v204
        %vm325 = vcmp.gt.s32.totalorder %v172, %v321
        %vm326 = vcmp.eq.s32.totalorder %v172, %v321
        %vm327 = vcmp.lt.s32.totalorder %v204, %v322
        %vm328 = vmand %vm326, %vm327
        %vm329 = vmor %vm325, %vm328
        %v330 = vsel %vm329, %v172, %v321
        %v331 = vsel %vm329, %v204, %v322
        %332 = xla_tuple %v330, %v331
        %333 = xla_tuple %v173, %v205
        %vm334 = vcmp.gt.s32.totalorder %v173, %v330
        %vm335 = vcmp.eq.s32.totalorder %v173, %v330
        %vm336 = vcmp.lt.s32.totalorder %v205, %v331
        %vm337 = vmand %vm335, %vm336
        %vm338 = vmor %vm334, %vm337
        %v339 = vsel %vm338, %v173, %v330
        %v340 = vsel %vm338, %v205, %v331
        %341 = xla_tuple %v339, %v340
        %v342 = vrot.slane %v339, 1
        %v343 = vrot.slane %v340, 1
        %344 = xla_tuple %v342, %v343
        %vm345 = vcmp.gt.s32.totalorder %v342, %v339
        %vm346 = vcmp.eq.s32.totalorder %v342, %v339
        %vm347 = vcmp.lt.s32.totalorder %v343, %v340
        %vm348 = vmand %vm346, %vm347
        %vm349 = vmor %vm345, %vm348
        %v350 = vsel %vm349, %v342, %v339
        %v351 = vsel %vm349, %v343, %v340
        %352 = xla_tuple %v350, %v351
        %v353 = vrot.slane %v350, 1
        %v354 = vrot.slane %v351, 1
        %355 = xla_tuple %v353, %v354
        %vm356 = vcmp.gt.s32.totalorder %v353, %v350
        %vm357 = vcmp.eq.s32.totalorder %v353, %v350
        %vm358 = vcmp.lt.s32.totalorder %v354, %v351
        %vm359 = vmand %vm357, %vm358
        %vm360 = vmor %vm356, %vm359
        %v361 = vsel %vm360, %v353, %v350
        %v362 = vsel %vm360, %v354, %v351
        %363 = xla_tuple %v361, %v362
        %v364 = vrot.slane %v361, 1
        %v365 = vrot.slane %v362, 1
        %366 = xla_tuple %v364, %v365
        %vm367 = vcmp.gt.s32.totalorder %v364, %v361
        %vm368 = vcmp.eq.s32.totalorder %v364, %v361
        %vm369 = vcmp.lt.s32.totalorder %v365, %v362
        %vm370 = vmand %vm368, %vm369
        %vm371 = vmor %vm367, %vm370
        %v372 = vsel %vm371, %v364, %v361
        %v373 = vsel %vm371, %v365, %v362
        %374 = xla_tuple %v372, %v373
        %v375 = vrot.slane %v372, 1
        %v376 = vrot.slane %v373, 1
        %377 = xla_tuple %v375, %v376
        %vm378 = vcmp.gt.s32.totalorder %v375, %v372
        %vm379 = vcmp.eq.s32.totalorder %v375, %v372
        %vm380 = vcmp.lt.s32.totalorder %v376, %v373
        %vm381 = vmand %vm379, %vm380
        %vm382 = vmor %vm378, %vm381
        %v383 = vsel %vm382, %v375, %v372
        %v384 = vsel %vm382, %v376, %v373
        %385 = xla_tuple %v383, %v384
        %v386 = vrot.slane %v383, 1
        %v387 = vrot.slane %v384, 1
        %388 = xla_tuple %v386, %v387
        %vm389 = vcmp.gt.s32.totalorder %v386, %v383
        %vm390 = vcmp.eq.s32.totalorder %v386, %v383
        %vm391 = vcmp.lt.s32.totalorder %v387, %v384
        %vm392 = vmand %vm390, %vm391
        %vm393 = vmor %vm389, %vm392
        %v394 = vsel %vm393, %v386, %v383
        %v395 = vsel %vm393, %v387, %v384
        %396 = xla_tuple %v394, %v395
        %v397 = vrot.slane %v394, 1
        %v398 = vrot.slane %v395, 1
        %399 = xla_tuple %v397, %v398
        %vm400 = vcmp.gt.s32.totalorder %v397, %v394
        %vm401 = vcmp.eq.s32.totalorder %v397, %v394
        %vm402 = vcmp.lt.s32.totalorder %v398, %v395
        %vm403 = vmand %vm401, %vm402
        %vm404 = vmor %vm400, %vm403
        %v405 = vsel %vm404, %v397, %v394
        %v406 = vsel %vm404, %v398, %v395
        %407 = xla_tuple %v405, %v406
        %v408 = vrot.slane %v405, 1
        %v409 = vrot.slane %v406, 1
        %410 = xla_tuple %v408, %v409
        %vm411 = vcmp.gt.s32.totalorder %v408, %v405
        %vm412 = vcmp.eq.s32.totalorder %v408, %v405
        %vm413 = vcmp.lt.s32.totalorder %v409, %v406
        %vm414 = vmand %vm412, %vm413
        %vm415 = vmor %vm411, %vm414
        %v416 = vsel %vm415, %v408, %v405
        %v417 = vsel %vm415, %v409, %v406
        %418 = xla_tuple %v416, %v417
        %s419 = scalar_lea.vmem [#allocation13], %s88
        %420 = vst [vmem:[%s419] sm:$0x1] %v416
        %s421 = scalar_lea.vmem [#allocation15], %s88
        %422 = vst [vmem:[%s421] sm:$0x1] %v417
        %423 = xla_tuple %420, %422
        %424 = vxpose.xlu0.b32.start [1/16] %v417, 128
        %425 = vxpose.xlu0.b32.cont [2/16] 0.0, 128
        %426 = vxpose.xlu0.b32.cont [3/16] 0.0, 128
        %427 = vxpose.xlu0.b32.cont [4/16] 0.0, 128
        %428 = vxpose.xlu0.b32.cont [5/16] 0.0, 128
        %429 = vxpose.xlu0.b32.cont [6/16] 0.0, 128
        %430 = vxpose.xlu0.b32.cont [7/16] 0.0, 128
        %431 = vxpose.xlu0.b32.cont [8/16] 0.0, 128
        %432 = vxpose.xlu0.b32.cont [9/16] 0.0, 128
        %433 = vxpose.xlu0.b32.cont [10/16] 0.0, 128
        %434 = vxpose.xlu0.b32.cont [11/16] 0.0, 128
        %435 = vxpose.xlu0.b32.cont [12/16] 0.0, 128
        %436 = vxpose.xlu0.b32.cont [13/16] 0.0, 128
        %437 = vxpose.xlu0.b32.cont [14/16] 0.0, 128
        %438 = vxpose.xlu0.b32.cont [15/16] 0.0, 128
        %439 = vxpose.xlu0.b32.end [16/16] 0.0, 128
        %v440 = vpop.trf.xlu0
        %v441 = vpop.trf.xlu0
        %v442 = vpop.trf.xlu0
        %v443 = vpop.trf.xlu0
        %v444 = vpop.trf.xlu0
        %v445 = vpop.trf.xlu0
        %v446 = vpop.trf.xlu0
        %v447 = vpop.trf.xlu0
        %v448 = vpop.trf.xlu0
        %v449 = vpop.trf.xlu0
        %v450 = vpop.trf.xlu0
        %v451 = vpop.trf.xlu0
        %v452 = vpop.trf.xlu0
        %v453 = vpop.trf.xlu0
        %v454 = vpop.trf.xlu0
        %v455 = vpop.trf.xlu0
        %s456 = vtos %v440
        %s457 = sshrl.u32 %s456, 9
        %p458 = scmp.lt.s32.totalorder %s456, 0
        %s459 = ssub.s32 0, %s456
        %s460 = scalar_select %p458, %s459, %s456
        %s461 = sand.u32 %s460, 511
        %s462 = ssub.s32 0, %s461
        %s463 = scalar_select %p458, %s462, %s461
        %s464 = sshrl.u32 %s463, 7
        %s465 = smul.u32 %s464, 256
        %s466 = sand.u32 %s463, 127
        %s467 = sadd.s32 %s465, %s466
        %v468 = vlaneseq
        %v469 = vstv %s467
        %vm471 = vcmp.eq.s32.totalorder %v468, %v469
        %s472 = smul.addr %s457, 8
        %s473 = scalar_lea.vmem [#allocation16], %s472
        %474 = vst.msk [vmem:[%s473] sm:$0xff] %vm471, 2147483648
        %s475 = smul.addr %s457, 8
        %s476 = scalar_lea.vmem [#allocation17], %s475
        %477 = vst.msk [vmem:[%s476] sm:$0xff] %vm471, 2147483647
        %478 = xla_tuple %474, %477
        %v479 = vrot.slane %v440, 1
        %s480 = vtos %v479
        %s481 = sshrl.u32 %s480, 9
        %p482 = scmp.lt.s32.totalorder %s480, 0
        %s483 = ssub.s32 0, %s480
        %s484 = scalar_select %p482, %s483, %s480
        %s485 = sand.u32 %s484, 511
        %s486 = ssub.s32 0, %s485
        %s487 = scalar_select %p482, %s486, %s485
        %s488 = sshrl.u32 %s487, 7
        %s489 = smul.u32 %s488, 256
        %s490 = sand.u32 %s487, 127
        %s491 = sadd.s32 %s489, %s490
        %v492 = vlaneseq
        %v493 = vstv %s491
        %v494 = vadd.s32 %v493, 128
        %vm495 = vcmp.eq.s32.totalorder %v492, %v494
        %s496 = smul.addr %s481, 8
        %s497 = scalar_lea.vmem [#allocation16], %s496
        %498 = vst.msk [vmem:[%s497] sm:$0xff] %vm495, 2147483648
        %s499 = smul.addr %s481, 8
        %s500 = scalar_lea.vmem [#allocation17], %s499
        %501 = vst.msk [vmem:[%s500] sm:$0xff] %vm495, 2147483647
        %502 = xla_tuple %498, %501
        %v503 = vrot.slane %v479, 1
      $region37: #{custom-call} parent=2 // loop_footer
        %s92 = sadd.s32 1, %s88
      $region38: #{custom-call} parent=2 // loop_footer_branch
        %87 = sbr.rel target = $region34
      $region39: #{custom-call} parent=2 // loop_exit
        _
      %s504 = scalar_lea.vmem [#allocation13], 7
      %v505 = vld [vmem:[%s504] ss:$-1 sm:$0xff]
      %s506 = scalar_lea.vmem [#allocation13], 7
      %v507 = vld [vmem:[%s506] ss:$-1 sm:$0xff]
      %508 = vst [vmem:[#allocation13] sm:$0xff] %v507
      %509 = vst [vmem:[#allocation13] sm:$0xff] %v505
      %s510 = scalar_lea.vmem [#allocation15], 7
      %v511 = vld [vmem:[%s510] ss:$-1 sm:$0xff]
      %s512 = scalar_lea.vmem [#allocation15], 7
      %v513 = vld [vmem:[%s512] ss:$-1 sm:$0xff]
      %514 = vst [vmem:[#allocation15] sm:$0xff] %v513
      %515 = vst [vmem:[#allocation15] sm:$0xff] %v511
      %516 = xla_tuple %509, %515
      %v517 = vld [vmem:[#allocation12] sm:$0xff]
      %v518 = vld [vmem:[#allocation14] sm:$0xff]
      %519 = xla_tuple %v517, %v518
      %v520 = vld [vmem:[#allocation13] sm:$0xff]
      %v521 = vld [vmem:[#allocation15] sm:$0xff]
      %522 = xla_tuple %v520, %v521
      %vm523 = vcmp.gt.s32.totalorder %v517, %v520
      %vm524 = vcmp.eq.s32.totalorder %v517, %v520
      %vm525 = vcmp.lt.s32.totalorder %v518, %v521
      %vm526 = vmand %vm524, %vm525
      %vm527 = vmor %vm523, %vm526
      %v528 = vsel %vm527, %v517, %v520
      %529 = vst [vmem:[#allocation12] sm:$0xff] %v528
      %v530 = vsel %vm527, %v520, %v517
      %531 = vst [vmem:[#allocation13] sm:$0xff] %v530
      %v532 = vsel %vm527, %v518, %v521
      %533 = vst [vmem:[#allocation14] sm:$0xff] %v532
      %v534 = vsel %vm527, %v521, %v518
      %535 = vst [vmem:[#allocation15] sm:$0xff] %v534
      %536 = xla_tuple %531, %535
      %537 = xla_tuple [#allocation12], [#allocation14]
      %v538 = vld [vmem:[#allocation12] sm:$0xff]
      %v539 = vld [vmem:[#allocation14] sm:$0xff]
      %540 = xla_tuple %v538, %v539
      %v542 = vunpack.c.l.s4 839939668
      %v543 = vunpack.c.0.s8 %v542
      %v544 = vlaneseq
      %v545 = vshrl.u32 %v544, 7
      %v546 = vsub.s32 %v543, %v545
      %v547 = vrot.slane %v538, %v546
      %v549 = vunpack.c.l.s4 839939668
      %v550 = vunpack.c.0.s8 %v549
      %v551 = vlaneseq
      %v552 = vshrl.u32 %v551, 7
      %v553 = vsub.s32 %v550, %v552
      %v554 = vrot.slane %v539, %v553
      %555 = xla_tuple %v547, %v554
      %vm556 = vcmp.gt.s32.totalorder %v538, %v547
      %vm557 = vcmp.eq.s32.totalorder %v538, %v547
      %vm558 = vcmp.lt.s32.totalorder %v539, %v554
      %vm559 = vmand %vm557, %vm558
      %vm560 = vmor %vm556, %vm559
      %v561 = vlaneseq
      %v562 = vshrl.u32 %v561, 7
      %v563 = vand.u32 %v562, 4
      %vm564 = vcmp.ne.s32.totalorder %v563, 0
      %vm565 = vmxor %vm560, %vm564
      %v566 = vsel %vm565, %v538, %v547
      %v567 = vsel %vm565, %v539, %v554
      %568 = xla_tuple %v566, %v567
      %v570 = vunpack.c.l.s4 1417023538
      %v571 = vunpack.c.0.s8 %v570
      %v572 = vlaneseq
      %v573 = vshrl.u32 %v572, 7
      %v574 = vsub.s32 %v571, %v573
      %v575 = vrot.slane %v566, %v574
      %v577 = vunpack.c.l.s4 1417023538
      %v578 = vunpack.c.0.s8 %v577
      %v579 = vlaneseq
      %v580 = vshrl.u32 %v579, 7
      %v581 = vsub.s32 %v578, %v580
      %v582 = vrot.slane %v567, %v581
      %583 = xla_tuple %v575, %v582
      %vm584 = vcmp.gt.s32.totalorder %v566, %v575
      %vm585 = vcmp.eq.s32.totalorder %v566, %v575
      %vm586 = vcmp.lt.s32.totalorder %v567, %v582
      %vm587 = vmand %vm585, %vm586
      %vm588 = vmor %vm584, %vm587
      %v589 = vlaneseq
      %v590 = vshrl.u32 %v589, 7
      %v591 = vand.u32 %v590, 2
      %vm592 = vcmp.ne.s32.totalorder %v591, 0
      %vm593 = vmxor %vm588, %vm592
      %v594 = vsel %vm593, %v566, %v575
      %v595 = vsel %vm593, %v567, %v582
      %596 = xla_tuple %v594, %v595
      %v598 = vunpack.c.l.s4 1732584193
      %v599 = vunpack.c.0.s8 %v598
      %v600 = vlaneseq
      %v601 = vshrl.u32 %v600, 7
      %v602 = vsub.s32 %v599, %v601
      %v603 = vrot.slane %v594, %v602
      %v605 = vunpack.c.l.s4 1732584193
      %v606 = vunpack.c.0.s8 %v605
      %v607 = vlaneseq
      %v608 = vshrl.u32 %v607, 7
      %v609 = vsub.s32 %v606, %v608
      %v610 = vrot.slane %v595, %v609
      %611 = xla_tuple %v603, %v610
      %vm612 = vcmp.gt.s32.totalorder %v594, %v603
      %vm613 = vcmp.eq.s32.totalorder %v594, %v603
      %vm614 = vcmp.lt.s32.totalorder %v595, %v610
      %vm615 = vmand %vm613, %vm614
      %vm616 = vmor %vm612, %vm615
      %v617 = vlaneseq
      %v618 = vshrl.u32 %v617, 7
      %v619 = vand.u32 %v618, 1
      %vm620 = vcmp.ne.s32.totalorder %v619, 0
      %vm621 = vmxor %vm616, %vm620
      %v622 = vsel %vm621, %v594, %v603
      %v623 = vsel %vm621, %v595, %v610
      %624 = xla_tuple %v622, %v623
      %625 = vst [vmem:[#allocation12] sm:$0xff] %v622
      %626 = vst [vmem:[#allocation14] sm:$0xff] %v623
      %627 = xla_tuple %625, %626
      %v628 = vld [vmem:[#allocation12] sm:$0xff]
      %v629 = vld [vmem:[#allocation14] sm:$0xff]
      %630 = xla_tuple %v628, %v629
      %v632 = vunpack.c.l.s4 839939668
      %v633 = vunpack.c.0.s8 %v632
      %v634 = vlaneseq
      %v635 = vshrl.u32 %v634, 7
      %v636 = vsub.s32 %v633, %v635
      %v637 = vrot.slane %v628, %v636
      %v639 = vunpack.c.l.s4 839939668
      %v640 = vunpack.c.0.s8 %v639
      %v641 = vlaneseq
      %v642 = vshrl.u32 %v641, 7
      %v643 = vsub.s32 %v640, %v642
      %v644 = vrot.slane %v629, %v643
      %645 = xla_tuple %v637, %v644
      %vm646 = vcmp.gt.s32.totalorder %v628, %v637
      %vm647 = vcmp.eq.s32.totalorder %v628, %v637
      %vm648 = vcmp.lt.s32.totalorder %v629, %v644
      %vm649 = vmand %vm647, %vm648
      %vm650 = vmor %vm646, %vm649
      %v651 = vlaneseq
      %v652 = vshrl.u32 %v651, 7
      %v653 = vand.u32 %v652, 4
      %vm654 = vcmp.ne.s32.totalorder %v653, 0
      %vm655 = vmxor %vm650, %vm654
      %v656 = vsel %vm655, %v628, %v637
      %v657 = vsel %vm655, %v629, %v644
      %658 = xla_tuple %v656, %v657
      %v660 = vunpack.c.l.s4 1417023538
      %v661 = vunpack.c.0.s8 %v660
      %v662 = vlaneseq
      %v663 = vshrl.u32 %v662, 7
      %v664 = vsub.s32 %v661, %v663
      %v665 = vrot.slane %v656, %v664
      %v667 = vunpack.c.l.s4 1417023538
      %v668 = vunpack.c.0.s8 %v667
      %v669 = vlaneseq
      %v670 = vshrl.u32 %v669, 7
      %v671 = vsub.s32 %v668, %v670
      %v672 = vrot.slane %v657, %v671
      %673 = xla_tuple %v665, %v672
      %vm674 = vcmp.gt.s32.totalorder %v656, %v665
      %vm675 = vcmp.eq.s32.totalorder %v656, %v665
      %vm676 = vcmp.lt.s32.totalorder %v657, %v672
      %vm677 = vmand %vm675, %vm676
      %vm678 = vmor %vm674, %vm677
      %v679 = vlaneseq
      %v680 = vshrl.u32 %v679, 7
      %v681 = vand.u32 %v680, 2
      %vm682 = vcmp.ne.s32.totalorder %v681, 0
      %vm683 = vmxor %vm678, %vm682
      %v684 = vsel %vm683, %v656, %v665
      %v685 = vsel %vm683, %v657, %v672
      %686 = xla_tuple %v684, %v685
      %v688 = vunpack.c.l.s4 1732584193
      %v689 = vunpack.c.0.s8 %v688
      %v690 = vlaneseq
      %v691 = vshrl.u32 %v690, 7
      %v692 = vsub.s32 %v689, %v691
      %v693 = vrot.slane %v684, %v692
      %v695 = vunpack.c.l.s4 1732584193
      %v696 = vunpack.c.0.s8 %v695
      %v697 = vlaneseq
      %v698 = vshrl.u32 %v697, 7
      %v699 = vsub.s32 %v696, %v698
      %v700 = vrot.slane %v685, %v699
      %701 = xla_tuple %v693, %v700
      %vm702 = vcmp.gt.s32.totalorder %v684, %v693
      %vm703 = vcmp.eq.s32.totalorder %v684, %v693
      %vm704 = vcmp.lt.s32.totalorder %v685, %v700
      %vm705 = vmand %vm703, %vm704
      %vm706 = vmor %vm702, %vm705
      %v707 = vlaneseq
      %v708 = vshrl.u32 %v707, 7
      %v709 = vand.u32 %v708, 1
      %vm710 = vcmp.ne.s32.totalorder %v709, 0
      %vm711 = vmxor %vm706, %vm710
      %v712 = vsel %vm711, %v684, %v693
      %v713 = vsel %vm711, %v685, %v700
      %714 = xla_tuple %v712, %v713
      %715 = vst [vmem:[#allocation12] sm:$0xff] %v712
      %716 = vst [vmem:[#allocation14] sm:$0xff] %v713
      %717 = xla_tuple %715, %716
      %718 = xla_tuple [#allocation13], [#allocation15]
      %v719 = vld [vmem:[#allocation13] sm:$0xff]
      %v720 = vld [vmem:[#allocation15] sm:$0xff]
      %721 = xla_tuple %v719, %v720
      %v723 = vunpack.c.l.s4 839939668
      %v724 = vunpack.c.0.s8 %v723
      %v725 = vlaneseq
      %v726 = vshrl.u32 %v725, 7
      %v727 = vsub.s32 %v724, %v726
      %v728 = vrot.slane %v719, %v727
      %v730 = vunpack.c.l.s4 839939668
      %v731 = vunpack.c.0.s8 %v730
      %v732 = vlaneseq
      %v733 = vshrl.u32 %v732, 7
      %v734 = vsub.s32 %v731, %v733
      %v735 = vrot.slane %v720, %v734
      %736 = xla_tuple %v728, %v735
      %vm737 = vcmp.gt.s32.totalorder %v719, %v728
      %vm738 = vcmp.eq.s32.totalorder %v719, %v728
      %vm739 = vcmp.lt.s32.totalorder %v720, %v735
      %vm740 = vmand %vm738, %vm739
      %vm741 = vmor %vm737, %vm740
      %v742 = vlaneseq
      %v743 = vshrl.u32 %v742, 7
      %v744 = vand.u32 %v743, 4
      %vm745 = vcmp.ne.s32.totalorder %v744, 0
      %vm746 = vmxor %vm741, %vm745
      %v747 = vsel %vm746, %v719, %v728
      %v748 = vsel %vm746, %v720, %v735
      %749 = xla_tuple %v747, %v748
      %v751 = vunpack.c.l.s4 1417023538
      %v752 = vunpack.c.0.s8 %v751
      %v753 = vlaneseq
      %v754 = vshrl.u32 %v753, 7
      %v755 = vsub.s32 %v752, %v754
      %v756 = vrot.slane %v747, %v755
      %v758 = vunpack.c.l.s4 1417023538
      %v759 = vunpack.c.0.s8 %v758
      %v760 = vlaneseq
      %v761 = vshrl.u32 %v760, 7
      %v762 = vsub.s32 %v759, %v761
      %v763 = vrot.slane %v748, %v762
      %764 = xla_tuple %v756, %v763
      %vm765 = vcmp.gt.s32.totalorder %v747, %v756
      %vm766 = vcmp.eq.s32.totalorder %v747, %v756
      %vm767 = vcmp.lt.s32.totalorder %v748, %v763
      %vm768 = vmand %vm766, %vm767
      %vm769 = vmor %vm765, %vm768
      %v770 = vlaneseq
      %v771 = vshrl.u32 %v770, 7
      %v772 = vand.u32 %v771, 2
      %vm773 = vcmp.ne.s32.totalorder %v772, 0
      %vm774 = vmxor %vm769, %vm773
      %v775 = vsel %vm774, %v747, %v756
      %v776 = vsel %vm774, %v748, %v763
      %777 = xla_tuple %v775, %v776
      %v779 = vunpack.c.l.s4 1732584193
      %v780 = vunpack.c.0.s8 %v779
      %v781 = vlaneseq
      %v782 = vshrl.u32 %v781, 7
      %v783 = vsub.s32 %v780, %v782
      %v784 = vrot.slane %v775, %v783
      %v786 = vunpack.c.l.s4 1732584193
      %v787 = vunpack.c.0.s8 %v786
      %v788 = vlaneseq
      %v789 = vshrl.u32 %v788, 7
      %v790 = vsub.s32 %v787, %v789
      %v791 = vrot.slane %v776, %v790
      %792 = xla_tuple %v784, %v791
      %vm793 = vcmp.gt.s32.totalorder %v775, %v784
      %vm794 = vcmp.eq.s32.totalorder %v775, %v784
      %vm795 = vcmp.lt.s32.totalorder %v776, %v791
      %vm796 = vmand %vm794, %vm795
      %vm797 = vmor %vm793, %vm796
      %v798 = vlaneseq
      %v799 = vshrl.u32 %v798, 7
      %v800 = vand.u32 %v799, 1
      %vm801 = vcmp.ne.s32.totalorder %v800, 0
      %vm802 = vmxor %vm797, %vm801
      %v803 = vsel %vm802, %v775, %v784
      %v804 = vsel %vm802, %v776, %v791
      %805 = xla_tuple %v803, %v804
      %806 = vst [vmem:[#allocation13] sm:$0xff] %v803
      %807 = vst [vmem:[#allocation15] sm:$0xff] %v804
      %808 = xla_tuple %806, %807
      %v809 = vld [vmem:[#allocation13] sm:$0xff]
      %v810 = vld [vmem:[#allocation15] sm:$0xff]
      %811 = xla_tuple %v809, %v810
      %v813 = vunpack.c.l.s4 839939668
      %v814 = vunpack.c.0.s8 %v813
      %v815 = vlaneseq
      %v816 = vshrl.u32 %v815, 7
      %v817 = vsub.s32 %v814, %v816
      %v818 = vrot.slane %v809, %v817
      %v820 = vunpack.c.l.s4 839939668
      %v821 = vunpack.c.0.s8 %v820
      %v822 = vlaneseq
      %v823 = vshrl.u32 %v822, 7
      %v824 = vsub.s32 %v821, %v823
      %v825 = vrot.slane %v810, %v824
      %826 = xla_tuple %v818, %v825
      %vm827 = vcmp.gt.s32.totalorder %v809, %v818
      %vm828 = vcmp.eq.s32.totalorder %v809, %v818
      %vm829 = vcmp.lt.s32.totalorder %v810, %v825
      %vm830 = vmand %vm828, %vm829
      %vm831 = vmor %vm827, %vm830
      %v832 = vlaneseq
      %v833 = vshrl.u32 %v832, 7
      %v834 = vand.u32 %v833, 4
      %vm835 = vcmp.ne.s32.totalorder %v834, 0
      %vm836 = vmxor %vm831, %vm835
      %v837 = vsel %vm836, %v809, %v818
      %v838 = vsel %vm836, %v810, %v825
      %839 = xla_tuple %v837, %v838
      %v841 = vunpack.c.l.s4 1417023538
      %v842 = vunpack.c.0.s8 %v841
      %v843 = vlaneseq
      %v844 = vshrl.u32 %v843, 7
      %v845 = vsub.s32 %v842, %v844
      %v846 = vrot.slane %v837, %v845
      %v848 = vunpack.c.l.s4 1417023538
      %v849 = vunpack.c.0.s8 %v848
      %v850 = vlaneseq
      %v851 = vshrl.u32 %v850, 7
      %v852 = vsub.s32 %v849, %v851
      %v853 = vrot.slane %v838, %v852
      %854 = xla_tuple %v846, %v853
      %vm855 = vcmp.gt.s32.totalorder %v837, %v846
      %vm856 = vcmp.eq.s32.totalorder %v837, %v846
      %vm857 = vcmp.lt.s32.totalorder %v838, %v853
      %vm858 = vmand %vm856, %vm857
      %vm859 = vmor %vm855, %vm858
      %v860 = vlaneseq
      %v861 = vshrl.u32 %v860, 7
      %v862 = vand.u32 %v861, 2
      %vm863 = vcmp.ne.s32.totalorder %v862, 0
      %vm864 = vmxor %vm859, %vm863
      %v865 = vsel %vm864, %v837, %v846
      %v866 = vsel %vm864, %v838, %v853
      %867 = xla_tuple %v865, %v866
      %v869 = vunpack.c.l.s4 1732584193
      %v870 = vunpack.c.0.s8 %v869
      %v871 = vlaneseq
      %v872 = vshrl.u32 %v871, 7
      %v873 = vsub.s32 %v870, %v872
      %v874 = vrot.slane %v865, %v873
      %v876 = vunpack.c.l.s4 1732584193
      %v877 = vunpack.c.0.s8 %v876
      %v878 = vlaneseq
      %v879 = vshrl.u32 %v878, 7
      %v880 = vsub.s32 %v877, %v879
      %v881 = vrot.slane %v866, %v880
      %882 = xla_tuple %v874, %v881
      %vm883 = vcmp.gt.s32.totalorder %v865, %v874
      %vm884 = vcmp.eq.s32.totalorder %v865, %v874
      %vm885 = vcmp.lt.s32.totalorder %v866, %v881
      %vm886 = vmand %vm884, %vm885
      %vm887 = vmor %vm883, %vm886
      %v888 = vlaneseq
      %v889 = vshrl.u32 %v888, 7
      %v890 = vand.u32 %v889, 1
      %vm891 = vcmp.ne.s32.totalorder %v890, 0
      %vm892 = vmxor %vm887, %vm891
      %v893 = vsel %vm892, %v865, %v874
      %v894 = vsel %vm892, %v866, %v881
      %895 = xla_tuple %v893, %v894
      %896 = vst [vmem:[#allocation13] sm:$0xff] %v893
      %897 = vst [vmem:[#allocation15] sm:$0xff] %v894
      %898 = xla_tuple %896, %897
    %v899 = vld [vmem:[#allocation12] sm:$0xff]
    %vm900 = vcmp.lt.s32.totalorder %v899, 0
    %v901 = vsub.s32 2147483647, %v899
    %v902 = vsel %vm900, %v901, %v899
    %903 = vst [vmem:[#allocation12] sm:$0xff] %v902
    %v904 = vld [vmem:[#allocation12] sm:$0xff]
    %905 = vxpose.xlu0.b32.start.end [1/1] (short) %v904, 128
    %v906 = vpop.trf.xlu0
    %v907 = vpop.trf.xlu0
    %v908 = vpop.trf.xlu0
    %v909 = vpop.trf.xlu0
    %v910 = vpop.trf.xlu0
    %v911 = vpop.trf.xlu0
    %v912 = vpop.trf.xlu0
    %v913 = vpop.trf.xlu0
    %v914 = vpop.trf.xlu0
    %v915 = vpop.trf.xlu0
    %v916 = vpop.trf.xlu0
    %v917 = vpop.trf.xlu0
    %v918 = vpop.trf.xlu0
    %v919 = vpop.trf.xlu0
    %v920 = vpop.trf.xlu0
    %v921 = vpop.trf.xlu0
    %922 = vst [vmem:[#allocation7] sm:$0xff] %v906
    %v923 = vld [vmem:[#allocation14] sm:$0xff]
    %924 = vxpose.xlu0.b32.start.end [1/1] (short) %v923, 128
    %v925 = vpop.trf.xlu0
    %v926 = vpop.trf.xlu0
    %v927 = vpop.trf.xlu0
    %v928 = vpop.trf.xlu0
    %v929 = vpop.trf.xlu0
    %v930 = vpop.trf.xlu0
    %v931 = vpop.trf.xlu0
    %v932 = vpop.trf.xlu0
    %v933 = vpop.trf.xlu0
    %v934 = vpop.trf.xlu0
    %v935 = vpop.trf.xlu0
    %v936 = vpop.trf.xlu0
    %v937 = vpop.trf.xlu0
    %v938 = vpop.trf.xlu0
    %v939 = vpop.trf.xlu0
    %v940 = vpop.trf.xlu0
    %941 = vst [vmem:[#allocation10] sm:$0xff] %v925
    %s943 = sshllo.u32 0, 2
    %v945 = vld [vmem:[#allocation7] sm:%s943]
    %s946 = sshllo.u32 0, 2
    %947 = vst [vmem:[#allocation8] sm:%s946] %v945
    %s949 = sshllo.u32 0, 2
    %v951 = vld [vmem:[#allocation10] sm:%s949]
    %s952 = sshllo.u32 0, 2
    %953 = vst [vmem:[#allocation11] sm:%s952] %v951
    %s955 = ssub.s32 32, 32
    %956 = vsyncadd [#allocation9], %s955
    %s958 = sshll.u32 [#allocation8], 4
    %s959 = int_to_ptr.vmem [resolvable:$true] %s958
    %961 = dma.vmem_to_hbm [thread:$0]  %s959, 32, %s1, [#allocation9]
    // Predicated region
    $region40: #{custom-call} parent=1 // pred_check
      _
    $region41: #{custom-call} parent=1 // pred_check_branch
      %963 = sbr.rel (0) target = $region43
    $region42: #{custom-call} parent=1 // pred_region
      // Predicated region
      $region44: #{custom-call} parent=42 // pred_check
        _
      $region45: #{custom-call} parent=42 // pred_check_branch
        %965 = sbr.rel target = $region47
      $region46: #{custom-call} parent=42 // pred_region
        // Predicated region
        $region59: #{custom-call} parent=46 // pred_check
          _
        $region60: #{custom-call} parent=46 // pred_check_branch
          %980 = sbr.rel (0) target = $region62
        $region61: #{custom-call} parent=46 // pred_region
          loop: start=0, step=1, limit=1
          $region63: #{custom-call} parent=61 // loop_pre_header
            _
          $region64: #{custom-call} parent=61 // loop_header
            %s983 = sphi 0, %s987
            %p984 = scmp.ge.s32.totalorder %s983, 1
            %s988 = sphi [#allocation11], [#allocation11]
            %s989 = sphi %s2, %s2
          $region65: #{custom-call} parent=61 // loop_header_branch
            %986 = sbr.rel (%p984) target = $region69
          $region66: #{custom-call} parent=61 // loop_body
            %v990 = vld [vmem:[%s988] sm:$0x3]
            %991 = vst [vmem:[%s989] sm:$0x3] %v990
          $region67: #{custom-call} parent=61 // loop_footer
            %s987 = sadd.s32 1, %s983
          $region68: #{custom-call} parent=61 // loop_footer_branch
            %982 = sbr.rel target = $region64
          $region69: #{custom-call} parent=61 // loop_exit
            _
        $region62: #{custom-call} parent=46 // pred_fallthru
          _
      $region47: #{custom-call} parent=42 // pred_fallthru
        _
      // Predicated region
      $region48: #{custom-call} parent=42 // pred_check
        _
      $region49: #{custom-call} parent=42 // pred_check_branch
        %967 = sbr.rel (0) target = $region51
      $region50: #{custom-call} parent=42 // pred_region
        loop: start=0, step=1, limit=1
        $region52: #{custom-call} parent=50 // loop_pre_header
          _
        $region53: #{custom-call} parent=50 // loop_header
          %s970 = sphi 0, %s974
          %p971 = scmp.ge.s32.totalorder %s970, 1
          %s975 = sphi [#allocation11], [#allocation11]
          %s976 = sphi %s2, %s2
        $region54: #{custom-call} parent=50 // loop_header_branch
          %973 = sbr.rel (%p971) target = $region58
        $region55: #{custom-call} parent=50 // loop_body
          %v977 = vld [vmem:[%s975] sm:$0x3]
          %978 = vst [vmem:[%s976] sm:$0x3] %v977
        $region56: #{custom-call} parent=50 // loop_footer
          %s974 = sadd.s32 1, %s970
        $region57: #{custom-call} parent=50 // loop_footer_branch
          %969 = sbr.rel target = $region53
        $region58: #{custom-call} parent=50 // loop_exit
          _
      $region51: #{custom-call} parent=42 // pred_fallthru
        _
    $region43: #{custom-call} parent=1 // pred_fallthru
      _
    %992 = vnop
    %993 = dma.done [#allocation9], 32
    %994 = vsyncpa [#allocation9], 1

// kernel: inference.4
$region0: #{inference.4}
  #allocation0 [shape = 'u32[]', space=smem, size = 0x4, offset = 0x4, fixed_abs, tag = 'smem constant byte address 0x4 - core index']
  #allocation1 [shape = 'u32[144,128]{1,0:T(1,128)}', space=vmem, size = 0x12000, scoped, tag = 'internal scratch']
  %s0 = inlined_call_operand.vmem [shape: f32[2,328,32], index: 0, kind: input, shape index: {}]
  %s1 = inlined_call_operand.vmem [shape: bf16[9,32,32], index: 1, kind: input, shape index: {}]
  %s2 = inlined_call_operand.vmem [shape: f32[1,32], index: 2, kind: input, shape index: {}]
  %s3 = inlined_call_operand.vmem [shape: bf16[32,128], index: 3, kind: input, shape index: {}]
  %s4 = inlined_call_operand.vmem [shape: f32[1,128], index: 4, kind: input, shape index: {}]
  %s5 = inlined_call_operand.vmem [shape: f32[2,288,128], index: 5, kind: output, shape index: {}]
  %s6 = sld [smem:[#allocation0]]
  $region53: #{inference.4} parent=0
    _
  %s8 = ssub.s32 1, %s6
  %s9 = scalar_select 0, %s8, %s6
  loop: start=0, step=1, limit=4
  $region2: #{inference.4} parent=0 // loop_pre_header
    _
  $region3: #{inference.4} parent=0 // loop_header
    %s11 = sphi 0, %s15
    %p12 = scmp.ge.s32.totalorder %s11, 4
    %s21 = sphi 0, %s23
    %s24 = sphi 0, %s21
    %s25 = sphi 0, %s24
    %s41 = sphi 0, %s25
    %s45 = sphi 0, %s45
    %s47 = sphi 0, %s45
    %s48 = sphi 0, %s47
    %s62 = sphi 0, %s48
    %s66 = sphi 0, %s66
    %s68 = sphi 0, %s66
    %s69 = sphi 0, %s68
    %s83 = sphi 0, %s69
    %s87 = sphi 0, %s87
    %s89 = sphi 0, %s87
    %s90 = sphi 0, %s89
    %s104 = sphi 0, %s90
    %s108 = sphi 0, %s108
    %s110 = sphi 0, %s108
    %s111 = sphi 0, %s110
    %s125 = sphi 0, %s111
    %s131 = sphi 0, %s133
    %s134 = sphi 0, %s131
    %s135 = sphi 0, %s134
    %s151 = sphi 0, %s135
  $region4: #{inference.4} parent=0 // loop_header_branch
    %14 = sbr.rel (%p12) target = $region8
  $region5: #{inference.4} parent=0 // loop_body
    %s16 = ssub.s32 %s11, 1
    %s17 = ssub.s32 %s11, 2
    %s18 = sadd.s32 %s11, 1
    %s19 = ssub.s32 %s11, %s18
    %p20 = scmp.eq.s32.totalorder %s19, 0
    %s22 = sadd.s32 %s21, 1
    %s23 = scalar_select %p20, %s21, %s22
    %p26 = pneg %p20
    %p27 = scmp.eq.s32.totalorder %s11, 1
    %p28 = por %p26, %p27
    %p29 = scmp.ne.s32.totalorder %s21, %s24
    %p30 = scmp.eq.s32.totalorder %s11, 0
    %p31 = por %p29, %p30
    %p32 = scmp.ne.s32.totalorder %s21, %s24
    %p33 = scmp.eq.s32.totalorder %s16, 1
    %p34 = por %p32, %p33
    %p35 = scmp.ne.s32.totalorder %s24, %s25
    %p36 = scmp.eq.s32.totalorder %s16, 0
    %p37 = por %p35, %p36
    %p38 = scmp.ne.s32.totalorder %s24, %s25
    %p39 = scmp.eq.s32.totalorder %s17, 1
    %p40 = por %p38, %p39
    %p42 = scmp.ne.s32.totalorder %s25, %s41
    %p43 = scmp.eq.s32.totalorder %s17, 0
    %p44 = por %p42, %p43
    %s46 = sadd.s32 %s45, 1
    %p49 = scmp.eq.s32.totalorder %s11, 1
    %p50 = scmp.ne.s32.totalorder %s45, %s47
    %p51 = scmp.eq.s32.totalorder %s11, 0
    %p52 = por %p50, %p51
    %p53 = scmp.ne.s32.totalorder %s45, %s47
    %p54 = scmp.eq.s32.totalorder %s16, 1
    %p55 = por %p53, %p54
    %p56 = scmp.ne.s32.totalorder %s47, %s48
    %p57 = scmp.eq.s32.totalorder %s16, 0
    %p58 = por %p56, %p57
    %p59 = scmp.ne.s32.totalorder %s47, %s48
    %p60 = scmp.eq.s32.totalorder %s17, 1
    %p61 = por %p59, %p60
    %p63 = scmp.ne.s32.totalorder %s48, %s62
    %p64 = scmp.eq.s32.totalorder %s17, 0
    %p65 = por %p63, %p64
    %s67 = sadd.s32 %s66, 1
    %p70 = scmp.eq.s32.totalorder %s11, 1
    %p71 = scmp.ne.s32.totalorder %s66, %s68
    %p72 = scmp.eq.s32.totalorder %s11, 0
    %p73 = por %p71, %p72
    %p74 = scmp.ne.s32.totalorder %s66, %s68
    %p75 = scmp.eq.s32.totalorder %s16, 1
    %p76 = por %p74, %p75
    %p77 = scmp.ne.s32.totalorder %s68, %s69
    %p78 = scmp.eq.s32.totalorder %s16, 0
    %p79 = por %p77, %p78
    %p80 = scmp.ne.s32.totalorder %s68, %s69
    %p81 = scmp.eq.s32.totalorder %s17, 1
    %p82 = por %p80, %p81
    %p84 = scmp.ne.s32.totalorder %s69, %s83
    %p85 = scmp.eq.s32.totalorder %s17, 0
    %p86 = por %p84, %p85
    %s88 = sadd.s32 %s87, 1
    %p91 = scmp.eq.s32.totalorder %s11, 1
    %p92 = scmp.ne.s32.totalorder %s87, %s89
    %p93 = scmp.eq.s32.totalorder %s11, 0
    %p94 = por %p92, %p93
    %p95 = scmp.ne.s32.totalorder %s87, %s89
    %p96 = scmp.eq.s32.totalorder %s16, 1
    %p97 = por %p95, %p96
    %p98 = scmp.ne.s32.totalorder %s89, %s90
    %p99 = scmp.eq.s32.totalorder %s16, 0
    %p100 = por %p98, %p99
    %p101 = scmp.ne.s32.totalorder %s89, %s90
    %p102 = scmp.eq.s32.totalorder %s17, 1
    %p103 = por %p101, %p102
    %p105 = scmp.ne.s32.totalorder %s90, %s104
    %p106 = scmp.eq.s32.totalorder %s17, 0
    %p107 = por %p105, %p106
    %s109 = sadd.s32 %s108, 1
    %p112 = scmp.eq.s32.totalorder %s11, 1
    %p113 = scmp.ne.s32.totalorder %s108, %s110
    %p114 = scmp.eq.s32.totalorder %s11, 0
    %p115 = por %p113, %p114
    %p116 = scmp.ne.s32.totalorder %s108, %s110
    %p117 = scmp.eq.s32.totalorder %s16, 1
    %p118 = por %p116, %p117
    %p119 = scmp.ne.s32.totalorder %s110, %s111
    %p120 = scmp.eq.s32.totalorder %s16, 0
    %p121 = por %p119, %p120
    %p122 = scmp.ne.s32.totalorder %s110, %s111
    %p123 = scmp.eq.s32.totalorder %s17, 1
    %p124 = por %p122, %p123
    %p126 = scmp.ne.s32.totalorder %s111, %s125
    %p127 = scmp.eq.s32.totalorder %s17, 0
    %p128 = por %p126, %p127
    %s129 = ssub.s32 %s11, %s18
    %p130 = scmp.eq.s32.totalorder %s129, 0
    %s132 = sadd.s32 %s131, 1
    %s133 = scalar_select %p130, %s131, %s132
    %p136 = pneg %p130
    %p137 = scmp.eq.s32.totalorder %s11, 1
    %p138 = por %p136, %p137
    %p139 = scmp.ne.s32.totalorder %s131, %s134
    %p140 = scmp.eq.s32.totalorder %s11, 0
    %p141 = por %p139, %p140
    %p142 = scmp.ne.s32.totalorder %s131, %s134
    %p143 = scmp.eq.s32.totalorder %s16, 1
    %p144 = por %p142, %p143
    %p145 = scmp.ne.s32.totalorder %s134, %s135
    %p146 = scmp.eq.s32.totalorder %s16, 0
    %p147 = por %p145, %p146
    %p148 = scmp.ne.s32.totalorder %s134, %s135
    %p149 = scmp.eq.s32.totalorder %s17, 1
    %p150 = por %p148, %p149
    %p152 = scmp.ne.s32.totalorder %s135, %s151
    %p153 = scmp.eq.s32.totalorder %s17, 0
    %p154 = por %p152, %p153
    %p155 = scmp.le.s32.totalorder 1, %s11
    %p156 = scmp.lt.s32.totalorder %s11, 3
    %p157 = pnand %p155, %p156
    %p158 = pneg %p157
    // Predicated region
    $region9: #{inference.4} parent=5 // pred_check
      _
    $region10: #{inference.4} parent=5 // pred_check_branch
      %160 = sbr.rel (%p157) target = $region12
    $region11: #{inference.4} parent=5 // pred_region
      %s161 = ssub.s32 %s11, 1
      // Predicated region
      $region13: #{inference.4} parent=11 // pred_check
        %p162 = pneg %p58
      $region14: #{inference.4} parent=11 // pred_check_branch
        %164 = sbr.rel (%p162) target = $region16
      $region15: #{inference.4} parent=11 // pred_region
        _
      $region16: #{inference.4} parent=11 // pred_fallthru
        _
      // Predicated region
      $region17: #{inference.4} parent=11 // pred_check
        %p165 = pneg %p79
      $region18: #{inference.4} parent=11 // pred_check_branch
        %167 = sbr.rel (%p165) target = $region20
      $region19: #{inference.4} parent=11 // pred_region
        _
      $region20: #{inference.4} parent=11 // pred_fallthru
        _
      // Predicated region
      $region21: #{inference.4} parent=11 // pred_check
        %p168 = pneg %p100
      $region22: #{inference.4} parent=11 // pred_check_branch
        %170 = sbr.rel (%p168) target = $region24
      $region23: #{inference.4} parent=11 // pred_region
        _
      $region24: #{inference.4} parent=11 // pred_fallthru
        _
      // Predicated region
      $region25: #{inference.4} parent=11 // pred_check
        %p171 = pneg %p121
      $region26: #{inference.4} parent=11 // pred_check_branch
        %173 = sbr.rel (%p171) target = $region28
      $region27: #{inference.4} parent=11 // pred_region
        _
      $region28: #{inference.4} parent=11 // pred_fallthru
        _
    $region12: #{inference.4} parent=5 // pred_fallthru
      _
    %p174 = scmp.lt.s32.totalorder %s11, 2
    // Predicated region
    $region29: #{inference.4} parent=5 // pred_check
      %p175 = pneg %p174
    $region30: #{inference.4} parent=5 // pred_check_branch
      %177 = sbr.rel (%p175) target = $region32
    $region31: #{inference.4} parent=5 // pred_region
      // Predicated region
      $region33: #{inference.4} parent=31 // pred_check
        %p178 = pneg %p31
      $region34: #{inference.4} parent=31 // pred_check_branch
        %180 = sbr.rel (%p178) target = $region36
      $region35: #{inference.4} parent=31 // pred_region
        %p181 = scmp.lt.s32.totalorder %s11, 1
        %s182 = scalar_select %p181, %s11, 1
        %s183 = smul.addr %s182, 41
        %s184 = smul.addr %s183, 8
        %s185 = scalar_lea.vmem %s0, %s184
      $region36: #{inference.4} parent=31 // pred_fallthru
        _
    $region32: #{inference.4} parent=5 // pred_fallthru
      _
    %p186 = scmp.le.s32.totalorder 1, %s11
    %p187 = scmp.lt.s32.totalorder %s11, 3
    %p188 = pnand %p186, %p187
    %p189 = pneg %p188
    // Predicated region
    $region37: #{inference.4} parent=5 // pred_check
      _
    $region38: #{inference.4} parent=5 // pred_check_branch
      %191 = sbr.rel (%p188) target = $region40
    $region39: #{inference.4} parent=5 // pred_region
      %s192 = ssub.s32 %s11, 1
      %p193 = scmp.lt.s32.totalorder %s16, 1
      %s194 = scalar_select %p193, %s16, 1
      %s195 = smul.addr %s194, 41
      %s196 = smul.addr %s195, 8
      %s197 = scalar_lea.vmem %s0, %s196
      %p198 = pneg %p37
      %p199 = pneg %p34
      %p200 = pneg %p58
      %p201 = pneg %p55
      %p202 = pneg %p79
      %p203 = pneg %p76
      %p204 = pneg %p100
      %p205 = pneg %p97
      %p206 = pneg %p121
      %p207 = pneg %p118
      %p208 = pneg %p147
      %p209 = pneg %p144
      %p210 = scmp.lt.s32.totalorder %s16, 1
      %s211 = scalar_select %p210, %s16, 1
      %s212 = smul.addr %s211, 36
      %s213 = smul.addr %s212, 8
      %s214 = scalar_lea.vmem %s5, %s213
      %p215 = scmp.lt.s32.totalorder %s16, 1
      %s216 = scalar_select %p215, %s16, 1
      %s217 = smul.addr %s216, 41
      %s218 = smul.addr %s217, 8
      %s219 = scalar_lea.vmem %s0, %s218
      %p220 = scmp.lt.s32.totalorder %s16, 1
      %s221 = scalar_select %p220, %s16, 1
      %s222 = smul.addr %s221, 36
      %s223 = smul.addr %s222, 8
      %s224 = scalar_lea.vmem %s5, %s223
      %v226 = vld [vmem:[%s219] sm:$0xff]
      %v227 = vld [vmem:[%s219 + $0x8] sm:$0xff]
      %v228 = vld [vmem:[%s219 + $0x10] sm:$0xff]
      %v229 = vld [vmem:[%s219 + $0x18] sm:$0xff]
      %v230 = vld [vmem:[%s219 + $0x20] sm:$0xff]
      %v231 = vld [vmem:[%s219 + $0x28] sm:$0xff]
      %v232 = vld [vmem:[%s219 + $0x30] sm:$0xff]
      %v233 = vld [vmem:[%s219 + $0x38] sm:$0xff]
      %v234 = vld [vmem:[%s219 + $0x40] sm:$0xff]
      %v235 = vld [vmem:[%s219 + $0x48] sm:$0xff]
      %v236 = vld [vmem:[%s219 + $0x50] sm:$0xff]
      %v237 = vld [vmem:[%s219 + $0x58] sm:$0xff]
      %v238 = vld [vmem:[%s219 + $0x60] sm:$0xff]
      %v239 = vld [vmem:[%s219 + $0x68] sm:$0xff]
      %v240 = vld [vmem:[%s219 + $0x70] sm:$0xff]
      %v241 = vld [vmem:[%s219 + $0x78] sm:$0xff]
      %v242 = vld [vmem:[%s219 + $0x80] sm:$0xff]
      %v243 = vld [vmem:[%s219 + $0x88] sm:$0xff]
      %v244 = vld [vmem:[%s219 + $0x90] sm:$0xff]
      %v245 = vld [vmem:[%s219 + $0x98] sm:$0xff]
      %v246 = vld [vmem:[%s219 + $0xa0] sm:$0xff]
      %v247 = vld [vmem:[%s219 + $0xa8] sm:$0xff]
      %v248 = vld [vmem:[%s219 + $0xb0] sm:$0xff]
      %v249 = vld [vmem:[%s219 + $0xb8] sm:$0xff]
      %v250 = vld [vmem:[%s219 + $0xc0] sm:$0xff]
      %v251 = vld [vmem:[%s219 + $0xc8] sm:$0xff]
      %v252 = vld [vmem:[%s219 + $0xd0] sm:$0xff]
      %v253 = vld [vmem:[%s219 + $0xd8] sm:$0xff]
      %v254 = vld [vmem:[%s219 + $0xe0] sm:$0xff]
      %v255 = vld [vmem:[%s219 + $0xe8] sm:$0xff]
      %v256 = vld [vmem:[%s219 + $0xf0] sm:$0xff]
      %v257 = vld [vmem:[%s219 + $0xf8] sm:$0xff]
      %v258 = vld [vmem:[%s219 + $0x100] sm:$0xff]
      %v259 = vld [vmem:[%s219 + $0x108] sm:$0xff]
      %v260 = vld [vmem:[%s219 + $0x110] sm:$0xff]
      %v261 = vld [vmem:[%s219 + $0x118] sm:$0xff]
      %v262 = vpack.c.bf16 %v227, %v226
      %v263 = vpack.c.bf16 %v229, %v228
      %v264 = vpack.c.bf16 %v231, %v230
      %v265 = vpack.c.bf16 %v233, %v232
      %v266 = vpack.c.bf16 %v235, %v234
      %v267 = vpack.c.bf16 %v237, %v236
      %v268 = vpack.c.bf16 %v239, %v238
      %v269 = vpack.c.bf16 %v241, %v240
      %v270 = vpack.c.bf16 %v243, %v242
      %v271 = vpack.c.bf16 %v245, %v244
      %v272 = vpack.c.bf16 %v247, %v246
      %v273 = vpack.c.bf16 %v249, %v248
      %v274 = vpack.c.bf16 %v251, %v250
      %v275 = vpack.c.bf16 %v253, %v252
      %v276 = vpack.c.bf16 %v255, %v254
      %v277 = vpack.c.bf16 %v257, %v256
      %v278 = vpack.c.bf16 %v259, %v258
      %v279 = vpack.c.bf16 %v261, %v260
      %v280 = vld [vmem:[%s1] sm:$0xf]
      %v281 = vld [vmem:[%s1 + $0x4] sm:$0xf]
      %v282 = vld [vmem:[%s1 + $0x8] sm:$0xf]
      %v283 = vld [vmem:[%s1 + $0xc] sm:$0xf]
      %v284 = vld [vmem:[%s219 + $0x1] sm:$0xff]
      %v285 = vld [vmem:[%s219 + $0x9] sm:$0xff]
      %v286 = vld [vmem:[%s219 + $0x11] sm:$0xff]
      %v287 = vld [vmem:[%s219 + $0x19] sm:$0xff]
      %v288 = vld [vmem:[%s219 + $0x21] sm:$0xff]
      %v289 = vld [vmem:[%s219 + $0x29] sm:$0xff]
      %v290 = vld [vmem:[%s219 + $0x31] sm:$0xff]
      %v291 = vld [vmem:[%s219 + $0x39] sm:$0xff]
      %v292 = vld [vmem:[%s219 + $0x41] sm:$0xff]
      %v293 = vld [vmem:[%s219 + $0x49] sm:$0xff]
      %v294 = vld [vmem:[%s219 + $0x51] sm:$0xff]
      %v295 = vld [vmem:[%s219 + $0x59] sm:$0xff]
      %v296 = vld [vmem:[%s219 + $0x61] sm:$0xff]
      %v297 = vld [vmem:[%s219 + $0x69] sm:$0xff]
      %v298 = vld [vmem:[%s219 + $0x71] sm:$0xff]
      %v299 = vld [vmem:[%s219 + $0x79] sm:$0xff]
      %v300 = vld [vmem:[%s219 + $0x81] sm:$0xff]
      %v301 = vld [vmem:[%s219 + $0x89] sm:$0xff]
      %v302 = vld [vmem:[%s219 + $0x91] sm:$0xff]
      %v303 = vld [vmem:[%s219 + $0x99] sm:$0xff]
      %v304 = vld [vmem:[%s219 + $0xa1] sm:$0xff]
      %v305 = vld [vmem:[%s219 + $0xa9] sm:$0xff]
      %v306 = vld [vmem:[%s219 + $0xb1] sm:$0xff]
      %v307 = vld [vmem:[%s219 + $0xb9] sm:$0xff]
      %v308 = vld [vmem:[%s219 + $0xc1] sm:$0xff]
      %v309 = vld [vmem:[%s219 + $0xc9] sm:$0xff]
      %v310 = vld [vmem:[%s219 + $0xd1] sm:$0xff]
      %v311 = vld [vmem:[%s219 + $0xd9] sm:$0xff]
      %v312 = vld [vmem:[%s219 + $0xe1] sm:$0xff]
      %v313 = vld [vmem:[%s219 + $0xe9] sm:$0xff]
      %v314 = vld [vmem:[%s219 + $0xf1] sm:$0xff]
      %v315 = vld [vmem:[%s219 + $0xf9] sm:$0xff]
      %v316 = vld [vmem:[%s219 + $0x101] sm:$0xff]
      %v317 = vld [vmem:[%s219 + $0x109] sm:$0xff]
      %v318 = vld [vmem:[%s219 + $0x111] sm:$0xff]
      %v319 = vld [vmem:[%s219 + $0x119] sm:$0xff]
      %v320 = vpack.c.bf16 %v285, %v284
      %v321 = vpack.c.bf16 %v287, %v286
      %v322 = vpack.c.bf16 %v289, %v288
      %v323 = vpack.c.bf16 %v291, %v290
      %v324 = vpack.c.bf16 %v293, %v292
      %v325 = vpack.c.bf16 %v295, %v294
      %v326 = vpack.c.bf16 %v297, %v296
      %v327 = vpack.c.bf16 %v299, %v298
      %v328 = vpack.c.bf16 %v301, %v300
      %v329 = vpack.c.bf16 %v303, %v302
      %v330 = vpack.c.bf16 %v305, %v304
      %v331 = vpack.c.bf16 %v307, %v306
      %v332 = vpack.c.bf16 %v309, %v308
      %v333 = vpack.c.bf16 %v311, %v310
      %v334 = vpack.c.bf16 %v313, %v312
      %v335 = vpack.c.bf16 %v315, %v314
      %v336 = vpack.c.bf16 %v317, %v316
      %v337 = vpack.c.bf16 %v319, %v318
      %s338 = scalar_lea.vmem %s1, 16
      %v339 = vld [vmem:[%s338] sm:$0xf]
      %v340 = vld [vmem:[%s338 + $0x4] sm:$0xf]
      %v341 = vld [vmem:[%s338 + $0x8] sm:$0xf]
      %v342 = vld [vmem:[%s338 + $0xc] sm:$0xf]
      %v347 = vunpack.c.l.b16 %v339
      %v348 = vunpack.c.l.b16 %v340
      %v349 = vunpack.c.l.b16 %v341
      %v350 = vunpack.c.l.b16 %v342
      %v351 = vpack.c.b16 %v348, %v347
      %v352 = vpack.c.b16 %v350, %v349
      %vm355 = vcmask 261120
      %v357 = vsel %vm355, %v320, 0
      %v360 = vsel %vm355, %v321, 0
      %v363 = vsel %vm355, %v322, 0
      %v366 = vsel %vm355, %v323, 0
      %v369 = vsel %vm355, %v324, 0
      %v372 = vsel %vm355, %v325, 0
      %v375 = vsel %vm355, %v326, 0
      %v378 = vsel %vm355, %v327, 0
      %v381 = vsel %vm355, %v328, 0
      %v384 = vsel %vm355, %v329, 0
      %v387 = vsel %vm355, %v330, 0
      %v390 = vsel %vm355, %v331, 0
      %v393 = vsel %vm355, %v332, 0
      %v396 = vsel %vm355, %v333, 0
      %v399 = vsel %vm355, %v334, 0
      %v402 = vsel %vm355, %v335, 0
      %v405 = vsel %vm355, %v336, 0
      %v408 = vsel %vm355, %v337, 0
      %410 = vmatprep.subr.bf16.mxu0 0
      %411 = vmatpush1.bf16.msra.mxu0 %v351
      %412 = vmatprep.subr.bf16.mxu0 0
      %413 = vmatpush1.bf16.msra.mxu0 %v352
      %414 = vmatprep.subr.bf16.mxu0 0
      %415 = vmatpush1.bf16.msra.mxu0 0
      %416 = vmatprep.subr.bf16.mxu0 0
      %417 = vmatpush1.bf16.msra.mxu0 0
      %418 = vmatprep.subr.bf16.mxu0 0
      %419 = vmatpush1.bf16.msra.mxu0 0
      %420 = vmatprep.subr.bf16.mxu0 0
      %421 = vmatpush1.bf16.msra.mxu0 0
      %422 = vmatprep.subr.bf16.mxu0 0
      %423 = vmatpush1.bf16.msra.mxu0 0
      %424 = vmatprep.subr.bf16.mxu0 0
      %425 = vmatpush1.bf16.msra.mxu0 0
      %426 = vmatprep.subr.bf16.mxu0 0
      %427 = vmatpush1.bf16.msra.mxu0 0
      %428 = vmatprep.subr.bf16.mxu0 0
      %429 = vmatpush1.bf16.msra.mxu0 0
      %430 = vmatprep.subr.bf16.mxu0 0
      %431 = vmatpush1.bf16.msra.mxu0 0
      %432 = vmatprep.subr.bf16.mxu0 0
      %433 = vmatpush1.bf16.msra.mxu0 0
      %434 = vmatprep.subr.bf16.mxu0 0
      %435 = vmatpush1.bf16.msra.mxu0 0
      %436 = vmatprep.subr.bf16.mxu0 0
      %437 = vmatpush1.bf16.msra.mxu0 0
      %438 = vmatprep.subr.bf16.mxu0 0
      %439 = vmatpush1.bf16.msra.mxu0 0
      %440 = vmatprep.subr.bf16.mxu0 0
      %441 = vmatpush1.bf16.msra.mxu0 0
      %442 = vmatprep.mubr.bf16.mxu0 0
      %443 = vmatmul.mubr.bf16.gmra.mrb[0].mxu0 %v357
      %v444 = vpop.f32.mrb[0].mxu0
      %v445 = vadd.f32 0.0, %v444
      %v446 = vpop.f32.mrb[0].mxu0
      %v447 = vpop.f32.mrb[0].mxu0
      %v448 = vadd.f32 0.0, %v447
      %v449 = vpop.f32.mrb[0].mxu0
      %450 = vmatprep.mubr.bf16.mxu0 0
      %451 = vmatmul.mubr.bf16.gmra.mrb[0].mxu0 %v360
      %v452 = vpop.f32.mrb[0].mxu0
      %v453 = vadd.f32 0.0, %v452
      %v454 = vpop.f32.mrb[0].mxu0
      %v455 = vpop.f32.mrb[0].mxu0
      %v456 = vadd.f32 0.0, %v455
      %v457 = vpop.f32.mrb[0].mxu0
      %458 = vmatprep.mubr.bf16.mxu0 0
      %459 = vmatmul.mubr.bf16.gmra.mrb[0].mxu0 %v363
      %v460 = vpop.f32.mrb[0].mxu0
      %v461 = vadd.f32 0.0, %v460
      %v462 = vpop.f32.mrb[0].mxu0
      %v463 = vpop.f32.mrb[0].mxu0
      %v464 = vadd.f32 0.0, %v463
      %v465 = vpop.f32.mrb[0].mxu0
      %466 = vmatprep.mubr.bf16.mxu0 0
      %467 = vmatmul.mubr.bf16.gmra.mrb[0].mxu0 %v366
      %v468 = vpop.f32.mrb[0].mxu0
      %v469 = vadd.f32 0.0, %v468
      %v470 = vpop.f32.mrb[0].mxu0
      %v471 = vpop.f32.mrb[0].mxu0
      %v472 = vadd.f32 0.0, %v471
      %v473 = vpop.f32.mrb[0].mxu0
      %474 = vmatprep.mubr.bf16.mxu0 0
      %475 = vmatmul.mubr.bf16.gmra.mrb[0].mxu0 %v369
      %v476 = vpop.f32.mrb[0].mxu0
      %v477 = vadd.f32 0.0, %v476
      %v478 = vpop.f32.mrb[0].mxu0
      %v479 = vpop.f32.mrb[0].mxu0
      %v480 = vadd.f32 0.0, %v479
      %v481 = vpop.f32.mrb[0].mxu0
      %482 = vmatprep.mubr.bf16.mxu0 0
      %483 = vmatmul.mubr.bf16.gmra.mrb[0].mxu0 %v372
      %v484 = vpop.f32.mrb[0].mxu0
      %v485 = vadd.f32 0.0, %v484
      %v486 = vpop.f32.mrb[0].mxu0
      %v487 = vpop.f32.mrb[0].mxu0
      %v488 = vadd.f32 0.0, %v487
      %v489 = vpop.f32.mrb[0].mxu0
      %490 = vmatprep.mubr.bf16.mxu0 0
      %491 = vmatmul.mubr.bf16.gmra.mrb[0].mxu0 %v375
      %v492 = vpop.f32.mrb[0].mxu0
      %v493 = vadd.f32 0.0, %v492
      %v494 = vpop.f32.mrb[0].mxu0
      %v495 = vpop.f32.mrb[0].mxu0
      %v496 = vadd.f32 0.0, %v495
      %v497 = vpop.f32.mrb[0].mxu0
      %498 = vmatprep.mubr.bf16.mxu0 0
      %499 = vmatmul.mubr.bf16.gmra.mrb[0].mxu0 %v378
      %v500 = vpop.f32.mrb[0].mxu0
      %v501 = vadd.f32 0.0, %v500
      %v502 = vpop.f32.mrb[0].mxu0
      %v503 = vpop.f32.mrb[0].mxu0
      %v504 = vadd.f32 0.0, %v503
      %v505 = vpop.f32.mrb[0].mxu0
      %506 = vmatprep.mubr.bf16.mxu0 0
      %507 = vmatmul.mubr.bf16.gmra.mrb[0].mxu0 %v381
      %v508 = vpop.f32.mrb[0].mxu0
      %v509 = vadd.f32 0.0, %v508
      %v510 = vpop.f32.mrb[0].mxu0
      %v511 = vpop.f32.mrb[0].mxu0
      %v512 = vadd.f32 0.0, %v511
      %v513 = vpop.f32.mrb[0].mxu0
      %514 = vmatprep.mubr.bf16.mxu0 0
      %515 = vmatmul.mubr.bf16.gmra.mrb[0].mxu0 %v384
      %v516 = vpop.f32.mrb[0].mxu0
      %v517 = vadd.f32 0.0, %v516
      %v518 = vpop.f32.mrb[0].mxu0
      %v519 = vpop.f32.mrb[0].mxu0
      %v520 = vadd.f32 0.0, %v519
      %v521 = vpop.f32.mrb[0].mxu0
      %522 = vmatprep.mubr.bf16.mxu0 0
      %523 = vmatmul.mubr.bf16.gmra.mrb[0].mxu0 %v387
      %v524 = vpop.f32.mrb[0].mxu0
      %v525 = vadd.f32 0.0, %v524
      %v526 = vpop.f32.mrb[0].mxu0
      %v527 = vpop.f32.mrb[0].mxu0
      %v528 = vadd.f32 0.0, %v527
      %v529 = vpop.f32.mrb[0].mxu0
      %530 = vmatprep.mubr.bf16.mxu0 0
      %531 = vmatmul.mubr.bf16.gmra.mrb[0].mxu0 %v390
      %v532 = vpop.f32.mrb[0].mxu0
      %v533 = vadd.f32 0.0, %v532
      %v534 = vpop.f32.mrb[0].mxu0
      %v535 = vpop.f32.mrb[0].mxu0
      %v536 = vadd.f32 0.0, %v535
      %v537 = vpop.f32.mrb[0].mxu0
      %538 = vmatprep.mubr.bf16.mxu0 0
      %539 = vmatmul.mubr.bf16.gmra.mrb[0].mxu0 %v393
      %v540 = vpop.f32.mrb[0].mxu0
      %v541 = vadd.f32 0.0, %v540
      %v542 = vpop.f32.mrb[0].mxu0
      %v543 = vpop.f32.mrb[0].mxu0
      %v544 = vadd.f32 0.0, %v543
      %v545 = vpop.f32.mrb[0].mxu0
      %546 = vmatprep.mubr.bf16.mxu0 0
      %547 = vmatmul.mubr.bf16.gmra.mrb[0].mxu0 %v396
      %v548 = vpop.f32.mrb[0].mxu0
      %v549 = vadd.f32 0.0, %v548
      %v550 = vpop.f32.mrb[0].mxu0
      %v551 = vpop.f32.mrb[0].mxu0
      %v552 = vadd.f32 0.0, %v551
      %v553 = vpop.f32.mrb[0].mxu0
      %554 = vmatprep.mubr.bf16.mxu0 0
      %555 = vmatmul.mubr.bf16.gmra.mrb[0].mxu0 %v399
      %v556 = vpop.f32.mrb[0].mxu0
      %v557 = vadd.f32 0.0, %v556
      %v558 = vpop.f32.mrb[0].mxu0
      %v559 = vpop.f32.mrb[0].mxu0
      %v560 = vadd.f32 0.0, %v559
      %v561 = vpop.f32.mrb[0].mxu0
      %562 = vmatprep.mubr.bf16.mxu0 0
      %563 = vmatmul.mubr.bf16.gmra.mrb[0].mxu0 %v402
      %v564 = vpop.f32.mrb[0].mxu0
      %v565 = vadd.f32 0.0, %v564
      %v566 = vpop.f32.mrb[0].mxu0
      %v567 = vpop.f32.mrb[0].mxu0
      %v568 = vadd.f32 0.0, %v567
      %v569 = vpop.f32.mrb[0].mxu0
      %570 = vmatprep.mubr.bf16.mxu0 0
      %571 = vmatmul.mubr.bf16.gmra.mrb[0].mxu0 %v405
      %v572 = vpop.f32.mrb[0].mxu0
      %v573 = vadd.f32 0.0, %v572
      %v574 = vpop.f32.mrb[0].mxu0
      %v575 = vpop.f32.mrb[0].mxu0
      %v576 = vadd.f32 0.0, %v575
      %v577 = vpop.f32.mrb[0].mxu0
      %578 = vmatprep.mubr.bf16.mxu0 0
      %579 = vmatmul.mubr.bf16.gmra.mrb[0].mxu0 %v408
      %v580 = vpop.f32.mrb[0].mxu0
      %v581 = vadd.f32 0.0, %v580
      %v582 = vpop.f32.mrb[0].mxu0
      %v583 = vpop.f32.mrb[0].mxu0
      %v584 = vadd.f32 0.0, %v583
      %v585 = vpop.f32.mrb[0].mxu0
      %586 = vdwg.mxu0
      %v591 = vunpack.c.l.b16 %v280
      %v592 = vunpack.c.l.b16 %v281
      %v593 = vunpack.c.l.b16 %v282
      %v594 = vunpack.c.l.b16 %v283
      %v595 = vpack.c.b16 %v592, %v591
      %v596 = vpack.c.b16 %v594, %v593
      %v600 = vsel %vm355, %v262, 0
      %v603 = vsel %vm355, %v263, 0
      %v606 = vsel %vm355, %v264, 0
      %v609 = vsel %vm355, %v265, 0
      %v612 = vsel %vm355, %v266, 0
      %v615 = vsel %vm355, %v267, 0
      %v618 = vsel %vm355, %v268, 0
      %v621 = vsel %vm355, %v269, 0
      %v624 = vsel %vm355, %v270, 0
      %v627 = vsel %vm355, %v271, 0
      %v630 = vsel %vm355, %v272, 0
      %v633 = vsel %vm355, %v273, 0
      %v636 = vsel %vm355, %v274, 0
      %v639 = vsel %vm355, %v275, 0
      %v642 = vsel %vm355, %v276, 0
      %v645 = vsel %vm355, %v277, 0
      %v648 = vsel %vm355, %v278, 0
      %v651 = vsel %vm355, %v279, 0
      %653 = vmatprep.subr.bf16.mxu0 0
      %654 = vmatpush1.bf16.msra.mxu0 %v595
      %655 = vmatprep.subr.bf16.mxu0 0
      %656 = vmatpush1.bf16.msra.mxu0 %v596
      %657 = vmatprep.subr.bf16.mxu0 0
      %658 = vmatpush1.bf16.msra.mxu0 0
      %659 = vmatprep.subr.bf16.mxu0 0
      %660 = vmatpush1.bf16.msra.mxu0 0
      %661 = vmatprep.subr.bf16.mxu0 0
      %662 = vmatpush1.bf16.msra.mxu0 0
      %663 = vmatprep.subr.bf16.mxu0 0
      %664 = vmatpush1.bf16.msra.mxu0 0
      %665 = vmatprep.subr.bf16.mxu0 0
      %666 = vmatpush1.bf16.msra.mxu0 0
      %667 = vmatprep.subr.bf16.mxu0 0
      %668 = vmatpush1.bf16.msra.mxu0 0
      %669 = vmatprep.subr.bf16.mxu0 0
      %670 = vmatpush1.bf16.msra.mxu0 0
      %671 = vmatprep.subr.bf16.mxu0 0
      %672 = vmatpush1.bf16.msra.mxu0 0
      %673 = vmatprep.subr.bf16.mxu0 0
      %674 = vmatpush1.bf16.msra.mxu0 0
      %675 = vmatprep.subr.bf16.mxu0 0
      %676 = vmatpush1.bf16.msra.mxu0 0
      %677 = vmatprep.subr.bf16.mxu0 0
      %678 = vmatpush1.bf16.msra.mxu0 0
      %679 = vmatprep.subr.bf16.mxu0 0
      %680 = vmatpush1.bf16.msra.mxu0 0
      %681 = vmatprep.subr.bf16.mxu0 0
      %682 = vmatpush1.bf16.msra.mxu0 0
      %683 = vmatprep.subr.bf16.mxu0 0
      %684 = vmatpush1.bf16.msra.mxu0 0
      %685 = vmatprep.mubr.bf16.mxu0 0
      %686 = vmatmul.mubr.bf16.gmra.mrb[0].mxu0 %v600
      %v687 = vpop.f32.mrb[0].mxu0
      %v688 = vadd.f32 %v445, %v687
      %v689 = vpop.f32.mrb[0].mxu0
      %v690 = vpop.f32.mrb[0].mxu0
      %v691 = vadd.f32 %v448, %v690
      %v692 = vpop.f32.mrb[0].mxu0
      %693 = vmatprep.mubr.bf16.mxu0 0
      %694 = vmatmul.mubr.bf16.gmra.mrb[0].mxu0 %v603
      %v695 = vpop.f32.mrb[0].mxu0
      %v696 = vadd.f32 %v453, %v695
      %v697 = vpop.f32.mrb[0].mxu0
      %v698 = vpop.f32.mrb[0].mxu0
      %v699 = vadd.f32 %v456, %v698
      %v700 = vpop.f32.mrb[0].mxu0
      %701 = vmatprep.mubr.bf16.mxu0 0
      %702 = vmatmul.mubr.bf16.gmra.mrb[0].mxu0 %v606
      %v703 = vpop.f32.mrb[0].mxu0
      %v704 = vadd.f32 %v461, %v703
      %v705 = vpop.f32.mrb[0].mxu0
      %v706 = vpop.f32.mrb[0].mxu0
      %v707 = vadd.f32 %v464, %v706
      %v708 = vpop.f32.mrb[0].mxu0
      %709 = vmatprep.mubr.bf16.mxu0 0
      %710 = vmatmul.mubr.bf16.gmra.mrb[0].mxu0 %v609
      %v711 = vpop.f32.mrb[0].mxu0
      %v712 = vadd.f32 %v469, %v711
      %v713 = vpop.f32.mrb[0].mxu0
      %v714 = vpop.f32.mrb[0].mxu0
      %v715 = vadd.f32 %v472, %v714
      %v716 = vpop.f32.mrb[0].mxu0
      %717 = vmatprep.mubr.bf16.mxu0 0
      %718 = vmatmul.mubr.bf16.gmra.mrb[0].mxu0 %v612
      %v719 = vpop.f32.mrb[0].mxu0
      %v720 = vadd.f32 %v477, %v719
      %v721 = vpop.f32.mrb[0].mxu0
      %v722 = vpop.f32.mrb[0].mxu0
      %v723 = vadd.f32 %v480, %v722
      %v724 = vpop.f32.mrb[0].mxu0
      %725 = vmatprep.mubr.bf16.mxu0 0
      %726 = vmatmul.mubr.bf16.gmra.mrb[0].mxu0 %v615
      %v727 = vpop.f32.mrb[0].mxu0
      %v728 = vadd.f32 %v485, %v727
      %v729 = vpop.f32.mrb[0].mxu0
      %v730 = vpop.f32.mrb[0].mxu0
      %v731 = vadd.f32 %v488, %v730
      %v732 = vpop.f32.mrb[0].mxu0
      %733 = vmatprep.mubr.bf16.mxu0 0
      %734 = vmatmul.mubr.bf16.gmra.mrb[0].mxu0 %v618
      %v735 = vpop.f32.mrb[0].mxu0
      %v736 = vadd.f32 %v493, %v735
      %v737 = vpop.f32.mrb[0].mxu0
      %v738 = vpop.f32.mrb[0].mxu0
      %v739 = vadd.f32 %v496, %v738
      %v740 = vpop.f32.mrb[0].mxu0
      %741 = vmatprep.mubr.bf16.mxu0 0
      %742 = vmatmul.mubr.bf16.gmra.mrb[0].mxu0 %v621
      %v743 = vpop.f32.mrb[0].mxu0
      %v744 = vadd.f32 %v501, %v743
      %v745 = vpop.f32.mrb[0].mxu0
      %v746 = vpop.f32.mrb[0].mxu0
      %v747 = vadd.f32 %v504, %v746
      %v748 = vpop.f32.mrb[0].mxu0
      %749 = vmatprep.mubr.bf16.mxu0 0
      %750 = vmatmul.mubr.bf16.gmra.mrb[0].mxu0 %v624
      %v751 = vpop.f32.mrb[0].mxu0
      %v752 = vadd.f32 %v509, %v751
      %v753 = vpop.f32.mrb[0].mxu0
      %v754 = vpop.f32.mrb[0].mxu0
      %v755 = vadd.f32 %v512, %v754
      %v756 = vpop.f32.mrb[0].mxu0
      %757 = vmatprep.mubr.bf16.mxu0 0
      %758 = vmatmul.mubr.bf16.gmra.mrb[0].mxu0 %v627
      %v759 = vpop.f32.mrb[0].mxu0
      %v760 = vadd.f32 %v517, %v759
      %v761 = vpop.f32.mrb[0].mxu0
      %v762 = vpop.f32.mrb[0].mxu0
      %v763 = vadd.f32 %v520, %v762
      %v764 = vpop.f32.mrb[0].mxu0
      %765 = vmatprep.mubr.bf16.mxu0 0
      %766 = vmatmul.mubr.bf16.gmra.mrb[0].mxu0 %v630
      %v767 = vpop.f32.mrb[0].mxu0
      %v768 = vadd.f32 %v525, %v767
      %v769 = vpop.f32.mrb[0].mxu0
      %v770 = vpop.f32.mrb[0].mxu0
      %v771 = vadd.f32 %v528, %v770
      %v772 = vpop.f32.mrb[0].mxu0
      %773 = vmatprep.mubr.bf16.mxu0 0
      %774 = vmatmul.mubr.bf16.gmra.mrb[0].mxu0 %v633
      %v775 = vpop.f32.mrb[0].mxu0
      %v776 = vadd.f32 %v533, %v775
      %v777 = vpop.f32.mrb[0].mxu0
      %v778 = vpop.f32.mrb[0].mxu0
      %v779 = vadd.f32 %v536, %v778
      %v780 = vpop.f32.mrb[0].mxu0
      %781 = vmatprep.mubr.bf16.mxu0 0
      %782 = vmatmul.mubr.bf16.gmra.mrb[0].mxu0 %v636
      %v783 = vpop.f32.mrb[0].mxu0
      %v784 = vadd.f32 %v541, %v783
      %v785 = vpop.f32.mrb[0].mxu0
      %v786 = vpop.f32.mrb[0].mxu0
      %v787 = vadd.f32 %v544, %v786
      %v788 = vpop.f32.mrb[0].mxu0
      %789 = vmatprep.mubr.bf16.mxu0 0
      %790 = vmatmul.mubr.bf16.gmra.mrb[0].mxu0 %v639
      %v791 = vpop.f32.mrb[0].mxu0
      %v792 = vadd.f32 %v549, %v791
      %v793 = vpop.f32.mrb[0].mxu0
      %v794 = vpop.f32.mrb[0].mxu0
      %v795 = vadd.f32 %v552, %v794
      %v796 = vpop.f32.mrb[0].mxu0
      %797 = vmatprep.mubr.bf16.mxu0 0
      %798 = vmatmul.mubr.bf16.gmra.mrb[0].mxu0 %v642
      %v799 = vpop.f32.mrb[0].mxu0
      %v800 = vadd.f32 %v557, %v799
      %v801 = vpop.f32.mrb[0].mxu0
      %v802 = vpop.f32.mrb[0].mxu0
      %v803 = vadd.f32 %v560, %v802
      %v804 = vpop.f32.mrb[0].mxu0
      %805 = vmatprep.mubr.bf16.mxu0 0
      %806 = vmatmul.mubr.bf16.gmra.mrb[0].mxu0 %v645
      %v807 = vpop.f32.mrb[0].mxu0
      %v808 = vadd.f32 %v565, %v807
      %v809 = vpop.f32.mrb[0].mxu0
      %v810 = vpop.f32.mrb[0].mxu0
      %v811 = vadd.f32 %v568, %v810
      %v812 = vpop.f32.mrb[0].mxu0
      %813 = vmatprep.mubr.bf16.mxu0 0
      %814 = vmatmul.mubr.bf16.gmra.mrb[0].mxu0 %v648
      %v815 = vpop.f32.mrb[0].mxu0
      %v816 = vadd.f32 %v573, %v815
      %v817 = vpop.f32.mrb[0].mxu0
      %v818 = vpop.f32.mrb[0].mxu0
      %v819 = vadd.f32 %v576, %v818
      %v820 = vpop.f32.mrb[0].mxu0
      %821 = vmatprep.mubr.bf16.mxu0 0
      %822 = vmatmul.mubr.bf16.gmra.mrb[0].mxu0 %v651
      %v823 = vpop.f32.mrb[0].mxu0
      %v824 = vadd.f32 %v581, %v823
      %v825 = vpop.f32.mrb[0].mxu0
      %v826 = vpop.f32.mrb[0].mxu0
      %v827 = vadd.f32 %v584, %v826
      %v828 = vpop.f32.mrb[0].mxu0
      %829 = vdwg.mxu0
      %v830 = vld [vmem:[%s219 + $0x2] sm:$0xff]
      %v831 = vld [vmem:[%s219 + $0xa] sm:$0xff]
      %v832 = vld [vmem:[%s219 + $0x12] sm:$0xff]
      %v833 = vld [vmem:[%s219 + $0x1a] sm:$0xff]
      %v834 = vld [vmem:[%s219 + $0x22] sm:$0xff]
      %v835 = vld [vmem:[%s219 + $0x2a] sm:$0xff]
      %v836 = vld [vmem:[%s219 + $0x32] sm:$0xff]
      %v837 = vld [vmem:[%s219 + $0x3a] sm:$0xff]
      %v838 = vld [vmem:[%s219 + $0x42] sm:$0xff]
      %v839 = vld [vmem:[%s219 + $0x4a] sm:$0xff]
      %v840 = vld [vmem:[%s219 + $0x52] sm:$0xff]
      %v841 = vld [vmem:[%s219 + $0x5a] sm:$0xff]
      %v842 = vld [vmem:[%s219 + $0x62] sm:$0xff]
      %v843 = vld [vmem:[%s219 + $0x6a] sm:$0xff]
      %v844 = vld [vmem:[%s219 + $0x72] sm:$0xff]
      %v845 = vld [vmem:[%s219 + $0x7a] sm:$0xff]
      %v846 = vld [vmem:[%s219 + $0x82] sm:$0xff]
      %v847 = vld [vmem:[%s219 + $0x8a] sm:$0xff]
      %v848 = vld [vmem:[%s219 + $0x92] sm:$0xff]
      %v849 = vld [vmem:[%s219 + $0x9a] sm:$0xff]
      %v850 = vld [vmem:[%s219 + $0xa2] sm:$0xff]
      %v851 = vld [vmem:[%s219 + $0xaa] sm:$0xff]
      %v852 = vld [vmem:[%s219 + $0xb2] sm:$0xff]
      %v853 = vld [vmem:[%s219 + $0xba] sm:$0xff]
      %v854 = vld [vmem:[%s219 + $0xc2] sm:$0xff]
      %v855 = vld [vmem:[%s219 + $0xca] sm:$0xff]
      %v856 = vld [vmem:[%s219 + $0xd2] sm:$0xff]
      %v857 = vld [vmem:[%s219 + $0xda] sm:$0xff]
      %v858 = vld [vmem:[%s219 + $0xe2] sm:$0xff]
      %v859 = vld [vmem:[%s219 + $0xea] sm:$0xff]
      %v860 = vld [vmem:[%s219 + $0xf2] sm:$0xff]
      %v861 = vld [vmem:[%s219 + $0xfa] sm:$0xff]
      %v862 = vld [vmem:[%s219 + $0x102] sm:$0xff]
      %v863 = vld [vmem:[%s219 + $0x10a] sm:$0xff]
      %v864 = vld [vmem:[%s219 + $0x112] sm:$0xff]
      %v865 = vld [vmem:[%s219 + $0x11a] sm:$0xff]
      %v866 = vpack.c.bf16 %v831, %v830
      %v867 = vpack.c.bf16 %v833, %v832
      %v868 = vpack.c.bf16 %v835, %v834
      %v869 = vpack.c.bf16 %v837, %v836
      %v870 = vpack.c.bf16 %v839, %v838
      %v871 = vpack.c.bf16 %v841, %v840
      %v872 = vpack.c.bf16 %v843, %v842
      %v873 = vpack.c.bf16 %v845, %v844
      %v874 = vpack.c.bf16 %v847, %v846
      %v875 = vpack.c.bf16 %v849, %v848
      %v876 = vpack.c.bf16 %v851, %v850
      %v877 = vpack.c.bf16 %v853, %v852
      %v878 = vpack.c.bf16 %v855, %v854
      %v879 = vpack.c.bf16 %v857, %v856
      %v880 = vpack.c.bf16 %v859, %v858
      %v881 = vpack.c.bf16 %v861, %v860
      %v882 = vpack.c.bf16 %v863, %v862
      %v883 = vpack.c.bf16 %v865, %v864
      %s884 = scalar_lea.vmem %s1, 32
      %v885 = vld [vmem:[%s884] sm:$0xf]
      %v886 = vld [vmem:[%s884 + $0x4] sm:$0xf]
      %v887 = vld [vmem:[%s884 + $0x8] sm:$0xf]
      %v888 = vld [vmem:[%s884 + $0xc] sm:$0xf]
      %v893 = vunpack.c.l.b16 %v885
      %v894 = vunpack.c.l.b16 %v886
      %v895 = vunpack.c.l.b16 %v887
      %v896 = vunpack.c.l.b16 %v888
      %v897 = vpack.c.b16 %v894, %v893
      %v898 = vpack.c.b16 %v896, %v895
      %v902 = vsel %vm355, %v866, 0
      %v905 = vsel %vm355, %v867, 0
      %v908 = vsel %vm355, %v868, 0
      %v911 = vsel %vm355, %v869, 0
      %v914 = vsel %vm355, %v870, 0
      %v917 = vsel %vm355, %v871, 0
      %v920 = vsel %vm355, %v872, 0
      %v923 = vsel %vm355, %v873, 0
      %v926 = vsel %vm355, %v874, 0
      %v929 = vsel %vm355, %v875, 0
      %v932 = vsel %vm355, %v876, 0
      %v935 = vsel %vm355, %v877, 0
      %v938 = vsel %vm355, %v878, 0
      %v941 = vsel %vm355, %v879, 0
      %v944 = vsel %vm355, %v880, 0
      %v947 = vsel %vm355, %v881, 0
      %v950 = vsel %vm355, %v882, 0
      %v953 = vsel %vm355, %v883, 0
      %955 = vmatprep.subr.bf16.mxu0 0
      %956 = vmatpush1.bf16.msra.mxu0 %v897
      %957 = vmatprep.subr.bf16.mxu0 0
      %958 = vmatpush1.bf16.msra.mxu0 %v898
      %959 = vmatprep.subr.bf16.mxu0 0
      %960 = vmatpush1.bf16.msra.mxu0 0
      %961 = vmatprep.subr.bf16.mxu0 0
      %962 = vmatpush1.bf16.msra.mxu0 0
      %963 = vmatprep.subr.bf16.mxu0 0
      %964 = vmatpush1.bf16.msra.mxu0 0
      %965 = vmatprep.subr.bf16.mxu0 0
      %966 = vmatpush1.bf16.msra.mxu0 0
      %967 = vmatprep.subr.bf16.mxu0 0
      %968 = vmatpush1.bf16.msra.mxu0 0
      %969 = vmatprep.subr.bf16.mxu0 0
      %970 = vmatpush1.bf16.msra.mxu0 0
      %971 = vmatprep.subr.bf16.mxu0 0
      %972 = vmatpush1.bf16.msra.mxu0 0
      %973 = vmatprep.subr.bf16.mxu0 0
      %974 = vmatpush1.bf16.msra.mxu0 0
      %975 = vmatprep.subr.bf16.mxu0 0
      %976 = vmatpush1.bf16.msra.mxu0 0
      %977 = vmatprep.subr.bf16.mxu0 0
      %978 = vmatpush1.bf16.msra.mxu0 0
      %979 = vmatprep.subr.bf16.mxu0 0
      %980 = vmatpush1.bf16.msra.mxu0 0
      %981 = vmatprep.subr.bf16.mxu0 0
      %982 = vmatpush1.bf16.msra.mxu0 0
      %983 = vmatprep.subr.bf16.mxu0 0
      %984 = vmatpush1.bf16.msra.mxu0 0
      %985 = vmatprep.subr.bf16.mxu0 0
      %986 = vmatpush1.bf16.msra.mxu0 0
      %987 = vmatprep.mubr.bf16.mxu0 0
      %988 = vmatmul.mubr.bf16.gmra.mrb[0].mxu0 %v902
      %v989 = vpop.f32.mrb[0].mxu0
      %v990 = vadd.f32 0.0, %v989
      %v991 = vpop.f32.mrb[0].mxu0
      %v992 = vpop.f32.mrb[0].mxu0
      %v993 = vadd.f32 0.0, %v992
      %v994 = vpop.f32.mrb[0].mxu0
      %995 = vmatprep.mubr.bf16.mxu0 0
      %996 = vmatmul.mubr.bf16.gmra.mrb[0].mxu0 %v905
      %v997 = vpop.f32.mrb[0].mxu0
      %v998 = vadd.f32 0.0, %v997
      %v999 = vpop.f32.mrb[0].mxu0
      %v1000 = vpop.f32.mrb[0].mxu0
      %v1001 = vadd.f32 0.0, %v1000
      %v1002 = vpop.f32.mrb[0].mxu0
      %1003 = vmatprep.mubr.bf16.mxu0 0
      %1004 = vmatmul.mubr.bf16.gmra.mrb[0].mxu0 %v908
      %v1005 = vpop.f32.mrb[0].mxu0
      %v1006 = vadd.f32 0.0, %v1005
      %v1007 = vpop.f32.mrb[0].mxu0
      %v1008 = vpop.f32.mrb[0].mxu0
      %v1009 = vadd.f32 0.0, %v1008
      %v1010 = vpop.f32.mrb[0].mxu0
      %1011 = vmatprep.mubr.bf16.mxu0 0
      %1012 = vmatmul.mubr.bf16.gmra.mrb[0].mxu0 %v911
      %v1013 = vpop.f32.mrb[0].mxu0
      %v1014 = vadd.f32 0.0, %v1013
      %v1015 = vpop.f32.mrb[0].mxu0
      %v1016 = vpop.f32.mrb[0].mxu0
      %v1017 = vadd.f32 0.0, %v1016
      %v1018 = vpop.f32.mrb[0].mxu0
      %1019 = vmatprep.mubr.bf16.mxu0 0
      %1020 = vmatmul.mubr.bf16.gmra.mrb[0].mxu0 %v914
      %v1021 = vpop.f32.mrb[0].mxu0
      %v1022 = vadd.f32 0.0, %v1021
      %v1023 = vpop.f32.mrb[0].mxu0
      %v1024 = vpop.f32.mrb[0].mxu0
      %v1025 = vadd.f32 0.0, %v1024
      %v1026 = vpop.f32.mrb[0].mxu0
      %1027 = vmatprep.mubr.bf16.mxu0 0
      %1028 = vmatmul.mubr.bf16.gmra.mrb[0].mxu0 %v917
      %v1029 = vpop.f32.mrb[0].mxu0
      %v1030 = vadd.f32 0.0, %v1029
      %v1031 = vpop.f32.mrb[0].mxu0
      %v1032 = vpop.f32.mrb[0].mxu0
      %v1033 = vadd.f32 0.0, %v1032
      %v1034 = vpop.f32.mrb[0].mxu0
      %1035 = vmatprep.mubr.bf16.mxu0 0
      %1036 = vmatmul.mubr.bf16.gmra.mrb[0].mxu0 %v920
      %v1037 = vpop.f32.mrb[0].mxu0
      %v1038 = vadd.f32 0.0, %v1037
      %v1039 = vpop.f32.mrb[0].mxu0
      %v1040 = vpop.f32.mrb[0].mxu0
      %v1041 = vadd.f32 0.0, %v1040
      %v1042 = vpop.f32.mrb[0].mxu0
      %1043 = vmatprep.mubr.bf16.mxu0 0
      %1044 = vmatmul.mubr.bf16.gmra.mrb[0].mxu0 %v923
      %v1045 = vpop.f32.mrb[0].mxu0
      %v1046 = vadd.f32 0.0, %v1045
      %v1047 = vpop.f32.mrb[0].mxu0
      %v1048 = vpop.f32.mrb[0].mxu0
      %v1049 = vadd.f32 0.0, %v1048
      %v1050 = vpop.f32.mrb[0].mxu0
      %1051 = vmatprep.mubr.bf16.mxu0 0
      %1052 = vmatmul.mubr.bf16.gmra.mrb[0].mxu0 %v926
      %v1053 = vpop.f32.mrb[0].mxu0
      %v1054 = vadd.f32 0.0, %v1053
      %v1055 = vpop.f32.mrb[0].mxu0
      %v1056 = vpop.f32.mrb[0].mxu0
      %v1057 = vadd.f32 0.0, %v1056
      %v1058 = vpop.f32.mrb[0].mxu0
      %1059 = vmatprep.mubr.bf16.mxu0 0
      %1060 = vmatmul.mubr.bf16.gmra.mrb[0].mxu0 %v929
      %v1061 = vpop.f32.mrb[0].mxu0
      %v1062 = vadd.f32 0.0, %v1061
      %v1063 = vpop.f32.mrb[0].mxu0
      %v1064 = vpop.f32.mrb[0].mxu0
      %v1065 = vadd.f32 0.0, %v1064
      %v1066 = vpop.f32.mrb[0].mxu0
      %1067 = vmatprep.mubr.bf16.mxu0 0
      %1068 = vmatmul.mubr.bf16.gmra.mrb[0].mxu0 %v932
      %v1069 = vpop.f32.mrb[0].mxu0
      %v1070 = vadd.f32 0.0, %v1069
      %v1071 = vpop.f32.mrb[0].mxu0
      %v1072 = vpop.f32.mrb[0].mxu0
      %v1073 = vadd.f32 0.0, %v1072
      %v1074 = vpop.f32.mrb[0].mxu0
      %1075 = vmatprep.mubr.bf16.mxu0 0
      %1076 = vmatmul.mubr.bf16.gmra.mrb[0].mxu0 %v935
      %v1077 = vpop.f32.mrb[0].mxu0
      %v1078 = vadd.f32 0.0, %v1077
      %v1079 = vpop.f32.mrb[0].mxu0
      %v1080 = vpop.f32.mrb[0].mxu0
      %v1081 = vadd.f32 0.0, %v1080
      %v1082 = vpop.f32.mrb[0].mxu0
      %1083 = vmatprep.mubr.bf16.mxu0 0
      %1084 = vmatmul.mubr.bf16.gmra.mrb[0].mxu0 %v938
      %v1085 = vpop.f32.mrb[0].mxu0
      %v1086 = vadd.f32 0.0, %v1085
      %v1087 = vpop.f32.mrb[0].mxu0
      %v1088 = vpop.f32.mrb[0].mxu0
      %v1089 = vadd.f32 0.0, %v1088
      %v1090 = vpop.f32.mrb[0].mxu0
      %1091 = vmatprep.mubr.bf16.mxu0 0
      %1092 = vmatmul.mubr.bf16.gmra.mrb[0].mxu0 %v941
      %v1093 = vpop.f32.mrb[0].mxu0
      %v1094 = vadd.f32 0.0, %v1093
      %v1095 = vpop.f32.mrb[0].mxu0
      %v1096 = vpop.f32.mrb[0].mxu0
      %v1097 = vadd.f32 0.0, %v1096
      %v1098 = vpop.f32.mrb[0].mxu0
      %1099 = vmatprep.mubr.bf16.mxu0 0
      %1100 = vmatmul.mubr.bf16.gmra.mrb[0].mxu0 %v944
      %v1101 = vpop.f32.mrb[0].mxu0
      %v1102 = vadd.f32 0.0, %v1101
      %v1103 = vpop.f32.mrb[0].mxu0
      %v1104 = vpop.f32.mrb[0].mxu0
      %v1105 = vadd.f32 0.0, %v1104
      %v1106 = vpop.f32.mrb[0].mxu0
      %1107 = vmatprep.mubr.bf16.mxu0 0
      %1108 = vmatmul.mubr.bf16.gmra.mrb[0].mxu0 %v947
      %v1109 = vpop.f32.mrb[0].mxu0
      %v1110 = vadd.f32 0.0, %v1109
      %v1111 = vpop.f32.mrb[0].mxu0
      %v1112 = vpop.f32.mrb[0].mxu0
      %v1113 = vadd.f32 0.0, %v1112
      %v1114 = vpop.f32.mrb[0].mxu0
      %1115 = vmatprep.mubr.bf16.mxu0 0
      %1116 = vmatmul.mubr.bf16.gmra.mrb[0].mxu0 %v950
      %v1117 = vpop.f32.mrb[0].mxu0
      %v1118 = vadd.f32 0.0, %v1117
      %v1119 = vpop.f32.mrb[0].mxu0
      %v1120 = vpop.f32.mrb[0].mxu0
      %v1121 = vadd.f32 0.0, %v1120
      %v1122 = vpop.f32.mrb[0].mxu0
      %1123 = vmatprep.mubr.bf16.mxu0 0
      %1124 = vmatmul.mubr.bf16.gmra.mrb[0].mxu0 %v953
      %v1125 = vpop.f32.mrb[0].mxu0
      %v1126 = vadd.f32 0.0, %v1125
      %v1127 = vpop.f32.mrb[0].mxu0
      %v1128 = vpop.f32.mrb[0].mxu0
      %v1129 = vadd.f32 0.0, %v1128
      %v1130 = vpop.f32.mrb[0].mxu0
      %1131 = vdwg.mxu0
      %v1132 = vadd.f32 %v688, %v990
      %v1133 = vadd.f32 %v691, %v993
      %v1134 = vadd.f32 %v696, %v998
      %v1135 = vadd.f32 %v699, %v1001
      %v1136 = vadd.f32 %v704, %v1006
      %v1137 = vadd.f32 %v707, %v1009
      %v1138 = vadd.f32 %v712, %v1014
      %v1139 = vadd.f32 %v715, %v1017
      %v1140 = vadd.f32 %v720, %v1022
      %v1141 = vadd.f32 %v723, %v1025
      %v1142 = vadd.f32 %v728, %v1030
      %v1143 = vadd.f32 %v731, %v1033
      %v1144 = vadd.f32 %v736, %v1038
      %v1145 = vadd.f32 %v739, %v1041
      %v1146 = vadd.f32 %v744, %v1046
      %v1147 = vadd.f32 %v747, %v1049
      %v1148 = vadd.f32 %v752, %v1054
      %v1149 = vadd.f32 %v755, %v1057
      %v1150 = vadd.f32 %v760, %v1062
      %v1151 = vadd.f32 %v763, %v1065
      %v1152 = vadd.f32 %v768, %v1070
      %v1153 = vadd.f32 %v771, %v1073
      %v1154 = vadd.f32 %v776, %v1078
      %v1155 = vadd.f32 %v779, %v1081
      %v1156 = vadd.f32 %v784, %v1086
      %v1157 = vadd.f32 %v787, %v1089
      %v1158 = vadd.f32 %v792, %v1094
      %v1159 = vadd.f32 %v795, %v1097
      %v1160 = vadd.f32 %v800, %v1102
      %v1161 = vadd.f32 %v803, %v1105
      %v1162 = vadd.f32 %v808, %v1110
      %v1163 = vadd.f32 %v811, %v1113
      %v1164 = vadd.f32 %v816, %v1118
      %v1165 = vadd.f32 %v819, %v1121
      %v1166 = vadd.f32 %v824, %v1126
      %v1167 = vadd.f32 %v827, %v1129
      %v1168 = vld [vmem:[%s219 + $0x12] sm:$0xff]
      %v1169 = vld [vmem:[%s219 + $0x1a] sm:$0xff]
      %v1170 = vld [vmem:[%s219 + $0x22] sm:$0xff]
      %v1171 = vld [vmem:[%s219 + $0x2a] sm:$0xff]
      %v1172 = vld [vmem:[%s219 + $0x32] sm:$0xff]
      %v1173 = vld [vmem:[%s219 + $0x3a] sm:$0xff]
      %v1174 = vld [vmem:[%s219 + $0x42] sm:$0xff]
      %v1175 = vld [vmem:[%s219 + $0x4a] sm:$0xff]
      %v1176 = vld [vmem:[%s219 + $0x52] sm:$0xff]
      %v1177 = vld [vmem:[%s219 + $0x5a] sm:$0xff]
      %v1178 = vld [vmem:[%s219 + $0x62] sm:$0xff]
      %v1179 = vld [vmem:[%s219 + $0x6a] sm:$0xff]
      %v1180 = vld [vmem:[%s219 + $0x72] sm:$0xff]
      %v1181 = vld [vmem:[%s219 + $0x7a] sm:$0xff]
      %v1182 = vld [vmem:[%s219 + $0x82] sm:$0xff]
      %v1183 = vld [vmem:[%s219 + $0x8a] sm:$0xff]
      %v1184 = vld [vmem:[%s219 + $0x92] sm:$0xff]
      %v1185 = vld [vmem:[%s219 + $0x9a] sm:$0xff]
      %v1186 = vld [vmem:[%s219 + $0xa2] sm:$0xff]
      %v1187 = vld [vmem:[%s219 + $0xaa] sm:$0xff]
      %v1188 = vld [vmem:[%s219 + $0xb2] sm:$0xff]
      %v1189 = vld [vmem:[%s219 + $0xba] sm:$0xff]
      %v1190 = vld [vmem:[%s219 + $0xc2] sm:$0xff]
      %v1191 = vld [vmem:[%s219 + $0xca] sm:$0xff]
      %v1192 = vld [vmem:[%s219 + $0xd2] sm:$0xff]
      %v1193 = vld [vmem:[%s219 + $0xda] sm:$0xff]
      %v1194 = vld [vmem:[%s219 + $0xe2] sm:$0xff]
      %v1195 = vld [vmem:[%s219 + $0xea] sm:$0xff]
      %v1196 = vld [vmem:[%s219 + $0xf2] sm:$0xff]
      %v1197 = vld [vmem:[%s219 + $0xfa] sm:$0xff]
      %v1198 = vld [vmem:[%s219 + $0x102] sm:$0xff]
      %v1199 = vld [vmem:[%s219 + $0x10a] sm:$0xff]
      %v1200 = vld [vmem:[%s219 + $0x112] sm:$0xff]
      %v1201 = vld [vmem:[%s219 + $0x11a] sm:$0xff]
      %v1202 = vld [vmem:[%s219 + $0x122] sm:$0xff]
      %v1203 = vld [vmem:[%s219 + $0x12a] sm:$0xff]
      %v1204 = vpack.c.bf16 %v1169, %v1168
      %v1205 = vpack.c.bf16 %v1171, %v1170
      %v1206 = vpack.c.bf16 %v1173, %v1172
      %v1207 = vpack.c.bf16 %v1175, %v1174
      %v1208 = vpack.c.bf16 %v1177, %v1176
      %v1209 = vpack.c.bf16 %v1179, %v1178
      %v1210 = vpack.c.bf16 %v1181, %v1180
      %v1211 = vpack.c.bf16 %v1183, %v1182
      %v1212 = vpack.c.bf16 %v1185, %v1184
      %v1213 = vpack.c.bf16 %v1187, %v1186
      %v1214 = vpack.c.bf16 %v1189, %v1188
      %v1215 = vpack.c.bf16 %v1191, %v1190
      %v1216 = vpack.c.bf16 %v1193, %v1192
      %v1217 = vpack.c.bf16 %v1195, %v1194
      %v1218 = vpack.c.bf16 %v1197, %v1196
      %v1219 = vpack.c.bf16 %v1199, %v1198
      %v1220 = vpack.c.bf16 %v1201, %v1200
      %v1221 = vpack.c.bf16 %v1203, %v1202
      %s1222 = scalar_lea.vmem %s1, 48
      %v1223 = vld [vmem:[%s1222] sm:$0xf]
      %v1224 = vld [vmem:[%s1222 + $0x4] sm:$0xf]
      %v1225 = vld [vmem:[%s1222 + $0x8] sm:$0xf]
      %v1226 = vld [vmem:[%s1222 + $0xc] sm:$0xf]
      %v1231 = vunpack.c.l.b16 %v1223
      %v1232 = vunpack.c.l.b16 %v1224
      %v1233 = vunpack.c.l.b16 %v1225
      %v1234 = vunpack.c.l.b16 %v1226
      %v1235 = vpack.c.b16 %v1232, %v1231
      %v1236 = vpack.c.b16 %v1234, %v1233
      %v1240 = vsel %vm355, %v1204, 0
      %v1243 = vsel %vm355, %v1205, 0
      %v1246 = vsel %vm355, %v1206, 0
      %v1249 = vsel %vm355, %v1207, 0
      %v1252 = vsel %vm355, %v1208, 0
      %v1255 = vsel %vm355, %v1209, 0
      %v1258 = vsel %vm355, %v1210, 0
      %v1261 = vsel %vm355, %v1211, 0
      %v1264 = vsel %vm355, %v1212, 0
      %v1267 = vsel %vm355, %v1213, 0
      %v1270 = vsel %vm355, %v1214, 0
      %v1273 = vsel %vm355, %v1215, 0
      %v1276 = vsel %vm355, %v1216, 0
      %v1279 = vsel %vm355, %v1217, 0
      %v1282 = vsel %vm355, %v1218, 0
      %v1285 = vsel %vm355, %v1219, 0
      %v1288 = vsel %vm355, %v1220, 0
      %v1291 = vsel %vm355, %v1221, 0
      %1293 = vmatprep.subr.bf16.mxu0 0
      %1294 = vmatpush1.bf16.msra.mxu0 %v1235
      %1295 = vmatprep.subr.bf16.mxu0 0
      %1296 = vmatpush1.bf16.msra.mxu0 %v1236
      %1297 = vmatprep.subr.bf16.mxu0 0
      %1298 = vmatpush1.bf16.msra.mxu0 0
      %1299 = vmatprep.subr.bf16.mxu0 0
      %1300 = vmatpush1.bf16.msra.mxu0 0
      %1301 = vmatprep.subr.bf16.mxu0 0
      %1302 = vmatpush1.bf16.msra.mxu0 0
      %1303 = vmatprep.subr.bf16.mxu0 0
      %1304 = vmatpush1.bf16.msra.mxu0 0
      %1305 = vmatprep.subr.bf16.mxu0 0
      %1306 = vmatpush1.bf16.msra.mxu0 0
      %1307 = vmatprep.subr.bf16.mxu0 0
      %1308 = vmatpush1.bf16.msra.mxu0 0
      %1309 = vmatprep.subr.bf16.mxu0 0
      %1310 = vmatpush1.bf16.msra.mxu0 0
      %1311 = vmatprep.subr.bf16.mxu0 0
      %1312 = vmatpush1.bf16.msra.mxu0 0
      %1313 = vmatprep.subr.bf16.mxu0 0
      %1314 = vmatpush1.bf16.msra.mxu0 0
      %1315 = vmatprep.subr.bf16.mxu0 0
      %1316 = vmatpush1.bf16.msra.mxu0 0
      %1317 = vmatprep.subr.bf16.mxu0 0
      %1318 = vmatpush1.bf16.msra.mxu0 0
      %1319 = vmatprep.subr.bf16.mxu0 0
      %1320 = vmatpush1.bf16.msra.mxu0 0
      %1321 = vmatprep.subr.bf16.mxu0 0
      %1322 = vmatpush1.bf16.msra.mxu0 0
      %1323 = vmatprep.subr.bf16.mxu0 0
      %1324 = vmatpush1.bf16.msra.mxu0 0
      %1325 = vmatprep.mubr.bf16.mxu0 0
      %1326 = vmatmul.mubr.bf16.gmra.mrb[0].mxu0 %v1240
      %v1327 = vpop.f32.mrb[0].mxu0
      %v1328 = vadd.f32 0.0, %v1327
      %v1329 = vpop.f32.mrb[0].mxu0
      %v1330 = vpop.f32.mrb[0].mxu0
      %v1331 = vadd.f32 0.0, %v1330
      %v1332 = vpop.f32.mrb[0].mxu0
      %1333 = vmatprep.mubr.bf16.mxu0 0
      %1334 = vmatmul.mubr.bf16.gmra.mrb[0].mxu0 %v1243
      %v1335 = vpop.f32.mrb[0].mxu0
      %v1336 = vadd.f32 0.0, %v1335
      %v1337 = vpop.f32.mrb[0].mxu0
      %v1338 = vpop.f32.mrb[0].mxu0
      %v1339 = vadd.f32 0.0, %v1338
      %v1340 = vpop.f32.mrb[0].mxu0
      %1341 = vmatprep.mubr.bf16.mxu0 0
      %1342 = vmatmul.mubr.bf16.gmra.mrb[0].mxu0 %v1246
      %v1343 = vpop.f32.mrb[0].mxu0
      %v1344 = vadd.f32 0.0, %v1343
      %v1345 = vpop.f32.mrb[0].mxu0
      %v1346 = vpop.f32.mrb[0].mxu0
      %v1347 = vadd.f32 0.0, %v1346
      %v1348 = vpop.f32.mrb[0].mxu0
      %1349 = vmatprep.mubr.bf16.mxu0 0
      %1350 = vmatmul.mubr.bf16.gmra.mrb[0].mxu0 %v1249
      %v1351 = vpop.f32.mrb[0].mxu0
      %v1352 = vadd.f32 0.0, %v1351
      %v1353 = vpop.f32.mrb[0].mxu0
      %v1354 = vpop.f32.mrb[0].mxu0
      %v1355 = vadd.f32 0.0, %v1354
      %v1356 = vpop.f32.mrb[0].mxu0
      %1357 = vmatprep.mubr.bf16.mxu0 0
      %1358 = vmatmul.mubr.bf16.gmra.mrb[0].mxu0 %v1252
      %v1359 = vpop.f32.mrb[0].mxu0
      %v1360 = vadd.f32 0.0, %v1359
      %v1361 = vpop.f32.mrb[0].mxu0
      %v1362 = vpop.f32.mrb[0].mxu0
      %v1363 = vadd.f32 0.0, %v1362
      %v1364 = vpop.f32.mrb[0].mxu0
      %1365 = vmatprep.mubr.bf16.mxu0 0
      %1366 = vmatmul.mubr.bf16.gmra.mrb[0].mxu0 %v1255
      %v1367 = vpop.f32.mrb[0].mxu0
      %v1368 = vadd.f32 0.0, %v1367
      %v1369 = vpop.f32.mrb[0].mxu0
      %v1370 = vpop.f32.mrb[0].mxu0
      %v1371 = vadd.f32 0.0, %v1370
      %v1372 = vpop.f32.mrb[0].mxu0
      %1373 = vmatprep.mubr.bf16.mxu0 0
      %1374 = vmatmul.mubr.bf16.gmra.mrb[0].mxu0 %v1258
      %v1375 = vpop.f32.mrb[0].mxu0
      %v1376 = vadd.f32 0.0, %v1375
      %v1377 = vpop.f32.mrb[0].mxu0
      %v1378 = vpop.f32.mrb[0].mxu0
      %v1379 = vadd.f32 0.0, %v1378
      %v1380 = vpop.f32.mrb[0].mxu0
      %1381 = vmatprep.mubr.bf16.mxu0 0
      %1382 = vmatmul.mubr.bf16.gmra.mrb[0].mxu0 %v1261
      %v1383 = vpop.f32.mrb[0].mxu0
      %v1384 = vadd.f32 0.0, %v1383
      %v1385 = vpop.f32.mrb[0].mxu0
      %v1386 = vpop.f32.mrb[0].mxu0
      %v1387 = vadd.f32 0.0, %v1386
      %v1388 = vpop.f32.mrb[0].mxu0
      %1389 = vmatprep.mubr.bf16.mxu0 0
      %1390 = vmatmul.mubr.bf16.gmra.mrb[0].mxu0 %v1264
      %v1391 = vpop.f32.mrb[0].mxu0
      %v1392 = vadd.f32 0.0, %v1391
      %v1393 = vpop.f32.mrb[0].mxu0
      %v1394 = vpop.f32.mrb[0].mxu0
      %v1395 = vadd.f32 0.0, %v1394
      %v1396 = vpop.f32.mrb[0].mxu0
      %1397 = vmatprep.mubr.bf16.mxu0 0
      %1398 = vmatmul.mubr.bf16.gmra.mrb[0].mxu0 %v1267
      %v1399 = vpop.f32.mrb[0].mxu0
      %v1400 = vadd.f32 0.0, %v1399
      %v1401 = vpop.f32.mrb[0].mxu0
      %v1402 = vpop.f32.mrb[0].mxu0
      %v1403 = vadd.f32 0.0, %v1402
      %v1404 = vpop.f32.mrb[0].mxu0
      %1405 = vmatprep.mubr.bf16.mxu0 0
      %1406 = vmatmul.mubr.bf16.gmra.mrb[0].mxu0 %v1270
      %v1407 = vpop.f32.mrb[0].mxu0
      %v1408 = vadd.f32 0.0, %v1407
      %v1409 = vpop.f32.mrb[0].mxu0
      %v1410 = vpop.f32.mrb[0].mxu0
      %v1411 = vadd.f32 0.0, %v1410
      %v1412 = vpop.f32.mrb[0].mxu0
      %1413 = vmatprep.mubr.bf16.mxu0 0
      %1414 = vmatmul.mubr.bf16.gmra.mrb[0].mxu0 %v1273
      %v1415 = vpop.f32.mrb[0].mxu0
      %v1416 = vadd.f32 0.0, %v1415
      %v1417 = vpop.f32.mrb[0].mxu0
      %v1418 = vpop.f32.mrb[0].mxu0
      %v1419 = vadd.f32 0.0, %v1418
      %v1420 = vpop.f32.mrb[0].mxu0
      %1421 = vmatprep.mubr.bf16.mxu0 0
      %1422 = vmatmul.mubr.bf16.gmra.mrb[0].mxu0 %v1276
      %v1423 = vpop.f32.mrb[0].mxu0
      %v1424 = vadd.f32 0.0, %v1423
      %v1425 = vpop.f32.mrb[0].mxu0
      %v1426 = vpop.f32.mrb[0].mxu0
      %v1427 = vadd.f32 0.0, %v1426
      %v1428 = vpop.f32.mrb[0].mxu0
      %1429 = vmatprep.mubr.bf16.mxu0 0
      %1430 = vmatmul.mubr.bf16.gmra.mrb[0].mxu0 %v1279
      %v1431 = vpop.f32.mrb[0].mxu0
      %v1432 = vadd.f32 0.0, %v1431
      %v1433 = vpop.f32.mrb[0].mxu0
      %v1434 = vpop.f32.mrb[0].mxu0
      %v1435 = vadd.f32 0.0, %v1434
      %v1436 = vpop.f32.mrb[0].mxu0
      %1437 = vmatprep.mubr.bf16.mxu0 0
      %1438 = vmatmul.mubr.bf16.gmra.mrb[0].mxu0 %v1282
      %v1439 = vpop.f32.mrb[0].mxu0
      %v1440 = vadd.f32 0.0, %v1439
      %v1441 = vpop.f32.mrb[0].mxu0
      %v1442 = vpop.f32.mrb[0].mxu0
      %v1443 = vadd.f32 0.0, %v1442
      %v1444 = vpop.f32.mrb[0].mxu0
      %1445 = vmatprep.mubr.bf16.mxu0 0
      %1446 = vmatmul.mubr.bf16.gmra.mrb[0].mxu0 %v1285
      %v1447 = vpop.f32.mrb[0].mxu0
      %v1448 = vadd.f32 0.0, %v1447
      %v1449 = vpop.f32.mrb[0].mxu0
      %v1450 = vpop.f32.mrb[0].mxu0
      %v1451 = vadd.f32 0.0, %v1450
      %v1452 = vpop.f32.mrb[0].mxu0
      %1453 = vmatprep.mubr.bf16.mxu0 0
      %1454 = vmatmul.mubr.bf16.gmra.mrb[0].mxu0 %v1288
      %v1455 = vpop.f32.mrb[0].mxu0
      %v1456 = vadd.f32 0.0, %v1455
      %v1457 = vpop.f32.mrb[0].mxu0
      %v1458 = vpop.f32.mrb[0].mxu0
      %v1459 = vadd.f32 0.0, %v1458
      %v1460 = vpop.f32.mrb[0].mxu0
      %1461 = vmatprep.mubr.bf16.mxu0 0
      %1462 = vmatmul.mubr.bf16.gmra.mrb[0].mxu0 %v1291
      %v1463 = vpop.f32.mrb[0].mxu0
      %v1464 = vadd.f32 0.0, %v1463
      %v1465 = vpop.f32.mrb[0].mxu0
      %v1466 = vpop.f32.mrb[0].mxu0
      %v1467 = vadd.f32 0.0, %v1466
      %v1468 = vpop.f32.mrb[0].mxu0
      %1469 = vdwg.mxu0
      %v1470 = vadd.f32 %v1132, %v1328
      %v1471 = vadd.f32 %v1133, %v1331
      %v1472 = vadd.f32 %v1134, %v1336
      %v1473 = vadd.f32 %v1135, %v1339
      %v1474 = vadd.f32 %v1136, %v1344
      %v1475 = vadd.f32 %v1137, %v1347
      %v1476 = vadd.f32 %v1138, %v1352
      %v1477 = vadd.f32 %v1139, %v1355
      %v1478 = vadd.f32 %v1140, %v1360
      %v1479 = vadd.f32 %v1141, %v1363
      %v1480 = vadd.f32 %v1142, %v1368
      %v1481 = vadd.f32 %v1143, %v1371
      %v1482 = vadd.f32 %v1144, %v1376
      %v1483 = vadd.f32 %v1145, %v1379
      %v1484 = vadd.f32 %v1146, %v1384
      %v1485 = vadd.f32 %v1147, %v1387
      %v1486 = vadd.f32 %v1148, %v1392
      %v1487 = vadd.f32 %v1149, %v1395
      %v1488 = vadd.f32 %v1150, %v1400
      %v1489 = vadd.f32 %v1151, %v1403
      %v1490 = vadd.f32 %v1152, %v1408
      %v1491 = vadd.f32 %v1153, %v1411
      %v1492 = vadd.f32 %v1154, %v1416
      %v1493 = vadd.f32 %v1155, %v1419
      %v1494 = vadd.f32 %v1156, %v1424
      %v1495 = vadd.f32 %v1157, %v1427
      %v1496 = vadd.f32 %v1158, %v1432
      %v1497 = vadd.f32 %v1159, %v1435
      %v1498 = vadd.f32 %v1160, %v1440
      %v1499 = vadd.f32 %v1161, %v1443
      %v1500 = vadd.f32 %v1162, %v1448
      %v1501 = vadd.f32 %v1163, %v1451
      %v1502 = vadd.f32 %v1164, %v1456
      %v1503 = vadd.f32 %v1165, %v1459
      %v1504 = vadd.f32 %v1166, %v1464
      %v1505 = vadd.f32 %v1167, %v1467
      %v1506 = vld [vmem:[%s219 + $0x13] sm:$0xff]
      %v1507 = vld [vmem:[%s219 + $0x1b] sm:$0xff]
      %v1508 = vld [vmem:[%s219 + $0x23] sm:$0xff]
      %v1509 = vld [vmem:[%s219 + $0x2b] sm:$0xff]
      %v1510 = vld [vmem:[%s219 + $0x33] sm:$0xff]
      %v1511 = vld [vmem:[%s219 + $0x3b] sm:$0xff]
      %v1512 = vld [vmem:[%s219 + $0x43] sm:$0xff]
      %v1513 = vld [vmem:[%s219 + $0x4b] sm:$0xff]
      %v1514 = vld [vmem:[%s219 + $0x53] sm:$0xff]
      %v1515 = vld [vmem:[%s219 + $0x5b] sm:$0xff]
      %v1516 = vld [vmem:[%s219 + $0x63] sm:$0xff]
      %v1517 = vld [vmem:[%s219 + $0x6b] sm:$0xff]
      %v1518 = vld [vmem:[%s219 + $0x73] sm:$0xff]
      %v1519 = vld [vmem:[%s219 + $0x7b] sm:$0xff]
      %v1520 = vld [vmem:[%s219 + $0x83] sm:$0xff]
      %v1521 = vld [vmem:[%s219 + $0x8b] sm:$0xff]
      %v1522 = vld [vmem:[%s219 + $0x93] sm:$0xff]
      %v1523 = vld [vmem:[%s219 + $0x9b] sm:$0xff]
      %v1524 = vld [vmem:[%s219 + $0xa3] sm:$0xff]
      %v1525 = vld [vmem:[%s219 + $0xab] sm:$0xff]
      %v1526 = vld [vmem:[%s219 + $0xb3] sm:$0xff]
      %v1527 = vld [vmem:[%s219 + $0xbb] sm:$0xff]
      %v1528 = vld [vmem:[%s219 + $0xc3] sm:$0xff]
      %v1529 = vld [vmem:[%s219 + $0xcb] sm:$0xff]
      %v1530 = vld [vmem:[%s219 + $0xd3] sm:$0xff]
      %v1531 = vld [vmem:[%s219 + $0xdb] sm:$0xff]
      %v1532 = vld [vmem:[%s219 + $0xe3] sm:$0xff]
      %v1533 = vld [vmem:[%s219 + $0xeb] sm:$0xff]
      %v1534 = vld [vmem:[%s219 + $0xf3] sm:$0xff]
      %v1535 = vld [vmem:[%s219 + $0xfb] sm:$0xff]
      %v1536 = vld [vmem:[%s219 + $0x103] sm:$0xff]
      %v1537 = vld [vmem:[%s219 + $0x10b] sm:$0xff]
      %v1538 = vld [vmem:[%s219 + $0x113] sm:$0xff]
      %v1539 = vld [vmem:[%s219 + $0x11b] sm:$0xff]
      %v1540 = vld [vmem:[%s219 + $0x123] sm:$0xff]
      %v1541 = vld [vmem:[%s219 + $0x12b] sm:$0xff]
      %v1542 = vpack.c.bf16 %v1507, %v1506
      %v1543 = vpack.c.bf16 %v1509, %v1508
      %v1544 = vpack.c.bf16 %v1511, %v1510
      %v1545 = vpack.c.bf16 %v1513, %v1512
      %v1546 = vpack.c.bf16 %v1515, %v1514
      %v1547 = vpack.c.bf16 %v1517, %v1516
      %v1548 = vpack.c.bf16 %v1519, %v1518
      %v1549 = vpack.c.bf16 %v1521, %v1520
      %v1550 = vpack.c.bf16 %v1523, %v1522
      %v1551 = vpack.c.bf16 %v1525, %v1524
      %v1552 = vpack.c.bf16 %v1527, %v1526
      %v1553 = vpack.c.bf16 %v1529, %v1528
      %v1554 = vpack.c.bf16 %v1531, %v1530
      %v1555 = vpack.c.bf16 %v1533, %v1532
      %v1556 = vpack.c.bf16 %v1535, %v1534
      %v1557 = vpack.c.bf16 %v1537, %v1536
      %v1558 = vpack.c.bf16 %v1539, %v1538
      %v1559 = vpack.c.bf16 %v1541, %v1540
      %s1560 = scalar_lea.vmem %s1, 64
      %v1561 = vld [vmem:[%s1560] sm:$0xf]
      %v1562 = vld [vmem:[%s1560 + $0x4] sm:$0xf]
      %v1563 = vld [vmem:[%s1560 + $0x8] sm:$0xf]
      %v1564 = vld [vmem:[%s1560 + $0xc] sm:$0xf]
      %v1569 = vunpack.c.l.b16 %v1561
      %v1570 = vunpack.c.l.b16 %v1562
      %v1571 = vunpack.c.l.b16 %v1563
      %v1572 = vunpack.c.l.b16 %v1564
      %v1573 = vpack.c.b16 %v1570, %v1569
      %v1574 = vpack.c.b16 %v1572, %v1571
      %v1578 = vsel %vm355, %v1542, 0
      %v1581 = vsel %vm355, %v1543, 0
      %v1584 = vsel %vm355, %v1544, 0
      %v1587 = vsel %vm355, %v1545, 0
      %v1590 = vsel %vm355, %v1546, 0
      %v1593 = vsel %vm355, %v1547, 0
      %v1596 = vsel %vm355, %v1548, 0
      %v1599 = vsel %vm355, %v1549, 0
      %v1602 = vsel %vm355, %v1550, 0
      %v1605 = vsel %vm355, %v1551, 0
      %v1608 = vsel %vm355, %v1552, 0
      %v1611 = vsel %vm355, %v1553, 0
      %v1614 = vsel %vm355, %v1554, 0
      %v1617 = vsel %vm355, %v1555, 0
      %v1620 = vsel %vm355, %v1556, 0
      %v1623 = vsel %vm355, %v1557, 0
      %v1626 = vsel %vm355, %v1558, 0
      %v1629 = vsel %vm355, %v1559, 0
      %1631 = vmatprep.subr.bf16.mxu0 0
      %1632 = vmatpush1.bf16.msra.mxu0 %v1573
      %1633 = vmatprep.subr.bf16.mxu0 0
      %1634 = vmatpush1.bf16.msra.mxu0 %v1574
      %1635 = vmatprep.subr.bf16.mxu0 0
      %1636 = vmatpush1.bf16.msra.mxu0 0
      %1637 = vmatprep.subr.bf16.mxu0 0
      %1638 = vmatpush1.bf16.msra.mxu0 0
      %1639 = vmatprep.subr.bf16.mxu0 0
      %1640 = vmatpush1.bf16.msra.mxu0 0
      %1641 = vmatprep.subr.bf16.mxu0 0
      %1642 = vmatpush1.bf16.msra.mxu0 0
      %1643 = vmatprep.subr.bf16.mxu0 0
      %1644 = vmatpush1.bf16.msra.mxu0 0
      %1645 = vmatprep.subr.bf16.mxu0 0
      %1646 = vmatpush1.bf16.msra.mxu0 0
      %1647 = vmatprep.subr.bf16.mxu0 0
      %1648 = vmatpush1.bf16.msra.mxu0 0
      %1649 = vmatprep.subr.bf16.mxu0 0
      %1650 = vmatpush1.bf16.msra.mxu0 0
      %1651 = vmatprep.subr.bf16.mxu0 0
      %1652 = vmatpush1.bf16.msra.mxu0 0
      %1653 = vmatprep.subr.bf16.mxu0 0
      %1654 = vmatpush1.bf16.msra.mxu0 0
      %1655 = vmatprep.subr.bf16.mxu0 0
      %1656 = vmatpush1.bf16.msra.mxu0 0
      %1657 = vmatprep.subr.bf16.mxu0 0
      %1658 = vmatpush1.bf16.msra.mxu0 0
      %1659 = vmatprep.subr.bf16.mxu0 0
      %1660 = vmatpush1.bf16.msra.mxu0 0
      %1661 = vmatprep.subr.bf16.mxu0 0
      %1662 = vmatpush1.bf16.msra.mxu0 0
      %1663 = vmatprep.mubr.bf16.mxu0 0
      %1664 = vmatmul.mubr.bf16.gmra.mrb[0].mxu0 %v1578
      %v1665 = vpop.f32.mrb[0].mxu0
      %v1666 = vadd.f32 0.0, %v1665
      %v1667 = vpop.f32.mrb[0].mxu0
      %v1668 = vpop.f32.mrb[0].mxu0
      %v1669 = vadd.f32 0.0, %v1668
      %v1670 = vpop.f32.mrb[0].mxu0
      %1671 = vmatprep.mubr.bf16.mxu0 0
      %1672 = vmatmul.mubr.bf16.gmra.mrb[0].mxu0 %v1581
      %v1673 = vpop.f32.mrb[0].mxu0
      %v1674 = vadd.f32 0.0, %v1673
      %v1675 = vpop.f32.mrb[0].mxu0
      %v1676 = vpop.f32.mrb[0].mxu0
      %v1677 = vadd.f32 0.0, %v1676
      %v1678 = vpop.f32.mrb[0].mxu0
      %1679 = vmatprep.mubr.bf16.mxu0 0
      %1680 = vmatmul.mubr.bf16.gmra.mrb[0].mxu0 %v1584
      %v1681 = vpop.f32.mrb[0].mxu0
      %v1682 = vadd.f32 0.0, %v1681
      %v1683 = vpop.f32.mrb[0].mxu0
      %v1684 = vpop.f32.mrb[0].mxu0
      %v1685 = vadd.f32 0.0, %v1684
      %v1686 = vpop.f32.mrb[0].mxu0
      %1687 = vmatprep.mubr.bf16.mxu0 0
      %1688 = vmatmul.mubr.bf16.gmra.mrb[0].mxu0 %v1587
      %v1689 = vpop.f32.mrb[0].mxu0
      %v1690 = vadd.f32 0.0, %v1689
      %v1691 = vpop.f32.mrb[0].mxu0
      %v1692 = vpop.f32.mrb[0].mxu0
      %v1693 = vadd.f32 0.0, %v1692
      %v1694 = vpop.f32.mrb[0].mxu0
      %1695 = vmatprep.mubr.bf16.mxu0 0
      %1696 = vmatmul.mubr.bf16.gmra.mrb[0].mxu0 %v1590
      %v1697 = vpop.f32.mrb[0].mxu0
      %v1698 = vadd.f32 0.0, %v1697
      %v1699 = vpop.f32.mrb[0].mxu0
      %v1700 = vpop.f32.mrb[0].mxu0
      %v1701 = vadd.f32 0.0, %v1700
      %v1702 = vpop.f32.mrb[0].mxu0
      %1703 = vmatprep.mubr.bf16.mxu0 0
      %1704 = vmatmul.mubr.bf16.gmra.mrb[0].mxu0 %v1593
      %v1705 = vpop.f32.mrb[0].mxu0
      %v1706 = vadd.f32 0.0, %v1705
      %v1707 = vpop.f32.mrb[0].mxu0
      %v1708 = vpop.f32.mrb[0].mxu0
      %v1709 = vadd.f32 0.0, %v1708
      %v1710 = vpop.f32.mrb[0].mxu0
      %1711 = vmatprep.mubr.bf16.mxu0 0
      %1712 = vmatmul.mubr.bf16.gmra.mrb[0].mxu0 %v1596
      %v1713 = vpop.f32.mrb[0].mxu0
      %v1714 = vadd.f32 0.0, %v1713
      %v1715 = vpop.f32.mrb[0].mxu0
      %v1716 = vpop.f32.mrb[0].mxu0
      %v1717 = vadd.f32 0.0, %v1716
      %v1718 = vpop.f32.mrb[0].mxu0
      %1719 = vmatprep.mubr.bf16.mxu0 0
      %1720 = vmatmul.mubr.bf16.gmra.mrb[0].mxu0 %v1599
      %v1721 = vpop.f32.mrb[0].mxu0
      %v1722 = vadd.f32 0.0, %v1721
      %v1723 = vpop.f32.mrb[0].mxu0
      %v1724 = vpop.f32.mrb[0].mxu0
      %v1725 = vadd.f32 0.0, %v1724
      %v1726 = vpop.f32.mrb[0].mxu0
      %1727 = vmatprep.mubr.bf16.mxu0 0
      %1728 = vmatmul.mubr.bf16.gmra.mrb[0].mxu0 %v1602
      %v1729 = vpop.f32.mrb[0].mxu0
      %v1730 = vadd.f32 0.0, %v1729
      %v1731 = vpop.f32.mrb[0].mxu0
      %v1732 = vpop.f32.mrb[0].mxu0
      %v1733 = vadd.f32 0.0, %v1732
      %v1734 = vpop.f32.mrb[0].mxu0
      %1735 = vmatprep.mubr.bf16.mxu0 0
      %1736 = vmatmul.mubr.bf16.gmra.mrb[0].mxu0 %v1605
      %v1737 = vpop.f32.mrb[0].mxu0
      %v1738 = vadd.f32 0.0, %v1737
      %v1739 = vpop.f32.mrb[0].mxu0
      %v1740 = vpop.f32.mrb[0].mxu0
      %v1741 = vadd.f32 0.0, %v1740
      %v1742 = vpop.f32.mrb[0].mxu0
      %1743 = vmatprep.mubr.bf16.mxu0 0
      %1744 = vmatmul.mubr.bf16.gmra.mrb[0].mxu0 %v1608
      %v1745 = vpop.f32.mrb[0].mxu0
      %v1746 = vadd.f32 0.0, %v1745
      %v1747 = vpop.f32.mrb[0].mxu0
      %v1748 = vpop.f32.mrb[0].mxu0
      %v1749 = vadd.f32 0.0, %v1748
      %v1750 = vpop.f32.mrb[0].mxu0
      %1751 = vmatprep.mubr.bf16.mxu0 0
      %1752 = vmatmul.mubr.bf16.gmra.mrb[0].mxu0 %v1611
      %v1753 = vpop.f32.mrb[0].mxu0
      %v1754 = vadd.f32 0.0, %v1753
      %v1755 = vpop.f32.mrb[0].mxu0
      %v1756 = vpop.f32.mrb[0].mxu0
      %v1757 = vadd.f32 0.0, %v1756
      %v1758 = vpop.f32.mrb[0].mxu0
      %1759 = vmatprep.mubr.bf16.mxu0 0
      %1760 = vmatmul.mubr.bf16.gmra.mrb[0].mxu0 %v1614
      %v1761 = vpop.f32.mrb[0].mxu0
      %v1762 = vadd.f32 0.0, %v1761
      %v1763 = vpop.f32.mrb[0].mxu0
      %v1764 = vpop.f32.mrb[0].mxu0
      %v1765 = vadd.f32 0.0, %v1764
      %v1766 = vpop.f32.mrb[0].mxu0
      %1767 = vmatprep.mubr.bf16.mxu0 0
      %1768 = vmatmul.mubr.bf16.gmra.mrb[0].mxu0 %v1617
      %v1769 = vpop.f32.mrb[0].mxu0
      %v1770 = vadd.f32 0.0, %v1769
      %v1771 = vpop.f32.mrb[0].mxu0
      %v1772 = vpop.f32.mrb[0].mxu0
      %v1773 = vadd.f32 0.0, %v1772
      %v1774 = vpop.f32.mrb[0].mxu0
      %1775 = vmatprep.mubr.bf16.mxu0 0
      %1776 = vmatmul.mubr.bf16.gmra.mrb[0].mxu0 %v1620
      %v1777 = vpop.f32.mrb[0].mxu0
      %v1778 = vadd.f32 0.0, %v1777
      %v1779 = vpop.f32.mrb[0].mxu0
      %v1780 = vpop.f32.mrb[0].mxu0
      %v1781 = vadd.f32 0.0, %v1780
      %v1782 = vpop.f32.mrb[0].mxu0
      %1783 = vmatprep.mubr.bf16.mxu0 0
      %1784 = vmatmul.mubr.bf16.gmra.mrb[0].mxu0 %v1623
      %v1785 = vpop.f32.mrb[0].mxu0
      %v1786 = vadd.f32 0.0, %v1785
      %v1787 = vpop.f32.mrb[0].mxu0
      %v1788 = vpop.f32.mrb[0].mxu0
      %v1789 = vadd.f32 0.0, %v1788
      %v1790 = vpop.f32.mrb[0].mxu0
      %1791 = vmatprep.mubr.bf16.mxu0 0
      %1792 = vmatmul.mubr.bf16.gmra.mrb[0].mxu0 %v1626
      %v1793 = vpop.f32.mrb[0].mxu0
      %v1794 = vadd.f32 0.0, %v1793
      %v1795 = vpop.f32.mrb[0].mxu0
      %v1796 = vpop.f32.mrb[0].mxu0
      %v1797 = vadd.f32 0.0, %v1796
      %v1798 = vpop.f32.mrb[0].mxu0
      %1799 = vmatprep.mubr.bf16.mxu0 0
      %1800 = vmatmul.mubr.bf16.gmra.mrb[0].mxu0 %v1629
      %v1801 = vpop.f32.mrb[0].mxu0
      %v1802 = vadd.f32 0.0, %v1801
      %v1803 = vpop.f32.mrb[0].mxu0
      %v1804 = vpop.f32.mrb[0].mxu0
      %v1805 = vadd.f32 0.0, %v1804
      %v1806 = vpop.f32.mrb[0].mxu0
      %1807 = vdwg.mxu0
      %v1808 = vadd.f32 %v1470, %v1666
      %v1809 = vadd.f32 %v1471, %v1669
      %v1810 = vadd.f32 %v1472, %v1674
      %v1811 = vadd.f32 %v1473, %v1677
      %v1812 = vadd.f32 %v1474, %v1682
      %v1813 = vadd.f32 %v1475, %v1685
      %v1814 = vadd.f32 %v1476, %v1690
      %v1815 = vadd.f32 %v1477, %v1693
      %v1816 = vadd.f32 %v1478, %v1698
      %v1817 = vadd.f32 %v1479, %v1701
      %v1818 = vadd.f32 %v1480, %v1706
      %v1819 = vadd.f32 %v1481, %v1709
      %v1820 = vadd.f32 %v1482, %v1714
      %v1821 = vadd.f32 %v1483, %v1717
      %v1822 = vadd.f32 %v1484, %v1722
      %v1823 = vadd.f32 %v1485, %v1725
      %v1824 = vadd.f32 %v1486, %v1730
      %v1825 = vadd.f32 %v1487, %v1733
      %v1826 = vadd.f32 %v1488, %v1738
      %v1827 = vadd.f32 %v1489, %v1741
      %v1828 = vadd.f32 %v1490, %v1746
      %v1829 = vadd.f32 %v1491, %v1749
      %v1830 = vadd.f32 %v1492, %v1754
      %v1831 = vadd.f32 %v1493, %v1757
      %v1832 = vadd.f32 %v1494, %v1762
      %v1833 = vadd.f32 %v1495, %v1765
      %v1834 = vadd.f32 %v1496, %v1770
      %v1835 = vadd.f32 %v1497, %v1773
      %v1836 = vadd.f32 %v1498, %v1778
      %v1837 = vadd.f32 %v1499, %v1781
      %v1838 = vadd.f32 %v1500, %v1786
      %v1839 = vadd.f32 %v1501, %v1789
      %v1840 = vadd.f32 %v1502, %v1794
      %v1841 = vadd.f32 %v1503, %v1797
      %v1842 = vadd.f32 %v1504, %v1802
      %v1843 = vadd.f32 %v1505, %v1805
      %v1844 = vld [vmem:[%s219 + $0x14] sm:$0xff]
      %v1845 = vld [vmem:[%s219 + $0x1c] sm:$0xff]
      %v1846 = vld [vmem:[%s219 + $0x24] sm:$0xff]
      %v1847 = vld [vmem:[%s219 + $0x2c] sm:$0xff]
      %v1848 = vld [vmem:[%s219 + $0x34] sm:$0xff]
      %v1849 = vld [vmem:[%s219 + $0x3c] sm:$0xff]
      %v1850 = vld [vmem:[%s219 + $0x44] sm:$0xff]
      %v1851 = vld [vmem:[%s219 + $0x4c] sm:$0xff]
      %v1852 = vld [vmem:[%s219 + $0x54] sm:$0xff]
      %v1853 = vld [vmem:[%s219 + $0x5c] sm:$0xff]
      %v1854 = vld [vmem:[%s219 + $0x64] sm:$0xff]
      %v1855 = vld [vmem:[%s219 + $0x6c] sm:$0xff]
      %v1856 = vld [vmem:[%s219 + $0x74] sm:$0xff]
      %v1857 = vld [vmem:[%s219 + $0x7c] sm:$0xff]
      %v1858 = vld [vmem:[%s219 + $0x84] sm:$0xff]
      %v1859 = vld [vmem:[%s219 + $0x8c] sm:$0xff]
      %v1860 = vld [vmem:[%s219 + $0x94] sm:$0xff]
      %v1861 = vld [vmem:[%s219 + $0x9c] sm:$0xff]
      %v1862 = vld [vmem:[%s219 + $0xa4] sm:$0xff]
      %v1863 = vld [vmem:[%s219 + $0xac] sm:$0xff]
      %v1864 = vld [vmem:[%s219 + $0xb4] sm:$0xff]
      %v1865 = vld [vmem:[%s219 + $0xbc] sm:$0xff]
      %v1866 = vld [vmem:[%s219 + $0xc4] sm:$0xff]
      %v1867 = vld [vmem:[%s219 + $0xcc] sm:$0xff]
      %v1868 = vld [vmem:[%s219 + $0xd4] sm:$0xff]
      %v1869 = vld [vmem:[%s219 + $0xdc] sm:$0xff]
      %v1870 = vld [vmem:[%s219 + $0xe4] sm:$0xff]
      %v1871 = vld [vmem:[%s219 + $0xec] sm:$0xff]
      %v1872 = vld [vmem:[%s219 + $0xf4] sm:$0xff]
      %v1873 = vld [vmem:[%s219 + $0xfc] sm:$0xff]
      %v1874 = vld [vmem:[%s219 + $0x104] sm:$0xff]
      %v1875 = vld [vmem:[%s219 + $0x10c] sm:$0xff]
      %v1876 = vld [vmem:[%s219 + $0x114] sm:$0xff]
      %v1877 = vld [vmem:[%s219 + $0x11c] sm:$0xff]
      %v1878 = vld [vmem:[%s219 + $0x124] sm:$0xff]
      %v1879 = vld [vmem:[%s219 + $0x12c] sm:$0xff]
      %v1880 = vpack.c.bf16 %v1845, %v1844
      %v1881 = vpack.c.bf16 %v1847, %v1846
      %v1882 = vpack.c.bf16 %v1849, %v1848
      %v1883 = vpack.c.bf16 %v1851, %v1850
      %v1884 = vpack.c.bf16 %v1853, %v1852
      %v1885 = vpack.c.bf16 %v1855, %v1854
      %v1886 = vpack.c.bf16 %v1857, %v1856
      %v1887 = vpack.c.bf16 %v1859, %v1858
      %v1888 = vpack.c.bf16 %v1861, %v1860
      %v1889 = vpack.c.bf16 %v1863, %v1862
      %v1890 = vpack.c.bf16 %v1865, %v1864
      %v1891 = vpack.c.bf16 %v1867, %v1866
      %v1892 = vpack.c.bf16 %v1869, %v1868
      %v1893 = vpack.c.bf16 %v1871, %v1870
      %v1894 = vpack.c.bf16 %v1873, %v1872
      %v1895 = vpack.c.bf16 %v1875, %v1874
      %v1896 = vpack.c.bf16 %v1877, %v1876
      %v1897 = vpack.c.bf16 %v1879, %v1878
      %s1898 = scalar_lea.vmem %s1, 80
      %v1899 = vld [vmem:[%s1898] sm:$0xf]
      %v1900 = vld [vmem:[%s1898 + $0x4] sm:$0xf]
      %v1901 = vld [vmem:[%s1898 + $0x8] sm:$0xf]
      %v1902 = vld [vmem:[%s1898 + $0xc] sm:$0xf]
      %v1907 = vunpack.c.l.b16 %v1899
      %v1908 = vunpack.c.l.b16 %v1900
      %v1909 = vunpack.c.l.b16 %v1901
      %v1910 = vunpack.c.l.b16 %v1902
      %v1911 = vpack.c.b16 %v1908, %v1907
      %v1912 = vpack.c.b16 %v1910, %v1909
      %v1916 = vsel %vm355, %v1880, 0
      %v1919 = vsel %vm355, %v1881, 0
      %v1922 = vsel %vm355, %v1882, 0
      %v1925 = vsel %vm355, %v1883, 0
      %v1928 = vsel %vm355, %v1884, 0
      %v1931 = vsel %vm355, %v1885, 0
      %v1934 = vsel %vm355, %v1886, 0
      %v1937 = vsel %vm355, %v1887, 0
      %v1940 = vsel %vm355, %v1888, 0
      %v1943 = vsel %vm355, %v1889, 0
      %v1946 = vsel %vm355, %v1890, 0
      %v1949 = vsel %vm355, %v1891, 0
      %v1952 = vsel %vm355, %v1892, 0
      %v1955 = vsel %vm355, %v1893, 0
      %v1958 = vsel %vm355, %v1894, 0
      %v1961 = vsel %vm355, %v1895, 0
      %v1964 = vsel %vm355, %v1896, 0
      %v1967 = vsel %vm355, %v1897, 0
      %1969 = vmatprep.subr.bf16.mxu0 0
      %1970 = vmatpush1.bf16.msra.mxu0 %v1911
      %1971 = vmatprep.subr.bf16.mxu0 0
      %1972 = vmatpush1.bf16.msra.mxu0 %v1912
      %1973 = vmatprep.subr.bf16.mxu0 0
      %1974 = vmatpush1.bf16.msra.mxu0 0
      %1975 = vmatprep.subr.bf16.mxu0 0
      %1976 = vmatpush1.bf16.msra.mxu0 0
      %1977 = vmatprep.subr.bf16.mxu0 0
      %1978 = vmatpush1.bf16.msra.mxu0 0
      %1979 = vmatprep.subr.bf16.mxu0 0
      %1980 = vmatpush1.bf16.msra.mxu0 0
      %1981 = vmatprep.subr.bf16.mxu0 0
      %1982 = vmatpush1.bf16.msra.mxu0 0
      %1983 = vmatprep.subr.bf16.mxu0 0
      %1984 = vmatpush1.bf16.msra.mxu0 0
      %1985 = vmatprep.subr.bf16.mxu0 0
      %1986 = vmatpush1.bf16.msra.mxu0 0
      %1987 = vmatprep.subr.bf16.mxu0 0
      %1988 = vmatpush1.bf16.msra.mxu0 0
      %1989 = vmatprep.subr.bf16.mxu0 0
      %1990 = vmatpush1.bf16.msra.mxu0 0
      %1991 = vmatprep.subr.bf16.mxu0 0
      %1992 = vmatpush1.bf16.msra.mxu0 0
      %1993 = vmatprep.subr.bf16.mxu0 0
      %1994 = vmatpush1.bf16.msra.mxu0 0
      %1995 = vmatprep.subr.bf16.mxu0 0
      %1996 = vmatpush1.bf16.msra.mxu0 0
      %1997 = vmatprep.subr.bf16.mxu0 0
      %1998 = vmatpush1.bf16.msra.mxu0 0
      %1999 = vmatprep.subr.bf16.mxu0 0
      %2000 = vmatpush1.bf16.msra.mxu0 0
      %2001 = vmatprep.mubr.bf16.mxu0 0
      %2002 = vmatmul.mubr.bf16.gmra.mrb[0].mxu0 %v1916
      %v2003 = vpop.f32.mrb[0].mxu0
      %v2004 = vadd.f32 0.0, %v2003
      %v2005 = vpop.f32.mrb[0].mxu0
      %v2006 = vpop.f32.mrb[0].mxu0
      %v2007 = vadd.f32 0.0, %v2006
      %v2008 = vpop.f32.mrb[0].mxu0
      %2009 = vmatprep.mubr.bf16.mxu0 0
      %2010 = vmatmul.mubr.bf16.gmra.mrb[0].mxu0 %v1919
      %v2011 = vpop.f32.mrb[0].mxu0
      %v2012 = vadd.f32 0.0, %v2011
      %v2013 = vpop.f32.mrb[0].mxu0
      %v2014 = vpop.f32.mrb[0].mxu0
      %v2015 = vadd.f32 0.0, %v2014
      %v2016 = vpop.f32.mrb[0].mxu0
      %2017 = vmatprep.mubr.bf16.mxu0 0
      %2018 = vmatmul.mubr.bf16.gmra.mrb[0].mxu0 %v1922
      %v2019 = vpop.f32.mrb[0].mxu0
      %v2020 = vadd.f32 0.0, %v2019
      %v2021 = vpop.f32.mrb[0].mxu0
      %v2022 = vpop.f32.mrb[0].mxu0
      %v2023 = vadd.f32 0.0, %v2022
      %v2024 = vpop.f32.mrb[0].mxu0
      %2025 = vmatprep.mubr.bf16.mxu0 0
      %2026 = vmatmul.mubr.bf16.gmra.mrb[0].mxu0 %v1925
      %v2027 = vpop.f32.mrb[0].mxu0
      %v2028 = vadd.f32 0.0, %v2027
      %v2029 = vpop.f32.mrb[0].mxu0
      %v2030 = vpop.f32.mrb[0].mxu0
      %v2031 = vadd.f32 0.0, %v2030
      %v2032 = vpop.f32.mrb[0].mxu0
      %2033 = vmatprep.mubr.bf16.mxu0 0
      %2034 = vmatmul.mubr.bf16.gmra.mrb[0].mxu0 %v1928
      %v2035 = vpop.f32.mrb[0].mxu0
      %v2036 = vadd.f32 0.0, %v2035
      %v2037 = vpop.f32.mrb[0].mxu0
      %v2038 = vpop.f32.mrb[0].mxu0
      %v2039 = vadd.f32 0.0, %v2038
      %v2040 = vpop.f32.mrb[0].mxu0
      %2041 = vmatprep.mubr.bf16.mxu0 0
      %2042 = vmatmul.mubr.bf16.gmra.mrb[0].mxu0 %v1931
      %v2043 = vpop.f32.mrb[0].mxu0
      %v2044 = vadd.f32 0.0, %v2043
      %v2045 = vpop.f32.mrb[0].mxu0
      %v2046 = vpop.f32.mrb[0].mxu0
      %v2047 = vadd.f32 0.0, %v2046
      %v2048 = vpop.f32.mrb[0].mxu0
      %2049 = vmatprep.mubr.bf16.mxu0 0
      %2050 = vmatmul.mubr.bf16.gmra.mrb[0].mxu0 %v1934
      %v2051 = vpop.f32.mrb[0].mxu0
      %v2052 = vadd.f32 0.0, %v2051
      %v2053 = vpop.f32.mrb[0].mxu0
      %v2054 = vpop.f32.mrb[0].mxu0
      %v2055 = vadd.f32 0.0, %v2054
      %v2056 = vpop.f32.mrb[0].mxu0
      %2057 = vmatprep.mubr.bf16.mxu0 0
      %2058 = vmatmul.mubr.bf16.gmra.mrb[0].mxu0 %v1937
      %v2059 = vpop.f32.mrb[0].mxu0
      %v2060 = vadd.f32 0.0, %v2059
      %v2061 = vpop.f32.mrb[0].mxu0
      %v2062 = vpop.f32.mrb[0].mxu0
      %v2063 = vadd.f32 0.0, %v2062
      %v2064 = vpop.f32.mrb[0].mxu0
      %2065 = vmatprep.mubr.bf16.mxu0 0
      %2066 = vmatmul.mubr.bf16.gmra.mrb[0].mxu0 %v1940
      %v2067 = vpop.f32.mrb[0].mxu0
      %v2068 = vadd.f32 0.0, %v2067
      %v2069 = vpop.f32.mrb[0].mxu0
      %v2070 = vpop.f32.mrb[0].mxu0
      %v2071 = vadd.f32 0.0, %v2070
      %v2072 = vpop.f32.mrb[0].mxu0
      %2073 = vmatprep.mubr.bf16.mxu0 0
      %2074 = vmatmul.mubr.bf16.gmra.mrb[0].mxu0 %v1943
      %v2075 = vpop.f32.mrb[0].mxu0
      %v2076 = vadd.f32 0.0, %v2075
      %v2077 = vpop.f32.mrb[0].mxu0
      %v2078 = vpop.f32.mrb[0].mxu0
      %v2079 = vadd.f32 0.0, %v2078
      %v2080 = vpop.f32.mrb[0].mxu0
      %2081 = vmatprep.mubr.bf16.mxu0 0
      %2082 = vmatmul.mubr.bf16.gmra.mrb[0].mxu0 %v1946
      %v2083 = vpop.f32.mrb[0].mxu0
      %v2084 = vadd.f32 0.0, %v2083
      %v2085 = vpop.f32.mrb[0].mxu0
      %v2086 = vpop.f32.mrb[0].mxu0
      %v2087 = vadd.f32 0.0, %v2086
      %v2088 = vpop.f32.mrb[0].mxu0
      %2089 = vmatprep.mubr.bf16.mxu0 0
      %2090 = vmatmul.mubr.bf16.gmra.mrb[0].mxu0 %v1949
      %v2091 = vpop.f32.mrb[0].mxu0
      %v2092 = vadd.f32 0.0, %v2091
      %v2093 = vpop.f32.mrb[0].mxu0
      %v2094 = vpop.f32.mrb[0].mxu0
      %v2095 = vadd.f32 0.0, %v2094
      %v2096 = vpop.f32.mrb[0].mxu0
      %2097 = vmatprep.mubr.bf16.mxu0 0
      %2098 = vmatmul.mubr.bf16.gmra.mrb[0].mxu0 %v1952
      %v2099 = vpop.f32.mrb[0].mxu0
      %v2100 = vadd.f32 0.0, %v2099
      %v2101 = vpop.f32.mrb[0].mxu0
      %v2102 = vpop.f32.mrb[0].mxu0
      %v2103 = vadd.f32 0.0, %v2102
      %v2104 = vpop.f32.mrb[0].mxu0
      %2105 = vmatprep.mubr.bf16.mxu0 0
      %2106 = vmatmul.mubr.bf16.gmra.mrb[0].mxu0 %v1955
      %v2107 = vpop.f32.mrb[0].mxu0
      %v2108 = vadd.f32 0.0, %v2107
      %v2109 = vpop.f32.mrb[0].mxu0
      %v2110 = vpop.f32.mrb[0].mxu0
      %v2111 = vadd.f32 0.0, %v2110
      %v2112 = vpop.f32.mrb[0].mxu0
      %2113 = vmatprep.mubr.bf16.mxu0 0
      %2114 = vmatmul.mubr.bf16.gmra.mrb[0].mxu0 %v1958
      %v2115 = vpop.f32.mrb[0].mxu0
      %v2116 = vadd.f32 0.0, %v2115
      %v2117 = vpop.f32.mrb[0].mxu0
      %v2118 = vpop.f32.mrb[0].mxu0
      %v2119 = vadd.f32 0.0, %v2118
      %v2120 = vpop.f32.mrb[0].mxu0
      %2121 = vmatprep.mubr.bf16.mxu0 0
      %2122 = vmatmul.mubr.bf16.gmra.mrb[0].mxu0 %v1961
      %v2123 = vpop.f32.mrb[0].mxu0
      %v2124 = vadd.f32 0.0, %v2123
      %v2125 = vpop.f32.mrb[0].mxu0
      %v2126 = vpop.f32.mrb[0].mxu0
      %v2127 = vadd.f32 0.0, %v2126
      %v2128 = vpop.f32.mrb[0].mxu0
      %2129 = vmatprep.mubr.bf16.mxu0 0
      %2130 = vmatmul.mubr.bf16.gmra.mrb[0].mxu0 %v1964
      %v2131 = vpop.f32.mrb[0].mxu0
      %v2132 = vadd.f32 0.0, %v2131
      %v2133 = vpop.f32.mrb[0].mxu0
      %v2134 = vpop.f32.mrb[0].mxu0
      %v2135 = vadd.f32 0.0, %v2134
      %v2136 = vpop.f32.mrb[0].mxu0
      %2137 = vmatprep.mubr.bf16.mxu0 0
      %2138 = vmatmul.mubr.bf16.gmra.mrb[0].mxu0 %v1967
      %v2139 = vpop.f32.mrb[0].mxu0
      %v2140 = vadd.f32 0.0, %v2139
      %v2141 = vpop.f32.mrb[0].mxu0
      %v2142 = vpop.f32.mrb[0].mxu0
      %v2143 = vadd.f32 0.0, %v2142
      %v2144 = vpop.f32.mrb[0].mxu0
      %2145 = vdwg.mxu0
      %v2146 = vadd.f32 %v1808, %v2004
      %v2147 = vadd.f32 %v1809, %v2007
      %v2148 = vadd.f32 %v1810, %v2012
      %v2149 = vadd.f32 %v1811, %v2015
      %v2150 = vadd.f32 %v1812, %v2020
      %v2151 = vadd.f32 %v1813, %v2023
      %v2152 = vadd.f32 %v1814, %v2028
      %v2153 = vadd.f32 %v1815, %v2031
      %v2154 = vadd.f32 %v1816, %v2036
      %v2155 = vadd.f32 %v1817, %v2039
      %v2156 = vadd.f32 %v1818, %v2044
      %v2157 = vadd.f32 %v1819, %v2047
      %v2158 = vadd.f32 %v1820, %v2052
      %v2159 = vadd.f32 %v1821, %v2055
      %v2160 = vadd.f32 %v1822, %v2060
      %v2161 = vadd.f32 %v1823, %v2063
      %v2162 = vadd.f32 %v1824, %v2068
      %v2163 = vadd.f32 %v1825, %v2071
      %v2164 = vadd.f32 %v1826, %v2076
      %v2165 = vadd.f32 %v1827, %v2079
      %v2166 = vadd.f32 %v1828, %v2084
      %v2167 = vadd.f32 %v1829, %v2087
      %v2168 = vadd.f32 %v1830, %v2092
      %v2169 = vadd.f32 %v1831, %v2095
      %v2170 = vadd.f32 %v1832, %v2100
      %v2171 = vadd.f32 %v1833, %v2103
      %v2172 = vadd.f32 %v1834, %v2108
      %v2173 = vadd.f32 %v1835, %v2111
      %v2174 = vadd.f32 %v1836, %v2116
      %v2175 = vadd.f32 %v1837, %v2119
      %v2176 = vadd.f32 %v1838, %v2124
      %v2177 = vadd.f32 %v1839, %v2127
      %v2178 = vadd.f32 %v1840, %v2132
      %v2179 = vadd.f32 %v1841, %v2135
      %v2180 = vadd.f32 %v1842, %v2140
      %v2181 = vadd.f32 %v1843, %v2143
      %v2182 = vld [vmem:[%s219 + $0x24] sm:$0xff]
      %v2183 = vld [vmem:[%s219 + $0x2c] sm:$0xff]
      %v2184 = vld [vmem:[%s219 + $0x34] sm:$0xff]
      %v2185 = vld [vmem:[%s219 + $0x3c] sm:$0xff]
      %v2186 = vld [vmem:[%s219 + $0x44] sm:$0xff]
      %v2187 = vld [vmem:[%s219 + $0x4c] sm:$0xff]
      %v2188 = vld [vmem:[%s219 + $0x54] sm:$0xff]
      %v2189 = vld [vmem:[%s219 + $0x5c] sm:$0xff]
      %v2190 = vld [vmem:[%s219 + $0x64] sm:$0xff]
      %v2191 = vld [vmem:[%s219 + $0x6c] sm:$0xff]
      %v2192 = vld [vmem:[%s219 + $0x74] sm:$0xff]
      %v2193 = vld [vmem:[%s219 + $0x7c] sm:$0xff]
      %v2194 = vld [vmem:[%s219 + $0x84] sm:$0xff]
      %v2195 = vld [vmem:[%s219 + $0x8c] sm:$0xff]
      %v2196 = vld [vmem:[%s219 + $0x94] sm:$0xff]
      %v2197 = vld [vmem:[%s219 + $0x9c] sm:$0xff]
      %v2198 = vld [vmem:[%s219 + $0xa4] sm:$0xff]
      %v2199 = vld [vmem:[%s219 + $0xac] sm:$0xff]
      %v2200 = vld [vmem:[%s219 + $0xb4] sm:$0xff]
      %v2201 = vld [vmem:[%s219 + $0xbc] sm:$0xff]
      %v2202 = vld [vmem:[%s219 + $0xc4] sm:$0xff]
      %v2203 = vld [vmem:[%s219 + $0xcc] sm:$0xff]
      %v2204 = vld [vmem:[%s219 + $0xd4] sm:$0xff]
      %v2205 = vld [vmem:[%s219 + $0xdc] sm:$0xff]
      %v2206 = vld [vmem:[%s219 + $0xe4] sm:$0xff]
      %v2207 = vld [vmem:[%s219 + $0xec] sm:$0xff]
      %v2208 = vld [vmem:[%s219 + $0xf4] sm:$0xff]
      %v2209 = vld [vmem:[%s219 + $0xfc] sm:$0xff]
      %v2210 = vld [vmem:[%s219 + $0x104] sm:$0xff]
      %v2211 = vld [vmem:[%s219 + $0x10c] sm:$0xff]
      %v2212 = vld [vmem:[%s219 + $0x114] sm:$0xff]
      %v2213 = vld [vmem:[%s219 + $0x11c] sm:$0xff]
      %v2214 = vld [vmem:[%s219 + $0x124] sm:$0xff]
      %v2215 = vld [vmem:[%s219 + $0x12c] sm:$0xff]
      %v2216 = vld [vmem:[%s219 + $0x134] sm:$0xff]
      %v2217 = vld [vmem:[%s219 + $0x13c] sm:$0xff]
      %v2218 = vpack.c.bf16 %v2183, %v2182
      %v2219 = vpack.c.bf16 %v2185, %v2184
      %v2220 = vpack.c.bf16 %v2187, %v2186
      %v2221 = vpack.c.bf16 %v2189, %v2188
      %v2222 = vpack.c.bf16 %v2191, %v2190
      %v2223 = vpack.c.bf16 %v2193, %v2192
      %v2224 = vpack.c.bf16 %v2195, %v2194
      %v2225 = vpack.c.bf16 %v2197, %v2196
      %v2226 = vpack.c.bf16 %v2199, %v2198
      %v2227 = vpack.c.bf16 %v2201, %v2200
      %v2228 = vpack.c.bf16 %v2203, %v2202
      %v2229 = vpack.c.bf16 %v2205, %v2204
      %v2230 = vpack.c.bf16 %v2207, %v2206
      %v2231 = vpack.c.bf16 %v2209, %v2208
      %v2232 = vpack.c.bf16 %v2211, %v2210
      %v2233 = vpack.c.bf16 %v2213, %v2212
      %v2234 = vpack.c.bf16 %v2215, %v2214
      %v2235 = vpack.c.bf16 %v2217, %v2216
      %s2236 = scalar_lea.vmem %s1, 96
      %v2237 = vld [vmem:[%s2236] sm:$0xf]
      %v2238 = vld [vmem:[%s2236 + $0x4] sm:$0xf]
      %v2239 = vld [vmem:[%s2236 + $0x8] sm:$0xf]
      %v2240 = vld [vmem:[%s2236 + $0xc] sm:$0xf]
      %v2245 = vunpack.c.l.b16 %v2237
      %v2246 = vunpack.c.l.b16 %v2238
      %v2247 = vunpack.c.l.b16 %v2239
      %v2248 = vunpack.c.l.b16 %v2240
      %v2249 = vpack.c.b16 %v2246, %v2245
      %v2250 = vpack.c.b16 %v2248, %v2247
      %v2254 = vsel %vm355, %v2218, 0
      %v2257 = vsel %vm355, %v2219, 0
      %v2260 = vsel %vm355, %v2220, 0
      %v2263 = vsel %vm355, %v2221, 0
      %v2266 = vsel %vm355, %v2222, 0
      %v2269 = vsel %vm355, %v2223, 0
      %v2272 = vsel %vm355, %v2224, 0
      %v2275 = vsel %vm355, %v2225, 0
      %v2278 = vsel %vm355, %v2226, 0
      %v2281 = vsel %vm355, %v2227, 0
      %v2284 = vsel %vm355, %v2228, 0
      %v2287 = vsel %vm355, %v2229, 0
      %v2290 = vsel %vm355, %v2230, 0
      %v2293 = vsel %vm355, %v2231, 0
      %v2296 = vsel %vm355, %v2232, 0
      %v2299 = vsel %vm355, %v2233, 0
      %v2302 = vsel %vm355, %v2234, 0
      %v2305 = vsel %vm355, %v2235, 0
      %2307 = vmatprep.subr.bf16.mxu0 0
      %2308 = vmatpush1.bf16.msra.mxu0 %v2249
      %2309 = vmatprep.subr.bf16.mxu0 0
      %2310 = vmatpush1.bf16.msra.mxu0 %v2250
      %2311 = vmatprep.subr.bf16.mxu0 0
      %2312 = vmatpush1.bf16.msra.mxu0 0
      %2313 = vmatprep.subr.bf16.mxu0 0
      %2314 = vmatpush1.bf16.msra.mxu0 0
      %2315 = vmatprep.subr.bf16.mxu0 0
      %2316 = vmatpush1.bf16.msra.mxu0 0
      %2317 = vmatprep.subr.bf16.mxu0 0
      %2318 = vmatpush1.bf16.msra.mxu0 0
      %2319 = vmatprep.subr.bf16.mxu0 0
      %2320 = vmatpush1.bf16.msra.mxu0 0
      %2321 = vmatprep.subr.bf16.mxu0 0
      %2322 = vmatpush1.bf16.msra.mxu0 0
      %2323 = vmatprep.subr.bf16.mxu0 0
      %2324 = vmatpush1.bf16.msra.mxu0 0
      %2325 = vmatprep.subr.bf16.mxu0 0
      %2326 = vmatpush1.bf16.msra.mxu0 0
      %2327 = vmatprep.subr.bf16.mxu0 0
      %2328 = vmatpush1.bf16.msra.mxu0 0
      %2329 = vmatprep.subr.bf16.mxu0 0
      %2330 = vmatpush1.bf16.msra.mxu0 0
      %2331 = vmatprep.subr.bf16.mxu0 0
      %2332 = vmatpush1.bf16.msra.mxu0 0
      %2333 = vmatprep.subr.bf16.mxu0 0
      %2334 = vmatpush1.bf16.msra.mxu0 0
      %2335 = vmatprep.subr.bf16.mxu0 0
      %2336 = vmatpush1.bf16.msra.mxu0 0
      %2337 = vmatprep.subr.bf16.mxu0 0
      %2338 = vmatpush1.bf16.msra.mxu0 0
      %2339 = vmatprep.mubr.bf16.mxu0 0
      %2340 = vmatmul.mubr.bf16.gmra.mrb[0].mxu0 %v2254
      %v2341 = vpop.f32.mrb[0].mxu0
      %v2342 = vadd.f32 0.0, %v2341
      %v2343 = vpop.f32.mrb[0].mxu0
      %v2344 = vpop.f32.mrb[0].mxu0
      %v2345 = vadd.f32 0.0, %v2344
      %v2346 = vpop.f32.mrb[0].mxu0
      %2347 = vmatprep.mubr.bf16.mxu0 0
      %2348 = vmatmul.mubr.bf16.gmra.mrb[0].mxu0 %v2257
      %v2349 = vpop.f32.mrb[0].mxu0
      %v2350 = vadd.f32 0.0, %v2349
      %v2351 = vpop.f32.mrb[0].mxu0
      %v2352 = vpop.f32.mrb[0].mxu0
      %v2353 = vadd.f32 0.0, %v2352
      %v2354 = vpop.f32.mrb[0].mxu0
      %2355 = vmatprep.mubr.bf16.mxu0 0
      %2356 = vmatmul.mubr.bf16.gmra.mrb[0].mxu0 %v2260
      %v2357 = vpop.f32.mrb[0].mxu0
      %v2358 = vadd.f32 0.0, %v2357
      %v2359 = vpop.f32.mrb[0].mxu0
      %v2360 = vpop.f32.mrb[0].mxu0
      %v2361 = vadd.f32 0.0, %v2360
      %v2362 = vpop.f32.mrb[0].mxu0
      %2363 = vmatprep.mubr.bf16.mxu0 0
      %2364 = vmatmul.mubr.bf16.gmra.mrb[0].mxu0 %v2263
      %v2365 = vpop.f32.mrb[0].mxu0
      %v2366 = vadd.f32 0.0, %v2365
      %v2367 = vpop.f32.mrb[0].mxu0
      %v2368 = vpop.f32.mrb[0].mxu0
      %v2369 = vadd.f32 0.0, %v2368
      %v2370 = vpop.f32.mrb[0].mxu0
      %2371 = vmatprep.mubr.bf16.mxu0 0
      %2372 = vmatmul.mubr.bf16.gmra.mrb[0].mxu0 %v2266
      %v2373 = vpop.f32.mrb[0].mxu0
      %v2374 = vadd.f32 0.0, %v2373
      %v2375 = vpop.f32.mrb[0].mxu0
      %v2376 = vpop.f32.mrb[0].mxu0
      %v2377 = vadd.f32 0.0, %v2376
      %v2378 = vpop.f32.mrb[0].mxu0
      %2379 = vmatprep.mubr.bf16.mxu0 0
      %2380 = vmatmul.mubr.bf16.gmra.mrb[0].mxu0 %v2269
      %v2381 = vpop.f32.mrb[0].mxu0
      %v2382 = vadd.f32 0.0, %v2381
      %v2383 = vpop.f32.mrb[0].mxu0
      %v2384 = vpop.f32.mrb[0].mxu0
      %v2385 = vadd.f32 0.0, %v2384
      %v2386 = vpop.f32.mrb[0].mxu0
      %2387 = vmatprep.mubr.bf16.mxu0 0
      %2388 = vmatmul.mubr.bf16.gmra.mrb[0].mxu0 %v2272
      %v2389 = vpop.f32.mrb[0].mxu0
      %v2390 = vadd.f32 0.0, %v2389
      %v2391 = vpop.f32.mrb[0].mxu0
      %v2392 = vpop.f32.mrb[0].mxu0
      %v2393 = vadd.f32 0.0, %v2392
      %v2394 = vpop.f32.mrb[0].mxu0
      %2395 = vmatprep.mubr.bf16.mxu0 0
      %2396 = vmatmul.mubr.bf16.gmra.mrb[0].mxu0 %v2275
      %v2397 = vpop.f32.mrb[0].mxu0
      %v2398 = vadd.f32 0.0, %v2397
      %v2399 = vpop.f32.mrb[0].mxu0
      %v2400 = vpop.f32.mrb[0].mxu0
      %v2401 = vadd.f32 0.0, %v2400
      %v2402 = vpop.f32.mrb[0].mxu0
      %2403 = vmatprep.mubr.bf16.mxu0 0
      %2404 = vmatmul.mubr.bf16.gmra.mrb[0].mxu0 %v2278
      %v2405 = vpop.f32.mrb[0].mxu0
      %v2406 = vadd.f32 0.0, %v2405
      %v2407 = vpop.f32.mrb[0].mxu0
      %v2408 = vpop.f32.mrb[0].mxu0
      %v2409 = vadd.f32 0.0, %v2408
      %v2410 = vpop.f32.mrb[0].mxu0
      %2411 = vmatprep.mubr.bf16.mxu0 0
      %2412 = vmatmul.mubr.bf16.gmra.mrb[0].mxu0 %v2281
      %v2413 = vpop.f32.mrb[0].mxu0
      %v2414 = vadd.f32 0.0, %v2413
      %v2415 = vpop.f32.mrb[0].mxu0
      %v2416 = vpop.f32.mrb[0].mxu0
      %v2417 = vadd.f32 0.0, %v2416
      %v2418 = vpop.f32.mrb[0].mxu0
      %2419 = vmatprep.mubr.bf16.mxu0 0
      %2420 = vmatmul.mubr.bf16.gmra.mrb[0].mxu0 %v2284
      %v2421 = vpop.f32.mrb[0].mxu0
      %v2422 = vadd.f32 0.0, %v2421
      %v2423 = vpop.f32.mrb[0].mxu0
      %v2424 = vpop.f32.mrb[0].mxu0
      %v2425 = vadd.f32 0.0, %v2424
      %v2426 = vpop.f32.mrb[0].mxu0
      %2427 = vmatprep.mubr.bf16.mxu0 0
      %2428 = vmatmul.mubr.bf16.gmra.mrb[0].mxu0 %v2287
      %v2429 = vpop.f32.mrb[0].mxu0
      %v2430 = vadd.f32 0.0, %v2429
      %v2431 = vpop.f32.mrb[0].mxu0
      %v2432 = vpop.f32.mrb[0].mxu0
      %v2433 = vadd.f32 0.0, %v2432
      %v2434 = vpop.f32.mrb[0].mxu0
      %2435 = vmatprep.mubr.bf16.mxu0 0
      %2436 = vmatmul.mubr.bf16.gmra.mrb[0].mxu0 %v2290
      %v2437 = vpop.f32.mrb[0].mxu0
      %v2438 = vadd.f32 0.0, %v2437
      %v2439 = vpop.f32.mrb[0].mxu0
      %v2440 = vpop.f32.mrb[0].mxu0
      %v2441 = vadd.f32 0.0, %v2440
      %v2442 = vpop.f32.mrb[0].mxu0
      %2443 = vmatprep.mubr.bf16.mxu0 0
      %2444 = vmatmul.mubr.bf16.gmra.mrb[0].mxu0 %v2293
      %v2445 = vpop.f32.mrb[0].mxu0
      %v2446 = vadd.f32 0.0, %v2445
      %v2447 = vpop.f32.mrb[0].mxu0
      %v2448 = vpop.f32.mrb[0].mxu0
      %v2449 = vadd.f32 0.0, %v2448
      %v2450 = vpop.f32.mrb[0].mxu0
      %2451 = vmatprep.mubr.bf16.mxu0 0
      %2452 = vmatmul.mubr.bf16.gmra.mrb[0].mxu0 %v2296
      %v2453 = vpop.f32.mrb[0].mxu0
      %v2454 = vadd.f32 0.0, %v2453
      %v2455 = vpop.f32.mrb[0].mxu0
      %v2456 = vpop.f32.mrb[0].mxu0
      %v2457 = vadd.f32 0.0, %v2456
      %v2458 = vpop.f32.mrb[0].mxu0
      %2459 = vmatprep.mubr.bf16.mxu0 0
      %2460 = vmatmul.mubr.bf16.gmra.mrb[0].mxu0 %v2299
      %v2461 = vpop.f32.mrb[0].mxu0
      %v2462 = vadd.f32 0.0, %v2461
      %v2463 = vpop.f32.mrb[0].mxu0
      %v2464 = vpop.f32.mrb[0].mxu0
      %v2465 = vadd.f32 0.0, %v2464
      %v2466 = vpop.f32.mrb[0].mxu0
      %2467 = vmatprep.mubr.bf16.mxu0 0
      %2468 = vmatmul.mubr.bf16.gmra.mrb[0].mxu0 %v2302
      %v2469 = vpop.f32.mrb[0].mxu0
      %v2470 = vadd.f32 0.0, %v2469
      %v2471 = vpop.f32.mrb[0].mxu0
      %v2472 = vpop.f32.mrb[0].mxu0
      %v2473 = vadd.f32 0.0, %v2472
      %v2474 = vpop.f32.mrb[0].mxu0
      %2475 = vmatprep.mubr.bf16.mxu0 0
      %2476 = vmatmul.mubr.bf16.gmra.mrb[0].mxu0 %v2305
      %v2477 = vpop.f32.mrb[0].mxu0
      %v2478 = vadd.f32 0.0, %v2477
      %v2479 = vpop.f32.mrb[0].mxu0
      %v2480 = vpop.f32.mrb[0].mxu0
      %v2481 = vadd.f32 0.0, %v2480
      %v2482 = vpop.f32.mrb[0].mxu0
      %2483 = vdwg.mxu0
      %v2484 = vadd.f32 %v2146, %v2342
      %v2485 = vadd.f32 %v2147, %v2345
      %v2486 = vadd.f32 %v2148, %v2350
      %v2487 = vadd.f32 %v2149, %v2353
      %v2488 = vadd.f32 %v2150, %v2358
      %v2489 = vadd.f32 %v2151, %v2361
      %v2490 = vadd.f32 %v2152, %v2366
      %v2491 = vadd.f32 %v2153, %v2369
      %v2492 = vadd.f32 %v2154, %v2374
      %v2493 = vadd.f32 %v2155, %v2377
      %v2494 = vadd.f32 %v2156, %v2382
      %v2495 = vadd.f32 %v2157, %v2385
      %v2496 = vadd.f32 %v2158, %v2390
      %v2497 = vadd.f32 %v2159, %v2393
      %v2498 = vadd.f32 %v2160, %v2398
      %v2499 = vadd.f32 %v2161, %v2401
      %v2500 = vadd.f32 %v2162, %v2406
      %v2501 = vadd.f32 %v2163, %v2409
      %v2502 = vadd.f32 %v2164, %v2414
      %v2503 = vadd.f32 %v2165, %v2417
      %v2504 = vadd.f32 %v2166, %v2422
      %v2505 = vadd.f32 %v2167, %v2425
      %v2506 = vadd.f32 %v2168, %v2430
      %v2507 = vadd.f32 %v2169, %v2433
      %v2508 = vadd.f32 %v2170, %v2438
      %v2509 = vadd.f32 %v2171, %v2441
      %v2510 = vadd.f32 %v2172, %v2446
      %v2511 = vadd.f32 %v2173, %v2449
      %v2512 = vadd.f32 %v2174, %v2454
      %v2513 = vadd.f32 %v2175, %v2457
      %v2514 = vadd.f32 %v2176, %v2462
      %v2515 = vadd.f32 %v2177, %v2465
      %v2516 = vadd.f32 %v2178, %v2470
      %v2517 = vadd.f32 %v2179, %v2473
      %v2518 = vadd.f32 %v2180, %v2478
      %v2519 = vadd.f32 %v2181, %v2481
      %v2520 = vld [vmem:[%s219 + $0x25] sm:$0xff]
      %v2521 = vld [vmem:[%s219 + $0x2d] sm:$0xff]
      %v2522 = vld [vmem:[%s219 + $0x35] sm:$0xff]
      %v2523 = vld [vmem:[%s219 + $0x3d] sm:$0xff]
      %v2524 = vld [vmem:[%s219 + $0x45] sm:$0xff]
      %v2525 = vld [vmem:[%s219 + $0x4d] sm:$0xff]
      %v2526 = vld [vmem:[%s219 + $0x55] sm:$0xff]
      %v2527 = vld [vmem:[%s219 + $0x5d] sm:$0xff]
      %v2528 = vld [vmem:[%s219 + $0x65] sm:$0xff]
      %v2529 = vld [vmem:[%s219 + $0x6d] sm:$0xff]
      %v2530 = vld [vmem:[%s219 + $0x75] sm:$0xff]
      %v2531 = vld [vmem:[%s219 + $0x7d] sm:$0xff]
      %v2532 = vld [vmem:[%s219 + $0x85] sm:$0xff]
      %v2533 = vld [vmem:[%s219 + $0x8d] sm:$0xff]
      %v2534 = vld [vmem:[%s219 + $0x95] sm:$0xff]
      %v2535 = vld [vmem:[%s219 + $0x9d] sm:$0xff]
      %v2536 = vld [vmem:[%s219 + $0xa5] sm:$0xff]
      %v2537 = vld [vmem:[%s219 + $0xad] sm:$0xff]
      %v2538 = vld [vmem:[%s219 + $0xb5] sm:$0xff]
      %v2539 = vld [vmem:[%s219 + $0xbd] sm:$0xff]
      %v2540 = vld [vmem:[%s219 + $0xc5] sm:$0xff]
      %v2541 = vld [vmem:[%s219 + $0xcd] sm:$0xff]
      %v2542 = vld [vmem:[%s219 + $0xd5] sm:$0xff]
      %v2543 = vld [vmem:[%s219 + $0xdd] sm:$0xff]
      %v2544 = vld [vmem:[%s219 + $0xe5] sm:$0xff]
      %v2545 = vld [vmem:[%s219 + $0xed] sm:$0xff]
      %v2546 = vld [vmem:[%s219 + $0xf5] sm:$0xff]
      %v2547 = vld [vmem:[%s219 + $0xfd] sm:$0xff]
      %v2548 = vld [vmem:[%s219 + $0x105] sm:$0xff]
      %v2549 = vld [vmem:[%s219 + $0x10d] sm:$0xff]
      %v2550 = vld [vmem:[%s219 + $0x115] sm:$0xff]
      %v2551 = vld [vmem:[%s219 + $0x11d] sm:$0xff]
      %v2552 = vld [vmem:[%s219 + $0x125] sm:$0xff]
      %v2553 = vld [vmem:[%s219 + $0x12d] sm:$0xff]
      %v2554 = vld [vmem:[%s219 + $0x135] sm:$0xff]
      %v2555 = vld [vmem:[%s219 + $0x13d] sm:$0xff]
      %v2556 = vpack.c.bf16 %v2521, %v2520
      %v2557 = vpack.c.bf16 %v2523, %v2522
      %v2558 = vpack.c.bf16 %v2525, %v2524
      %v2559 = vpack.c.bf16 %v2527, %v2526
      %v2560 = vpack.c.bf16 %v2529, %v2528
      %v2561 = vpack.c.bf16 %v2531, %v2530
      %v2562 = vpack.c.bf16 %v2533, %v2532
      %v2563 = vpack.c.bf16 %v2535, %v2534
      %v2564 = vpack.c.bf16 %v2537, %v2536
      %v2565 = vpack.c.bf16 %v2539, %v2538
      %v2566 = vpack.c.bf16 %v2541, %v2540
      %v2567 = vpack.c.bf16 %v2543, %v2542
      %v2568 = vpack.c.bf16 %v2545, %v2544
      %v2569 = vpack.c.bf16 %v2547, %v2546
      %v2570 = vpack.c.bf16 %v2549, %v2548
      %v2571 = vpack.c.bf16 %v2551, %v2550
      %v2572 = vpack.c.bf16 %v2553, %v2552
      %v2573 = vpack.c.bf16 %v2555, %v2554
      %s2574 = scalar_lea.vmem %s1, 112
      %v2575 = vld [vmem:[%s2574] sm:$0xf]
      %v2576 = vld [vmem:[%s2574 + $0x4] sm:$0xf]
      %v2577 = vld [vmem:[%s2574 + $0x8] sm:$0xf]
      %v2578 = vld [vmem:[%s2574 + $0xc] sm:$0xf]
      %v2583 = vunpack.c.l.b16 %v2575
      %v2584 = vunpack.c.l.b16 %v2576
      %v2585 = vunpack.c.l.b16 %v2577
      %v2586 = vunpack.c.l.b16 %v2578
      %v2587 = vpack.c.b16 %v2584, %v2583
      %v2588 = vpack.c.b16 %v2586, %v2585
      %v2592 = vsel %vm355, %v2556, 0
      %v2595 = vsel %vm355, %v2557, 0
      %v2598 = vsel %vm355, %v2558, 0
      %v2601 = vsel %vm355, %v2559, 0
      %v2604 = vsel %vm355, %v2560, 0
      %v2607 = vsel %vm355, %v2561, 0
      %v2610 = vsel %vm355, %v2562, 0
      %v2613 = vsel %vm355, %v2563, 0
      %v2616 = vsel %vm355, %v2564, 0
      %v2619 = vsel %vm355, %v2565, 0
      %v2622 = vsel %vm355, %v2566, 0
      %v2625 = vsel %vm355, %v2567, 0
      %v2628 = vsel %vm355, %v2568, 0
      %v2631 = vsel %vm355, %v2569, 0
      %v2634 = vsel %vm355, %v2570, 0
      %v2637 = vsel %vm355, %v2571, 0
      %v2640 = vsel %vm355, %v2572, 0
      %v2643 = vsel %vm355, %v2573, 0
      %2645 = vmatprep.subr.bf16.mxu0 0
      %2646 = vmatpush1.bf16.msra.mxu0 %v2587
      %2647 = vmatprep.subr.bf16.mxu0 0
      %2648 = vmatpush1.bf16.msra.mxu0 %v2588
      %2649 = vmatprep.subr.bf16.mxu0 0
      %2650 = vmatpush1.bf16.msra.mxu0 0
      %2651 = vmatprep.subr.bf16.mxu0 0
      %2652 = vmatpush1.bf16.msra.mxu0 0
      %2653 = vmatprep.subr.bf16.mxu0 0
      %2654 = vmatpush1.bf16.msra.mxu0 0
      %2655 = vmatprep.subr.bf16.mxu0 0
      %2656 = vmatpush1.bf16.msra.mxu0 0
      %2657 = vmatprep.subr.bf16.mxu0 0
      %2658 = vmatpush1.bf16.msra.mxu0 0
      %2659 = vmatprep.subr.bf16.mxu0 0
      %2660 = vmatpush1.bf16.msra.mxu0 0
      %2661 = vmatprep.subr.bf16.mxu0 0
      %2662 = vmatpush1.bf16.msra.mxu0 0
      %2663 = vmatprep.subr.bf16.mxu0 0
      %2664 = vmatpush1.bf16.msra.mxu0 0
      %2665 = vmatprep.subr.bf16.mxu0 0
      %2666 = vmatpush1.bf16.msra.mxu0 0
      %2667 = vmatprep.subr.bf16.mxu0 0
      %2668 = vmatpush1.bf16.msra.mxu0 0
      %2669 = vmatprep.subr.bf16.mxu0 0
      %2670 = vmatpush1.bf16.msra.mxu0 0
      %2671 = vmatprep.subr.bf16.mxu0 0
      %2672 = vmatpush1.bf16.msra.mxu0 0
      %2673 = vmatprep.subr.bf16.mxu0 0
      %2674 = vmatpush1.bf16.msra.mxu0 0
      %2675 = vmatprep.subr.bf16.mxu0 0
      %2676 = vmatpush1.bf16.msra.mxu0 0
      %2677 = vmatprep.mubr.bf16.mxu0 0
      %2678 = vmatmul.mubr.bf16.gmra.mrb[0].mxu0 %v2592
      %v2679 = vpop.f32.mrb[0].mxu0
      %v2680 = vadd.f32 0.0, %v2679
      %v2681 = vpop.f32.mrb[0].mxu0
      %v2682 = vpop.f32.mrb[0].mxu0
      %v2683 = vadd.f32 0.0, %v2682
      %v2684 = vpop.f32.mrb[0].mxu0
      %2685 = vmatprep.mubr.bf16.mxu0 0
      %2686 = vmatmul.mubr.bf16.gmra.mrb[0].mxu0 %v2595
      %v2687 = vpop.f32.mrb[0].mxu0
      %v2688 = vadd.f32 0.0, %v2687
      %v2689 = vpop.f32.mrb[0].mxu0
      %v2690 = vpop.f32.mrb[0].mxu0
      %v2691 = vadd.f32 0.0, %v2690
      %v2692 = vpop.f32.mrb[0].mxu0
      %2693 = vmatprep.mubr.bf16.mxu0 0
      %2694 = vmatmul.mubr.bf16.gmra.mrb[0].mxu0 %v2598
      %v2695 = vpop.f32.mrb[0].mxu0
      %v2696 = vadd.f32 0.0, %v2695
      %v2697 = vpop.f32.mrb[0].mxu0
      %v2698 = vpop.f32.mrb[0].mxu0
      %v2699 = vadd.f32 0.0, %v2698
      %v2700 = vpop.f32.mrb[0].mxu0
      %2701 = vmatprep.mubr.bf16.mxu0 0
      %2702 = vmatmul.mubr.bf16.gmra.mrb[0].mxu0 %v2601
      %v2703 = vpop.f32.mrb[0].mxu0
      %v2704 = vadd.f32 0.0, %v2703
      %v2705 = vpop.f32.mrb[0].mxu0
      %v2706 = vpop.f32.mrb[0].mxu0
      %v2707 = vadd.f32 0.0, %v2706
      %v2708 = vpop.f32.mrb[0].mxu0
      %2709 = vmatprep.mubr.bf16.mxu0 0
      %2710 = vmatmul.mubr.bf16.gmra.mrb[0].mxu0 %v2604
      %v2711 = vpop.f32.mrb[0].mxu0
      %v2712 = vadd.f32 0.0, %v2711
      %v2713 = vpop.f32.mrb[0].mxu0
      %v2714 = vpop.f32.mrb[0].mxu0
      %v2715 = vadd.f32 0.0, %v2714
      %v2716 = vpop.f32.mrb[0].mxu0
      %2717 = vmatprep.mubr.bf16.mxu0 0
      %2718 = vmatmul.mubr.bf16.gmra.mrb[0].mxu0 %v2607
      %v2719 = vpop.f32.mrb[0].mxu0
      %v2720 = vadd.f32 0.0, %v2719
      %v2721 = vpop.f32.mrb[0].mxu0
      %v2722 = vpop.f32.mrb[0].mxu0
      %v2723 = vadd.f32 0.0, %v2722
      %v2724 = vpop.f32.mrb[0].mxu0
      %2725 = vmatprep.mubr.bf16.mxu0 0
      %2726 = vmatmul.mubr.bf16.gmra.mrb[0].mxu0 %v2610
      %v2727 = vpop.f32.mrb[0].mxu0
      %v2728 = vadd.f32 0.0, %v2727
      %v2729 = vpop.f32.mrb[0].mxu0
      %v2730 = vpop.f32.mrb[0].mxu0
      %v2731 = vadd.f32 0.0, %v2730
      %v2732 = vpop.f32.mrb[0].mxu0
      %2733 = vmatprep.mubr.bf16.mxu0 0
      %2734 = vmatmul.mubr.bf16.gmra.mrb[0].mxu0 %v2613
      %v2735 = vpop.f32.mrb[0].mxu0
      %v2736 = vadd.f32 0.0, %v2735
      %v2737 = vpop.f32.mrb[0].mxu0
      %v2738 = vpop.f32.mrb[0].mxu0
      %v2739 = vadd.f32 0.0, %v2738
      %v2740 = vpop.f32.mrb[0].mxu0
      %2741 = vmatprep.mubr.bf16.mxu0 0
      %2742 = vmatmul.mubr.bf16.gmra.mrb[0].mxu0 %v2616
      %v2743 = vpop.f32.mrb[0].mxu0
      %v2744 = vadd.f32 0.0, %v2743
      %v2745 = vpop.f32.mrb[0].mxu0
      %v2746 = vpop.f32.mrb[0].mxu0
      %v2747 = vadd.f32 0.0, %v2746
      %v2748 = vpop.f32.mrb[0].mxu0
      %2749 = vmatprep.mubr.bf16.mxu0 0
      %2750 = vmatmul.mubr.bf16.gmra.mrb[0].mxu0 %v2619
      %v2751 = vpop.f32.mrb[0].mxu0
      %v2752 = vadd.f32 0.0, %v2751
      %v2753 = vpop.f32.mrb[0].mxu0
      %v2754 = vpop.f32.mrb[0].mxu0
      %v2755 = vadd.f32 0.0, %v2754
      %v2756 = vpop.f32.mrb[0].mxu0
      %2757 = vmatprep.mubr.bf16.mxu0 0
      %2758 = vmatmul.mubr.bf16.gmra.mrb[0].mxu0 %v2622
      %v2759 = vpop.f32.mrb[0].mxu0
      %v2760 = vadd.f32 0.0, %v2759
      %v2761 = vpop.f32.mrb[0].mxu0
      %v2762 = vpop.f32.mrb[0].mxu0
      %v2763 = vadd.f32 0.0, %v2762
      %v2764 = vpop.f32.mrb[0].mxu0
      %2765 = vmatprep.mubr.bf16.mxu0 0
      %2766 = vmatmul.mubr.bf16.gmra.mrb[0].mxu0 %v2625
      %v2767 = vpop.f32.mrb[0].mxu0
      %v2768 = vadd.f32 0.0, %v2767
      %v2769 = vpop.f32.mrb[0].mxu0
      %v2770 = vpop.f32.mrb[0].mxu0
      %v2771 = vadd.f32 0.0, %v2770
      %v2772 = vpop.f32.mrb[0].mxu0
      %2773 = vmatprep.mubr.bf16.mxu0 0
      %2774 = vmatmul.mubr.bf16.gmra.mrb[0].mxu0 %v2628
      %v2775 = vpop.f32.mrb[0].mxu0
      %v2776 = vadd.f32 0.0, %v2775
      %v2777 = vpop.f32.mrb[0].mxu0
      %v2778 = vpop.f32.mrb[0].mxu0
      %v2779 = vadd.f32 0.0, %v2778
      %v2780 = vpop.f32.mrb[0].mxu0
      %2781 = vmatprep.mubr.bf16.mxu0 0
      %2782 = vmatmul.mubr.bf16.gmra.mrb[0].mxu0 %v2631
      %v2783 = vpop.f32.mrb[0].mxu0
      %v2784 = vadd.f32 0.0, %v2783
      %v2785 = vpop.f32.mrb[0].mxu0
      %v2786 = vpop.f32.mrb[0].mxu0
      %v2787 = vadd.f32 0.0, %v2786
      %v2788 = vpop.f32.mrb[0].mxu0
      %2789 = vmatprep.mubr.bf16.mxu0 0
      %2790 = vmatmul.mubr.bf16.gmra.mrb[0].mxu0 %v2634
      %v2791 = vpop.f32.mrb[0].mxu0
      %v2792 = vadd.f32 0.0, %v2791
      %v2793 = vpop.f32.mrb[0].mxu0
      %v2794 = vpop.f32.mrb[0].mxu0
      %v2795 = vadd.f32 0.0, %v2794
      %v2796 = vpop.f32.mrb[0].mxu0
      %2797 = vmatprep.mubr.bf16.mxu0 0
      %2798 = vmatmul.mubr.bf16.gmra.mrb[0].mxu0 %v2637
      %v2799 = vpop.f32.mrb[0].mxu0
      %v2800 = vadd.f32 0.0, %v2799
      %v2801 = vpop.f32.mrb[0].mxu0
      %v2802 = vpop.f32.mrb[0].mxu0
      %v2803 = vadd.f32 0.0, %v2802
      %v2804 = vpop.f32.mrb[0].mxu0
      %2805 = vmatprep.mubr.bf16.mxu0 0
      %2806 = vmatmul.mubr.bf16.gmra.mrb[0].mxu0 %v2640
      %v2807 = vpop.f32.mrb[0].mxu0
      %v2808 = vadd.f32 0.0, %v2807
      %v2809 = vpop.f32.mrb[0].mxu0
      %v2810 = vpop.f32.mrb[0].mxu0
      %v2811 = vadd.f32 0.0, %v2810
      %v2812 = vpop.f32.mrb[0].mxu0
      %2813 = vmatprep.mubr.bf16.mxu0 0
      %2814 = vmatmul.mubr.bf16.gmra.mrb[0].mxu0 %v2643
      %v2815 = vpop.f32.mrb[0].mxu0
      %v2816 = vadd.f32 0.0, %v2815
      %v2817 = vpop.f32.mrb[0].mxu0
      %v2818 = vpop.f32.mrb[0].mxu0
      %v2819 = vadd.f32 0.0, %v2818
      %v2820 = vpop.f32.mrb[0].mxu0
      %2821 = vdwg.mxu0
      %v2822 = vadd.f32 %v2484, %v2680
      %v2823 = vadd.f32 %v2485, %v2683
      %v2824 = vadd.f32 %v2486, %v2688
      %v2825 = vadd.f32 %v2487, %v2691
      %v2826 = vadd.f32 %v2488, %v2696
      %v2827 = vadd.f32 %v2489, %v2699
      %v2828 = vadd.f32 %v2490, %v2704
      %v2829 = vadd.f32 %v2491, %v2707
      %v2830 = vadd.f32 %v2492, %v2712
      %v2831 = vadd.f32 %v2493, %v2715
      %v2832 = vadd.f32 %v2494, %v2720
      %v2833 = vadd.f32 %v2495, %v2723
      %v2834 = vadd.f32 %v2496, %v2728
      %v2835 = vadd.f32 %v2497, %v2731
      %v2836 = vadd.f32 %v2498, %v2736
      %v2837 = vadd.f32 %v2499, %v2739
      %v2838 = vadd.f32 %v2500, %v2744
      %v2839 = vadd.f32 %v2501, %v2747
      %v2840 = vadd.f32 %v2502, %v2752
      %v2841 = vadd.f32 %v2503, %v2755
      %v2842 = vadd.f32 %v2504, %v2760
      %v2843 = vadd.f32 %v2505, %v2763
      %v2844 = vadd.f32 %v2506, %v2768
      %v2845 = vadd.f32 %v2507, %v2771
      %v2846 = vadd.f32 %v2508, %v2776
      %v2847 = vadd.f32 %v2509, %v2779
      %v2848 = vadd.f32 %v2510, %v2784
      %v2849 = vadd.f32 %v2511, %v2787
      %v2850 = vadd.f32 %v2512, %v2792
      %v2851 = vadd.f32 %v2513, %v2795
      %v2852 = vadd.f32 %v2514, %v2800
      %v2853 = vadd.f32 %v2515, %v2803
      %v2854 = vadd.f32 %v2516, %v2808
      %v2855 = vadd.f32 %v2517, %v2811
      %v2856 = vadd.f32 %v2518, %v2816
      %v2857 = vadd.f32 %v2519, %v2819
      %v2858 = vld [vmem:[%s219 + $0x26] sm:$0xff]
      %v2859 = vld [vmem:[%s219 + $0x2e] sm:$0xff]
      %v2860 = vld [vmem:[%s219 + $0x36] sm:$0xff]
      %v2861 = vld [vmem:[%s219 + $0x3e] sm:$0xff]
      %v2862 = vld [vmem:[%s219 + $0x46] sm:$0xff]
      %v2863 = vld [vmem:[%s219 + $0x4e] sm:$0xff]
      %v2864 = vld [vmem:[%s219 + $0x56] sm:$0xff]
      %v2865 = vld [vmem:[%s219 + $0x5e] sm:$0xff]
      %v2866 = vld [vmem:[%s219 + $0x66] sm:$0xff]
      %v2867 = vld [vmem:[%s219 + $0x6e] sm:$0xff]
      %v2868 = vld [vmem:[%s219 + $0x76] sm:$0xff]
      %v2869 = vld [vmem:[%s219 + $0x7e] sm:$0xff]
      %v2870 = vld [vmem:[%s219 + $0x86] sm:$0xff]
      %v2871 = vld [vmem:[%s219 + $0x8e] sm:$0xff]
      %v2872 = vld [vmem:[%s219 + $0x96] sm:$0xff]
      %v2873 = vld [vmem:[%s219 + $0x9e] sm:$0xff]
      %v2874 = vld [vmem:[%s219 + $0xa6] sm:$0xff]
      %v2875 = vld [vmem:[%s219 + $0xae] sm:$0xff]
      %v2876 = vld [vmem:[%s219 + $0xb6] sm:$0xff]
      %v2877 = vld [vmem:[%s219 + $0xbe] sm:$0xff]
      %v2878 = vld [vmem:[%s219 + $0xc6] sm:$0xff]
      %v2879 = vld [vmem:[%s219 + $0xce] sm:$0xff]
      %v2880 = vld [vmem:[%s219 + $0xd6] sm:$0xff]
      %v2881 = vld [vmem:[%s219 + $0xde] sm:$0xff]
      %v2882 = vld [vmem:[%s219 + $0xe6] sm:$0xff]
      %v2883 = vld [vmem:[%s219 + $0xee] sm:$0xff]
      %v2884 = vld [vmem:[%s219 + $0xf6] sm:$0xff]
      %v2885 = vld [vmem:[%s219 + $0xfe] sm:$0xff]
      %v2886 = vld [vmem:[%s219 + $0x106] sm:$0xff]
      %v2887 = vld [vmem:[%s219 + $0x10e] sm:$0xff]
      %v2888 = vld [vmem:[%s219 + $0x116] sm:$0xff]
      %v2889 = vld [vmem:[%s219 + $0x11e] sm:$0xff]
      %v2890 = vld [vmem:[%s219 + $0x126] sm:$0xff]
      %v2891 = vld [vmem:[%s219 + $0x12e] sm:$0xff]
      %v2892 = vld [vmem:[%s219 + $0x136] sm:$0xff]
      %v2893 = vld [vmem:[%s219 + $0x13e] sm:$0xff]
      %v2894 = vpack.c.bf16 %v2859, %v2858
      %v2895 = vpack.c.bf16 %v2861, %v2860
      %v2896 = vpack.c.bf16 %v2863, %v2862
      %v2897 = vpack.c.bf16 %v2865, %v2864
      %v2898 = vpack.c.bf16 %v2867, %v2866
      %v2899 = vpack.c.bf16 %v2869, %v2868
      %v2900 = vpack.c.bf16 %v2871, %v2870
      %v2901 = vpack.c.bf16 %v2873, %v2872
      %v2902 = vpack.c.bf16 %v2875, %v2874
      %v2903 = vpack.c.bf16 %v2877, %v2876
      %v2904 = vpack.c.bf16 %v2879, %v2878
      %v2905 = vpack.c.bf16 %v2881, %v2880
      %v2906 = vpack.c.bf16 %v2883, %v2882
      %v2907 = vpack.c.bf16 %v2885, %v2884
      %v2908 = vpack.c.bf16 %v2887, %v2886
      %v2909 = vpack.c.bf16 %v2889, %v2888
      %v2910 = vpack.c.bf16 %v2891, %v2890
      %v2911 = vpack.c.bf16 %v2893, %v2892
      %s2912 = scalar_lea.vmem %s1, 128
      %v2913 = vld [vmem:[%s2912] sm:$0xf]
      %v2914 = vld [vmem:[%s2912 + $0x4] sm:$0xf]
      %v2915 = vld [vmem:[%s2912 + $0x8] sm:$0xf]
      %v2916 = vld [vmem:[%s2912 + $0xc] sm:$0xf]
      %v2921 = vunpack.c.l.b16 %v2913
      %v2922 = vunpack.c.l.b16 %v2914
      %v2923 = vunpack.c.l.b16 %v2915
      %v2924 = vunpack.c.l.b16 %v2916
      %v2925 = vpack.c.b16 %v2922, %v2921
      %v2926 = vpack.c.b16 %v2924, %v2923
      %v2930 = vsel %vm355, %v2894, 0
      %v2933 = vsel %vm355, %v2895, 0
      %v2936 = vsel %vm355, %v2896, 0
      %v2939 = vsel %vm355, %v2897, 0
      %v2942 = vsel %vm355, %v2898, 0
      %v2945 = vsel %vm355, %v2899, 0
      %v2948 = vsel %vm355, %v2900, 0
      %v2951 = vsel %vm355, %v2901, 0
      %v2954 = vsel %vm355, %v2902, 0
      %v2957 = vsel %vm355, %v2903, 0
      %v2960 = vsel %vm355, %v2904, 0
      %v2963 = vsel %vm355, %v2905, 0
      %v2966 = vsel %vm355, %v2906, 0
      %v2969 = vsel %vm355, %v2907, 0
      %v2972 = vsel %vm355, %v2908, 0
      %v2975 = vsel %vm355, %v2909, 0
      %v2978 = vsel %vm355, %v2910, 0
      %v2981 = vsel %vm355, %v2911, 0
      %2983 = vmatprep.subr.bf16.mxu0 0
      %2984 = vmatpush1.bf16.msra.mxu0 %v2925
      %2985 = vmatprep.subr.bf16.mxu0 0
      %2986 = vmatpush1.bf16.msra.mxu0 %v2926
      %2987 = vmatprep.subr.bf16.mxu0 0
      %2988 = vmatpush1.bf16.msra.mxu0 0
      %2989 = vmatprep.subr.bf16.mxu0 0
      %2990 = vmatpush1.bf16.msra.mxu0 0
      %2991 = vmatprep.subr.bf16.mxu0 0
      %2992 = vmatpush1.bf16.msra.mxu0 0
      %2993 = vmatprep.subr.bf16.mxu0 0
      %2994 = vmatpush1.bf16.msra.mxu0 0
      %2995 = vmatprep.subr.bf16.mxu0 0
      %2996 = vmatpush1.bf16.msra.mxu0 0
      %2997 = vmatprep.subr.bf16.mxu0 0
      %2998 = vmatpush1.bf16.msra.mxu0 0
      %2999 = vmatprep.subr.bf16.mxu0 0
      %3000 = vmatpush1.bf16.msra.mxu0 0
      %3001 = vmatprep.subr.bf16.mxu0 0
      %3002 = vmatpush1.bf16.msra.mxu0 0
      %3003 = vmatprep.subr.bf16.mxu0 0
      %3004 = vmatpush1.bf16.msra.mxu0 0
      %3005 = vmatprep.subr.bf16.mxu0 0
      %3006 = vmatpush1.bf16.msra.mxu0 0
      %3007 = vmatprep.subr.bf16.mxu0 0
      %3008 = vmatpush1.bf16.msra.mxu0 0
      %3009 = vmatprep.subr.bf16.mxu0 0
      %3010 = vmatpush1.bf16.msra.mxu0 0
      %3011 = vmatprep.subr.bf16.mxu0 0
      %3012 = vmatpush1.bf16.msra.mxu0 0
      %3013 = vmatprep.subr.bf16.mxu0 0
      %3014 = vmatpush1.bf16.msra.mxu0 0
      %3015 = vmatprep.mubr.bf16.mxu0 0
      %3016 = vmatmul.mubr.bf16.gmra.mrb[0].mxu0 %v2930
      %v3017 = vpop.f32.mrb[0].mxu0
      %v3018 = vadd.f32 0.0, %v3017
      %v3019 = vpop.f32.mrb[0].mxu0
      %v3020 = vpop.f32.mrb[0].mxu0
      %v3021 = vadd.f32 0.0, %v3020
      %v3022 = vpop.f32.mrb[0].mxu0
      %3023 = vmatprep.mubr.bf16.mxu0 0
      %3024 = vmatmul.mubr.bf16.gmra.mrb[0].mxu0 %v2933
      %v3025 = vpop.f32.mrb[0].mxu0
      %v3026 = vadd.f32 0.0, %v3025
      %v3027 = vpop.f32.mrb[0].mxu0
      %v3028 = vpop.f32.mrb[0].mxu0
      %v3029 = vadd.f32 0.0, %v3028
      %v3030 = vpop.f32.mrb[0].mxu0
      %3031 = vmatprep.mubr.bf16.mxu0 0
      %3032 = vmatmul.mubr.bf16.gmra.mrb[0].mxu0 %v2936
      %v3033 = vpop.f32.mrb[0].mxu0
      %v3034 = vadd.f32 0.0, %v3033
      %v3035 = vpop.f32.mrb[0].mxu0
      %v3036 = vpop.f32.mrb[0].mxu0
      %v3037 = vadd.f32 0.0, %v3036
      %v3038 = vpop.f32.mrb[0].mxu0
      %3039 = vmatprep.mubr.bf16.mxu0 0
      %3040 = vmatmul.mubr.bf16.gmra.mrb[0].mxu0 %v2939
      %v3041 = vpop.f32.mrb[0].mxu0
      %v3042 = vadd.f32 0.0, %v3041
      %v3043 = vpop.f32.mrb[0].mxu0
      %v3044 = vpop.f32.mrb[0].mxu0
      %v3045 = vadd.f32 0.0, %v3044
      %v3046 = vpop.f32.mrb[0].mxu0
      %3047 = vmatprep.mubr.bf16.mxu0 0
      %3048 = vmatmul.mubr.bf16.gmra.mrb[0].mxu0 %v2942
      %v3049 = vpop.f32.mrb[0].mxu0
      %v3050 = vadd.f32 0.0, %v3049
      %v3051 = vpop.f32.mrb[0].mxu0
      %v3052 = vpop.f32.mrb[0].mxu0
      %v3053 = vadd.f32 0.0, %v3052
      %v3054 = vpop.f32.mrb[0].mxu0
      %3055 = vmatprep.mubr.bf16.mxu0 0
      %3056 = vmatmul.mubr.bf16.gmra.mrb[0].mxu0 %v2945
      %v3057 = vpop.f32.mrb[0].mxu0
      %v3058 = vadd.f32 0.0, %v3057
      %v3059 = vpop.f32.mrb[0].mxu0
      %v3060 = vpop.f32.mrb[0].mxu0
      %v3061 = vadd.f32 0.0, %v3060
      %v3062 = vpop.f32.mrb[0].mxu0
      %3063 = vmatprep.mubr.bf16.mxu0 0
      %3064 = vmatmul.mubr.bf16.gmra.mrb[0].mxu0 %v2948
      %v3065 = vpop.f32.mrb[0].mxu0
      %v3066 = vadd.f32 0.0, %v3065
      %v3067 = vpop.f32.mrb[0].mxu0
      %v3068 = vpop.f32.mrb[0].mxu0
      %v3069 = vadd.f32 0.0, %v3068
      %v3070 = vpop.f32.mrb[0].mxu0
      %3071 = vmatprep.mubr.bf16.mxu0 0
      %3072 = vmatmul.mubr.bf16.gmra.mrb[0].mxu0 %v2951
      %v3073 = vpop.f32.mrb[0].mxu0
      %v3074 = vadd.f32 0.0, %v3073
      %v3075 = vpop.f32.mrb[0].mxu0
      %v3076 = vpop.f32.mrb[0].mxu0
      %v3077 = vadd.f32 0.0, %v3076
      %v3078 = vpop.f32.mrb[0].mxu0
      %3079 = vmatprep.mubr.bf16.mxu0 0
      %3080 = vmatmul.mubr.bf16.gmra.mrb[0].mxu0 %v2954
      %v3081 = vpop.f32.mrb[0].mxu0
      %v3082 = vadd.f32 0.0, %v3081
      %v3083 = vpop.f32.mrb[0].mxu0
      %v3084 = vpop.f32.mrb[0].mxu0
      %v3085 = vadd.f32 0.0, %v3084
      %v3086 = vpop.f32.mrb[0].mxu0
      %3087 = vmatprep.mubr.bf16.mxu0 0
      %3088 = vmatmul.mubr.bf16.gmra.mrb[0].mxu0 %v2957
      %v3089 = vpop.f32.mrb[0].mxu0
      %v3090 = vadd.f32 0.0, %v3089
      %v3091 = vpop.f32.mrb[0].mxu0
      %v3092 = vpop.f32.mrb[0].mxu0
      %v3093 = vadd.f32 0.0, %v3092
      %v3094 = vpop.f32.mrb[0].mxu0
      %3095 = vmatprep.mubr.bf16.mxu0 0
      %3096 = vmatmul.mubr.bf16.gmra.mrb[0].mxu0 %v2960
      %v3097 = vpop.f32.mrb[0].mxu0
      %v3098 = vadd.f32 0.0, %v3097
      %v3099 = vpop.f32.mrb[0].mxu0
      %v3100 = vpop.f32.mrb[0].mxu0
      %v3101 = vadd.f32 0.0, %v3100
      %v3102 = vpop.f32.mrb[0].mxu0
      %3103 = vmatprep.mubr.bf16.mxu0 0
      %3104 = vmatmul.mubr.bf16.gmra.mrb[0].mxu0 %v2963
      %v3105 = vpop.f32.mrb[0].mxu0
      %v3106 = vadd.f32 0.0, %v3105
      %v3107 = vpop.f32.mrb[0].mxu0
      %v3108 = vpop.f32.mrb[0].mxu0
      %v3109 = vadd.f32 0.0, %v3108
      %v3110 = vpop.f32.mrb[0].mxu0
      %3111 = vmatprep.mubr.bf16.mxu0 0
      %3112 = vmatmul.mubr.bf16.gmra.mrb[0].mxu0 %v2966
      %v3113 = vpop.f32.mrb[0].mxu0
      %v3114 = vadd.f32 0.0, %v3113
      %v3115 = vpop.f32.mrb[0].mxu0
      %v3116 = vpop.f32.mrb[0].mxu0
      %v3117 = vadd.f32 0.0, %v3116
      %v3118 = vpop.f32.mrb[0].mxu0
      %3119 = vmatprep.mubr.bf16.mxu0 0
      %3120 = vmatmul.mubr.bf16.gmra.mrb[0].mxu0 %v2969
      %v3121 = vpop.f32.mrb[0].mxu0
      %v3122 = vadd.f32 0.0, %v3121
      %v3123 = vpop.f32.mrb[0].mxu0
      %v3124 = vpop.f32.mrb[0].mxu0
      %v3125 = vadd.f32 0.0, %v3124
      %v3126 = vpop.f32.mrb[0].mxu0
      %3127 = vmatprep.mubr.bf16.mxu0 0
      %3128 = vmatmul.mubr.bf16.gmra.mrb[0].mxu0 %v2972
      %v3129 = vpop.f32.mrb[0].mxu0
      %v3130 = vadd.f32 0.0, %v3129
      %v3131 = vpop.f32.mrb[0].mxu0
      %v3132 = vpop.f32.mrb[0].mxu0
      %v3133 = vadd.f32 0.0, %v3132
      %v3134 = vpop.f32.mrb[0].mxu0
      %3135 = vmatprep.mubr.bf16.mxu0 0
      %3136 = vmatmul.mubr.bf16.gmra.mrb[0].mxu0 %v2975
      %v3137 = vpop.f32.mrb[0].mxu0
      %v3138 = vadd.f32 0.0, %v3137
      %v3139 = vpop.f32.mrb[0].mxu0
      %v3140 = vpop.f32.mrb[0].mxu0
      %v3141 = vadd.f32 0.0, %v3140
      %v3142 = vpop.f32.mrb[0].mxu0
      %3143 = vmatprep.mubr.bf16.mxu0 0
      %3144 = vmatmul.mubr.bf16.gmra.mrb[0].mxu0 %v2978
      %v3145 = vpop.f32.mrb[0].mxu0
      %v3146 = vadd.f32 0.0, %v3145
      %v3147 = vpop.f32.mrb[0].mxu0
      %v3148 = vpop.f32.mrb[0].mxu0
      %v3149 = vadd.f32 0.0, %v3148
      %v3150 = vpop.f32.mrb[0].mxu0
      %3151 = vmatprep.mubr.bf16.mxu0 0
      %3152 = vmatmul.mubr.bf16.gmra.mrb[0].mxu0 %v2981
      %v3153 = vpop.f32.mrb[0].mxu0
      %v3154 = vadd.f32 0.0, %v3153
      %v3155 = vpop.f32.mrb[0].mxu0
      %v3156 = vpop.f32.mrb[0].mxu0
      %v3157 = vadd.f32 0.0, %v3156
      %v3158 = vpop.f32.mrb[0].mxu0
      %3159 = vdwg.mxu0
      %v3160 = vadd.f32 %v2822, %v3018
      %v3161 = vadd.f32 %v2823, %v3021
      %v3162 = vadd.f32 %v2824, %v3026
      %v3163 = vadd.f32 %v2825, %v3029
      %v3164 = vadd.f32 %v2826, %v3034
      %v3165 = vadd.f32 %v2827, %v3037
      %v3166 = vadd.f32 %v2828, %v3042
      %v3167 = vadd.f32 %v2829, %v3045
      %v3168 = vadd.f32 %v2830, %v3050
      %v3169 = vadd.f32 %v2831, %v3053
      %v3170 = vadd.f32 %v2832, %v3058
      %v3171 = vadd.f32 %v2833, %v3061
      %v3172 = vadd.f32 %v2834, %v3066
      %v3173 = vadd.f32 %v2835, %v3069
      %v3174 = vadd.f32 %v2836, %v3074
      %v3175 = vadd.f32 %v2837, %v3077
      %v3176 = vadd.f32 %v2838, %v3082
      %v3177 = vadd.f32 %v2839, %v3085
      %v3178 = vadd.f32 %v2840, %v3090
      %v3179 = vadd.f32 %v2841, %v3093
      %v3180 = vadd.f32 %v2842, %v3098
      %v3181 = vadd.f32 %v2843, %v3101
      %v3182 = vadd.f32 %v2844, %v3106
      %v3183 = vadd.f32 %v2845, %v3109
      %v3184 = vadd.f32 %v2846, %v3114
      %v3185 = vadd.f32 %v2847, %v3117
      %v3186 = vadd.f32 %v2848, %v3122
      %v3187 = vadd.f32 %v2849, %v3125
      %v3188 = vadd.f32 %v2850, %v3130
      %v3189 = vadd.f32 %v2851, %v3133
      %v3190 = vadd.f32 %v2852, %v3138
      %v3191 = vadd.f32 %v2853, %v3141
      %v3192 = vadd.f32 %v2854, %v3146
      %v3193 = vadd.f32 %v2855, %v3149
      %v3194 = vadd.f32 %v2856, %v3154
      %v3195 = vadd.f32 %v2857, %v3157
      %v3196 = vld [vmem:[%s2] sm:$0x1]
      %v3198 = vlaneseq
      %v3199 = vshrl.u32 %v3198, 7
      %v3200 = vsub.s32 0, %v3199
      %v3201 = vrot.slane %v3196, %v3200
      %v3203 = vadd.f32 %v3160, %v3201
      %v3204 = vadd.f32 %v3161, %v3201
      %v3205 = vadd.f32 %v3162, %v3201
      %v3206 = vadd.f32 %v3163, %v3201
      %v3207 = vadd.f32 %v3164, %v3201
      %v3208 = vadd.f32 %v3165, %v3201
      %v3209 = vadd.f32 %v3166, %v3201
      %v3210 = vadd.f32 %v3167, %v3201
      %v3211 = vadd.f32 %v3168, %v3201
      %v3212 = vadd.f32 %v3169, %v3201
      %v3213 = vadd.f32 %v3170, %v3201
      %v3214 = vadd.f32 %v3171, %v3201
      %v3215 = vadd.f32 %v3172, %v3201
      %v3216 = vadd.f32 %v3173, %v3201
      %v3217 = vadd.f32 %v3174, %v3201
      %v3218 = vadd.f32 %v3175, %v3201
      %v3219 = vadd.f32 %v3176, %v3201
      %v3220 = vadd.f32 %v3177, %v3201
      %v3221 = vadd.f32 %v3178, %v3201
      %v3222 = vadd.f32 %v3179, %v3201
      %v3223 = vadd.f32 %v3180, %v3201
      %v3224 = vadd.f32 %v3181, %v3201
      %v3225 = vadd.f32 %v3182, %v3201
      %v3226 = vadd.f32 %v3183, %v3201
      %v3227 = vadd.f32 %v3184, %v3201
      %v3228 = vadd.f32 %v3185, %v3201
      %v3229 = vadd.f32 %v3186, %v3201
      %v3230 = vadd.f32 %v3187, %v3201
      %v3231 = vadd.f32 %v3188, %v3201
      %v3232 = vadd.f32 %v3189, %v3201
      %v3233 = vadd.f32 %v3190, %v3201
      %v3234 = vadd.f32 %v3191, %v3201
      %v3235 = vadd.f32 %v3192, %v3201
      %v3236 = vadd.f32 %v3193, %v3201
      %v3237 = vadd.f32 %v3194, %v3201
      %v3238 = vadd.f32 %v3195, %v3201
      %v3239 = vmax.f32 %v3203, 0.0
      %v3240 = vmax.f32 %v3204, 0.0
      %v3241 = vmax.f32 %v3205, 0.0
      %v3242 = vmax.f32 %v3206, 0.0
      %v3243 = vmax.f32 %v3207, 0.0
      %v3244 = vmax.f32 %v3208, 0.0
      %v3245 = vmax.f32 %v3209, 0.0
      %v3246 = vmax.f32 %v3210, 0.0
      %v3247 = vmax.f32 %v3211, 0.0
      %v3248 = vmax.f32 %v3212, 0.0
      %v3249 = vmax.f32 %v3213, 0.0
      %v3250 = vmax.f32 %v3214, 0.0
      %v3251 = vmax.f32 %v3215, 0.0
      %v3252 = vmax.f32 %v3216, 0.0
      %v3253 = vmax.f32 %v3217, 0.0
      %v3254 = vmax.f32 %v3218, 0.0
      %v3255 = vmax.f32 %v3219, 0.0
      %v3256 = vmax.f32 %v3220, 0.0
      %v3257 = vmax.f32 %v3221, 0.0
      %v3258 = vmax.f32 %v3222, 0.0
      %v3259 = vmax.f32 %v3223, 0.0
      %v3260 = vmax.f32 %v3224, 0.0
      %v3261 = vmax.f32 %v3225, 0.0
      %v3262 = vmax.f32 %v3226, 0.0
      %v3263 = vmax.f32 %v3227, 0.0
      %v3264 = vmax.f32 %v3228, 0.0
      %v3265 = vmax.f32 %v3229, 0.0
      %v3266 = vmax.f32 %v3230, 0.0
      %v3267 = vmax.f32 %v3231, 0.0
      %v3268 = vmax.f32 %v3232, 0.0
      %v3269 = vmax.f32 %v3233, 0.0
      %v3270 = vmax.f32 %v3234, 0.0
      %v3271 = vmax.f32 %v3235, 0.0
      %v3272 = vmax.f32 %v3236, 0.0
      %v3273 = vmax.f32 %v3237, 0.0
      %v3274 = vmax.f32 %v3238, 0.0
      %v3275 = vpack.c.bf16 %v3240, %v3239
      %v3276 = vpack.c.bf16 %v3242, %v3241
      %v3277 = vpack.c.bf16 %v3244, %v3243
      %v3278 = vpack.c.bf16 %v3246, %v3245
      %v3279 = vpack.c.bf16 %v3248, %v3247
      %v3280 = vpack.c.bf16 %v3250, %v3249
      %v3281 = vpack.c.bf16 %v3252, %v3251
      %v3282 = vpack.c.bf16 %v3254, %v3253
      %v3283 = vpack.c.bf16 %v3256, %v3255
      %v3284 = vpack.c.bf16 %v3258, %v3257
      %v3285 = vpack.c.bf16 %v3260, %v3259
      %v3286 = vpack.c.bf16 %v3262, %v3261
      %v3287 = vpack.c.bf16 %v3264, %v3263
      %v3288 = vpack.c.bf16 %v3266, %v3265
      %v3289 = vpack.c.bf16 %v3268, %v3267
      %v3290 = vpack.c.bf16 %v3270, %v3269
      %v3291 = vpack.c.bf16 %v3272, %v3271
      %v3292 = vpack.c.bf16 %v3274, %v3273
      %v3293 = vld [vmem:[%s3] sm:$0xf]
      %v3294 = vld [vmem:[%s3 + $0x4] sm:$0xf]
      %v3295 = vld [vmem:[%s3 + $0x8] sm:$0xf]
      %v3296 = vld [vmem:[%s3 + $0xc] sm:$0xf]
      %v3297 = vld [vmem:[%s4] sm:$0x1]
      %v3299 = vlaneseq
      %v3300 = vshrl.u32 %v3299, 7
      %v3301 = vsub.s32 0, %v3300
      %v3302 = vrot.slane %v3297, %v3301
      %v3308 = vunpack.c.l.b16 %v3293
      %v3309 = vunpack.c.l.b16 %v3294
      %v3310 = vunpack.c.l.b16 %v3295
      %v3311 = vunpack.c.l.b16 %v3296
      %v3312 = vpack.c.b16 %v3309, %v3308
      %v3313 = vpack.c.b16 %v3311, %v3310
      %v3317 = vsel %vm355, %v3275, 0
      %v3320 = vsel %vm355, %v3276, 0
      %v3323 = vsel %vm355, %v3277, 0
      %v3326 = vsel %vm355, %v3278, 0
      %v3329 = vsel %vm355, %v3279, 0
      %v3332 = vsel %vm355, %v3280, 0
      %v3335 = vsel %vm355, %v3281, 0
      %v3338 = vsel %vm355, %v3282, 0
      %v3341 = vsel %vm355, %v3283, 0
      %v3344 = vsel %vm355, %v3284, 0
      %v3347 = vsel %vm355, %v3285, 0
      %v3350 = vsel %vm355, %v3286, 0
      %v3353 = vsel %vm355, %v3287, 0
      %v3356 = vsel %vm355, %v3288, 0
      %v3359 = vsel %vm355, %v3289, 0
      %v3362 = vsel %vm355, %v3290, 0
      %v3365 = vsel %vm355, %v3291, 0
      %v3368 = vsel %vm355, %v3292, 0
      %3370 = vmatprep.subr.bf16.mxu0 0
      %3371 = vmatpush1.bf16.msra.mxu0 %v3312
      %3372 = vmatprep.subr.bf16.mxu0 0
      %3373 = vmatpush1.bf16.msra.mxu0 %v3313
      %3374 = vmatprep.subr.bf16.mxu0 0
      %3375 = vmatpush1.bf16.msra.mxu0 0
      %3376 = vmatprep.subr.bf16.mxu0 0
      %3377 = vmatpush1.bf16.msra.mxu0 0
      %3378 = vmatprep.subr.bf16.mxu0 0
      %3379 = vmatpush1.bf16.msra.mxu0 0
      %3380 = vmatprep.subr.bf16.mxu0 0
      %3381 = vmatpush1.bf16.msra.mxu0 0
      %3382 = vmatprep.subr.bf16.mxu0 0
      %3383 = vmatpush1.bf16.msra.mxu0 0
      %3384 = vmatprep.subr.bf16.mxu0 0
      %3385 = vmatpush1.bf16.msra.mxu0 0
      %3386 = vmatprep.subr.bf16.mxu0 0
      %3387 = vmatpush1.bf16.msra.mxu0 0
      %3388 = vmatprep.subr.bf16.mxu0 0
      %3389 = vmatpush1.bf16.msra.mxu0 0
      %3390 = vmatprep.subr.bf16.mxu0 0
      %3391 = vmatpush1.bf16.msra.mxu0 0
      %3392 = vmatprep.subr.bf16.mxu0 0
      %3393 = vmatpush1.bf16.msra.mxu0 0
      %3394 = vmatprep.subr.bf16.mxu0 0
      %3395 = vmatpush1.bf16.msra.mxu0 0
      %3396 = vmatprep.subr.bf16.mxu0 0
      %3397 = vmatpush1.bf16.msra.mxu0 0
      %3398 = vmatprep.subr.bf16.mxu0 0
      %3399 = vmatpush1.bf16.msra.mxu0 0
      %3400 = vmatprep.subr.bf16.mxu0 0
      %3401 = vmatpush1.bf16.msra.mxu0 0
      %3402 = vmatprep.mubr.bf16.mxu0 0
      %3403 = vmatmul.mubr.bf16.gmra.mrb[0].mxu0 %v3317
      %v3404 = vpop.f32.mrb[0].mxu0
      %v3405 = vadd.f32 %v3302, %v3404
      %v3406 = vpop.f32.mrb[0].mxu0
      %v3407 = vpop.f32.mrb[0].mxu0
      %v3408 = vadd.f32 %v3302, %v3407
      %v3409 = vpop.f32.mrb[0].mxu0
      %3410 = vmatprep.mubr.bf16.mxu0 0
      %3411 = vmatmul.mubr.bf16.gmra.mrb[0].mxu0 %v3320
      %v3412 = vpop.f32.mrb[0].mxu0
      %v3413 = vadd.f32 %v3302, %v3412
      %v3414 = vpop.f32.mrb[0].mxu0
      %v3415 = vpop.f32.mrb[0].mxu0
      %v3416 = vadd.f32 %v3302, %v3415
      %v3417 = vpop.f32.mrb[0].mxu0
      %3418 = vmatprep.mubr.bf16.mxu0 0
      %3419 = vmatmul.mubr.bf16.gmra.mrb[0].mxu0 %v3323
      %v3420 = vpop.f32.mrb[0].mxu0
      %v3421 = vadd.f32 %v3302, %v3420
      %v3422 = vpop.f32.mrb[0].mxu0
      %v3423 = vpop.f32.mrb[0].mxu0
      %v3424 = vadd.f32 %v3302, %v3423
      %v3425 = vpop.f32.mrb[0].mxu0
      %3426 = vmatprep.mubr.bf16.mxu0 0
      %3427 = vmatmul.mubr.bf16.gmra.mrb[0].mxu0 %v3326
      %v3428 = vpop.f32.mrb[0].mxu0
      %v3429 = vadd.f32 %v3302, %v3428
      %v3430 = vpop.f32.mrb[0].mxu0
      %v3431 = vpop.f32.mrb[0].mxu0
      %v3432 = vadd.f32 %v3302, %v3431
      %v3433 = vpop.f32.mrb[0].mxu0
      %3434 = vmatprep.mubr.bf16.mxu0 0
      %3435 = vmatmul.mubr.bf16.gmra.mrb[0].mxu0 %v3329
      %v3436 = vpop.f32.mrb[0].mxu0
      %v3437 = vadd.f32 %v3302, %v3436
      %v3438 = vpop.f32.mrb[0].mxu0
      %v3439 = vpop.f32.mrb[0].mxu0
      %v3440 = vadd.f32 %v3302, %v3439
      %v3441 = vpop.f32.mrb[0].mxu0
      %3442 = vmatprep.mubr.bf16.mxu0 0
      %3443 = vmatmul.mubr.bf16.gmra.mrb[0].mxu0 %v3332
      %v3444 = vpop.f32.mrb[0].mxu0
      %v3445 = vadd.f32 %v3302, %v3444
      %v3446 = vpop.f32.mrb[0].mxu0
      %v3447 = vpop.f32.mrb[0].mxu0
      %v3448 = vadd.f32 %v3302, %v3447
      %v3449 = vpop.f32.mrb[0].mxu0
      %3450 = vmatprep.mubr.bf16.mxu0 0
      %3451 = vmatmul.mubr.bf16.gmra.mrb[0].mxu0 %v3335
      %v3452 = vpop.f32.mrb[0].mxu0
      %v3453 = vadd.f32 %v3302, %v3452
      %v3454 = vpop.f32.mrb[0].mxu0
      %v3455 = vpop.f32.mrb[0].mxu0
      %v3456 = vadd.f32 %v3302, %v3455
      %v3457 = vpop.f32.mrb[0].mxu0
      %3458 = vmatprep.mubr.bf16.mxu0 0
      %3459 = vmatmul.mubr.bf16.gmra.mrb[0].mxu0 %v3338
      %v3460 = vpop.f32.mrb[0].mxu0
      %v3461 = vadd.f32 %v3302, %v3460
      %v3462 = vpop.f32.mrb[0].mxu0
      %v3463 = vpop.f32.mrb[0].mxu0
      %v3464 = vadd.f32 %v3302, %v3463
      %v3465 = vpop.f32.mrb[0].mxu0
      %3466 = vmatprep.mubr.bf16.mxu0 0
      %3467 = vmatmul.mubr.bf16.gmra.mrb[0].mxu0 %v3341
      %v3468 = vpop.f32.mrb[0].mxu0
      %v3469 = vadd.f32 %v3302, %v3468
      %v3470 = vpop.f32.mrb[0].mxu0
      %v3471 = vpop.f32.mrb[0].mxu0
      %v3472 = vadd.f32 %v3302, %v3471
      %v3473 = vpop.f32.mrb[0].mxu0
      %3474 = vmatprep.mubr.bf16.mxu0 0
      %3475 = vmatmul.mubr.bf16.gmra.mrb[0].mxu0 %v3344
      %v3476 = vpop.f32.mrb[0].mxu0
      %v3477 = vadd.f32 %v3302, %v3476
      %v3478 = vpop.f32.mrb[0].mxu0
      %v3479 = vpop.f32.mrb[0].mxu0
      %v3480 = vadd.f32 %v3302, %v3479
      %v3481 = vpop.f32.mrb[0].mxu0
      %3482 = vmatprep.mubr.bf16.mxu0 0
      %3483 = vmatmul.mubr.bf16.gmra.mrb[0].mxu0 %v3347
      %v3484 = vpop.f32.mrb[0].mxu0
      %v3485 = vadd.f32 %v3302, %v3484
      %v3486 = vpop.f32.mrb[0].mxu0
      %v3487 = vpop.f32.mrb[0].mxu0
      %v3488 = vadd.f32 %v3302, %v3487
      %v3489 = vpop.f32.mrb[0].mxu0
      %3490 = vmatprep.mubr.bf16.mxu0 0
      %3491 = vmatmul.mubr.bf16.gmra.mrb[0].mxu0 %v3350
      %v3492 = vpop.f32.mrb[0].mxu0
      %v3493 = vadd.f32 %v3302, %v3492
      %v3494 = vpop.f32.mrb[0].mxu0
      %v3495 = vpop.f32.mrb[0].mxu0
      %v3496 = vadd.f32 %v3302, %v3495
      %v3497 = vpop.f32.mrb[0].mxu0
      %3498 = vmatprep.mubr.bf16.mxu0 0
      %3499 = vmatmul.mubr.bf16.gmra.mrb[0].mxu0 %v3353
      %v3500 = vpop.f32.mrb[0].mxu0
      %v3501 = vadd.f32 %v3302, %v3500
      %v3502 = vpop.f32.mrb[0].mxu0
      %v3503 = vpop.f32.mrb[0].mxu0
      %v3504 = vadd.f32 %v3302, %v3503
      %v3505 = vpop.f32.mrb[0].mxu0
      %3506 = vmatprep.mubr.bf16.mxu0 0
      %3507 = vmatmul.mubr.bf16.gmra.mrb[0].mxu0 %v3356
      %v3508 = vpop.f32.mrb[0].mxu0
      %v3509 = vadd.f32 %v3302, %v3508
      %v3510 = vpop.f32.mrb[0].mxu0
      %v3511 = vpop.f32.mrb[0].mxu0
      %v3512 = vadd.f32 %v3302, %v3511
      %v3513 = vpop.f32.mrb[0].mxu0
      %3514 = vmatprep.mubr.bf16.mxu0 0
      %3515 = vmatmul.mubr.bf16.gmra.mrb[0].mxu0 %v3359
      %v3516 = vpop.f32.mrb[0].mxu0
      %v3517 = vadd.f32 %v3302, %v3516
      %v3518 = vpop.f32.mrb[0].mxu0
      %v3519 = vpop.f32.mrb[0].mxu0
      %v3520 = vadd.f32 %v3302, %v3519
      %v3521 = vpop.f32.mrb[0].mxu0
      %3522 = vmatprep.mubr.bf16.mxu0 0
      %3523 = vmatmul.mubr.bf16.gmra.mrb[0].mxu0 %v3362
      %v3524 = vpop.f32.mrb[0].mxu0
      %v3525 = vadd.f32 %v3302, %v3524
      %v3526 = vpop.f32.mrb[0].mxu0
      %v3527 = vpop.f32.mrb[0].mxu0
      %v3528 = vadd.f32 %v3302, %v3527
      %v3529 = vpop.f32.mrb[0].mxu0
      %3530 = vmatprep.mubr.bf16.mxu0 0
      %3531 = vmatmul.mubr.bf16.gmra.mrb[0].mxu0 %v3365
      %v3532 = vpop.f32.mrb[0].mxu0
      %v3533 = vadd.f32 %v3302, %v3532
      %v3534 = vpop.f32.mrb[0].mxu0
      %v3535 = vpop.f32.mrb[0].mxu0
      %v3536 = vadd.f32 %v3302, %v3535
      %v3537 = vpop.f32.mrb[0].mxu0
      %3538 = vmatprep.mubr.bf16.mxu0 0
      %3539 = vmatmul.mubr.bf16.gmra.mrb[0].mxu0 %v3368
      %v3540 = vpop.f32.mrb[0].mxu0
      %v3541 = vadd.f32 %v3302, %v3540
      %v3542 = vpop.f32.mrb[0].mxu0
      %v3543 = vpop.f32.mrb[0].mxu0
      %v3544 = vadd.f32 %v3302, %v3543
      %v3545 = vpop.f32.mrb[0].mxu0
      %3546 = vdwg.mxu0
      %3547 = vst [vmem:[%s224] sm:$0xff] %v3405
      %3548 = vst [vmem:[%s224 + $0x8] sm:$0xff] %v3408
      %3549 = vst [vmem:[%s224 + $0x10] sm:$0xff] %v3413
      %3550 = vst [vmem:[%s224 + $0x18] sm:$0xff] %v3416
      %3551 = vst [vmem:[%s224 + $0x20] sm:$0xff] %v3421
      %3552 = vst [vmem:[%s224 + $0x28] sm:$0xff] %v3424
      %3553 = vst [vmem:[%s224 + $0x30] sm:$0xff] %v3429
      %3554 = vst [vmem:[%s224 + $0x38] sm:$0xff] %v3432
      %3555 = vst [vmem:[%s224 + $0x40] sm:$0xff] %v3437
      %3556 = vst [vmem:[%s224 + $0x48] sm:$0xff] %v3440
      %3557 = vst [vmem:[%s224 + $0x50] sm:$0xff] %v3445
      %3558 = vst [vmem:[%s224 + $0x58] sm:$0xff] %v3448
      %3559 = vst [vmem:[%s224 + $0x60] sm:$0xff] %v3453
      %3560 = vst [vmem:[%s224 + $0x68] sm:$0xff] %v3456
      %3561 = vst [vmem:[%s224 + $0x70] sm:$0xff] %v3461
      %3562 = vst [vmem:[%s224 + $0x78] sm:$0xff] %v3464
      %3563 = vst [vmem:[%s224 + $0x80] sm:$0xff] %v3469
      %3564 = vst [vmem:[%s224 + $0x88] sm:$0xff] %v3472
      %3565 = vst [vmem:[%s224 + $0x90] sm:$0xff] %v3477
      %3566 = vst [vmem:[%s224 + $0x98] sm:$0xff] %v3480
      %3567 = vst [vmem:[%s224 + $0xa0] sm:$0xff] %v3485
      %3568 = vst [vmem:[%s224 + $0xa8] sm:$0xff] %v3488
      %3569 = vst [vmem:[%s224 + $0xb0] sm:$0xff] %v3493
      %3570 = vst [vmem:[%s224 + $0xb8] sm:$0xff] %v3496
      %3571 = vst [vmem:[%s224 + $0xc0] sm:$0xff] %v3501
      %3572 = vst [vmem:[%s224 + $0xc8] sm:$0xff] %v3504
      %3573 = vst [vmem:[%s224 + $0xd0] sm:$0xff] %v3509
      %3574 = vst [vmem:[%s224 + $0xd8] sm:$0xff] %v3512
      %3575 = vst [vmem:[%s224 + $0xe0] sm:$0xff] %v3517
      %3576 = vst [vmem:[%s224 + $0xe8] sm:$0xff] %v3520
      %3577 = vst [vmem:[%s224 + $0xf0] sm:$0xff] %v3525
      %3578 = vst [vmem:[%s224 + $0xf8] sm:$0xff] %v3528
      %3579 = vst [vmem:[%s224 + $0x100] sm:$0xff] %v3533
      %3580 = vst [vmem:[%s224 + $0x108] sm:$0xff] %v3536
      %3581 = vst [vmem:[%s224 + $0x110] sm:$0xff] %v3541
      %3582 = vst [vmem:[%s224 + $0x118] sm:$0xff] %v3544
      %p3583 = scmp.lt.s32.totalorder %s16, 1
      %s3584 = scalar_select %p3583, %s16, 1
      %s3585 = smul.addr %s3584, 36
      %s3586 = smul.addr %s3585, 8
      %s3587 = scalar_lea.vmem %s5, %s3586
      // Predicated region
      $region41: #{inference.4} parent=39 // pred_check
        %p3588 = pneg %p144
      $region42: #{inference.4} parent=39 // pred_check_branch
        %3590 = sbr.rel (%p3588) target = $region44
      $region43: #{inference.4} parent=39 // pred_region
        _
      $region44: #{inference.4} parent=39 // pred_fallthru
        _
    $region40: #{inference.4} parent=5 // pred_fallthru
      _
    %p3591 = scmp.le.s32.totalorder 2, %s11
    // Predicated region
    $region45: #{inference.4} parent=5 // pred_check
      %p3592 = pneg %p3591
    $region46: #{inference.4} parent=5 // pred_check_branch
      %3594 = sbr.rel (%p3592) target = $region48
    $region47: #{inference.4} parent=5 // pred_region
      %s3595 = ssub.s32 %s11, 2
      // Predicated region
      $region49: #{inference.4} parent=47 // pred_check
        %p3596 = pneg %p150
      $region50: #{inference.4} parent=47 // pred_check_branch
        %3598 = sbr.rel (%p3596) target = $region52
      $region51: #{inference.4} parent=47 // pred_region
        %p3599 = scmp.lt.s32.totalorder %s17, 1
        %s3600 = scalar_select %p3599, %s17, 1
        %s3601 = smul.addr %s3600, 36
        %s3602 = smul.addr %s3601, 8
        %s3603 = scalar_lea.vmem %s5, %s3602
      $region52: #{inference.4} parent=47 // pred_fallthru
        _
    $region48: #{inference.4} parent=5 // pred_fallthru
      _
  $region6: #{inference.4} parent=0 // loop_footer
    %s15 = sadd.s32 1, %s11
  $region7: #{inference.4} parent=0 // loop_footer_branch
    %10 = sbr.rel target = $region3
  $region8: #{inference.4} parent=0 // loop_exit
    _

// kernel: inference.5
$region0: #{inference.5}
  #allocation0 [shape = 'u32[]', space=smem, size = 0x4, offset = 0x4, fixed_abs, tag = 'smem constant byte address 0x4 - core index']
  #allocation1 [shape = 'u32[144,128]{1,0:T(1,128)}', space=vmem, size = 0x12000, scoped, tag = 'internal scratch']
  %s0 = inlined_call_operand.vmem [shape: bf16[16,32], index: 0, kind: input, shape index: {}]
  %s1 = inlined_call_operand.vmem [shape: bf16[32,64], index: 1, kind: input, shape index: {}]
  %s2 = inlined_call_operand.vmem [shape: f32[1,64], index: 2, kind: input, shape index: {}]
  %s3 = inlined_call_operand.vmem [shape: bf16[64,128], index: 3, kind: input, shape index: {}]
  %s4 = inlined_call_operand.vmem [shape: f32[1,128], index: 4, kind: input, shape index: {}]
  %s5 = inlined_call_operand.vmem [shape: f32[16,128], index: 5, kind: output, shape index: {}]
  %s6 = sld [smem:[#allocation0]]
  $region30: #{inference.5} parent=0
    _
  %s8 = ssub.s32 1, %s6
  %s9 = scalar_select 0, %s8, %s6
  // Predicated region
  $region2: #{inference.5} parent=0 // pred_check
    _
  $region3: #{inference.5} parent=0 // pred_check_branch
    %11 = sbr.rel (0) target = $region5
  $region4: #{inference.5} parent=0 // pred_region
    _
  $region5: #{inference.5} parent=0 // pred_fallthru
    _
  // Predicated region
  $region6: #{inference.5} parent=0 // pred_check
    _
  $region7: #{inference.5} parent=0 // pred_check_branch
    %13 = sbr.rel (0) target = $region9
  $region8: #{inference.5} parent=0 // pred_region
    _
  $region9: #{inference.5} parent=0 // pred_fallthru
    _
  // Predicated region
  $region10: #{inference.5} parent=0 // pred_check
    _
  $region11: #{inference.5} parent=0 // pred_check_branch
    %15 = sbr.rel (0) target = $region13
  $region12: #{inference.5} parent=0 // pred_region
    _
  $region13: #{inference.5} parent=0 // pred_fallthru
    _
  // Predicated region
  $region14: #{inference.5} parent=0 // pred_check
    _
  $region15: #{inference.5} parent=0 // pred_check_branch
    %17 = sbr.rel (0) target = $region17
  $region16: #{inference.5} parent=0 // pred_region
    _
  $region17: #{inference.5} parent=0 // pred_fallthru
    _
  // Predicated region
  $region18: #{inference.5} parent=0 // pred_check
    _
  $region19: #{inference.5} parent=0 // pred_check_branch
    %19 = sbr.rel (0) target = $region21
  $region20: #{inference.5} parent=0 // pred_region
    _
  $region21: #{inference.5} parent=0 // pred_fallthru
    _
  %v21 = vld [vmem:[%s0] sm:$0xf]
  %v22 = vld [vmem:[%s0 + $0x4] sm:$0xf]
  %v23 = vld [vmem:[%s1] sm:$0xf]
  %v24 = vld [vmem:[%s1 + $0x4] sm:$0xf]
  %v25 = vld [vmem:[%s1 + $0x8] sm:$0xf]
  %v26 = vld [vmem:[%s1 + $0xc] sm:$0xf]
  %v27 = vld [vmem:[%s2] sm:$0x1]
  %v29 = vlaneseq
  %v30 = vshrl.u32 %v29, 7
  %v31 = vsub.s32 0, %v30
  %v32 = vrot.slane %v27, %v31
  %v36 = vunpack.c.l.b16 %v21
  %v37 = vunpack.c.l.b16 %v22
  %v38 = vpack.c.b16 %v37, %v36
  %v43 = vunpack.c.l.b16 %v23
  %v44 = vunpack.c.l.b16 %v24
  %v45 = vunpack.c.l.b16 %v25
  %v46 = vunpack.c.l.b16 %v26
  %v47 = vpack.c.b16 %v44, %v43
  %v48 = vpack.c.b16 %v46, %v45
  %vm51 = vcmask 261120
  %v53 = vsel %vm51, %v38, 0
  %55 = vmatprep.subr.bf16.mxu0 0
  %56 = vmatpush1.bf16.msra.mxu0 %v47
  %57 = vmatprep.subr.bf16.mxu0 0
  %58 = vmatpush1.bf16.msra.mxu0 %v48
  %59 = vmatprep.subr.bf16.mxu0 0
  %60 = vmatpush1.bf16.msra.mxu0 0
  %61 = vmatprep.subr.bf16.mxu0 0
  %62 = vmatpush1.bf16.msra.mxu0 0
  %63 = vmatprep.subr.bf16.mxu0 0
  %64 = vmatpush1.bf16.msra.mxu0 0
  %65 = vmatprep.subr.bf16.mxu0 0
  %66 = vmatpush1.bf16.msra.mxu0 0
  %67 = vmatprep.subr.bf16.mxu0 0
  %68 = vmatpush1.bf16.msra.mxu0 0
  %69 = vmatprep.subr.bf16.mxu0 0
  %70 = vmatpush1.bf16.msra.mxu0 0
  %71 = vmatprep.subr.bf16.mxu0 0
  %72 = vmatpush1.bf16.msra.mxu0 0
  %73 = vmatprep.subr.bf16.mxu0 0
  %74 = vmatpush1.bf16.msra.mxu0 0
  %75 = vmatprep.subr.bf16.mxu0 0
  %76 = vmatpush1.bf16.msra.mxu0 0
  %77 = vmatprep.subr.bf16.mxu0 0
  %78 = vmatpush1.bf16.msra.mxu0 0
  %79 = vmatprep.subr.bf16.mxu0 0
  %80 = vmatpush1.bf16.msra.mxu0 0
  %81 = vmatprep.subr.bf16.mxu0 0
  %82 = vmatpush1.bf16.msra.mxu0 0
  %83 = vmatprep.subr.bf16.mxu0 0
  %84 = vmatpush1.bf16.msra.mxu0 0
  %85 = vmatprep.subr.bf16.mxu0 0
  %86 = vmatpush1.bf16.msra.mxu0 0
  %87 = vmatprep.mubr.bf16.mxu0 0
  %88 = vmatmul.mubr.bf16.gmra.mrb[0].mxu0 %v53
  %v89 = vpop.f32.mrb[0].mxu0
  %v90 = vadd.f32 %v32, %v89
  %v91 = vpop.f32.mrb[0].mxu0
  %v92 = vpop.f32.mrb[0].mxu0
  %v93 = vadd.f32 %v32, %v92
  %v94 = vpop.f32.mrb[0].mxu0
  %95 = vdwg.mxu0
  %v96 = vmax.f32 %v90, 0.0
  %v97 = vmax.f32 %v93, 0.0
  %v98 = vpack.c.bf16 %v97, %v96
  %v99 = vld [vmem:[%s3] sm:$0xf]
  %v100 = vld [vmem:[%s3 + $0x4] sm:$0xf]
  %v101 = vld [vmem:[%s3 + $0x8] sm:$0xf]
  %v102 = vld [vmem:[%s3 + $0xc] sm:$0xf]
  %v103 = vld [vmem:[%s3 + $0x10] sm:$0xf]
  %v104 = vld [vmem:[%s3 + $0x14] sm:$0xf]
  %v105 = vld [vmem:[%s3 + $0x18] sm:$0xf]
  %v106 = vld [vmem:[%s3 + $0x1c] sm:$0xf]
  %v107 = vld [vmem:[%s4] sm:$0x1]
  %v109 = vlaneseq
  %v110 = vshrl.u32 %v109, 7
  %v111 = vsub.s32 0, %v110
  %v112 = vrot.slane %v107, %v111
  %v122 = vunpack.c.l.b16 %v99
  %v123 = vunpack.c.l.b16 %v100
  %v124 = vunpack.c.l.b16 %v101
  %v125 = vunpack.c.l.b16 %v102
  %v126 = vunpack.c.l.b16 %v103
  %v127 = vunpack.c.l.b16 %v104
  %v128 = vunpack.c.l.b16 %v105
  %v129 = vunpack.c.l.b16 %v106
  %v130 = vpack.c.b16 %v123, %v122
  %v131 = vpack.c.b16 %v125, %v124
  %v132 = vpack.c.b16 %v127, %v126
  %v133 = vpack.c.b16 %v129, %v128
  %vm138 = vcmask 523264
  %v140 = vsel %vm138, %v98, 0
  %142 = vmatprep.subr.bf16.mxu0 0
  %143 = vmatpush1.bf16.msra.mxu0 %v130
  %144 = vmatprep.subr.bf16.mxu0 0
  %145 = vmatpush1.bf16.msra.mxu0 %v131
  %146 = vmatprep.subr.bf16.mxu0 0
  %147 = vmatpush1.bf16.msra.mxu0 %v132
  %148 = vmatprep.subr.bf16.mxu0 0
  %149 = vmatpush1.bf16.msra.mxu0 %v133
  %150 = vmatprep.subr.bf16.mxu0 0
  %151 = vmatpush1.bf16.msra.mxu0 0
  %152 = vmatprep.subr.bf16.mxu0 0
  %153 = vmatpush1.bf16.msra.mxu0 0
  %154 = vmatprep.subr.bf16.mxu0 0
  %155 = vmatpush1.bf16.msra.mxu0 0
  %156 = vmatprep.subr.bf16.mxu0 0
  %157 = vmatpush1.bf16.msra.mxu0 0
  %158 = vmatprep.subr.bf16.mxu0 0
  %159 = vmatpush1.bf16.msra.mxu0 0
  %160 = vmatprep.subr.bf16.mxu0 0
  %161 = vmatpush1.bf16.msra.mxu0 0
  %162 = vmatprep.subr.bf16.mxu0 0
  %163 = vmatpush1.bf16.msra.mxu0 0
  %164 = vmatprep.subr.bf16.mxu0 0
  %165 = vmatpush1.bf16.msra.mxu0 0
  %166 = vmatprep.subr.bf16.mxu0 0
  %167 = vmatpush1.bf16.msra.mxu0 0
  %168 = vmatprep.subr.bf16.mxu0 0
  %169 = vmatpush1.bf16.msra.mxu0 0
  %170 = vmatprep.subr.bf16.mxu0 0
  %171 = vmatpush1.bf16.msra.mxu0 0
  %172 = vmatprep.subr.bf16.mxu0 0
  %173 = vmatpush1.bf16.msra.mxu0 0
  %174 = vmatprep.mubr.bf16.mxu0 0
  %175 = vmatmul.mubr.bf16.gmra.mrb[0].mxu0 %v140
  %v176 = vpop.f32.mrb[0].mxu0
  %v177 = vadd.f32 %v112, %v176
  %v178 = vpop.f32.mrb[0].mxu0
  %v179 = vpop.f32.mrb[0].mxu0
  %v180 = vadd.f32 %v112, %v179
  %v181 = vpop.f32.mrb[0].mxu0
  %182 = vdwg.mxu0
  %183 = vst [vmem:[%s5] sm:$0xff] %v177
  %184 = vst [vmem:[%s5 + $0x8] sm:$0xff] %v180
  // Predicated region
  $region22: #{inference.5} parent=0 // pred_check
    _
  $region23: #{inference.5} parent=0 // pred_check_branch
    %186 = sbr.rel (0) target = $region25
  $region24: #{inference.5} parent=0 // pred_region
    _
  $region25: #{inference.5} parent=0 // pred_fallthru
    _
  // Predicated region
  $region26: #{inference.5} parent=0 // pred_check
    _
  $region27: #{inference.5} parent=0 // pred_check_branch
    %188 = sbr.rel (0) target = $region29
  $region28: #{inference.5} parent=0 // pred_region
    _
  $region29: #{inference.5} parent=0 // pred_fallthru
    _

</llo_original>
